<compile_context>
chip_gen: v7x
topology: tpu7x:2x2x1
jax: 0.10.0
libtpu: 0.0.40
codegen_flags: <defaults>
</compile_context>

<pallas_src>
import math
from functools import partial

import numpy as np
import jax
import jax.numpy as jnp
from jax.experimental import pallas as pl
from jax.experimental.pallas import tpu as pltpu


# ----------------------------------------------------------------------------
# sin-cos positional embeddings (verbatim port of the reference numpy helpers)
# ----------------------------------------------------------------------------
def get_1d_sincos_pos_embed_from_grid(embed_dim, pos):
    assert embed_dim % 2 == 0
    omega = np.arange(embed_dim // 2, dtype=float)
    omega /= embed_dim / 2.0
    omega = 1.0 / 10000 ** omega
    pos = pos.reshape(-1)
    out = np.einsum('m,d->md', pos, omega)
    emb_sin = np.sin(out)
    emb_cos = np.cos(out)
    return np.concatenate([emb_sin, emb_cos], axis=1)


def get_2d_sincos_pos_embed_from_grid(embed_dim, grid):
    assert embed_dim % 2 == 0
    emb_h = get_1d_sincos_pos_embed_from_grid(embed_dim // 2, grid[0])
    emb_w = get_1d_sincos_pos_embed_from_grid(embed_dim // 2, grid[1])
    return np.concatenate([emb_h, emb_w], axis=1)


def get_2d_sincos_pos_embed(embed_dim, grid_size, cls_token=False):
    grid_h = np.arange(grid_size, dtype=np.float32)
    grid_w = np.arange(grid_size, dtype=np.float32)
    grid = np.meshgrid(grid_w, grid_h)
    grid = np.stack(grid, axis=0)
    grid = grid.reshape([2, 1, grid_size, grid_size])
    pos_embed = get_2d_sincos_pos_embed_from_grid(embed_dim, grid)
    if cls_token:
        pos_embed = np.concatenate([np.zeros([1, embed_dim]), pos_embed], axis=0)
    return pos_embed


# ----------------------------------------------------------------------------
# Small in-kernel helpers
# ----------------------------------------------------------------------------
def _ln(x, g, b, eps):
    mu = jnp.mean(x, axis=-1, keepdims=True)
    xc = x - mu
    var = jnp.mean(xc * xc, axis=-1, keepdims=True)
    return xc * jax.lax.rsqrt(var + eps) * g + b


# ----------------------------------------------------------------------------
# Pallas kernels
# ----------------------------------------------------------------------------
def _patch_embed_kernel(x_ref, w_ref, b_ref, pos_ref, o_ref):
    # [P, C*p*p] x [C*p*p, E] -> [P, E], pos-embed add fused in the epilogue.
    h = jnp.dot(x_ref[0].astype(jnp.bfloat16), w_ref[...],
                preferred_element_type=jnp.float32)
    o_ref[0] = h + b_ref[...] + pos_ref[0]


def _make_stacked_kernel(num_heads, eps, add_pos):
    """Full transformer stack: grid=(depth,), whole batch per step, weights once per layer.

    Residual stream lives in a VMEM scratch across the depth axis; the (optional) positional
    add happens at depth step 0 and the final LayerNorm + linear head is fused into the last
    depth step, so the only HBM traffic per call is: tokens in, per-layer weights (once each),
    head output out.
    """
    def kernel(*refs):
        if add_pos:
            (x_ref, pos_ref,
             n1w, n1b, qw, qb, kw, kb, vw, vb, pw, pb,
             n2w, n2b, f1w, f1b, f2w, f2b,
             fnw, fnb, hw, hb,
             o_ref, res_ref) = refs
        else:
            (x_ref,
             n1w, n1b, qw, qb, kw, kb, vw, vb, pw, pb,
             n2w, n2b, f1w, f1b, f2w, f2b,
             fnw, fnb, hw, hb,
             o_ref, res_ref) = refs
            pos_ref = None

        l = pl.program_id(0)
        B, N, D = x_ref.shape
        dh = D // num_heads
        scale = dh ** -0.5

        @pl.when(l == 0)
        def _():
            x0 = x_ref[...].astype(jnp.float32)
            if add_pos:
                x0 = x0 + pos_ref[...]          # [B,N,D] + [1,N,D]
            res_ref[...] = x0

        # Static unroll over the (small) batch so every matmul stays a plain 2-D MXU dot and
        # the per-layer weight tiles are reused for all batch elements within this grid step.
        for b in range(B):
            x = res_ref[b]                      # [N, D] f32 residual stream

            # ---- attention (pre-split Q/K/V weights; per-head projection-accumulate) ----
            h = _ln(x, n1w[0], n1b[0], eps).astype(jnp.bfloat16)
            q = jnp.dot(h, qw[0], preferred_element_type=jnp.float32) + qb[0]
            k = jnp.dot(h, kw[0], preferred_element_type=jnp.float32) + kb[0]
            v = jnp.dot(h, vw[0], preferred_element_type=jnp.float32) + vb[0]
            for hi in range(num_heads):         # unrolled; static slices per head
                sl = slice(hi * dh, (hi + 1) * dh)
                qh = (q[:, sl] * scale).astype(jnp.bfloat16)   # scale folded into Q
                kh = k[:, sl].astype(jnp.bfloat16)
                vh = v[:, sl].astype(jnp.bfloat16)
                s = jax.lax.dot_general(qh, kh, (((1,), (1,)), ((), ())),
                                        preferred_element_type=jnp.float32)   # [N, N]
                s = s - jnp.max(s, axis=-1, keepdims=True)
                pattn = jnp.exp(s)
                pattn = pattn / jnp.sum(pattn, axis=-1, keepdims=True)        # exact softmax
                oh = jnp.dot(pattn.astype(jnp.bfloat16), vh,
                             preferred_element_type=jnp.float32)              # [N, dh]
                # accumulate projection per head (sublane-row slice of proj_w; no lane concat)
                x = x + jnp.dot(oh.astype(jnp.bfloat16), pw[0][sl, :],
                                preferred_element_type=jnp.float32)
            x = x + pb[0]

            # ---- MLP ----
            h2 = _ln(x, n2w[0], n2b[0], eps).astype(jnp.bfloat16)
            h2 = jnp.dot(h2, f1w[0], preferred_element_type=jnp.float32) + f1b[0]
            # TODO(synk): timm nn.GELU is the exact erf form; tanh approximation used here.
            h2 = jax.nn.gelu(h2, approximate=True)
            x = x + jnp.dot(h2.astype(jnp.bfloat16), f2w[0],
                            preferred_element_type=jnp.float32) + f2b[0]

            res_ref[b] = x

        # ---- fused final LayerNorm + head, written once at the last depth step ----
        @pl.when(l == pl.num_programs(0) - 1)
        def _():
            for b in range(B):
                hfin = _ln(res_ref[b], fnw[...], fnb[...], eps).astype(jnp.bfloat16)
                o_ref[b] = (jnp.dot(hfin, hw[...], preferred_element_type=jnp.float32)
                            + hb[...]).astype(o_ref.dtype)

    return kernel


# ----------------------------------------------------------------------------
# Pallas wrappers
# ----------------------------------------------------------------------------
def pallas_patch_embed(patches, w, b, pos):
    """patches [B, P, C*p*p] -> tokens [B, P, E], pos-embed add fused; grid over batch."""
    B, P, K = patches.shape
    E = w.shape[1]
    return pl.pallas_call(
        _patch_embed_kernel,
        out_shape=jax.ShapeDtypeStruct((B, P, E), jnp.float32),
        grid=(B,),
        in_specs=[pl.BlockSpec((1, P, K), lambda i: (i, 0, 0)),
                  pl.BlockSpec((K, E), lambda i: (0, 0)),      # weight resident across grid
                  pl.BlockSpec((1, E), lambda i: (0, 0)),
                  pl.BlockSpec((1, P, E), lambda i: (0, 0, 0))],
        out_specs=pl.BlockSpec((1, P, E), lambda i: (i, 0, 0)),
        compiler_params=pltpu.CompilerParams(dimension_semantics=("parallel",)),
    )(patches, w, b, pos)


def stacked_transformer(x, blocks, num_heads, head_nw, head_nb, head_w, head_b,
                        pos=None, out_dtype=jnp.float32, eps=1e-5):
    """All transformer blocks + fused final-LN/head in one pallas_call; grid=(depth,)."""
    B, N, D = x.shape
    L = blocks['q_w'].shape[0]
    Hd = blocks['fc1_w'].shape[-1]
    Nout = head_w.shape[-1]
    add_pos = pos is not None

    def wspec(shape):                      # per-layer weights, depth-indexed (prefetch l+1)
        return pl.BlockSpec((1,) + shape, lambda l: (l, 0, 0))

    def hspec(shape):                      # head / final-norm weights, resident across grid
        return pl.BlockSpec(shape, lambda l: tuple(0 for _ in shape))

    in_specs = [pl.BlockSpec((B, N, D), lambda l: (0, 0, 0))]
    args = [x]
    if add_pos:
        in_specs.append(pl.BlockSpec((1, N, D), lambda l: (0, 0, 0)))
        args.append(pos)
    in_specs += [
        wspec((1, D)), wspec((1, D)),                 # norm1
        wspec((D, D)), wspec((1, D)),                 # q
        wspec((D, D)), wspec((1, D)),                 # k
        wspec((D, D)), wspec((1, D)),                 # v
        wspec((D, D)), wspec((1, D)),                 # proj
        wspec((1, D)), wspec((1, D)),                 # norm2
        wspec((D, Hd)), wspec((1, Hd)),               # fc1
        wspec((Hd, D)), wspec((1, D)),                # fc2
        hspec((1, D)), hspec((1, D)),                 # final norm
        hspec((D, Nout)), hspec((1, Nout)),           # head
    ]
    args += [blocks['norm1_w'], blocks['norm1_b'],
             blocks['q_w'], blocks['q_b'],
             blocks['k_w'], blocks['k_b'],
             blocks['v_w'], blocks['v_b'],
             blocks['proj_w'], blocks['proj_b'],
             blocks['norm2_w'], blocks['norm2_b'],
             blocks['fc1_w'], blocks['fc1_b'],
             blocks['fc2_w'], blocks['fc2_b'],
             head_nw, head_nb, head_w, head_b]

    return pl.pallas_call(
        _make_stacked_kernel(num_heads, eps, add_pos),
        out_shape=jax.ShapeDtypeStruct((B, N, Nout), out_dtype),
        grid=(L,),
        in_specs=in_specs,
        out_specs=pl.BlockSpec((B, N, Nout), lambda l: (0, 0, 0)),
        scratch_shapes=[pltpu.VMEM((B, N, D), jnp.float32)],    # residual stream across depth
        compiler_params=pltpu.CompilerParams(
            dimension_semantics=("arbitrary",),
            vmem_limit_bytes=48 * 1024 * 1024),
    )(*args)


# ----------------------------------------------------------------------------
# Patch helpers / region labels (host-side glue, outside the jitted forward)
# ----------------------------------------------------------------------------
def extract_patches_conv_order(imgs, p):
    # PatchEmbed Conv2d(stride=patch) equivalent: [B,C,H,W] -> [B, h*w, C*p*p]
    B, C, H, W = imgs.shape
    h = w = H // p
    x = imgs.reshape(B, C, h, p, w, p)
    x = jnp.transpose(x, (0, 2, 4, 1, 3, 5))     # n h w c p q
    return x.reshape(B, h * w, C * p * p)


def regional_labels_np(x_mask_np, p):
    # matches RegionMAE.regional_labels (patchify + per-patch mean threshold), pure numpy
    B, C, H, W = x_mask_np.shape
    h = w = H // p
    xm = x_mask_np.reshape(B, C, h, p, w, p)
    xm = np.einsum('nchpwq->nhwpqc', xm).reshape(B, h * w, p * p * C)
    ratio = xm.sum(-1) / xm.shape[-1]
    labels = np.where(ratio > 0.5, 1, np.where((ratio < 0.5) & (ratio > 0.01), 2, 3))
    return labels.astype(np.int32)                # [B, L]


def mask_specific_region_host(labels_np, num_tokens, region):
    # TODO(synk): the PyTorch gather uses an index tensor with batch dim 1 (so it would only
    # slice batch 0); since ids_keep is batch-independent we apply the same keep-set to every
    # batch element instead.
    region_to_mask = {'tumor': 1, 'boundary': 2, 'parenchyma': 3}
    rv = region_to_mask[region]
    Bm, Lm = labels_np.shape
    ids_region = [l for b in range(Bm) for l in range(Lm) if labels_np[b, l] == rv]
    masked_set = set(ids_region)
    ids_keep = [t for t in range(num_tokens) if t not in masked_set]
    mask = np.ones((Bm, num_tokens), np.float32)
    if ids_region:
        mask[:, ids_region] = 0.0
    return ids_keep, mask


def build_ids_restore(ids_keep, P):
    # TODO(synk): the PyTorch module returns 1-D ids_keep which crashes inside MAEDecoder
    # (ids.shape[1]); we construct the standard MAE "ids_restore" [P] permutation consistent
    # with the decoder's gather semantics instead.
    K = len(ids_keep)
    rank = {t: r for r, t in enumerate(ids_keep)}
    restore, cnt = [], 0
    for j in range(P):
        t = j + 1
        if t in rank and rank[t] > 0:
            restore.append(rank[t] - 1)
        else:
            restore.append(K - 1 + cnt)
            cnt += 1
    return np.asarray(restore, np.int32)


# ----------------------------------------------------------------------------
# Parameter init (deterministic, synthetic); MXU weights stored in bf16
# ----------------------------------------------------------------------------
def xavier(key, fan_in, fan_out):
    a = math.sqrt(6.0 / (fan_in + fan_out))
    return jax.random.uniform(key, (fan_in, fan_out), jnp.float32, -a, a)


def init_stacked_blocks(key, depth, dim, mlp_ratio=4.0):
    hidden = int(dim * mlp_ratio)
    keys = jax.random.split(key, depth)
    qw, kw, vw, pw, f1, f2 = [], [], [], [], [], []
    for kk in keys:
        ks = jax.random.split(kk, 4)
        qkv = xavier(ks[0], dim, 3 * dim)          # joint xavier (matches nn.Linear(dim, 3*dim))
        qw.append(qkv[:, :dim])
        kw.append(qkv[:, dim:2 * dim])
        vw.append(qkv[:, 2 * dim:])
        pw.append(xavier(ks[1], dim, dim))
        f1.append(xavier(ks[2], dim, hidden))
        f2.append(xavier(ks[3], hidden, dim))
    L = depth
    z = lambda c: jnp.zeros((L, 1, c), jnp.float32)
    o = lambda c: jnp.ones((L, 1, c), jnp.float32)
    bf = lambda lst: jnp.stack(lst).astype(jnp.bfloat16)
    return dict(
        norm1_w=o(dim), norm1_b=z(dim),
        q_w=bf(qw), q_b=z(dim),
        k_w=bf(kw), k_b=z(dim),
        v_w=bf(vw), v_b=z(dim),
        proj_w=bf(pw), proj_b=z(dim),
        norm2_w=o(dim), norm2_b=z(dim),
        fc1_w=bf(f1), fc1_b=z(hidden),
        fc2_w=bf(f2), fc2_b=z(dim),
    )


def init_params(key, cfg):
    p = cfg['patch_size']
    P = cfg['num_patches']
    E = cfg['embed_dim']
    dd = cfg['decoder_dim']
    gs = int(P ** 0.5)
    keys = jax.random.split(key, 8)
    return dict(
        patch_w=xavier(keys[0], cfg['chn_in'] * p * p, E).astype(jnp.bfloat16),
        patch_b=jnp.zeros((1, E), jnp.float32),
        cls_token=0.02 * jax.random.normal(keys[1], (1, 1, E), jnp.float32),
        pos_embed=jnp.asarray(get_2d_sincos_pos_embed(E, gs, cls_token=True), jnp.float32)[None],
        enc_blocks=init_stacked_blocks(keys[2], cfg['enc_depth'], E),
        enc_norm_w=jnp.ones((1, E), jnp.float32), enc_norm_b=jnp.zeros((1, E), jnp.float32),
        dec_embed_w=xavier(keys[3], E, dd).astype(jnp.bfloat16),
        dec_embed_b=jnp.zeros((1, dd), jnp.float32),
        mask_token=0.02 * jax.random.normal(keys[4], (1, 1, dd), jnp.float32),
        dec_pos_embed=jnp.asarray(get_2d_sincos_pos_embed(dd, gs, cls_token=True), jnp.float32)[None],
        dec_blocks=init_stacked_blocks(keys[5], cfg['dec_depth'], dd),
        dec_norm_w=jnp.ones((1, dd), jnp.float32), dec_norm_b=jnp.zeros((1, dd), jnp.float32),
        dec_pred_w=xavier(keys[6], dd, p * p * 1).astype(jnp.bfloat16),
        dec_pred_b=jnp.zeros((1, p * p), jnp.float32),
    )


# ----------------------------------------------------------------------------
# Jitted device forward (masking indices precomputed on host)
# ----------------------------------------------------------------------------
def region_mae_apply(params, x, ids_keep, ids_restore, cfg):
    B, C, H, W = x.shape
    p = cfg['patch_size']
    P = cfg['num_patches']
    E = cfg['embed_dim']
    dd = cfg['decoder_dim']

    # patch embedding (Conv2d stride=patch == patch-extract + matmul) with fused pos add
    patches = extract_patches_conv_order(x, p)                                    # [B, P, C*p*p]
    tok = pallas_patch_embed(patches, params['patch_w'], params['patch_b'],
                             params['pos_embed'][:, 1:, :])                       # [B, P, E]
    cls_tok = params['cls_token'] + params['pos_embed'][:, :1, :]
    xseq = jnp.concatenate([jnp.broadcast_to(cls_tok, (B, 1, E)), tok], axis=1)   # [B, P+1, E]

    # region-specific keep gather (indices are device args with static shape, no host sync)
    # TODO(synk): RegionMAE.random_mask (region=None path) is undefined in the source; only
    # the region path is implemented.
    masked = jnp.take(xseq, ids_keep, axis=1)                                     # [B, K, E]
    K = masked.shape[1]

    # encoder blocks + fused encoder-final-LayerNorm + decoder_embed; bf16 handoff
    xdec = stacked_transformer(
        masked, params['enc_blocks'], cfg['enc_heads'],
        head_nw=params['enc_norm_w'], head_nb=params['enc_norm_b'],
        head_w=params['dec_embed_w'], head_b=params['dec_embed_b'],
        pos=None, out_dtype=jnp.bfloat16)                                         # [B, K, dd]

    # MAE decoder token un-shuffle (same ids per batch, see TODO above)
    n_mask = P + 1 - K
    mask_tokens = jnp.broadcast_to(params['mask_token'].astype(jnp.bfloat16), (B, n_mask, dd))
    x_ = jnp.concatenate([xdec[:, 1:, :], mask_tokens], axis=1)                   # [B, P, dd]
    x_ = jnp.take(x_, ids_restore, axis=1)
    xd = jnp.concatenate([xdec[:, :1, :], x_], axis=1)                            # [B, P+1, dd]

    # decoder blocks (dec_pos_embed add fused at depth 0) + fused final-LN + prediction head
    pred_full = stacked_transformer(
        xd, params['dec_blocks'], cfg['dec_heads'],
        head_nw=params['dec_norm_w'], head_nb=params['dec_norm_b'],
        head_w=params['dec_pred_w'], head_b=params['dec_pred_b'],
        pos=params['dec_pos_embed'], out_dtype=jnp.float32)                       # [B, P+1, p*p]
    pred = pred_full[:, 1:, :]
    return masked, pred


# ----------------------------------------------------------------------------
if __name__ == "__main__":
    cfg = dict(patch_size=4, inputsize=16, chn_in=1,
               embed_dim=32, enc_heads=4, enc_depth=2,
               decoder_dim=32, dec_heads=4, dec_depth=2,
               region='tumor')
    cfg['num_patches'] = (cfg['inputsize'] // cfg['patch_size']) ** 2

    key = jax.random.PRNGKey(0)
    k_param, k_x, k_m = jax.random.split(key, 3)
    params = init_params(k_param, cfg)

    B = 2
    x = jax.random.normal(k_x, (B, cfg['chn_in'], cfg['inputsize'], cfg['inputsize']), jnp.float32)
    x_mask = (jax.random.uniform(k_m, (B, cfg['chn_in'], cfg['inputsize'], cfg['inputsize']))
              > 0.6).astype(jnp.float32)

    # ---- host-side masking bookkeeping (once, OUTSIDE the jitted forward) ----
    labels = regional_labels_np(np.asarray(x_mask), cfg['patch_size'])
    ids_keep, mask_np = mask_specific_region_host(labels, cfg['num_patches'] + 1, cfg['region'])
    ids_restore = build_ids_restore(ids_keep, cfg['num_patches'])

    fwd = jax.jit(lambda prm, xx, ik, ir: region_mae_apply(prm, xx, ik, ir, cfg))
    img, pred = fwd(params, x,
                    jnp.asarray(ids_keep, jnp.int32),
                    jnp.asarray(ids_restore, jnp.int32))
    out = {'img': img, 'mask': jnp.asarray(mask_np), 'pred': pred}

    jax.block_until_ready(out['pred'])
    jax.block_until_ready(out['img'])
    jax.block_until_ready(out['mask'])

    assert out['pred'].shape == (B, cfg['num_patches'], cfg['patch_size'] ** 2)
    assert out['mask'].shape == (B, cfg['num_patches'] + 1)
    assert out['img'].shape[0] == B and out['img'].shape[2] == cfg['embed_dim']
    print("KERNEL_OK")
</pallas_src>

<mosaic_0001>
module attributes {stable_mosaic.version = 11 : i64} {
  func.func @_patch_embed_kernel(%arg0: i32, %arg1: memref<1x16x16xf32, #tpu.memory_space<vmem>>, %arg2: memref<16x32xbf16, #tpu.memory_space<vmem>>, %arg3: memref<1x32xf32, #tpu.memory_space<vmem>>, %arg4: memref<1x16x32xf32, #tpu.memory_space<vmem>>, %arg5: memref<1x16x32xf32, #tpu.memory_space<vmem>>) attributes {dimension_semantics = [#tpu.dimension_semantics<parallel>], iteration_bounds = array<i64: 2>, scalar_prefetch = 0 : i64, scratch_operands = 0 : i64, tpu.core_type = #tpu.core_type<tc>, window_params = [{transform_indices = @transform_0, window_bounds = array<i64: 1, 16, 16>}, {pipeline_mode = #tpu.pipeline_mode<synchronous>, transform_indices = @transform_1, window_bounds = array<i64: 16, 32>}, {pipeline_mode = #tpu.pipeline_mode<synchronous>, transform_indices = @transform_2, window_bounds = array<i64: 1, 32>}, {pipeline_mode = #tpu.pipeline_mode<synchronous>, transform_indices = @transform_3, window_bounds = array<i64: 1, 16, 32>}, {transform_indices = @transform_4, window_bounds = array<i64: 1, 16, 32>}]} {
    %c0 = arith.constant 0 : index
    %c0_0 = arith.constant 0 : index
    %c0_1 = arith.constant 0 : index
    %0 = vector.load %arg1[%c0, %c0_0, %c0_1] : memref<1x16x16xf32, #tpu.memory_space<vmem>>, vector<1x16x16xf32>
    %1 = vector.shape_cast %0 : vector<1x16x16xf32> to vector<16x16xf32>
    %2 = arith.truncf %1 : vector<16x16xf32> to vector<16x16xbf16>
    %c0_2 = arith.constant 0 : index
    %c0_3 = arith.constant 0 : index
    %3 = vector.load %arg2[%c0_2, %c0_3] : memref<16x32xbf16, #tpu.memory_space<vmem>>, vector<16x32xbf16>
    %cst = arith.constant dense<0.000000e+00> : vector<16x32xf32>
    %4 = tpu.matmul %2, %3, %cst {dimension_numbers = #tpu.dot_dimension_numbers<[1], [0], [0], [1], [0, 0, 1, 1], [], []>} : vector<16x16xbf16>, vector<16x32xbf16>, vector<16x32xf32> -> vector<16x32xf32>
    %c0_4 = arith.constant 0 : index
    %c0_5 = arith.constant 0 : index
    %5 = vector.load %arg3[%c0_4, %c0_5] : memref<1x32xf32, #tpu.memory_space<vmem>>, vector<1x32xf32>
    %6 = vector.broadcast %5 : vector<1x32xf32> to vector<16x32xf32>
    %7 = arith.addf %4, %6 : vector<16x32xf32>
    %c0_6 = arith.constant 0 : index
    %c0_7 = arith.constant 0 : index
    %c0_8 = arith.constant 0 : index
    %8 = vector.load %arg4[%c0_6, %c0_7, %c0_8] : memref<1x16x32xf32, #tpu.memory_space<vmem>>, vector<1x16x32xf32>
    %9 = vector.shape_cast %8 : vector<1x16x32xf32> to vector<16x32xf32>
    %10 = arith.addf %7, %9 : vector<16x32xf32>
    %c0_9 = arith.constant 0 : index
    %c0_10 = arith.constant 0 : index
    %c0_11 = arith.constant 0 : index
    %11 = vector.load %arg5[%c0_9, %c0_10, %c0_11] : memref<1x16x32xf32, #tpu.memory_space<vmem>>, vector<1x16x32xf32>
    %12 = vector.shape_cast %11 : vector<1x16x32xf32> to vector<16x32xf32>
    %13 = vector.shape_cast %10 : vector<16x32xf32> to vector<1x16x32xf32>
    tpu.vector_store %arg5[%c0_9, %c0_10, %c0_11], %13 {strides = array<i32>} : memref<1x16x32xf32, #tpu.memory_space<vmem>>, vector<1x16x32xf32>,
    return
  }
  func.func @transform_0(%arg0: i32) -> (i32, i32, i32) {
    %c0_i32 = arith.constant 0 : i32
    %c0_i32_0 = arith.constant 0 : i32
    %c0_i32_1 = arith.constant 0 : i32
    return %arg0, %c0_i32, %c0_i32_0 : i32, i32, i32
  }
  func.func @transform_1(%arg0: i32) -> (i32, i32) {
    %c0_i32 = arith.constant 0 : i32
    %c0_i32_0 = arith.constant 0 : i32
    %c0_i32_1 = arith.constant 0 : i32
    return %c0_i32, %c0_i32_0 : i32, i32
  }
  func.func @transform_2(%arg0: i32) -> (i32, i32) {
    %c0_i32 = arith.constant 0 : i32
    %c0_i32_0 = arith.constant 0 : i32
    %c0_i32_1 = arith.constant 0 : i32
    return %c0_i32, %c0_i32_0 : i32, i32
  }
  func.func @transform_3(%arg0: i32) -> (i32, i32, i32) {
    %c0_i32 = arith.constant 0 : i32
    %c0_i32_0 = arith.constant 0 : i32
    %c0_i32_1 = arith.constant 0 : i32
    %c0_i32_2 = arith.constant 0 : i32
    return %c0_i32, %c0_i32_0, %c0_i32_1 : i32, i32, i32
  }
  func.func @transform_4(%arg0: i32) -> (i32, i32, i32) {
    %c0_i32 = arith.constant 0 : i32
    %c0_i32_0 = arith.constant 0 : i32
    %c0_i32_1 = arith.constant 0 : i32
    return %arg0, %c0_i32, %c0_i32_0 : i32, i32, i32
  }
}

module attributes {stable_mosaic.version = 11 : i64} {
  func.func @kernel(%arg0: i32, %arg1: memref<2x13x32xf32, #tpu.memory_space<vmem>>, %arg2: memref<1x1x32xf32, #tpu.memory_space<vmem>>, %arg3: memref<1x1x32xf32, #tpu.memory_space<vmem>>, %arg4: memref<1x32x32xbf16, #tpu.memory_space<vmem>>, %arg5: memref<1x1x32xf32, #tpu.memory_space<vmem>>, %arg6: memref<1x32x32xbf16, #tpu.memory_space<vmem>>, %arg7: memref<1x1x32xf32, #tpu.memory_space<vmem>>, %arg8: memref<1x32x32xbf16, #tpu.memory_space<vmem>>, %arg9: memref<1x1x32xf32, #tpu.memory_space<vmem>>, %arg10: memref<1x32x32xbf16, #tpu.memory_space<vmem>>, %arg11: memref<1x1x32xf32, #tpu.memory_space<vmem>>, %arg12: memref<1x1x32xf32, #tpu.memory_space<vmem>>, %arg13: memref<1x1x32xf32, #tpu.memory_space<vmem>>, %arg14: memref<1x32x128xbf16, #tpu.memory_space<vmem>>, %arg15: memref<1x1x128xf32, #tpu.memory_space<vmem>>, %arg16: memref<1x128x32xbf16, #tpu.memory_space<vmem>>, %arg17: memref<1x1x32xf32, #tpu.memory_space<vmem>>, %arg18: memref<1x32xf32, #tpu.memory_space<vmem>>, %arg19: memref<1x32xf32, #tpu.memory_space<vmem>>, %arg20: memref<32x32xbf16, #tpu.memory_space<vmem>>, %arg21: memref<1x32xf32, #tpu.memory_space<vmem>>, %arg22: memref<2x13x32xbf16, #tpu.memory_space<vmem>>, %arg23: memref<2x13x32xf32, #tpu.memory_space<vmem>>) attributes {dimension_semantics = [#tpu.dimension_semantics<arbitrary>], iteration_bounds = array<i64: 2>, scalar_prefetch = 0 : i64, scratch_operands = 1 : i64, tpu.core_type = #tpu.core_type<tc>, window_params = [{pipeline_mode = #tpu.pipeline_mode<synchronous>, transform_indices = @transform_0, window_bounds = array<i64: 2, 13, 32>}, {transform_indices = @transform_1, window_bounds = array<i64: 1, 1, 32>}, {transform_indices = @transform_2, window_bounds = array<i64: 1, 1, 32>}, {transform_indices = @transform_3, window_bounds = array<i64: 1, 32, 32>}, {transform_indices = @transform_4, window_bounds = array<i64: 1, 1, 32>}, {transform_indices = @transform_5, window_bounds = array<i64: 1, 32, 32>}, {transform_indices = @transform_6, window_bounds = array<i64: 1, 1, 32>}, {transform_indices = @transform_7, window_bounds = array<i64: 1, 32, 32>}, {transform_indices = @transform_8, window_bounds = array<i64: 1, 1, 32>}, {transform_indices = @transform_9, window_bounds = array<i64: 1, 32, 32>}, {transform_indices = @transform_10, window_bounds = array<i64: 1, 1, 32>}, {transform_indices = @transform_11, window_bounds = array<i64: 1, 1, 32>}, {transform_indices = @transform_12, window_bounds = array<i64: 1, 1, 32>}, {transform_indices = @transform_13, window_bounds = array<i64: 1, 32, 128>}, {transform_indices = @transform_14, window_bounds = array<i64: 1, 1, 128>}, {transform_indices = @transform_15, window_bounds = array<i64: 1, 128, 32>}, {transform_indices = @transform_16, window_bounds = array<i64: 1, 1, 32>}, {pipeline_mode = #tpu.pipeline_mode<synchronous>, transform_indices = @transform_17, window_bounds = array<i64: 1, 32>}, {pipeline_mode = #tpu.pipeline_mode<synchronous>, transform_indices = @transform_18, window_bounds = array<i64: 1, 32>}, {pipeline_mode = #tpu.pipeline_mode<synchronous>, transform_indices = @transform_19, window_bounds = array<i64: 32, 32>}, {pipeline_mode = #tpu.pipeline_mode<synchronous>, transform_indices = @transform_20, window_bounds = array<i64: 1, 32>}, {pipeline_mode = #tpu.pipeline_mode<synchronous>, transform_indices = @transform_21, window_bounds = array<i64: 2, 13, 32>}]} {
    %c0_i32 = arith.constant 0 : i32
    %0 = arith.cmpi eq, %arg0, %c0_i32 : i32
    %1 = arith.extui %0 : i1 to i32
    %c0_i32_0 = arith.constant 0 : i32
    %2 = arith.cmpi ne, %1, %c0_i32_0 : i32
    scf.if %2 {
      %c0_211 = arith.constant 0 : index
      %c0_212 = arith.constant 0 : index
      %c0_213 = arith.constant 0 : index
      %432 = vector.load %arg1[%c0_211, %c0_212, %c0_213] : memref<2x13x32xf32, #tpu.memory_space<vmem>>, vector<2x13x32xf32>
      %c0_214 = arith.constant 0 : index
      %c0_215 = arith.constant 0 : index
      %c0_216 = arith.constant 0 : index
      %433 = vector.load %arg23[%c0_214, %c0_215, %c0_216] : memref<2x13x32xf32, #tpu.memory_space<vmem>>, vector<2x13x32xf32>
      tpu.vector_store %arg23[%c0_214, %c0_215, %c0_216], %432 {strides = array<i32>} : memref<2x13x32xf32, #tpu.memory_space<vmem>>, vector<2x13x32xf32>,
    } else {
    }
    %c0 = arith.constant 0 : index
    %c0_1 = arith.constant 0 : index
    %c0_2 = arith.constant 0 : index
    %3 = vector.load %arg23[%c0, %c0_1, %c0_2] : memref<2x13x32xf32, #tpu.memory_space<vmem>>, vector<1x13x32xf32>
    %4 = vector.shape_cast %3 : vector<1x13x32xf32> to vector<13x32xf32>
    %c0_3 = arith.constant 0 : index
    %c0_4 = arith.constant 0 : index
    %c0_5 = arith.constant 0 : index
    %5 = vector.load %arg2[%c0_3, %c0_4, %c0_5] : memref<1x1x32xf32, #tpu.memory_space<vmem>>, vector<1x1x32xf32>
    %6 = vector.shape_cast %5 : vector<1x1x32xf32> to vector<1x32xf32>
    %c0_6 = arith.constant 0 : index
    %c0_7 = arith.constant 0 : index
    %c0_8 = arith.constant 0 : index
    %7 = vector.load %arg3[%c0_6, %c0_7, %c0_8] : memref<1x1x32xf32, #tpu.memory_space<vmem>>, vector<1x1x32xf32>
    %8 = vector.shape_cast %7 : vector<1x1x32xf32> to vector<1x32xf32>
    %cst = arith.constant dense<0.000000e+00> : vector<13xf32>
    %9 = vector.multi_reduction <add>, %4, %cst [1] : vector<13x32xf32> to vector<13xf32>
    %10 = vector.shape_cast %9 : vector<13xf32> to vector<13x1xf32>
    %cst_9 = arith.constant 3.200000e+01 : f32
    %11 = vector.broadcast %cst_9 : f32 to vector<13x1xf32>
    %12 = arith.divf %10, %11 : vector<13x1xf32>
    %13 = vector.broadcast %12 : vector<13x1xf32> to vector<13x32xf32>
    %14 = arith.subf %4, %13 : vector<13x32xf32>
    %15 = arith.mulf %14, %14 : vector<13x32xf32>
    %cst_10 = arith.constant dense<0.000000e+00> : vector<13xf32>
    %16 = vector.multi_reduction <add>, %15, %cst_10 [1] : vector<13x32xf32> to vector<13xf32>
    %17 = vector.shape_cast %16 : vector<13xf32> to vector<13x1xf32>
    %cst_11 = arith.constant 3.200000e+01 : f32
    %18 = vector.broadcast %cst_11 : f32 to vector<13x1xf32>
    %19 = arith.divf %17, %18 : vector<13x1xf32>
    %cst_12 = arith.constant 9.99999974E-6 : f32
    %20 = vector.broadcast %cst_12 : f32 to vector<13x1xf32>
    %21 = arith.addf %19, %20 : vector<13x1xf32>
    %22 = math.rsqrt %21 : vector<13x1xf32>
    %23 = vector.broadcast %22 : vector<13x1xf32> to vector<13x32xf32>
    %24 = arith.mulf %14, %23 : vector<13x32xf32>
    %25 = vector.broadcast %6 : vector<1x32xf32> to vector<13x32xf32>
    %26 = arith.mulf %24, %25 : vector<13x32xf32>
    %27 = vector.broadcast %8 : vector<1x32xf32> to vector<13x32xf32>
    %28 = arith.addf %26, %27 : vector<13x32xf32>
    %29 = arith.truncf %28 : vector<13x32xf32> to vector<13x32xbf16>
    %c0_13 = arith.constant 0 : index
    %c0_14 = arith.constant 0 : index
    %c0_15 = arith.constant 0 : index
    %30 = vector.load %arg4[%c0_13, %c0_14, %c0_15] : memref<1x32x32xbf16, #tpu.memory_space<vmem>>, vector<1x32x32xbf16>
    %31 = vector.shape_cast %30 : vector<1x32x32xbf16> to vector<32x32xbf16>
    %cst_16 = arith.constant dense<0.000000e+00> : vector<13x32xf32>
    %32 = tpu.matmul %29, %31, %cst_16 {dimension_numbers = #tpu.dot_dimension_numbers<[1], [0], [0], [1], [0, 0, 1, 1], [], []>} : vector<13x32xbf16>, vector<32x32xbf16>, vector<13x32xf32> -> vector<13x32xf32>
    %c0_17 = arith.constant 0 : index
    %c0_18 = arith.constant 0 : index
    %c0_19 = arith.constant 0 : index
    %33 = vector.load %arg5[%c0_17, %c0_18, %c0_19] : memref<1x1x32xf32, #tpu.memory_space<vmem>>, vector<1x1x32xf32>
    %34 = vector.shape_cast %33 : vector<1x1x32xf32> to vector<1x32xf32>
    %35 = vector.broadcast %34 : vector<1x32xf32> to vector<13x32xf32>
    %36 = arith.addf %32, %35 : vector<13x32xf32>
    %c0_20 = arith.constant 0 : index
    %c0_21 = arith.constant 0 : index
    %c0_22 = arith.constant 0 : index
    %37 = vector.load %arg6[%c0_20, %c0_21, %c0_22] : memref<1x32x32xbf16, #tpu.memory_space<vmem>>, vector<1x32x32xbf16>
    %38 = vector.shape_cast %37 : vector<1x32x32xbf16> to vector<32x32xbf16>
    %cst_23 = arith.constant dense<0.000000e+00> : vector<13x32xf32>
    %39 = tpu.matmul %29, %38, %cst_23 {dimension_numbers = #tpu.dot_dimension_numbers<[1], [0], [0], [1], [0, 0, 1, 1], [], []>} : vector<13x32xbf16>, vector<32x32xbf16>, vector<13x32xf32> -> vector<13x32xf32>
    %c0_24 = arith.constant 0 : index
    %c0_25 = arith.constant 0 : index
    %c0_26 = arith.constant 0 : index
    %40 = vector.load %arg7[%c0_24, %c0_25, %c0_26] : memref<1x1x32xf32, #tpu.memory_space<vmem>>, vector<1x1x32xf32>
    %41 = vector.shape_cast %40 : vector<1x1x32xf32> to vector<1x32xf32>
    %42 = vector.broadcast %41 : vector<1x32xf32> to vector<13x32xf32>
    %43 = arith.addf %39, %42 : vector<13x32xf32>
    %c0_27 = arith.constant 0 : index
    %c0_28 = arith.constant 0 : index
    %c0_29 = arith.constant 0 : index
    %44 = vector.load %arg8[%c0_27, %c0_28, %c0_29] : memref<1x32x32xbf16, #tpu.memory_space<vmem>>, vector<1x32x32xbf16>
    %45 = vector.shape_cast %44 : vector<1x32x32xbf16> to vector<32x32xbf16>
    %cst_30 = arith.constant dense<0.000000e+00> : vector<13x32xf32>
    %46 = tpu.matmul %29, %45, %cst_30 {dimension_numbers = #tpu.dot_dimension_numbers<[1], [0], [0], [1], [0, 0, 1, 1], [], []>} : vector<13x32xbf16>, vector<32x32xbf16>, vector<13x32xf32> -> vector<13x32xf32>
    %c0_31 = arith.constant 0 : index
    %c0_32 = arith.constant 0 : index
    %c0_33 = arith.constant 0 : index
    %47 = vector.load %arg9[%c0_31, %c0_32, %c0_33] : memref<1x1x32xf32, #tpu.memory_space<vmem>>, vector<1x1x32xf32>
    %48 = vector.shape_cast %47 : vector<1x1x32xf32> to vector<1x32xf32>
    %49 = vector.broadcast %48 : vector<1x32xf32> to vector<13x32xf32>
    %50 = arith.addf %46, %49 : vector<13x32xf32>
    %51 = vector.extract_strided_slice %36 {offsets = [0, 0], sizes = [13, 8], strides = [1, 1]} : vector<13x32xf32> to vector<13x8xf32>
    %cst_34 = arith.constant 0.353553385 : f32
    %52 = vector.broadcast %cst_34 : f32 to vector<13x8xf32>
    %53 = arith.mulf %51, %52 : vector<13x8xf32>
    %54 = arith.truncf %53 : vector<13x8xf32> to vector<13x8xbf16>
    %55 = vector.extract_strided_slice %43 {offsets = [0, 0], sizes = [13, 8], strides = [1, 1]} : vector<13x32xf32> to vector<13x8xf32>
    %56 = arith.truncf %55 : vector<13x8xf32> to vector<13x8xbf16>
    %57 = vector.extract_strided_slice %50 {offsets = [0, 0], sizes = [13, 8], strides = [1, 1]} : vector<13x32xf32> to vector<13x8xf32>
    %58 = arith.truncf %57 : vector<13x8xf32> to vector<13x8xbf16>
    %cst_35 = arith.constant dense<0.000000e+00> : vector<13x13xf32>
    %59 = tpu.matmul %54, %56, %cst_35 {dimension_numbers = #tpu.dot_dimension_numbers<[1], [1], [0], [0], [0, 0, 1, 0], [], []>} : vector<13x8xbf16>, vector<13x8xbf16>, vector<13x13xf32> -> vector<13x13xf32>
    %cst_36 = arith.constant dense<0xFF800000> : vector<13xf32>
    %60 = vector.multi_reduction <maximumf>, %59, %cst_36 [1] : vector<13x13xf32> to vector<13xf32>
    %61 = vector.shape_cast %60 : vector<13xf32> to vector<13x1xf32>
    %62 = vector.broadcast %61 : vector<13x1xf32> to vector<13x13xf32>
    %63 = arith.subf %59, %62 : vector<13x13xf32>
    %64 = math.exp %63 : vector<13x13xf32>
    %cst_37 = arith.constant dense<0.000000e+00> : vector<13xf32>
    %65 = vector.multi_reduction <add>, %64, %cst_37 [1] : vector<13x13xf32> to vector<13xf32>
    %66 = vector.shape_cast %65 : vector<13xf32> to vector<13x1xf32>
    %67 = vector.broadcast %66 : vector<13x1xf32> to vector<13x13xf32>
    %68 = arith.divf %64, %67 : vector<13x13xf32>
    %69 = arith.truncf %68 : vector<13x13xf32> to vector<13x13xbf16>
    %cst_38 = arith.constant dense<0.000000e+00> : vector<13x8xf32>
    %70 = tpu.matmul %69, %58, %cst_38 {dimension_numbers = #tpu.dot_dimension_numbers<[1], [0], [0], [1], [0, 0, 1, 1], [], []>} : vector<13x13xbf16>, vector<13x8xbf16>, vector<13x8xf32> -> vector<13x8xf32>
    %71 = arith.truncf %70 : vector<13x8xf32> to vector<13x8xbf16>
    %c0_39 = arith.constant 0 : index
    %c0_40 = arith.constant 0 : index
    %c0_41 = arith.constant 0 : index
    %72 = vector.load %arg10[%c0_39, %c0_40, %c0_41] : memref<1x32x32xbf16, #tpu.memory_space<vmem>>, vector<1x32x32xbf16>
    %73 = vector.shape_cast %72 : vector<1x32x32xbf16> to vector<32x32xbf16>
    %74 = vector.extract_strided_slice %73 {offsets = [0, 0], sizes = [8, 32], strides = [1, 1]} : vector<32x32xbf16> to vector<8x32xbf16>
    %cst_42 = arith.constant dense<0.000000e+00> : vector<13x32xf32>
    %75 = tpu.matmul %71, %74, %cst_42 {dimension_numbers = #tpu.dot_dimension_numbers<[1], [0], [0], [1], [0, 0, 1, 1], [], []>} : vector<13x8xbf16>, vector<8x32xbf16>, vector<13x32xf32> -> vector<13x32xf32>
    %76 = arith.addf %4, %75 : vector<13x32xf32>
    %77 = vector.extract_strided_slice %36 {offsets = [0, 8], sizes = [13, 8], strides = [1, 1]} : vector<13x32xf32> to vector<13x8xf32>
    %cst_43 = arith.constant 0.353553385 : f32
    %78 = vector.broadcast %cst_43 : f32 to vector<13x8xf32>
    %79 = arith.mulf %77, %78 : vector<13x8xf32>
    %80 = arith.truncf %79 : vector<13x8xf32> to vector<13x8xbf16>
    %81 = vector.extract_strided_slice %43 {offsets = [0, 8], sizes = [13, 8], strides = [1, 1]} : vector<13x32xf32> to vector<13x8xf32>
    %82 = arith.truncf %81 : vector<13x8xf32> to vector<13x8xbf16>
    %83 = vector.extract_strided_slice %50 {offsets = [0, 8], sizes = [13, 8], strides = [1, 1]} : vector<13x32xf32> to vector<13x8xf32>
    %84 = arith.truncf %83 : vector<13x8xf32> to vector<13x8xbf16>
    %cst_44 = arith.constant dense<0.000000e+00> : vector<13x13xf32>
    %85 = tpu.matmul %80, %82, %cst_44 {dimension_numbers = #tpu.dot_dimension_numbers<[1], [1], [0], [0], [0, 0, 1, 0], [], []>} : vector<13x8xbf16>, vector<13x8xbf16>, vector<13x13xf32> -> vector<13x13xf32>
    %cst_45 = arith.constant dense<0xFF800000> : vector<13xf32>
    %86 = vector.multi_reduction <maximumf>, %85, %cst_45 [1] : vector<13x13xf32> to vector<13xf32>
    %87 = vector.shape_cast %86 : vector<13xf32> to vector<13x1xf32>
    %88 = vector.broadcast %87 : vector<13x1xf32> to vector<13x13xf32>
    %89 = arith.subf %85, %88 : vector<13x13xf32>
    %90 = math.exp %89 : vector<13x13xf32>
    %cst_46 = arith.constant dense<0.000000e+00> : vector<13xf32>
    %91 = vector.multi_reduction <add>, %90, %cst_46 [1] : vector<13x13xf32> to vector<13xf32>
    %92 = vector.shape_cast %91 : vector<13xf32> to vector<13x1xf32>
    %93 = vector.broadcast %92 : vector<13x1xf32> to vector<13x13xf32>
    %94 = arith.divf %90, %93 : vector<13x13xf32>
    %95 = arith.truncf %94 : vector<13x13xf32> to vector<13x13xbf16>
    %cst_47 = arith.constant dense<0.000000e+00> : vector<13x8xf32>
    %96 = tpu.matmul %95, %84, %cst_47 {dimension_numbers = #tpu.dot_dimension_numbers<[1], [0], [0], [1], [0, 0, 1, 1], [], []>} : vector<13x13xbf16>, vector<13x8xbf16>, vector<13x8xf32> -> vector<13x8xf32>
    %97 = arith.truncf %96 : vector<13x8xf32> to vector<13x8xbf16>
    %c0_48 = arith.constant 0 : index
    %c0_49 = arith.constant 0 : index
    %c0_50 = arith.constant 0 : index
    %98 = vector.load %arg10[%c0_48, %c0_49, %c0_50] : memref<1x32x32xbf16, #tpu.memory_space<vmem>>, vector<1x32x32xbf16>
    %99 = vector.shape_cast %98 : vector<1x32x32xbf16> to vector<32x32xbf16>
    %100 = vector.extract_strided_slice %99 {offsets = [8, 0], sizes = [8, 32], strides = [1, 1]} : vector<32x32xbf16> to vector<8x32xbf16>
    %cst_51 = arith.constant dense<0.000000e+00> : vector<13x32xf32>
    %101 = tpu.matmul %97, %100, %cst_51 {dimension_numbers = #tpu.dot_dimension_numbers<[1], [0], [0], [1], [0, 0, 1, 1], [], []>} : vector<13x8xbf16>, vector<8x32xbf16>, vector<13x32xf32> -> vector<13x32xf32>
    %102 = arith.addf %76, %101 : vector<13x32xf32>
    %103 = vector.extract_strided_slice %36 {offsets = [0, 16], sizes = [13, 8], strides = [1, 1]} : vector<13x32xf32> to vector<13x8xf32>
    %cst_52 = arith.constant 0.353553385 : f32
    %104 = vector.broadcast %cst_52 : f32 to vector<13x8xf32>
    %105 = arith.mulf %103, %104 : vector<13x8xf32>
    %106 = arith.truncf %105 : vector<13x8xf32> to vector<13x8xbf16>
    %107 = vector.extract_strided_slice %43 {offsets = [0, 16], sizes = [13, 8], strides = [1, 1]} : vector<13x32xf32> to vector<13x8xf32>
    %108 = arith.truncf %107 : vector<13x8xf32> to vector<13x8xbf16>
    %109 = vector.extract_strided_slice %50 {offsets = [0, 16], sizes = [13, 8], strides = [1, 1]} : vector<13x32xf32> to vector<13x8xf32>
    %110 = arith.truncf %109 : vector<13x8xf32> to vector<13x8xbf16>
    %cst_53 = arith.constant dense<0.000000e+00> : vector<13x13xf32>
    %111 = tpu.matmul %106, %108, %cst_53 {dimension_numbers = #tpu.dot_dimension_numbers<[1], [1], [0], [0], [0, 0, 1, 0], [], []>} : vector<13x8xbf16>, vector<13x8xbf16>, vector<13x13xf32> -> vector<13x13xf32>
    %cst_54 = arith.constant dense<0xFF800000> : vector<13xf32>
    %112 = vector.multi_reduction <maximumf>, %111, %cst_54 [1] : vector<13x13xf32> to vector<13xf32>
    %113 = vector.shape_cast %112 : vector<13xf32> to vector<13x1xf32>
    %114 = vector.broadcast %113 : vector<13x1xf32> to vector<13x13xf32>
    %115 = arith.subf %111, %114 : vector<13x13xf32>
    %116 = math.exp %115 : vector<13x13xf32>
    %cst_55 = arith.constant dense<0.000000e+00> : vector<13xf32>
    %117 = vector.multi_reduction <add>, %116, %cst_55 [1] : vector<13x13xf32> to vector<13xf32>
    %118 = vector.shape_cast %117 : vector<13xf32> to vector<13x1xf32>
    %119 = vector.broadcast %118 : vector<13x1xf32> to vector<13x13xf32>
    %120 = arith.divf %116, %119 : vector<13x13xf32>
    %121 = arith.truncf %120 : vector<13x13xf32> to vector<13x13xbf16>
    %cst_56 = arith.constant dense<0.000000e+00> : vector<13x8xf32>
    %122 = tpu.matmul %121, %110, %cst_56 {dimension_numbers = #tpu.dot_dimension_numbers<[1], [0], [0], [1], [0, 0, 1, 1], [], []>} : vector<13x13xbf16>, vector<13x8xbf16>, vector<13x8xf32> -> vector<13x8xf32>
    %123 = arith.truncf %122 : vector<13x8xf32> to vector<13x8xbf16>
    %c0_57 = arith.constant 0 : index
    %c0_58 = arith.constant 0 : index
    %c0_59 = arith.constant 0 : index
    %124 = vector.load %arg10[%c0_57, %c0_58, %c0_59] : memref<1x32x32xbf16, #tpu.memory_space<vmem>>, vector<1x32x32xbf16>
    %125 = vector.shape_cast %124 : vector<1x32x32xbf16> to vector<32x32xbf16>
    %126 = vector.extract_strided_slice %125 {offsets = [16, 0], sizes = [8, 32], strides = [1, 1]} : vector<32x32xbf16> to vector<8x32xbf16>
    %cst_60 = arith.constant dense<0.000000e+00> : vector<13x32xf32>
    %127 = tpu.matmul %123, %126, %cst_60 {dimension_numbers = #tpu.dot_dimension_numbers<[1], [0], [0], [1], [0, 0, 1, 1], [], []>} : vector<13x8xbf16>, vector<8x32xbf16>, vector<13x32xf32> -> vector<13x32xf32>
    %128 = arith.addf %102, %127 : vector<13x32xf32>
    %129 = vector.extract_strided_slice %36 {offsets = [0, 24], sizes = [13, 8], strides = [1, 1]} : vector<13x32xf32> to vector<13x8xf32>
    %cst_61 = arith.constant 0.353553385 : f32
    %130 = vector.broadcast %cst_61 : f32 to vector<13x8xf32>
    %131 = arith.mulf %129, %130 : vector<13x8xf32>
    %132 = arith.truncf %131 : vector<13x8xf32> to vector<13x8xbf16>
    %133 = vector.extract_strided_slice %43 {offsets = [0, 24], sizes = [13, 8], strides = [1, 1]} : vector<13x32xf32> to vector<13x8xf32>
    %134 = arith.truncf %133 : vector<13x8xf32> to vector<13x8xbf16>
    %135 = vector.extract_strided_slice %50 {offsets = [0, 24], sizes = [13, 8], strides = [1, 1]} : vector<13x32xf32> to vector<13x8xf32>
    %136 = arith.truncf %135 : vector<13x8xf32> to vector<13x8xbf16>
    %cst_62 = arith.constant dense<0.000000e+00> : vector<13x13xf32>
    %137 = tpu.matmul %132, %134, %cst_62 {dimension_numbers = #tpu.dot_dimension_numbers<[1], [1], [0], [0], [0, 0, 1, 0], [], []>} : vector<13x8xbf16>, vector<13x8xbf16>, vector<13x13xf32> -> vector<13x13xf32>
    %cst_63 = arith.constant dense<0xFF800000> : vector<13xf32>
    %138 = vector.multi_reduction <maximumf>, %137, %cst_63 [1] : vector<13x13xf32> to vector<13xf32>
    %139 = vector.shape_cast %138 : vector<13xf32> to vector<13x1xf32>
    %140 = vector.broadcast %139 : vector<13x1xf32> to vector<13x13xf32>
    %141 = arith.subf %137, %140 : vector<13x13xf32>
    %142 = math.exp %141 : vector<13x13xf32>
    %cst_64 = arith.constant dense<0.000000e+00> : vector<13xf32>
    %143 = vector.multi_reduction <add>, %142, %cst_64 [1] : vector<13x13xf32> to vector<13xf32>
    %144 = vector.shape_cast %143 : vector<13xf32> to vector<13x1xf32>
    %145 = vector.broadcast %144 : vector<13x1xf32> to vector<13x13xf32>
    %146 = arith.divf %142, %145 : vector<13x13xf32>
    %147 = arith.truncf %146 : vector<13x13xf32> to vector<13x13xbf16>
    %cst_65 = arith.constant dense<0.000000e+00> : vector<13x8xf32>
    %148 = tpu.matmul %147, %136, %cst_65 {dimension_numbers = #tpu.dot_dimension_numbers<[1], [0], [0], [1], [0, 0, 1, 1], [], []>} : vector<13x13xbf16>, vector<13x8xbf16>, vector<13x8xf32> -> vector<13x8xf32>
    %149 = arith.truncf %148 : vector<13x8xf32> to vector<13x8xbf16>
    %c0_66 = arith.constant 0 : index
    %c0_67 = arith.constant 0 : index
    %c0_68 = arith.constant 0 : index
    %150 = vector.load %arg10[%c0_66, %c0_67, %c0_68] : memref<1x32x32xbf16, #tpu.memory_space<vmem>>, vector<1x32x32xbf16>
    %151 = vector.shape_cast %150 : vector<1x32x32xbf16> to vector<32x32xbf16>
    %152 = vector.extract_strided_slice %151 {offsets = [24, 0], sizes = [8, 32], strides = [1, 1]} : vector<32x32xbf16> to vector<8x32xbf16>
    %cst_69 = arith.constant dense<0.000000e+00> : vector<13x32xf32>
    %153 = tpu.matmul %149, %152, %cst_69 {dimension_numbers = #tpu.dot_dimension_numbers<[1], [0], [0], [1], [0, 0, 1, 1], [], []>} : vector<13x8xbf16>, vector<8x32xbf16>, vector<13x32xf32> -> vector<13x32xf32>
    %154 = arith.addf %128, %153 : vector<13x32xf32>
    %c0_70 = arith.constant 0 : index
    %c0_71 = arith.constant 0 : index
    %c0_72 = arith.constant 0 : index
    %155 = vector.load %arg11[%c0_70, %c0_71, %c0_72] : memref<1x1x32xf32, #tpu.memory_space<vmem>>, vector<1x1x32xf32>
    %156 = vector.shape_cast %155 : vector<1x1x32xf32> to vector<1x32xf32>
    %157 = vector.broadcast %156 : vector<1x32xf32> to vector<13x32xf32>
    %158 = arith.addf %154, %157 : vector<13x32xf32>
    %c0_73 = arith.constant 0 : index
    %c0_74 = arith.constant 0 : index
    %c0_75 = arith.constant 0 : index
    %159 = vector.load %arg12[%c0_73, %c0_74, %c0_75] : memref<1x1x32xf32, #tpu.memory_space<vmem>>, vector<1x1x32xf32>
    %160 = vector.shape_cast %159 : vector<1x1x32xf32> to vector<1x32xf32>
    %c0_76 = arith.constant 0 : index
    %c0_77 = arith.constant 0 : index
    %c0_78 = arith.constant 0 : index
    %161 = vector.load %arg13[%c0_76, %c0_77, %c0_78] : memref<1x1x32xf32, #tpu.memory_space<vmem>>, vector<1x1x32xf32>
    %162 = vector.shape_cast %161 : vector<1x1x32xf32> to vector<1x32xf32>
    %cst_79 = arith.constant dense<0.000000e+00> : vector<13xf32>
    %163 = vector.multi_reduction <add>, %158, %cst_79 [1] : vector<13x32xf32> to vector<13xf32>
    %164 = vector.shape_cast %163 : vector<13xf32> to vector<13x1xf32>
    %cst_80 = arith.constant 3.200000e+01 : f32
    %165 = vector.broadcast %cst_80 : f32 to vector<13x1xf32>
    %166 = arith.divf %164, %165 : vector<13x1xf32>
    %167 = vector.broadcast %166 : vector<13x1xf32> to vector<13x32xf32>
    %168 = arith.subf %158, %167 : vector<13x32xf32>
    %169 = arith.mulf %168, %168 : vector<13x32xf32>
    %cst_81 = arith.constant dense<0.000000e+00> : vector<13xf32>
    %170 = vector.multi_reduction <add>, %169, %cst_81 [1] : vector<13x32xf32> to vector<13xf32>
    %171 = vector.shape_cast %170 : vector<13xf32> to vector<13x1xf32>
    %cst_82 = arith.constant 3.200000e+01 : f32
    %172 = vector.broadcast %cst_82 : f32 to vector<13x1xf32>
    %173 = arith.divf %171, %172 : vector<13x1xf32>
    %cst_83 = arith.constant 9.99999974E-6 : f32
    %174 = vector.broadcast %cst_83 : f32 to vector<13x1xf32>
    %175 = arith.addf %173, %174 : vector<13x1xf32>
    %176 = math.rsqrt %175 : vector<13x1xf32>
    %177 = vector.broadcast %176 : vector<13x1xf32> to vector<13x32xf32>
    %178 = arith.mulf %168, %177 : vector<13x32xf32>
    %179 = vector.broadcast %160 : vector<1x32xf32> to vector<13x32xf32>
    %180 = arith.mulf %178, %179 : vector<13x32xf32>
    %181 = vector.broadcast %162 : vector<1x32xf32> to vector<13x32xf32>
    %182 = arith.addf %180, %181 : vector<13x32xf32>
    %183 = arith.truncf %182 : vector<13x32xf32> to vector<13x32xbf16>
    %c0_84 = arith.constant 0 : index
    %c0_85 = arith.constant 0 : index
    %c0_86 = arith.constant 0 : index
    %184 = vector.load %arg14[%c0_84, %c0_85, %c0_86] : memref<1x32x128xbf16, #tpu.memory_space<vmem>>, vector<1x32x128xbf16>
    %185 = vector.shape_cast %184 : vector<1x32x128xbf16> to vector<32x128xbf16>
    %cst_87 = arith.constant dense<0.000000e+00> : vector<13x128xf32>
    %186 = tpu.matmul %183, %185, %cst_87 {dimension_numbers = #tpu.dot_dimension_numbers<[1], [0], [0], [1], [0, 0, 1, 1], [], []>} : vector<13x32xbf16>, vector<32x128xbf16>, vector<13x128xf32> -> vector<13x128xf32>
    %c0_88 = arith.constant 0 : index
    %c0_89 = arith.constant 0 : index
    %c0_90 = arith.constant 0 : index
    %187 = vector.load %arg15[%c0_88, %c0_89, %c0_90] : memref<1x1x128xf32, #tpu.memory_space<vmem>>, vector<1x1x128xf32>
    %188 = vector.shape_cast %187 : vector<1x1x128xf32> to vector<1x128xf32>
    %189 = vector.broadcast %188 : vector<1x128xf32> to vector<13x128xf32>
    %190 = arith.addf %186, %189 : vector<13x128xf32>
    %191 = arith.mulf %190, %190 : vector<13x128xf32>
    %192 = arith.mulf %190, %191 : vector<13x128xf32>
    %cst_91 = arith.constant 4.471500e-02 : f32
    %193 = vector.broadcast %cst_91 : f32 to vector<13x128xf32>
    %194 = arith.mulf %193, %192 : vector<13x128xf32>
    %195 = arith.addf %190, %194 : vector<13x128xf32>
    %cst_92 = arith.constant 0.797884583 : f32
    %196 = vector.broadcast %cst_92 : f32 to vector<13x128xf32>
    %197 = arith.mulf %196, %195 : vector<13x128xf32>
    %198 = math.tanh %197 : vector<13x128xf32>
    %cst_93 = arith.constant 1.000000e+00 : f32
    %199 = vector.broadcast %cst_93 : f32 to vector<13x128xf32>
    %200 = arith.addf %199, %198 : vector<13x128xf32>
    %cst_94 = arith.constant 5.000000e-01 : f32
    %201 = vector.broadcast %cst_94 : f32 to vector<13x128xf32>
    %202 = arith.mulf %201, %200 : vector<13x128xf32>
    %203 = arith.mulf %190, %202 : vector<13x128xf32>
    %204 = arith.truncf %203 : vector<13x128xf32> to vector<13x128xbf16>
    %c0_95 = arith.constant 0 : index
    %c0_96 = arith.constant 0 : index
    %c0_97 = arith.constant 0 : index
    %205 = vector.load %arg16[%c0_95, %c0_96, %c0_97] : memref<1x128x32xbf16, #tpu.memory_space<vmem>>, vector<1x128x32xbf16>
    %206 = vector.shape_cast %205 : vector<1x128x32xbf16> to vector<128x32xbf16>
    %cst_98 = arith.constant dense<0.000000e+00> : vector<13x32xf32>
    %207 = tpu.matmul %204, %206, %cst_98 {dimension_numbers = #tpu.dot_dimension_numbers<[1], [0], [0], [1], [0, 0, 1, 1], [], []>} : vector<13x128xbf16>, vector<128x32xbf16>, vector<13x32xf32> -> vector<13x32xf32>
    %208 = arith.addf %158, %207 : vector<13x32xf32>
    %c0_99 = arith.constant 0 : index
    %c0_100 = arith.constant 0 : index
    %c0_101 = arith.constant 0 : index
    %209 = vector.load %arg17[%c0_99, %c0_100, %c0_101] : memref<1x1x32xf32, #tpu.memory_space<vmem>>, vector<1x1x32xf32>
    %210 = vector.shape_cast %209 : vector<1x1x32xf32> to vector<1x32xf32>
    %211 = vector.broadcast %210 : vector<1x32xf32> to vector<13x32xf32>
    %212 = arith.addf %208, %211 : vector<13x32xf32>
    %c0_102 = arith.constant 0 : index
    %c0_103 = arith.constant 0 : index
    %c0_104 = arith.constant 0 : index
    %213 = vector.load %arg23[%c0_102, %c0_103, %c0_104] : memref<2x13x32xf32, #tpu.memory_space<vmem>>, vector<1x13x32xf32>
    %214 = vector.shape_cast %213 : vector<1x13x32xf32> to vector<13x32xf32>
    %215 = vector.shape_cast %212 : vector<13x32xf32> to vector<1x13x32xf32>
    tpu.vector_store %arg23[%c0_102, %c0_103, %c0_104], %215 {strides = array<i32>} : memref<2x13x32xf32, #tpu.memory_space<vmem>>, vector<1x13x32xf32>,
    %c1 = arith.constant 1 : index
    %c0_105 = arith.constant 0 : index
    %c0_106 = arith.constant 0 : index
    %216 = vector.load %arg23[%c1, %c0_105, %c0_106] : memref<2x13x32xf32, #tpu.memory_space<vmem>>, vector<1x13x32xf32>
    %217 = vector.shape_cast %216 : vector<1x13x32xf32> to vector<13x32xf32>
    %c0_107 = arith.constant 0 : index
    %c0_108 = arith.constant 0 : index
    %c0_109 = arith.constant 0 : index
    %218 = vector.load %arg2[%c0_107, %c0_108, %c0_109] : memref<1x1x32xf32, #tpu.memory_space<vmem>>, vector<1x1x32xf32>
    %219 = vector.shape_cast %218 : vector<1x1x32xf32> to vector<1x32xf32>
    %c0_110 = arith.constant 0 : index
    %c0_111 = arith.constant 0 : index
    %c0_112 = arith.constant 0 : index
    %220 = vector.load %arg3[%c0_110, %c0_111, %c0_112] : memref<1x1x32xf32, #tpu.memory_space<vmem>>, vector<1x1x32xf32>
    %221 = vector.shape_cast %220 : vector<1x1x32xf32> to vector<1x32xf32>
    %cst_113 = arith.constant dense<0.000000e+00> : vector<13xf32>
    %222 = vector.multi_reduction <add>, %217, %cst_113 [1] : vector<13x32xf32> to vector<13xf32>
    %223 = vector.shape_cast %222 : vector<13xf32> to vector<13x1xf32>
    %cst_114 = arith.constant 3.200000e+01 : f32
    %224 = vector.broadcast %cst_114 : f32 to vector<13x1xf32>
    %225 = arith.divf %223, %224 : vector<13x1xf32>
    %226 = vector.broadcast %225 : vector<13x1xf32> to vector<13x32xf32>
    %227 = arith.subf %217, %226 : vector<13x32xf32>
    %228 = arith.mulf %227, %227 : vector<13x32xf32>
    %cst_115 = arith.constant dense<0.000000e+00> : vector<13xf32>
    %229 = vector.multi_reduction <add>, %228, %cst_115 [1] : vector<13x32xf32> to vector<13xf32>
    %230 = vector.shape_cast %229 : vector<13xf32> to vector<13x1xf32>
    %cst_116 = arith.constant 3.200000e+01 : f32
    %231 = vector.broadcast %cst_116 : f32 to vector<13x1xf32>
    %232 = arith.divf %230, %231 : vector<13x1xf32>
    %cst_117 = arith.constant 9.99999974E-6 : f32
    %233 = vector.broadcast %cst_117 : f32 to vector<13x1xf32>
    %234 = arith.addf %232, %233 : vector<13x1xf32>
    %235 = math.rsqrt %234 : vector<13x1xf32>
    %236 = vector.broadcast %235 : vector<13x1xf32> to vector<13x32xf32>
    %237 = arith.mulf %227, %236 : vector<13x32xf32>
    %238 = vector.broadcast %219 : vector<1x32xf32> to vector<13x32xf32>
    %239 = arith.mulf %237, %238 : vector<13x32xf32>
    %240 = vector.broadcast %221 : vector<1x32xf32> to vector<13x32xf32>
    %241 = arith.addf %239, %240 : vector<13x32xf32>
    %242 = arith.truncf %241 : vector<13x32xf32> to vector<13x32xbf16>
    %c0_118 = arith.constant 0 : index
    %c0_119 = arith.constant 0 : index
    %c0_120 = arith.constant 0 : index
    %243 = vector.load %arg4[%c0_118, %c0_119, %c0_120] : memref<1x32x32xbf16, #tpu.memory_space<vmem>>, vector<1x32x32xbf16>
    %244 = vector.shape_cast %243 : vector<1x32x32xbf16> to vector<32x32xbf16>
    %cst_121 = arith.constant dense<0.000000e+00> : vector<13x32xf32>
    %245 = tpu.matmul %242, %244, %cst_121 {dimension_numbers = #tpu.dot_dimension_numbers<[1], [0], [0], [1], [0, 0, 1, 1], [], []>} : vector<13x32xbf16>, vector<32x32xbf16>, vector<13x32xf32> -> vector<13x32xf32>
    %c0_122 = arith.constant 0 : index
    %c0_123 = arith.constant 0 : index
    %c0_124 = arith.constant 0 : index
    %246 = vector.load %arg5[%c0_122, %c0_123, %c0_124] : memref<1x1x32xf32, #tpu.memory_space<vmem>>, vector<1x1x32xf32>
    %247 = vector.shape_cast %246 : vector<1x1x32xf32> to vector<1x32xf32>
    %248 = vector.broadcast %247 : vector<1x32xf32> to vector<13x32xf32>
    %249 = arith.addf %245, %248 : vector<13x32xf32>
    %c0_125 = arith.constant 0 : index
    %c0_126 = arith.constant 0 : index
    %c0_127 = arith.constant 0 : index
    %250 = vector.load %arg6[%c0_125, %c0_126, %c0_127] : memref<1x32x32xbf16, #tpu.memory_space<vmem>>, vector<1x32x32xbf16>
    %251 = vector.shape_cast %250 : vector<1x32x32xbf16> to vector<32x32xbf16>
    %cst_128 = arith.constant dense<0.000000e+00> : vector<13x32xf32>
    %252 = tpu.matmul %242, %251, %cst_128 {dimension_numbers = #tpu.dot_dimension_numbers<[1], [0], [0], [1], [0, 0, 1, 1], [], []>} : vector<13x32xbf16>, vector<32x32xbf16>, vector<13x32xf32> -> vector<13x32xf32>
    %c0_129 = arith.constant 0 : index
    %c0_130 = arith.constant 0 : index
    %c0_131 = arith.constant 0 : index
    %253 = vector.load %arg7[%c0_129, %c0_130, %c0_131] : memref<1x1x32xf32, #tpu.memory_space<vmem>>, vector<1x1x32xf32>
    %254 = vector.shape_cast %253 : vector<1x1x32xf32> to vector<1x32xf32>
    %255 = vector.broadcast %254 : vector<1x32xf32> to vector<13x32xf32>
    %256 = arith.addf %252, %255 : vector<13x32xf32>
    %c0_132 = arith.constant 0 : index
    %c0_133 = arith.constant 0 : index
    %c0_134 = arith.constant 0 : index
    %257 = vector.load %arg8[%c0_132, %c0_133, %c0_134] : memref<1x32x32xbf16, #tpu.memory_space<vmem>>, vector<1x32x32xbf16>
    %258 = vector.shape_cast %257 : vector<1x32x32xbf16> to vector<32x32xbf16>
    %cst_135 = arith.constant dense<0.000000e+00> : vector<13x32xf32>
    %259 = tpu.matmul %242, %258, %cst_135 {dimension_numbers = #tpu.dot_dimension_numbers<[1], [0], [0], [1], [0, 0, 1, 1], [], []>} : vector<13x32xbf16>, vector<32x32xbf16>, vector<13x32xf32> -> vector<13x32xf32>
    %c0_136 = arith.constant 0 : index
    %c0_137 = arith.constant 0 : index
    %c0_138 = arith.constant 0 : index
    %260 = vector.load %arg9[%c0_136, %c0_137, %c0_138] : memref<1x1x32xf32, #tpu.memory_space<vmem>>, vector<1x1x32xf32>
    %261 = vector.shape_cast %260 : vector<1x1x32xf32> to vector<1x32xf32>
    %262 = vector.broadcast %261 : vector<1x32xf32> to vector<13x32xf32>
    %263 = arith.addf %259, %262 : vector<13x32xf32>
    %264 = vector.extract_strided_slice %249 {offsets = [0, 0], sizes = [13, 8], strides = [1, 1]} : vector<13x32xf32> to vector<13x8xf32>
    %cst_139 = arith.constant 0.353553385 : f32
    %265 = vector.broadcast %cst_139 : f32 to vector<13x8xf32>
    %266 = arith.mulf %264, %265 : vector<13x8xf32>
    %267 = arith.truncf %266 : vector<13x8xf32> to vector<13x8xbf16>
    %268 = vector.extract_strided_slice %256 {offsets = [0, 0], sizes = [13, 8], strides = [1, 1]} : vector<13x32xf32> to vector<13x8xf32>
    %269 = arith.truncf %268 : vector<13x8xf32> to vector<13x8xbf16>
    %270 = vector.extract_strided_slice %263 {offsets = [0, 0], sizes = [13, 8], strides = [1, 1]} : vector<13x32xf32> to vector<13x8xf32>
    %271 = arith.truncf %270 : vector<13x8xf32> to vector<13x8xbf16>
    %cst_140 = arith.constant dense<0.000000e+00> : vector<13x13xf32>
    %272 = tpu.matmul %267, %269, %cst_140 {dimension_numbers = #tpu.dot_dimension_numbers<[1], [1], [0], [0], [0, 0, 1, 0], [], []>} : vector<13x8xbf16>, vector<13x8xbf16>, vector<13x13xf32> -> vector<13x13xf32>
    %cst_141 = arith.constant dense<0xFF800000> : vector<13xf32>
    %273 = vector.multi_reduction <maximumf>, %272, %cst_141 [1] : vector<13x13xf32> to vector<13xf32>
    %274 = vector.shape_cast %273 : vector<13xf32> to vector<13x1xf32>
    %275 = vector.broadcast %274 : vector<13x1xf32> to vector<13x13xf32>
    %276 = arith.subf %272, %275 : vector<13x13xf32>
    %277 = math.exp %276 : vector<13x13xf32>
    %cst_142 = arith.constant dense<0.000000e+00> : vector<13xf32>
    %278 = vector.multi_reduction <add>, %277, %cst_142 [1] : vector<13x13xf32> to vector<13xf32>
    %279 = vector.shape_cast %278 : vector<13xf32> to vector<13x1xf32>
    %280 = vector.broadcast %279 : vector<13x1xf32> to vector<13x13xf32>
    %281 = arith.divf %277, %280 : vector<13x13xf32>
    %282 = arith.truncf %281 : vector<13x13xf32> to vector<13x13xbf16>
    %cst_143 = arith.constant dense<0.000000e+00> : vector<13x8xf32>
    %283 = tpu.matmul %282, %271, %cst_143 {dimension_numbers = #tpu.dot_dimension_numbers<[1], [0], [0], [1], [0, 0, 1, 1], [], []>} : vector<13x13xbf16>, vector<13x8xbf16>, vector<13x8xf32> -> vector<13x8xf32>
    %284 = arith.truncf %283 : vector<13x8xf32> to vector<13x8xbf16>
    %c0_144 = arith.constant 0 : index
    %c0_145 = arith.constant 0 : index
    %c0_146 = arith.constant 0 : index
    %285 = vector.load %arg10[%c0_144, %c0_145, %c0_146] : memref<1x32x32xbf16, #tpu.memory_space<vmem>>, vector<1x32x32xbf16>
    %286 = vector.shape_cast %285 : vector<1x32x32xbf16> to vector<32x32xbf16>
    %287 = vector.extract_strided_slice %286 {offsets = [0, 0], sizes = [8, 32], strides = [1, 1]} : vector<32x32xbf16> to vector<8x32xbf16>
    %cst_147 = arith.constant dense<0.000000e+00> : vector<13x32xf32>
    %288 = tpu.matmul %284, %287, %cst_147 {dimension_numbers = #tpu.dot_dimension_numbers<[1], [0], [0], [1], [0, 0, 1, 1], [], []>} : vector<13x8xbf16>, vector<8x32xbf16>, vector<13x32xf32> -> vector<13x32xf32>
    %289 = arith.addf %217, %288 : vector<13x32xf32>
    %290 = vector.extract_strided_slice %249 {offsets = [0, 8], sizes = [13, 8], strides = [1, 1]} : vector<13x32xf32> to vector<13x8xf32>
    %cst_148 = arith.constant 0.353553385 : f32
    %291 = vector.broadcast %cst_148 : f32 to vector<13x8xf32>
    %292 = arith.mulf %290, %291 : vector<13x8xf32>
    %293 = arith.truncf %292 : vector<13x8xf32> to vector<13x8xbf16>
    %294 = vector.extract_strided_slice %256 {offsets = [0, 8], sizes = [13, 8], strides = [1, 1]} : vector<13x32xf32> to vector<13x8xf32>
    %295 = arith.truncf %294 : vector<13x8xf32> to vector<13x8xbf16>
    %296 = vector.extract_strided_slice %263 {offsets = [0, 8], sizes = [13, 8], strides = [1, 1]} : vector<13x32xf32> to vector<13x8xf32>
    %297 = arith.truncf %296 : vector<13x8xf32> to vector<13x8xbf16>
    %cst_149 = arith.constant dense<0.000000e+00> : vector<13x13xf32>
    %298 = tpu.matmul %293, %295, %cst_149 {dimension_numbers = #tpu.dot_dimension_numbers<[1], [1], [0], [0], [0, 0, 1, 0], [], []>} : vector<13x8xbf16>, vector<13x8xbf16>, vector<13x13xf32> -> vector<13x13xf32>
    %cst_150 = arith.constant dense<0xFF800000> : vector<13xf32>
    %299 = vector.multi_reduction <maximumf>, %298, %cst_150 [1] : vector<13x13xf32> to vector<13xf32>
    %300 = vector.shape_cast %299 : vector<13xf32> to vector<13x1xf32>
    %301 = vector.broadcast %300 : vector<13x1xf32> to vector<13x13xf32>
    %302 = arith.subf %298, %301 : vector<13x13xf32>
    %303 = math.exp %302 : vector<13x13xf32>
    %cst_151 = arith.constant dense<0.000000e+00> : vector<13xf32>
    %304 = vector.multi_reduction <add>, %303, %cst_151 [1] : vector<13x13xf32> to vector<13xf32>
    %305 = vector.shape_cast %304 : vector<13xf32> to vector<13x1xf32>
    %306 = vector.broadcast %305 : vector<13x1xf32> to vector<13x13xf32>
    %307 = arith.divf %303, %306 : vector<13x13xf32>
    %308 = arith.truncf %307 : vector<13x13xf32> to vector<13x13xbf16>
    %cst_152 = arith.constant dense<0.000000e+00> : vector<13x8xf32>
    %309 = tpu.matmul %308, %297, %cst_152 {dimension_numbers = #tpu.dot_dimension_numbers<[1], [0], [0], [1], [0, 0, 1, 1], [], []>} : vector<13x13xbf16>, vector<13x8xbf16>, vector<13x8xf32> -> vector<13x8xf32>
    %310 = arith.truncf %309 : vector<13x8xf32> to vector<13x8xbf16>
    %c0_153 = arith.constant 0 : index
    %c0_154 = arith.constant 0 : index
    %c0_155 = arith.constant 0 : index
    %311 = vector.load %arg10[%c0_153, %c0_154, %c0_155] : memref<1x32x32xbf16, #tpu.memory_space<vmem>>, vector<1x32x32xbf16>
    %312 = vector.shape_cast %311 : vector<1x32x32xbf16> to vector<32x32xbf16>
    %313 = vector.extract_strided_slice %312 {offsets = [8, 0], sizes = [8, 32], strides = [1, 1]} : vector<32x32xbf16> to vector<8x32xbf16>
    %cst_156 = arith.constant dense<0.000000e+00> : vector<13x32xf32>
    %314 = tpu.matmul %310, %313, %cst_156 {dimension_numbers = #tpu.dot_dimension_numbers<[1], [0], [0], [1], [0, 0, 1, 1], [], []>} : vector<13x8xbf16>, vector<8x32xbf16>, vector<13x32xf32> -> vector<13x32xf32>
    %315 = arith.addf %289, %314 : vector<13x32xf32>
    %316 = vector.extract_strided_slice %249 {offsets = [0, 16], sizes = [13, 8], strides = [1, 1]} : vector<13x32xf32> to vector<13x8xf32>
    %cst_157 = arith.constant 0.353553385 : f32
    %317 = vector.broadcast %cst_157 : f32 to vector<13x8xf32>
    %318 = arith.mulf %316, %317 : vector<13x8xf32>
    %319 = arith.truncf %318 : vector<13x8xf32> to vector<13x8xbf16>
    %320 = vector.extract_strided_slice %256 {offsets = [0, 16], sizes = [13, 8], strides = [1, 1]} : vector<13x32xf32> to vector<13x8xf32>
    %321 = arith.truncf %320 : vector<13x8xf32> to vector<13x8xbf16>
    %322 = vector.extract_strided_slice %263 {offsets = [0, 16], sizes = [13, 8], strides = [1, 1]} : vector<13x32xf32> to vector<13x8xf32>
    %323 = arith.truncf %322 : vector<13x8xf32> to vector<13x8xbf16>
    %cst_158 = arith.constant dense<0.000000e+00> : vector<13x13xf32>
    %324 = tpu.matmul %319, %321, %cst_158 {dimension_numbers = #tpu.dot_dimension_numbers<[1], [1], [0], [0], [0, 0, 1, 0], [], []>} : vector<13x8xbf16>, vector<13x8xbf16>, vector<13x13xf32> -> vector<13x13xf32>
    %cst_159 = arith.constant dense<0xFF800000> : vector<13xf32>
    %325 = vector.multi_reduction <maximumf>, %324, %cst_159 [1] : vector<13x13xf32> to vector<13xf32>
    %326 = vector.shape_cast %325 : vector<13xf32> to vector<13x1xf32>
    %327 = vector.broadcast %326 : vector<13x1xf32> to vector<13x13xf32>
    %328 = arith.subf %324, %327 : vector<13x13xf32>
    %329 = math.exp %328 : vector<13x13xf32>
    %cst_160 = arith.constant dense<0.000000e+00> : vector<13xf32>
    %330 = vector.multi_reduction <add>, %329, %cst_160 [1] : vector<13x13xf32> to vector<13xf32>
    %331 = vector.shape_cast %330 : vector<13xf32> to vector<13x1xf32>
    %332 = vector.broadcast %331 : vector<13x1xf32> to vector<13x13xf32>
    %333 = arith.divf %329, %332 : vector<13x13xf32>
    %334 = arith.truncf %333 : vector<13x13xf32> to vector<13x13xbf16>
    %cst_161 = arith.constant dense<0.000000e+00> : vector<13x8xf32>
    %335 = tpu.matmul %334, %323, %cst_161 {dimension_numbers = #tpu.dot_dimension_numbers<[1], [0], [0], [1], [0, 0, 1, 1], [], []>} : vector<13x13xbf16>, vector<13x8xbf16>, vector<13x8xf32> -> vector<13x8xf32>
    %336 = arith.truncf %335 : vector<13x8xf32> to vector<13x8xbf16>
    %c0_162 = arith.constant 0 : index
    %c0_163 = arith.constant 0 : index
    %c0_164 = arith.constant 0 : index
    %337 = vector.load %arg10[%c0_162, %c0_163, %c0_164] : memref<1x32x32xbf16, #tpu.memory_space<vmem>>, vector<1x32x32xbf16>
    %338 = vector.shape_cast %337 : vector<1x32x32xbf16> to vector<32x32xbf16>
    %339 = vector.extract_strided_slice %338 {offsets = [16, 0], sizes = [8, 32], strides = [1, 1]} : vector<32x32xbf16> to vector<8x32xbf16>
    %cst_165 = arith.constant dense<0.000000e+00> : vector<13x32xf32>
    %340 = tpu.matmul %336, %339, %cst_165 {dimension_numbers = #tpu.dot_dimension_numbers<[1], [0], [0], [1], [0, 0, 1, 1], [], []>} : vector<13x8xbf16>, vector<8x32xbf16>, vector<13x32xf32> -> vector<13x32xf32>
    %341 = arith.addf %315, %340 : vector<13x32xf32>
    %342 = vector.extract_strided_slice %249 {offsets = [0, 24], sizes = [13, 8], strides = [1, 1]} : vector<13x32xf32> to vector<13x8xf32>
    %cst_166 = arith.constant 0.353553385 : f32
    %343 = vector.broadcast %cst_166 : f32 to vector<13x8xf32>
    %344 = arith.mulf %342, %343 : vector<13x8xf32>
    %345 = arith.truncf %344 : vector<13x8xf32> to vector<13x8xbf16>
    %346 = vector.extract_strided_slice %256 {offsets = [0, 24], sizes = [13, 8], strides = [1, 1]} : vector<13x32xf32> to vector<13x8xf32>
    %347 = arith.truncf %346 : vector<13x8xf32> to vector<13x8xbf16>
    %348 = vector.extract_strided_slice %263 {offsets = [0, 24], sizes = [13, 8], strides = [1, 1]} : vector<13x32xf32> to vector<13x8xf32>
    %349 = arith.truncf %348 : vector<13x8xf32> to vector<13x8xbf16>
    %cst_167 = arith.constant dense<0.000000e+00> : vector<13x13xf32>
    %350 = tpu.matmul %345, %347, %cst_167 {dimension_numbers = #tpu.dot_dimension_numbers<[1], [1], [0], [0], [0, 0, 1, 0], [], []>} : vector<13x8xbf16>, vector<13x8xbf16>, vector<13x13xf32> -> vector<13x13xf32>
    %cst_168 = arith.constant dense<0xFF800000> : vector<13xf32>
    %351 = vector.multi_reduction <maximumf>, %350, %cst_168 [1] : vector<13x13xf32> to vector<13xf32>
    %352 = vector.shape_cast %351 : vector<13xf32> to vector<13x1xf32>
    %353 = vector.broadcast %352 : vector<13x1xf32> to vector<13x13xf32>
    %354 = arith.subf %350, %353 : vector<13x13xf32>
    %355 = math.exp %354 : vector<13x13xf32>
    %cst_169 = arith.constant dense<0.000000e+00> : vector<13xf32>
    %356 = vector.multi_reduction <add>, %355, %cst_169 [1] : vector<13x13xf32> to vector<13xf32>
    %357 = vector.shape_cast %356 : vector<13xf32> to vector<13x1xf32>
    %358 = vector.broadcast %357 : vector<13x1xf32> to vector<13x13xf32>
    %359 = arith.divf %355, %358 : vector<13x13xf32>
    %360 = arith.truncf %359 : vector<13x13xf32> to vector<13x13xbf16>
    %cst_170 = arith.constant dense<0.000000e+00> : vector<13x8xf32>
    %361 = tpu.matmul %360, %349, %cst_170 {dimension_numbers = #tpu.dot_dimension_numbers<[1], [0], [0], [1], [0, 0, 1, 1], [], []>} : vector<13x13xbf16>, vector<13x8xbf16>, vector<13x8xf32> -> vector<13x8xf32>
    %362 = arith.truncf %361 : vector<13x8xf32> to vector<13x8xbf16>
    %c0_171 = arith.constant 0 : index
    %c0_172 = arith.constant 0 : index
    %c0_173 = arith.constant 0 : index
    %363 = vector.load %arg10[%c0_171, %c0_172, %c0_173] : memref<1x32x32xbf16, #tpu.memory_space<vmem>>, vector<1x32x32xbf16>
    %364 = vector.shape_cast %363 : vector<1x32x32xbf16> to vector<32x32xbf16>
    %365 = vector.extract_strided_slice %364 {offsets = [24, 0], sizes = [8, 32], strides = [1, 1]} : vector<32x32xbf16> to vector<8x32xbf16>
    %cst_174 = arith.constant dense<0.000000e+00> : vector<13x32xf32>
    %366 = tpu.matmul %362, %365, %cst_174 {dimension_numbers = #tpu.dot_dimension_numbers<[1], [0], [0], [1], [0, 0, 1, 1], [], []>} : vector<13x8xbf16>, vector<8x32xbf16>, vector<13x32xf32> -> vector<13x32xf32>
    %367 = arith.addf %341, %366 : vector<13x32xf32>
    %c0_175 = arith.constant 0 : index
    %c0_176 = arith.constant 0 : index
    %c0_177 = arith.constant 0 : index
    %368 = vector.load %arg11[%c0_175, %c0_176, %c0_177] : memref<1x1x32xf32, #tpu.memory_space<vmem>>, vector<1x1x32xf32>
    %369 = vector.shape_cast %368 : vector<1x1x32xf32> to vector<1x32xf32>
    %370 = vector.broadcast %369 : vector<1x32xf32> to vector<13x32xf32>
    %371 = arith.addf %367, %370 : vector<13x32xf32>
    %c0_178 = arith.constant 0 : index
    %c0_179 = arith.constant 0 : index
    %c0_180 = arith.constant 0 : index
    %372 = vector.load %arg12[%c0_178, %c0_179, %c0_180] : memref<1x1x32xf32, #tpu.memory_space<vmem>>, vector<1x1x32xf32>
    %373 = vector.shape_cast %372 : vector<1x1x32xf32> to vector<1x32xf32>
    %c0_181 = arith.constant 0 : index
    %c0_182 = arith.constant 0 : index
    %c0_183 = arith.constant 0 : index
    %374 = vector.load %arg13[%c0_181, %c0_182, %c0_183] : memref<1x1x32xf32, #tpu.memory_space<vmem>>, vector<1x1x32xf32>
    %375 = vector.shape_cast %374 : vector<1x1x32xf32> to vector<1x32xf32>
    %cst_184 = arith.constant dense<0.000000e+00> : vector<13xf32>
    %376 = vector.multi_reduction <add>, %371, %cst_184 [1] : vector<13x32xf32> to vector<13xf32>
    %377 = vector.shape_cast %376 : vector<13xf32> to vector<13x1xf32>
    %cst_185 = arith.constant 3.200000e+01 : f32
    %378 = vector.broadcast %cst_185 : f32 to vector<13x1xf32>
    %379 = arith.divf %377, %378 : vector<13x1xf32>
    %380 = vector.broadcast %379 : vector<13x1xf32> to vector<13x32xf32>
    %381 = arith.subf %371, %380 : vector<13x32xf32>
    %382 = arith.mulf %381, %381 : vector<13x32xf32>
    %cst_186 = arith.constant dense<0.000000e+00> : vector<13xf32>
    %383 = vector.multi_reduction <add>, %382, %cst_186 [1] : vector<13x32xf32> to vector<13xf32>
    %384 = vector.shape_cast %383 : vector<13xf32> to vector<13x1xf32>
    %cst_187 = arith.constant 3.200000e+01 : f32
    %385 = vector.broadcast %cst_187 : f32 to vector<13x1xf32>
    %386 = arith.divf %384, %385 : vector<13x1xf32>
    %cst_188 = arith.constant 9.99999974E-6 : f32
    %387 = vector.broadcast %cst_188 : f32 to vector<13x1xf32>
    %388 = arith.addf %386, %387 : vector<13x1xf32>
    %389 = math.rsqrt %388 : vector<13x1xf32>
    %390 = vector.broadcast %389 : vector<13x1xf32> to vector<13x32xf32>
    %391 = arith.mulf %381, %390 : vector<13x32xf32>
    %392 = vector.broadcast %373 : vector<1x32xf32> to vector<13x32xf32>
    %393 = arith.mulf %391, %392 : vector<13x32xf32>
    %394 = vector.broadcast %375 : vector<1x32xf32> to vector<13x32xf32>
    %395 = arith.addf %393, %394 : vector<13x32xf32>
    %396 = arith.truncf %395 : vector<13x32xf32> to vector<13x32xbf16>
    %c0_189 = arith.constant 0 : index
    %c0_190 = arith.constant 0 : index
    %c0_191 = arith.constant 0 : index
    %397 = vector.load %arg14[%c0_189, %c0_190, %c0_191] : memref<1x32x128xbf16, #tpu.memory_space<vmem>>, vector<1x32x128xbf16>
    %398 = vector.shape_cast %397 : vector<1x32x128xbf16> to vector<32x128xbf16>
    %cst_192 = arith.constant dense<0.000000e+00> : vector<13x128xf32>
    %399 = tpu.matmul %396, %398, %cst_192 {dimension_numbers = #tpu.dot_dimension_numbers<[1], [0], [0], [1], [0, 0, 1, 1], [], []>} : vector<13x32xbf16>, vector<32x128xbf16>, vector<13x128xf32> -> vector<13x128xf32>
    %c0_193 = arith.constant 0 : index
    %c0_194 = arith.constant 0 : index
    %c0_195 = arith.constant 0 : index
    %400 = vector.load %arg15[%c0_193, %c0_194, %c0_195] : memref<1x1x128xf32, #tpu.memory_space<vmem>>, vector<1x1x128xf32>
    %401 = vector.shape_cast %400 : vector<1x1x128xf32> to vector<1x128xf32>
    %402 = vector.broadcast %401 : vector<1x128xf32> to vector<13x128xf32>
    %403 = arith.addf %399, %402 : vector<13x128xf32>
    %404 = arith.mulf %403, %403 : vector<13x128xf32>
    %405 = arith.mulf %403, %404 : vector<13x128xf32>
    %cst_196 = arith.constant 4.471500e-02 : f32
    %406 = vector.broadcast %cst_196 : f32 to vector<13x128xf32>
    %407 = arith.mulf %406, %405 : vector<13x128xf32>
    %408 = arith.addf %403, %407 : vector<13x128xf32>
    %cst_197 = arith.constant 0.797884583 : f32
    %409 = vector.broadcast %cst_197 : f32 to vector<13x128xf32>
    %410 = arith.mulf %409, %408 : vector<13x128xf32>
    %411 = math.tanh %410 : vector<13x128xf32>
    %cst_198 = arith.constant 1.000000e+00 : f32
    %412 = vector.broadcast %cst_198 : f32 to vector<13x128xf32>
    %413 = arith.addf %412, %411 : vector<13x128xf32>
    %cst_199 = arith.constant 5.000000e-01 : f32
    %414 = vector.broadcast %cst_199 : f32 to vector<13x128xf32>
    %415 = arith.mulf %414, %413 : vector<13x128xf32>
    %416 = arith.mulf %403, %415 : vector<13x128xf32>
    %417 = arith.truncf %416 : vector<13x128xf32> to vector<13x128xbf16>
    %c0_200 = arith.constant 0 : index
    %c0_201 = arith.constant 0 : index
    %c0_202 = arith.constant 0 : index
    %418 = vector.load %arg16[%c0_200, %c0_201, %c0_202] : memref<1x128x32xbf16, #tpu.memory_space<vmem>>, vector<1x128x32xbf16>
    %419 = vector.shape_cast %418 : vector<1x128x32xbf16> to vector<128x32xbf16>
    %cst_203 = arith.constant dense<0.000000e+00> : vector<13x32xf32>
    %420 = tpu.matmul %417, %419, %cst_203 {dimension_numbers = #tpu.dot_dimension_numbers<[1], [0], [0], [1], [0, 0, 1, 1], [], []>} : vector<13x128xbf16>, vector<128x32xbf16>, vector<13x32xf32> -> vector<13x32xf32>
    %421 = arith.addf %371, %420 : vector<13x32xf32>
    %c0_204 = arith.constant 0 : index
    %c0_205 = arith.constant 0 : index
    %c0_206 = arith.constant 0 : index
    %422 = vector.load %arg17[%c0_204, %c0_205, %c0_206] : memref<1x1x32xf32, #tpu.memory_space<vmem>>, vector<1x1x32xf32>
    %423 = vector.shape_cast %422 : vector<1x1x32xf32> to vector<1x32xf32>
    %424 = vector.broadcast %423 : vector<1x32xf32> to vector<13x32xf32>
    %425 = arith.addf %421, %424 : vector<13x32xf32>
    %c1_207 = arith.constant 1 : index
    %c0_208 = arith.constant 0 : index
    %c0_209 = arith.constant 0 : index
    %426 = vector.load %arg23[%c1_207, %c0_208, %c0_209] : memref<2x13x32xf32, #tpu.memory_space<vmem>>, vector<1x13x32xf32>
    %427 = vector.shape_cast %426 : vector<1x13x32xf32> to vector<13x32xf32>
    %428 = vector.shape_cast %425 : vector<13x32xf32> to vector<1x13x32xf32>
    tpu.vector_store %arg23[%c1_207, %c0_208, %c0_209], %428 {strides = array<i32>} : memref<2x13x32xf32, #tpu.memory_space<vmem>>, vector<1x13x32xf32>,
    %c1_i32 = arith.constant 1 : i32
    %429 = arith.cmpi eq, %arg0, %c1_i32 : i32
    %430 = arith.extui %429 : i1 to i32
    %c0_i32_210 = arith.constant 0 : i32
    %431 = arith.cmpi ne, %430, %c0_i32_210 : i32
    scf.if %431 {
      %c0_211 = arith.constant 0 : index
      %c0_212 = arith.constant 0 : index
      %c0_213 = arith.constant 0 : index
      %432 = vector.load %arg23[%c0_211, %c0_212, %c0_213] : memref<2x13x32xf32, #tpu.memory_space<vmem>>, vector<1x13x32xf32>
      %433 = vector.shape_cast %432 : vector<1x13x32xf32> to vector<13x32xf32>
      %c0_214 = arith.constant 0 : index
      %c0_215 = arith.constant 0 : index
      %434 = vector.load %arg18[%c0_214, %c0_215] : memref<1x32xf32, #tpu.memory_space<vmem>>, vector<1x32xf32>
      %c0_216 = arith.constant 0 : index
      %c0_217 = arith.constant 0 : index
      %435 = vector.load %arg19[%c0_216, %c0_217] : memref<1x32xf32, #tpu.memory_space<vmem>>, vector<1x32xf32>
      %cst_218 = arith.constant dense<0.000000e+00> : vector<13xf32>
      %436 = vector.multi_reduction <add>, %433, %cst_218 [1] : vector<13x32xf32> to vector<13xf32>
      %437 = vector.shape_cast %436 : vector<13xf32> to vector<13x1xf32>
      %cst_219 = arith.constant 3.200000e+01 : f32
      %438 = vector.broadcast %cst_219 : f32 to vector<13x1xf32>
      %439 = arith.divf %437, %438 : vector<13x1xf32>
      %440 = vector.broadcast %439 : vector<13x1xf32> to vector<13x32xf32>
      %441 = arith.subf %433, %440 : vector<13x32xf32>
      %442 = arith.mulf %441, %441 : vector<13x32xf32>
      %cst_220 = arith.constant dense<0.000000e+00> : vector<13xf32>
      %443 = vector.multi_reduction <add>, %442, %cst_220 [1] : vector<13x32xf32> to vector<13xf32>
      %444 = vector.shape_cast %443 : vector<13xf32> to vector<13x1xf32>
      %cst_221 = arith.constant 3.200000e+01 : f32
      %445 = vector.broadcast %cst_221 : f32 to vector<13x1xf32>
      %446 = arith.divf %444, %445 : vector<13x1xf32>
      %cst_222 = arith.constant 9.99999974E-6 : f32
      %447 = vector.broadcast %cst_222 : f32 to vector<13x1xf32>
      %448 = arith.addf %446, %447 : vector<13x1xf32>
      %449 = math.rsqrt %448 : vector<13x1xf32>
      %450 = vector.broadcast %449 : vector<13x1xf32> to vector<13x32xf32>
      %451 = arith.mulf %441, %450 : vector<13x32xf32>
      %452 = vector.broadcast %434 : vector<1x32xf32> to vector<13x32xf32>
      %453 = arith.mulf %451, %452 : vector<13x32xf32>
      %454 = vector.broadcast %435 : vector<1x32xf32> to vector<13x32xf32>
      %455 = arith.addf %453, %454 : vector<13x32xf32>
      %456 = arith.truncf %455 : vector<13x32xf32> to vector<13x32xbf16>
      %c0_223 = arith.constant 0 : index
      %c0_224 = arith.constant 0 : index
      %457 = vector.load %arg20[%c0_223, %c0_224] : memref<32x32xbf16, #tpu.memory_space<vmem>>, vector<32x32xbf16>
      %cst_225 = arith.constant dense<0.000000e+00> : vector<13x32xf32>
      %458 = tpu.matmul %456, %457, %cst_225 {dimension_numbers = #tpu.dot_dimension_numbers<[1], [0], [0], [1], [0, 0, 1, 1], [], []>} : vector<13x32xbf16>, vector<32x32xbf16>, vector<13x32xf32> -> vector<13x32xf32>
      %c0_226 = arith.constant 0 : index
      %c0_227 = arith.constant 0 : index
      %459 = vector.load %arg21[%c0_226, %c0_227] : memref<1x32xf32, #tpu.memory_space<vmem>>, vector<1x32xf32>
      %460 = vector.broadcast %459 : vector<1x32xf32> to vector<13x32xf32>
      %461 = arith.addf %458, %460 : vector<13x32xf32>
      %462 = arith.truncf %461 : vector<13x32xf32> to vector<13x32xbf16>
      %c0_228 = arith.constant 0 : index
      %c0_229 = arith.constant 0 : index
      %c0_230 = arith.constant 0 : index
      %463 = vector.load %arg22[%c0_228, %c0_229, %c0_230] : memref<2x13x32xbf16, #tpu.memory_space<vmem>>, vector<1x13x32xbf16>
      %464 = vector.shape_cast %463 : vector<1x13x32xbf16> to vector<13x32xbf16>
      %465 = vector.shape_cast %462 : vector<13x32xbf16> to vector<1x13x32xbf16>
      tpu.vector_store %arg22[%c0_228, %c0_229, %c0_230], %465 {strides = array<i32>} : memref<2x13x32xbf16, #tpu.memory_space<vmem>>, vector<1x13x32xbf16>,
      %c1_231 = arith.constant 1 : index
      %c0_232 = arith.constant 0 : index
      %c0_233 = arith.constant 0 : index
      %466 = vector.load %arg23[%c1_231, %c0_232, %c0_233] : memref<2x13x32xf32, #tpu.memory_space<vmem>>, vector<1x13x32xf32>
      %467 = vector.shape_cast %466 : vector<1x13x32xf32> to vector<13x32xf32>
      %c0_234 = arith.constant 0 : index
      %c0_235 = arith.constant 0 : index
      %468 = vector.load %arg18[%c0_234, %c0_235] : memref<1x32xf32, #tpu.memory_space<vmem>>, vector<1x32xf32>
      %c0_236 = arith.constant 0 : index
      %c0_237 = arith.constant 0 : index
      %469 = vector.load %arg19[%c0_236, %c0_237] : memref<1x32xf32, #tpu.memory_space<vmem>>, vector<1x32xf32>
      %cst_238 = arith.constant dense<0.000000e+00> : vector<13xf32>
      %470 = vector.multi_reduction <add>, %467, %cst_238 [1] : vector<13x32xf32> to vector<13xf32>
      %471 = vector.shape_cast %470 : vector<13xf32> to vector<13x1xf32>
      %cst_239 = arith.constant 3.200000e+01 : f32
      %472 = vector.broadcast %cst_239 : f32 to vector<13x1xf32>
      %473 = arith.divf %471, %472 : vector<13x1xf32>
      %474 = vector.broadcast %473 : vector<13x1xf32> to vector<13x32xf32>
      %475 = arith.subf %467, %474 : vector<13x32xf32>
      %476 = arith.mulf %475, %475 : vector<13x32xf32>
      %cst_240 = arith.constant dense<0.000000e+00> : vector<13xf32>
      %477 = vector.multi_reduction <add>, %476, %cst_240 [1] : vector<13x32xf32> to vector<13xf32>
      %478 = vector.shape_cast %477 : vector<13xf32> to vector<13x1xf32>
      %cst_241 = arith.constant 3.200000e+01 : f32
      %479 = vector.broadcast %cst_241 : f32 to vector<13x1xf32>
      %480 = arith.divf %478, %479 : vector<13x1xf32>
      %cst_242 = arith.constant 9.99999974E-6 : f32
      %481 = vector.broadcast %cst_242 : f32 to vector<13x1xf32>
      %482 = arith.addf %480, %481 : vector<13x1xf32>
      %483 = math.rsqrt %482 : vector<13x1xf32>
      %484 = vector.broadcast %483 : vector<13x1xf32> to vector<13x32xf32>
      %485 = arith.mulf %475, %484 : vector<13x32xf32>
      %486 = vector.broadcast %468 : vector<1x32xf32> to vector<13x32xf32>
      %487 = arith.mulf %485, %486 : vector<13x32xf32>
      %488 = vector.broadcast %469 : vector<1x32xf32> to vector<13x32xf32>
      %489 = arith.addf %487, %488 : vector<13x32xf32>
      %490 = arith.truncf %489 : vector<13x32xf32> to vector<13x32xbf16>
      %c0_243 = arith.constant 0 : index
      %c0_244 = arith.constant 0 : index
      %491 = vector.load %arg20[%c0_243, %c0_244] : memref<32x32xbf16, #tpu.memory_space<vmem>>, vector<32x32xbf16>
      %cst_245 = arith.constant dense<0.000000e+00> : vector<13x32xf32>
      %492 = tpu.matmul %490, %491, %cst_245 {dimension_numbers = #tpu.dot_dimension_numbers<[1], [0], [0], [1], [0, 0, 1, 1], [], []>} : vector<13x32xbf16>, vector<32x32xbf16>, vector<13x32xf32> -> vector<13x32xf32>
      %c0_246 = arith.constant 0 : index
      %c0_247 = arith.constant 0 : index
      %493 = vector.load %arg21[%c0_246, %c0_247] : memref<1x32xf32, #tpu.memory_space<vmem>>, vector<1x32xf32>
      %494 = vector.broadcast %493 : vector<1x32xf32> to vector<13x32xf32>
      %495 = arith.addf %492, %494 : vector<13x32xf32>
      %496 = arith.truncf %495 : vector<13x32xf32> to vector<13x32xbf16>
      %c1_248 = arith.constant 1 : index
      %c0_249 = arith.constant 0 : index
      %c0_250 = arith.constant 0 : index
      %497 = vector.load %arg22[%c1_248, %c0_249, %c0_250] : memref<2x13x32xbf16, #tpu.memory_space<vmem>>, vector<1x13x32xbf16>
      %498 = vector.shape_cast %497 : vector<1x13x32xbf16> to vector<13x32xbf16>
      %499 = vector.shape_cast %496 : vector<13x32xbf16> to vector<1x13x32xbf16>
      tpu.vector_store %arg22[%c1_248, %c0_249, %c0_250], %499 {strides = array<i32>} : memref<2x13x32xbf16, #tpu.memory_space<vmem>>, vector<1x13x32xbf16>,
    } else {
    }
    return
  }
  func.func @transform_0(%arg0: i32) -> (i32, i32, i32) {
    %c0_i32 = arith.constant 0 : i32
    %c0_i32_0 = arith.constant 0 : i32
    %c0_i32_1 = arith.constant 0 : i32
    %c0_i32_2 = arith.constant 0 : i32
    return %c0_i32, %c0_i32_0, %c0_i32_1 : i32, i32, i32
  }
  func.func @transform_1(%arg0: i32) -> (i32, i32, i32) {
    %c0_i32 = arith.constant 0 : i32
    %c0_i32_0 = arith.constant 0 : i32
    %c0_i32_1 = arith.constant 0 : i32
    return %arg0, %c0_i32, %c0_i32_0 : i32, i32, i32
  }
  func.func @transform_2(%arg0: i32) -> (i32, i32, i32) {
    %c0_i32 = arith.constant 0 : i32
    %c0_i32_0 = arith.constant 0 : i32
    %c0_i32_1 = arith.constant 0 : i32
    return %arg0, %c0_i32, %c0_i32_0 : i32, i32, i32
  }
  func.func @transform_3(%arg0: i32) -> (i32, i32, i32) {
    %c0_i32 = arith.constant 0 : i32
    %c0_i32_0 = arith.constant 0 : i32
    %c0_i32_1 = arith.constant 0 : i32
    return %arg0, %c0_i32, %c0_i32_0 : i32, i32, i32
  }
  func.func @transform_4(%arg0: i32) -> (i32, i32, i32) {
    %c0_i32 = arith.constant 0 : i32
    %c0_i32_0 = arith.constant 0 : i32
    %c0_i32_1 = arith.constant 0 : i32
    return %arg0, %c0_i32, %c0_i32_0 : i32, i32, i32
  }
  func.func @transform_5(%arg0: i32) -> (i32, i32, i32) {
    %c0_i32 = arith.constant 0 : i32
    %c0_i32_0 = arith.constant 0 : i32
    %c0_i32_1 = arith.constant 0 : i32
    return %arg0, %c0_i32, %c0_i32_0 : i32, i32, i32
  }
  func.func @transform_6(%arg0: i32) -> (i32, i32, i32) {
    %c0_i32 = arith.constant 0 : i32
    %c0_i32_0 = arith.constant 0 : i32
    %c0_i32_1 = arith.constant 0 : i32
    return %arg0, %c0_i32, %c0_i32_0 : i32, i32, i32
  }
  func.func @transform_7(%arg0: i32) -> (i32, i32, i32) {
    %c0_i32 = arith.constant 0 : i32
    %c0_i32_0 = arith.constant 0 : i32
    %c0_i32_1 = arith.constant 0 : i32
    return %arg0, %c0_i32, %c0_i32_0 : i32, i32, i32
  }
  func.func @transform_8(%arg0: i32) -> (i32, i32, i32) {
    %c0_i32 = arith.constant 0 : i32
    %c0_i32_0 = arith.constant 0 : i32
    %c0_i32_1 = arith.constant 0 : i32
    return %arg0, %c0_i32, %c0_i32_0 : i32, i32, i32
  }
  func.func @transform_9(%arg0: i32) -> (i32, i32, i32) {
    %c0_i32 = arith.constant 0 : i32
    %c0_i32_0 = arith.constant 0 : i32
    %c0_i32_1 = arith.constant 0 : i32
    return %arg0, %c0_i32, %c0_i32_0 : i32, i32, i32
  }
  func.func @transform_10(%arg0: i32) -> (i32, i32, i32) {
    %c0_i32 = arith.constant 0 : i32
    %c0_i32_0 = arith.constant 0 : i32
    %c0_i32_1 = arith.constant 0 : i32
    return %arg0, %c0_i32, %c0_i32_0 : i32, i32, i32
  }
  func.func @transform_11(%arg0: i32) -> (i32, i32, i32) {
    %c0_i32 = arith.constant 0 : i32
    %c0_i32_0 = arith.constant 0 : i32
    %c0_i32_1 = arith.constant 0 : i32
    return %arg0, %c0_i32, %c0_i32_0 : i32, i32, i32
  }
  func.func @transform_12(%arg0: i32) -> (i32, i32, i32) {
    %c0_i32 = arith.constant 0 : i32
    %c0_i32_0 = arith.constant 0 : i32
    %c0_i32_1 = arith.constant 0 : i32
    return %arg0, %c0_i32, %c0_i32_0 : i32, i32, i32
  }
  func.func @transform_13(%arg0: i32) -> (i32, i32, i32) {
    %c0_i32 = arith.constant 0 : i32
    %c0_i32_0 = arith.constant 0 : i32
    %c0_i32_1 = arith.constant 0 : i32
    return %arg0, %c0_i32, %c0_i32_0 : i32, i32, i32
  }
  func.func @transform_14(%arg0: i32) -> (i32, i32, i32) {
    %c0_i32 = arith.constant 0 : i32
    %c0_i32_0 = arith.constant 0 : i32
    %c0_i32_1 = arith.constant 0 : i32
    return %arg0, %c0_i32, %c0_i32_0 : i32, i32, i32
  }
  func.func @transform_15(%arg0: i32) -> (i32, i32, i32) {
    %c0_i32 = arith.constant 0 : i32
    %c0_i32_0 = arith.constant 0 : i32
    %c0_i32_1 = arith.constant 0 : i32
    return %arg0, %c0_i32, %c0_i32_0 : i32, i32, i32
  }
  func.func @transform_16(%arg0: i32) -> (i32, i32, i32) {
    %c0_i32 = arith.constant 0 : i32
    %c0_i32_0 = arith.constant 0 : i32
    %c0_i32_1 = arith.constant 0 : i32
    return %arg0, %c0_i32, %c0_i32_0 : i32, i32, i32
  }
  func.func @transform_17(%arg0: i32) -> (i32, i32) {
    %c0_i32 = arith.constant 0 : i32
    %c0_i32_0 = arith.constant 0 : i32
    %c0_i32_1 = arith.constant 0 : i32
    return %c0_i32, %c0_i32_0 : i32, i32
  }
  func.func @transform_18(%arg0: i32) -> (i32, i32) {
    %c0_i32 = arith.constant 0 : i32
    %c0_i32_0 = arith.constant 0 : i32
    %c0_i32_1 = arith.constant 0 : i32
    return %c0_i32, %c0_i32_0 : i32, i32
  }
  func.func @transform_19(%arg0: i32) -> (i32, i32) {
    %c0_i32 = arith.constant 0 : i32
    %c0_i32_0 = arith.constant 0 : i32
    %c0_i32_1 = arith.constant 0 : i32
    return %c0_i32, %c0_i32_0 : i32, i32
  }
  func.func @transform_20(%arg0: i32) -> (i32, i32) {
    %c0_i32 = arith.constant 0 : i32
    %c0_i32_0 = arith.constant 0 : i32
    %c0_i32_1 = arith.constant 0 : i32
    return %c0_i32, %c0_i32_0 : i32, i32
  }
  func.func @transform_21(%arg0: i32) -> (i32, i32, i32) {
    %c0_i32 = arith.constant 0 : i32
    %c0_i32_0 = arith.constant 0 : i32
    %c0_i32_1 = arith.constant 0 : i32
    %c0_i32_2 = arith.constant 0 : i32
    return %c0_i32, %c0_i32_0, %c0_i32_1 : i32, i32, i32
  }
}

module attributes {stable_mosaic.version = 11 : i64} {
  func.func @kernel(%arg0: i32, %arg1: memref<2x17x32xbf16, #tpu.memory_space<vmem>>, %arg2: memref<1x17x32xf32, #tpu.memory_space<vmem>>, %arg3: memref<1x1x32xf32, #tpu.memory_space<vmem>>, %arg4: memref<1x1x32xf32, #tpu.memory_space<vmem>>, %arg5: memref<1x32x32xbf16, #tpu.memory_space<vmem>>, %arg6: memref<1x1x32xf32, #tpu.memory_space<vmem>>, %arg7: memref<1x32x32xbf16, #tpu.memory_space<vmem>>, %arg8: memref<1x1x32xf32, #tpu.memory_space<vmem>>, %arg9: memref<1x32x32xbf16, #tpu.memory_space<vmem>>, %arg10: memref<1x1x32xf32, #tpu.memory_space<vmem>>, %arg11: memref<1x32x32xbf16, #tpu.memory_space<vmem>>, %arg12: memref<1x1x32xf32, #tpu.memory_space<vmem>>, %arg13: memref<1x1x32xf32, #tpu.memory_space<vmem>>, %arg14: memref<1x1x32xf32, #tpu.memory_space<vmem>>, %arg15: memref<1x32x128xbf16, #tpu.memory_space<vmem>>, %arg16: memref<1x1x128xf32, #tpu.memory_space<vmem>>, %arg17: memref<1x128x32xbf16, #tpu.memory_space<vmem>>, %arg18: memref<1x1x32xf32, #tpu.memory_space<vmem>>, %arg19: memref<1x32xf32, #tpu.memory_space<vmem>>, %arg20: memref<1x32xf32, #tpu.memory_space<vmem>>, %arg21: memref<32x16xbf16, #tpu.memory_space<vmem>>, %arg22: memref<1x16xf32, #tpu.memory_space<vmem>>, %arg23: memref<2x17x16xf32, #tpu.memory_space<vmem>>, %arg24: memref<2x17x32xf32, #tpu.memory_space<vmem>>) attributes {dimension_semantics = [#tpu.dimension_semantics<arbitrary>], iteration_bounds = array<i64: 2>, scalar_prefetch = 0 : i64, scratch_operands = 1 : i64, tpu.core_type = #tpu.core_type<tc>, window_params = [{pipeline_mode = #tpu.pipeline_mode<synchronous>, transform_indices = @transform_0, window_bounds = array<i64: 2, 17, 32>}, {pipeline_mode = #tpu.pipeline_mode<synchronous>, transform_indices = @transform_1, window_bounds = array<i64: 1, 17, 32>}, {transform_indices = @transform_2, window_bounds = array<i64: 1, 1, 32>}, {transform_indices = @transform_3, window_bounds = array<i64: 1, 1, 32>}, {transform_indices = @transform_4, window_bounds = array<i64: 1, 32, 32>}, {transform_indices = @transform_5, window_bounds = array<i64: 1, 1, 32>}, {transform_indices = @transform_6, window_bounds = array<i64: 1, 32, 32>}, {transform_indices = @transform_7, window_bounds = array<i64: 1, 1, 32>}, {transform_indices = @transform_8, window_bounds = array<i64: 1, 32, 32>}, {transform_indices = @transform_9, window_bounds = array<i64: 1, 1, 32>}, {transform_indices = @transform_10, window_bounds = array<i64: 1, 32, 32>}, {transform_indices = @transform_11, window_bounds = array<i64: 1, 1, 32>}, {transform_indices = @transform_12, window_bounds = array<i64: 1, 1, 32>}, {transform_indices = @transform_13, window_bounds = array<i64: 1, 1, 32>}, {transform_indices = @transform_14, window_bounds = array<i64: 1, 32, 128>}, {transform_indices = @transform_15, window_bounds = array<i64: 1, 1, 128>}, {transform_indices = @transform_16, window_bounds = array<i64: 1, 128, 32>}, {transform_indices = @transform_17, window_bounds = array<i64: 1, 1, 32>}, {pipeline_mode = #tpu.pipeline_mode<synchronous>, transform_indices = @transform_18, window_bounds = array<i64: 1, 32>}, {pipeline_mode = #tpu.pipeline_mode<synchronous>, transform_indices = @transform_19, window_bounds = array<i64: 1, 32>}, {pipeline_mode = #tpu.pipeline_mode<synchronous>, transform_indices = @transform_20, window_bounds = array<i64: 32, 16>}, {pipeline_mode = #tpu.pipeline_mode<synchronous>, transform_indices = @transform_21, window_bounds = array<i64: 1, 16>}, {pipeline_mode = #tpu.pipeline_mode<synchronous>, transform_indices = @transform_22, window_bounds = array<i64: 2, 17, 16>}]} {
    %c0_i32 = arith.constant 0 : i32
    %0 = arith.cmpi eq, %arg0, %c0_i32 : i32
    %1 = arith.extui %0 : i1 to i32
    %c0_i32_0 = arith.constant 0 : i32
    %2 = arith.cmpi ne, %1, %c0_i32_0 : i32
    scf.if %2 {
      %c0_211 = arith.constant 0 : index
      %c0_212 = arith.constant 0 : index
      %c0_213 = arith.constant 0 : index
      %432 = vector.load %arg1[%c0_211, %c0_212, %c0_213] : memref<2x17x32xbf16, #tpu.memory_space<vmem>>, vector<2x17x32xbf16>
      %433 = arith.extf %432 : vector<2x17x32xbf16> to vector<2x17x32xf32>
      %c0_214 = arith.constant 0 : index
      %c0_215 = arith.constant 0 : index
      %c0_216 = arith.constant 0 : index
      %434 = vector.load %arg2[%c0_214, %c0_215, %c0_216] : memref<1x17x32xf32, #tpu.memory_space<vmem>>, vector<1x17x32xf32>
      %435 = vector.broadcast %434 : vector<1x17x32xf32> to vector<2x17x32xf32>
      %436 = arith.addf %433, %435 : vector<2x17x32xf32>
      %c0_217 = arith.constant 0 : index
      %c0_218 = arith.constant 0 : index
      %c0_219 = arith.constant 0 : index
      %437 = vector.load %arg24[%c0_217, %c0_218, %c0_219] : memref<2x17x32xf32, #tpu.memory_space<vmem>>, vector<2x17x32xf32>
      tpu.vector_store %arg24[%c0_217, %c0_218, %c0_219], %436 {strides = array<i32>} : memref<2x17x32xf32, #tpu.memory_space<vmem>>, vector<2x17x32xf32>,
    } else {
    }
    %c0 = arith.constant 0 : index
    %c0_1 = arith.constant 0 : index
    %c0_2 = arith.constant 0 : index
    %3 = vector.load %arg24[%c0, %c0_1, %c0_2] : memref<2x17x32xf32, #tpu.memory_space<vmem>>, vector<1x17x32xf32>
    %4 = vector.shape_cast %3 : vector<1x17x32xf32> to vector<17x32xf32>
    %c0_3 = arith.constant 0 : index
    %c0_4 = arith.constant 0 : index
    %c0_5 = arith.constant 0 : index
    %5 = vector.load %arg3[%c0_3, %c0_4, %c0_5] : memref<1x1x32xf32, #tpu.memory_space<vmem>>, vector<1x1x32xf32>
    %6 = vector.shape_cast %5 : vector<1x1x32xf32> to vector<1x32xf32>
    %c0_6 = arith.constant 0 : index
    %c0_7 = arith.constant 0 : index
    %c0_8 = arith.constant 0 : index
    %7 = vector.load %arg4[%c0_6, %c0_7, %c0_8] : memref<1x1x32xf32, #tpu.memory_space<vmem>>, vector<1x1x32xf32>
    %8 = vector.shape_cast %7 : vector<1x1x32xf32> to vector<1x32xf32>
    %cst = arith.constant dense<0.000000e+00> : vector<17xf32>
    %9 = vector.multi_reduction <add>, %4, %cst [1] : vector<17x32xf32> to vector<17xf32>
    %10 = vector.shape_cast %9 : vector<17xf32> to vector<17x1xf32>
    %cst_9 = arith.constant 3.200000e+01 : f32
    %11 = vector.broadcast %cst_9 : f32 to vector<17x1xf32>
    %12 = arith.divf %10, %11 : vector<17x1xf32>
    %13 = vector.broadcast %12 : vector<17x1xf32> to vector<17x32xf32>
    %14 = arith.subf %4, %13 : vector<17x32xf32>
    %15 = arith.mulf %14, %14 : vector<17x32xf32>
    %cst_10 = arith.constant dense<0.000000e+00> : vector<17xf32>
    %16 = vector.multi_reduction <add>, %15, %cst_10 [1] : vector<17x32xf32> to vector<17xf32>
    %17 = vector.shape_cast %16 : vector<17xf32> to vector<17x1xf32>
    %cst_11 = arith.constant 3.200000e+01 : f32
    %18 = vector.broadcast %cst_11 : f32 to vector<17x1xf32>
    %19 = arith.divf %17, %18 : vector<17x1xf32>
    %cst_12 = arith.constant 9.99999974E-6 : f32
    %20 = vector.broadcast %cst_12 : f32 to vector<17x1xf32>
    %21 = arith.addf %19, %20 : vector<17x1xf32>
    %22 = math.rsqrt %21 : vector<17x1xf32>
    %23 = vector.broadcast %22 : vector<17x1xf32> to vector<17x32xf32>
    %24 = arith.mulf %14, %23 : vector<17x32xf32>
    %25 = vector.broadcast %6 : vector<1x32xf32> to vector<17x32xf32>
    %26 = arith.mulf %24, %25 : vector<17x32xf32>
    %27 = vector.broadcast %8 : vector<1x32xf32> to vector<17x32xf32>
    %28 = arith.addf %26, %27 : vector<17x32xf32>
    %29 = arith.truncf %28 : vector<17x32xf32> to vector<17x32xbf16>
    %c0_13 = arith.constant 0 : index
    %c0_14 = arith.constant 0 : index
    %c0_15 = arith.constant 0 : index
    %30 = vector.load %arg5[%c0_13, %c0_14, %c0_15] : memref<1x32x32xbf16, #tpu.memory_space<vmem>>, vector<1x32x32xbf16>
    %31 = vector.shape_cast %30 : vector<1x32x32xbf16> to vector<32x32xbf16>
    %cst_16 = arith.constant dense<0.000000e+00> : vector<17x32xf32>
    %32 = tpu.matmul %29, %31, %cst_16 {dimension_numbers = #tpu.dot_dimension_numbers<[1], [0], [0], [1], [0, 0, 1, 1], [], []>} : vector<17x32xbf16>, vector<32x32xbf16>, vector<17x32xf32> -> vector<17x32xf32>
    %c0_17 = arith.constant 0 : index
    %c0_18 = arith.constant 0 : index
    %c0_19 = arith.constant 0 : index
    %33 = vector.load %arg6[%c0_17, %c0_18, %c0_19] : memref<1x1x32xf32, #tpu.memory_space<vmem>>, vector<1x1x32xf32>
    %34 = vector.shape_cast %33 : vector<1x1x32xf32> to vector<1x32xf32>
    %35 = vector.broadcast %34 : vector<1x32xf32> to vector<17x32xf32>
    %36 = arith.addf %32, %35 : vector<17x32xf32>
    %c0_20 = arith.constant 0 : index
    %c0_21 = arith.constant 0 : index
    %c0_22 = arith.constant 0 : index
    %37 = vector.load %arg7[%c0_20, %c0_21, %c0_22] : memref<1x32x32xbf16, #tpu.memory_space<vmem>>, vector<1x32x32xbf16>
    %38 = vector.shape_cast %37 : vector<1x32x32xbf16> to vector<32x32xbf16>
    %cst_23 = arith.constant dense<0.000000e+00> : vector<17x32xf32>
    %39 = tpu.matmul %29, %38, %cst_23 {dimension_numbers = #tpu.dot_dimension_numbers<[1], [0], [0], [1], [0, 0, 1, 1], [], []>} : vector<17x32xbf16>, vector<32x32xbf16>, vector<17x32xf32> -> vector<17x32xf32>
    %c0_24 = arith.constant 0 : index
    %c0_25 = arith.constant 0 : index
    %c0_26 = arith.constant 0 : index
    %40 = vector.load %arg8[%c0_24, %c0_25, %c0_26] : memref<1x1x32xf32, #tpu.memory_space<vmem>>, vector<1x1x32xf32>
    %41 = vector.shape_cast %40 : vector<1x1x32xf32> to vector<1x32xf32>
    %42 = vector.broadcast %41 : vector<1x32xf32> to vector<17x32xf32>
    %43 = arith.addf %39, %42 : vector<17x32xf32>
    %c0_27 = arith.constant 0 : index
    %c0_28 = arith.constant 0 : index
    %c0_29 = arith.constant 0 : index
    %44 = vector.load %arg9[%c0_27, %c0_28, %c0_29] : memref<1x32x32xbf16, #tpu.memory_space<vmem>>, vector<1x32x32xbf16>
    %45 = vector.shape_cast %44 : vector<1x32x32xbf16> to vector<32x32xbf16>
    %cst_30 = arith.constant dense<0.000000e+00> : vector<17x32xf32>
    %46 = tpu.matmul %29, %45, %cst_30 {dimension_numbers = #tpu.dot_dimension_numbers<[1], [0], [0], [1], [0, 0, 1, 1], [], []>} : vector<17x32xbf16>, vector<32x32xbf16>, vector<17x32xf32> -> vector<17x32xf32>
    %c0_31 = arith.constant 0 : index
    %c0_32 = arith.constant 0 : index
    %c0_33 = arith.constant 0 : index
    %47 = vector.load %arg10[%c0_31, %c0_32, %c0_33] : memref<1x1x32xf32, #tpu.memory_space<vmem>>, vector<1x1x32xf32>
    %48 = vector.shape_cast %47 : vector<1x1x32xf32> to vector<1x32xf32>
    %49 = vector.broadcast %48 : vector<1x32xf32> to vector<17x32xf32>
    %50 = arith.addf %46, %49 : vector<17x32xf32>
    %51 = vector.extract_strided_slice %36 {offsets = [0, 0], sizes = [17, 8], strides = [1, 1]} : vector<17x32xf32> to vector<17x8xf32>
    %cst_34 = arith.constant 0.353553385 : f32
    %52 = vector.broadcast %cst_34 : f32 to vector<17x8xf32>
    %53 = arith.mulf %51, %52 : vector<17x8xf32>
    %54 = arith.truncf %53 : vector<17x8xf32> to vector<17x8xbf16>
    %55 = vector.extract_strided_slice %43 {offsets = [0, 0], sizes = [17, 8], strides = [1, 1]} : vector<17x32xf32> to vector<17x8xf32>
    %56 = arith.truncf %55 : vector<17x8xf32> to vector<17x8xbf16>
    %57 = vector.extract_strided_slice %50 {offsets = [0, 0], sizes = [17, 8], strides = [1, 1]} : vector<17x32xf32> to vector<17x8xf32>
    %58 = arith.truncf %57 : vector<17x8xf32> to vector<17x8xbf16>
    %cst_35 = arith.constant dense<0.000000e+00> : vector<17x17xf32>
    %59 = tpu.matmul %54, %56, %cst_35 {dimension_numbers = #tpu.dot_dimension_numbers<[1], [1], [0], [0], [0, 0, 1, 0], [], []>} : vector<17x8xbf16>, vector<17x8xbf16>, vector<17x17xf32> -> vector<17x17xf32>
    %cst_36 = arith.constant dense<0xFF800000> : vector<17xf32>
    %60 = vector.multi_reduction <maximumf>, %59, %cst_36 [1] : vector<17x17xf32> to vector<17xf32>
    %61 = vector.shape_cast %60 : vector<17xf32> to vector<17x1xf32>
    %62 = vector.broadcast %61 : vector<17x1xf32> to vector<17x17xf32>
    %63 = arith.subf %59, %62 : vector<17x17xf32>
    %64 = math.exp %63 : vector<17x17xf32>
    %cst_37 = arith.constant dense<0.000000e+00> : vector<17xf32>
    %65 = vector.multi_reduction <add>, %64, %cst_37 [1] : vector<17x17xf32> to vector<17xf32>
    %66 = vector.shape_cast %65 : vector<17xf32> to vector<17x1xf32>
    %67 = vector.broadcast %66 : vector<17x1xf32> to vector<17x17xf32>
    %68 = arith.divf %64, %67 : vector<17x17xf32>
    %69 = arith.truncf %68 : vector<17x17xf32> to vector<17x17xbf16>
    %cst_38 = arith.constant dense<0.000000e+00> : vector<17x8xf32>
    %70 = tpu.matmul %69, %58, %cst_38 {dimension_numbers = #tpu.dot_dimension_numbers<[1], [0], [0], [1], [0, 0, 1, 1], [], []>} : vector<17x17xbf16>, vector<17x8xbf16>, vector<17x8xf32> -> vector<17x8xf32>
    %71 = arith.truncf %70 : vector<17x8xf32> to vector<17x8xbf16>
    %c0_39 = arith.constant 0 : index
    %c0_40 = arith.constant 0 : index
    %c0_41 = arith.constant 0 : index
    %72 = vector.load %arg11[%c0_39, %c0_40, %c0_41] : memref<1x32x32xbf16, #tpu.memory_space<vmem>>, vector<1x32x32xbf16>
    %73 = vector.shape_cast %72 : vector<1x32x32xbf16> to vector<32x32xbf16>
    %74 = vector.extract_strided_slice %73 {offsets = [0, 0], sizes = [8, 32], strides = [1, 1]} : vector<32x32xbf16> to vector<8x32xbf16>
    %cst_42 = arith.constant dense<0.000000e+00> : vector<17x32xf32>
    %75 = tpu.matmul %71, %74, %cst_42 {dimension_numbers = #tpu.dot_dimension_numbers<[1], [0], [0], [1], [0, 0, 1, 1], [], []>} : vector<17x8xbf16>, vector<8x32xbf16>, vector<17x32xf32> -> vector<17x32xf32>
    %76 = arith.addf %4, %75 : vector<17x32xf32>
    %77 = vector.extract_strided_slice %36 {offsets = [0, 8], sizes = [17, 8], strides = [1, 1]} : vector<17x32xf32> to vector<17x8xf32>
    %cst_43 = arith.constant 0.353553385 : f32
    %78 = vector.broadcast %cst_43 : f32 to vector<17x8xf32>
    %79 = arith.mulf %77, %78 : vector<17x8xf32>
    %80 = arith.truncf %79 : vector<17x8xf32> to vector<17x8xbf16>
    %81 = vector.extract_strided_slice %43 {offsets = [0, 8], sizes = [17, 8], strides = [1, 1]} : vector<17x32xf32> to vector<17x8xf32>
    %82 = arith.truncf %81 : vector<17x8xf32> to vector<17x8xbf16>
    %83 = vector.extract_strided_slice %50 {offsets = [0, 8], sizes = [17, 8], strides = [1, 1]} : vector<17x32xf32> to vector<17x8xf32>
    %84 = arith.truncf %83 : vector<17x8xf32> to vector<17x8xbf16>
    %cst_44 = arith.constant dense<0.000000e+00> : vector<17x17xf32>
    %85 = tpu.matmul %80, %82, %cst_44 {dimension_numbers = #tpu.dot_dimension_numbers<[1], [1], [0], [0], [0, 0, 1, 0], [], []>} : vector<17x8xbf16>, vector<17x8xbf16>, vector<17x17xf32> -> vector<17x17xf32>
    %cst_45 = arith.constant dense<0xFF800000> : vector<17xf32>
    %86 = vector.multi_reduction <maximumf>, %85, %cst_45 [1] : vector<17x17xf32> to vector<17xf32>
    %87 = vector.shape_cast %86 : vector<17xf32> to vector<17x1xf32>
    %88 = vector.broadcast %87 : vector<17x1xf32> to vector<17x17xf32>
    %89 = arith.subf %85, %88 : vector<17x17xf32>
    %90 = math.exp %89 : vector<17x17xf32>
    %cst_46 = arith.constant dense<0.000000e+00> : vector<17xf32>
    %91 = vector.multi_reduction <add>, %90, %cst_46 [1] : vector<17x17xf32> to vector<17xf32>
    %92 = vector.shape_cast %91 : vector<17xf32> to vector<17x1xf32>
    %93 = vector.broadcast %92 : vector<17x1xf32> to vector<17x17xf32>
    %94 = arith.divf %90, %93 : vector<17x17xf32>
    %95 = arith.truncf %94 : vector<17x17xf32> to vector<17x17xbf16>
    %cst_47 = arith.constant dense<0.000000e+00> : vector<17x8xf32>
    %96 = tpu.matmul %95, %84, %cst_47 {dimension_numbers = #tpu.dot_dimension_numbers<[1], [0], [0], [1], [0, 0, 1, 1], [], []>} : vector<17x17xbf16>, vector<17x8xbf16>, vector<17x8xf32> -> vector<17x8xf32>
    %97 = arith.truncf %96 : vector<17x8xf32> to vector<17x8xbf16>
    %c0_48 = arith.constant 0 : index
    %c0_49 = arith.constant 0 : index
    %c0_50 = arith.constant 0 : index
    %98 = vector.load %arg11[%c0_48, %c0_49, %c0_50] : memref<1x32x32xbf16, #tpu.memory_space<vmem>>, vector<1x32x32xbf16>
    %99 = vector.shape_cast %98 : vector<1x32x32xbf16> to vector<32x32xbf16>
    %100 = vector.extract_strided_slice %99 {offsets = [8, 0], sizes = [8, 32], strides = [1, 1]} : vector<32x32xbf16> to vector<8x32xbf16>
    %cst_51 = arith.constant dense<0.000000e+00> : vector<17x32xf32>
    %101 = tpu.matmul %97, %100, %cst_51 {dimension_numbers = #tpu.dot_dimension_numbers<[1], [0], [0], [1], [0, 0, 1, 1], [], []>} : vector<17x8xbf16>, vector<8x32xbf16>, vector<17x32xf32> -> vector<17x32xf32>
    %102 = arith.addf %76, %101 : vector<17x32xf32>
    %103 = vector.extract_strided_slice %36 {offsets = [0, 16], sizes = [17, 8], strides = [1, 1]} : vector<17x32xf32> to vector<17x8xf32>
    %cst_52 = arith.constant 0.353553385 : f32
    %104 = vector.broadcast %cst_52 : f32 to vector<17x8xf32>
    %105 = arith.mulf %103, %104 : vector<17x8xf32>
    %106 = arith.truncf %105 : vector<17x8xf32> to vector<17x8xbf16>
    %107 = vector.extract_strided_slice %43 {offsets = [0, 16], sizes = [17, 8], strides = [1, 1]} : vector<17x32xf32> to vector<17x8xf32>
    %108 = arith.truncf %107 : vector<17x8xf32> to vector<17x8xbf16>
    %109 = vector.extract_strided_slice %50 {offsets = [0, 16], sizes = [17, 8], strides = [1, 1]} : vector<17x32xf32> to vector<17x8xf32>
    %110 = arith.truncf %109 : vector<17x8xf32> to vector<17x8xbf16>
    %cst_53 = arith.constant dense<0.000000e+00> : vector<17x17xf32>
    %111 = tpu.matmul %106, %108, %cst_53 {dimension_numbers = #tpu.dot_dimension_numbers<[1], [1], [0], [0], [0, 0, 1, 0], [], []>} : vector<17x8xbf16>, vector<17x8xbf16>, vector<17x17xf32> -> vector<17x17xf32>
    %cst_54 = arith.constant dense<0xFF800000> : vector<17xf32>
    %112 = vector.multi_reduction <maximumf>, %111, %cst_54 [1] : vector<17x17xf32> to vector<17xf32>
    %113 = vector.shape_cast %112 : vector<17xf32> to vector<17x1xf32>
    %114 = vector.broadcast %113 : vector<17x1xf32> to vector<17x17xf32>
    %115 = arith.subf %111, %114 : vector<17x17xf32>
    %116 = math.exp %115 : vector<17x17xf32>
    %cst_55 = arith.constant dense<0.000000e+00> : vector<17xf32>
    %117 = vector.multi_reduction <add>, %116, %cst_55 [1] : vector<17x17xf32> to vector<17xf32>
    %118 = vector.shape_cast %117 : vector<17xf32> to vector<17x1xf32>
    %119 = vector.broadcast %118 : vector<17x1xf32> to vector<17x17xf32>
    %120 = arith.divf %116, %119 : vector<17x17xf32>
    %121 = arith.truncf %120 : vector<17x17xf32> to vector<17x17xbf16>
    %cst_56 = arith.constant dense<0.000000e+00> : vector<17x8xf32>
    %122 = tpu.matmul %121, %110, %cst_56 {dimension_numbers = #tpu.dot_dimension_numbers<[1], [0], [0], [1], [0, 0, 1, 1], [], []>} : vector<17x17xbf16>, vector<17x8xbf16>, vector<17x8xf32> -> vector<17x8xf32>
    %123 = arith.truncf %122 : vector<17x8xf32> to vector<17x8xbf16>
    %c0_57 = arith.constant 0 : index
    %c0_58 = arith.constant 0 : index
    %c0_59 = arith.constant 0 : index
    %124 = vector.load %arg11[%c0_57, %c0_58, %c0_59] : memref<1x32x32xbf16, #tpu.memory_space<vmem>>, vector<1x32x32xbf16>
    %125 = vector.shape_cast %124 : vector<1x32x32xbf16> to vector<32x32xbf16>
    %126 = vector.extract_strided_slice %125 {offsets = [16, 0], sizes = [8, 32], strides = [1, 1]} : vector<32x32xbf16> to vector<8x32xbf16>
    %cst_60 = arith.constant dense<0.000000e+00> : vector<17x32xf32>
    %127 = tpu.matmul %123, %126, %cst_60 {dimension_numbers = #tpu.dot_dimension_numbers<[1], [0], [0], [1], [0, 0, 1, 1], [], []>} : vector<17x8xbf16>, vector<8x32xbf16>, vector<17x32xf32> -> vector<17x32xf32>
    %128 = arith.addf %102, %127 : vector<17x32xf32>
    %129 = vector.extract_strided_slice %36 {offsets = [0, 24], sizes = [17, 8], strides = [1, 1]} : vector<17x32xf32> to vector<17x8xf32>
    %cst_61 = arith.constant 0.353553385 : f32
    %130 = vector.broadcast %cst_61 : f32 to vector<17x8xf32>
    %131 = arith.mulf %129, %130 : vector<17x8xf32>
    %132 = arith.truncf %131 : vector<17x8xf32> to vector<17x8xbf16>
    %133 = vector.extract_strided_slice %43 {offsets = [0, 24], sizes = [17, 8], strides = [1, 1]} : vector<17x32xf32> to vector<17x8xf32>
    %134 = arith.truncf %133 : vector<17x8xf32> to vector<17x8xbf16>
    %135 = vector.extract_strided_slice %50 {offsets = [0, 24], sizes = [17, 8], strides = [1, 1]} : vector<17x32xf32> to vector<17x8xf32>
    %136 = arith.truncf %135 : vector<17x8xf32> to vector<17x8xbf16>
    %cst_62 = arith.constant dense<0.000000e+00> : vector<17x17xf32>
    %137 = tpu.matmul %132, %134, %cst_62 {dimension_numbers = #tpu.dot_dimension_numbers<[1], [1], [0], [0], [0, 0, 1, 0], [], []>} : vector<17x8xbf16>, vector<17x8xbf16>, vector<17x17xf32> -> vector<17x17xf32>
    %cst_63 = arith.constant dense<0xFF800000> : vector<17xf32>
    %138 = vector.multi_reduction <maximumf>, %137, %cst_63 [1] : vector<17x17xf32> to vector<17xf32>
    %139 = vector.shape_cast %138 : vector<17xf32> to vector<17x1xf32>
    %140 = vector.broadcast %139 : vector<17x1xf32> to vector<17x17xf32>
    %141 = arith.subf %137, %140 : vector<17x17xf32>
    %142 = math.exp %141 : vector<17x17xf32>
    %cst_64 = arith.constant dense<0.000000e+00> : vector<17xf32>
    %143 = vector.multi_reduction <add>, %142, %cst_64 [1] : vector<17x17xf32> to vector<17xf32>
    %144 = vector.shape_cast %143 : vector<17xf32> to vector<17x1xf32>
    %145 = vector.broadcast %144 : vector<17x1xf32> to vector<17x17xf32>
    %146 = arith.divf %142, %145 : vector<17x17xf32>
    %147 = arith.truncf %146 : vector<17x17xf32> to vector<17x17xbf16>
    %cst_65 = arith.constant dense<0.000000e+00> : vector<17x8xf32>
    %148 = tpu.matmul %147, %136, %cst_65 {dimension_numbers = #tpu.dot_dimension_numbers<[1], [0], [0], [1], [0, 0, 1, 1], [], []>} : vector<17x17xbf16>, vector<17x8xbf16>, vector<17x8xf32> -> vector<17x8xf32>
    %149 = arith.truncf %148 : vector<17x8xf32> to vector<17x8xbf16>
    %c0_66 = arith.constant 0 : index
    %c0_67 = arith.constant 0 : index
    %c0_68 = arith.constant 0 : index
    %150 = vector.load %arg11[%c0_66, %c0_67, %c0_68] : memref<1x32x32xbf16, #tpu.memory_space<vmem>>, vector<1x32x32xbf16>
    %151 = vector.shape_cast %150 : vector<1x32x32xbf16> to vector<32x32xbf16>
    %152 = vector.extract_strided_slice %151 {offsets = [24, 0], sizes = [8, 32], strides = [1, 1]} : vector<32x32xbf16> to vector<8x32xbf16>
    %cst_69 = arith.constant dense<0.000000e+00> : vector<17x32xf32>
    %153 = tpu.matmul %149, %152, %cst_69 {dimension_numbers = #tpu.dot_dimension_numbers<[1], [0], [0], [1], [0, 0, 1, 1], [], []>} : vector<17x8xbf16>, vector<8x32xbf16>, vector<17x32xf32> -> vector<17x32xf32>
    %154 = arith.addf %128, %153 : vector<17x32xf32>
    %c0_70 = arith.constant 0 : index
    %c0_71 = arith.constant 0 : index
    %c0_72 = arith.constant 0 : index
    %155 = vector.load %arg12[%c0_70, %c0_71, %c0_72] : memref<1x1x32xf32, #tpu.memory_space<vmem>>, vector<1x1x32xf32>
    %156 = vector.shape_cast %155 : vector<1x1x32xf32> to vector<1x32xf32>
    %157 = vector.broadcast %156 : vector<1x32xf32> to vector<17x32xf32>
    %158 = arith.addf %154, %157 : vector<17x32xf32>
    %c0_73 = arith.constant 0 : index
    %c0_74 = arith.constant 0 : index
    %c0_75 = arith.constant 0 : index
    %159 = vector.load %arg13[%c0_73, %c0_74, %c0_75] : memref<1x1x32xf32, #tpu.memory_space<vmem>>, vector<1x1x32xf32>
    %160 = vector.shape_cast %159 : vector<1x1x32xf32> to vector<1x32xf32>
    %c0_76 = arith.constant 0 : index
    %c0_77 = arith.constant 0 : index
    %c0_78 = arith.constant 0 : index
    %161 = vector.load %arg14[%c0_76, %c0_77, %c0_78] : memref<1x1x32xf32, #tpu.memory_space<vmem>>, vector<1x1x32xf32>
    %162 = vector.shape_cast %161 : vector<1x1x32xf32> to vector<1x32xf32>
    %cst_79 = arith.constant dense<0.000000e+00> : vector<17xf32>
    %163 = vector.multi_reduction <add>, %158, %cst_79 [1] : vector<17x32xf32> to vector<17xf32>
    %164 = vector.shape_cast %163 : vector<17xf32> to vector<17x1xf32>
    %cst_80 = arith.constant 3.200000e+01 : f32
    %165 = vector.broadcast %cst_80 : f32 to vector<17x1xf32>
    %166 = arith.divf %164, %165 : vector<17x1xf32>
    %167 = vector.broadcast %166 : vector<17x1xf32> to vector<17x32xf32>
    %168 = arith.subf %158, %167 : vector<17x32xf32>
    %169 = arith.mulf %168, %168 : vector<17x32xf32>
    %cst_81 = arith.constant dense<0.000000e+00> : vector<17xf32>
    %170 = vector.multi_reduction <add>, %169, %cst_81 [1] : vector<17x32xf32> to vector<17xf32>
    %171 = vector.shape_cast %170 : vector<17xf32> to vector<17x1xf32>
    %cst_82 = arith.constant 3.200000e+01 : f32
    %172 = vector.broadcast %cst_82 : f32 to vector<17x1xf32>
    %173 = arith.divf %171, %172 : vector<17x1xf32>
    %cst_83 = arith.constant 9.99999974E-6 : f32
    %174 = vector.broadcast %cst_83 : f32 to vector<17x1xf32>
    %175 = arith.addf %173, %174 : vector<17x1xf32>
    %176 = math.rsqrt %175 : vector<17x1xf32>
    %177 = vector.broadcast %176 : vector<17x1xf32> to vector<17x32xf32>
    %178 = arith.mulf %168, %177 : vector<17x32xf32>
    %179 = vector.broadcast %160 : vector<1x32xf32> to vector<17x32xf32>
    %180 = arith.mulf %178, %179 : vector<17x32xf32>
    %181 = vector.broadcast %162 : vector<1x32xf32> to vector<17x32xf32>
    %182 = arith.addf %180, %181 : vector<17x32xf32>
    %183 = arith.truncf %182 : vector<17x32xf32> to vector<17x32xbf16>
    %c0_84 = arith.constant 0 : index
    %c0_85 = arith.constant 0 : index
    %c0_86 = arith.constant 0 : index
    %184 = vector.load %arg15[%c0_84, %c0_85, %c0_86] : memref<1x32x128xbf16, #tpu.memory_space<vmem>>, vector<1x32x128xbf16>
    %185 = vector.shape_cast %184 : vector<1x32x128xbf16> to vector<32x128xbf16>
    %cst_87 = arith.constant dense<0.000000e+00> : vector<17x128xf32>
    %186 = tpu.matmul %183, %185, %cst_87 {dimension_numbers = #tpu.dot_dimension_numbers<[1], [0], [0], [1], [0, 0, 1, 1], [], []>} : vector<17x32xbf16>, vector<32x128xbf16>, vector<17x128xf32> -> vector<17x128xf32>
    %c0_88 = arith.constant 0 : index
    %c0_89 = arith.constant 0 : index
    %c0_90 = arith.constant 0 : index
    %187 = vector.load %arg16[%c0_88, %c0_89, %c0_90] : memref<1x1x128xf32, #tpu.memory_space<vmem>>, vector<1x1x128xf32>
    %188 = vector.shape_cast %187 : vector<1x1x128xf32> to vector<1x128xf32>
    %189 = vector.broadcast %188 : vector<1x128xf32> to vector<17x128xf32>
    %190 = arith.addf %186, %189 : vector<17x128xf32>
    %191 = arith.mulf %190, %190 : vector<17x128xf32>
    %192 = arith.mulf %190, %191 : vector<17x128xf32>
    %cst_91 = arith.constant 4.471500e-02 : f32
    %193 = vector.broadcast %cst_91 : f32 to vector<17x128xf32>
    %194 = arith.mulf %193, %192 : vector<17x128xf32>
    %195 = arith.addf %190, %194 : vector<17x128xf32>
    %cst_92 = arith.constant 0.797884583 : f32
    %196 = vector.broadcast %cst_92 : f32 to vector<17x128xf32>
    %197 = arith.mulf %196, %195 : vector<17x128xf32>
    %198 = math.tanh %197 : vector<17x128xf32>
    %cst_93 = arith.constant 1.000000e+00 : f32
    %199 = vector.broadcast %cst_93 : f32 to vector<17x128xf32>
    %200 = arith.addf %199, %198 : vector<17x128xf32>
    %cst_94 = arith.constant 5.000000e-01 : f32
    %201 = vector.broadcast %cst_94 : f32 to vector<17x128xf32>
    %202 = arith.mulf %201, %200 : vector<17x128xf32>
    %203 = arith.mulf %190, %202 : vector<17x128xf32>
    %204 = arith.truncf %203 : vector<17x128xf32> to vector<17x128xbf16>
    %c0_95 = arith.constant 0 : index
    %c0_96 = arith.constant 0 : index
    %c0_97 = arith.constant 0 : index
    %205 = vector.load %arg17[%c0_95, %c0_96, %c0_97] : memref<1x128x32xbf16, #tpu.memory_space<vmem>>, vector<1x128x32xbf16>
    %206 = vector.shape_cast %205 : vector<1x128x32xbf16> to vector<128x32xbf16>
    %cst_98 = arith.constant dense<0.000000e+00> : vector<17x32xf32>
    %207 = tpu.matmul %204, %206, %cst_98 {dimension_numbers = #tpu.dot_dimension_numbers<[1], [0], [0], [1], [0, 0, 1, 1], [], []>} : vector<17x128xbf16>, vector<128x32xbf16>, vector<17x32xf32> -> vector<17x32xf32>
    %208 = arith.addf %158, %207 : vector<17x32xf32>
    %c0_99 = arith.constant 0 : index
    %c0_100 = arith.constant 0 : index
    %c0_101 = arith.constant 0 : index
    %209 = vector.load %arg18[%c0_99, %c0_100, %c0_101] : memref<1x1x32xf32, #tpu.memory_space<vmem>>, vector<1x1x32xf32>
    %210 = vector.shape_cast %209 : vector<1x1x32xf32> to vector<1x32xf32>
    %211 = vector.broadcast %210 : vector<1x32xf32> to vector<17x32xf32>
    %212 = arith.addf %208, %211 : vector<17x32xf32>
    %c0_102 = arith.constant 0 : index
    %c0_103 = arith.constant 0 : index
    %c0_104 = arith.constant 0 : index
    %213 = vector.load %arg24[%c0_102, %c0_103, %c0_104] : memref<2x17x32xf32, #tpu.memory_space<vmem>>, vector<1x17x32xf32>
    %214 = vector.shape_cast %213 : vector<1x17x32xf32> to vector<17x32xf32>
    %215 = vector.shape_cast %212 : vector<17x32xf32> to vector<1x17x32xf32>
    tpu.vector_store %arg24[%c0_102, %c0_103, %c0_104], %215 {strides = array<i32>} : memref<2x17x32xf32, #tpu.memory_space<vmem>>, vector<1x17x32xf32>,
    %c1 = arith.constant 1 : index
    %c0_105 = arith.constant 0 : index
    %c0_106 = arith.constant 0 : index
    %216 = vector.load %arg24[%c1, %c0_105, %c0_106] : memref<2x17x32xf32, #tpu.memory_space<vmem>>, vector<1x17x32xf32>
    %217 = vector.shape_cast %216 : vector<1x17x32xf32> to vector<17x32xf32>
    %c0_107 = arith.constant 0 : index
    %c0_108 = arith.constant 0 : index
    %c0_109 = arith.constant 0 : index
    %218 = vector.load %arg3[%c0_107, %c0_108, %c0_109] : memref<1x1x32xf32, #tpu.memory_space<vmem>>, vector<1x1x32xf32>
    %219 = vector.shape_cast %218 : vector<1x1x32xf32> to vector<1x32xf32>
    %c0_110 = arith.constant 0 : index
    %c0_111 = arith.constant 0 : index
    %c0_112 = arith.constant 0 : index
    %220 = vector.load %arg4[%c0_110, %c0_111, %c0_112] : memref<1x1x32xf32, #tpu.memory_space<vmem>>, vector<1x1x32xf32>
    %221 = vector.shape_cast %220 : vector<1x1x32xf32> to vector<1x32xf32>
    %cst_113 = arith.constant dense<0.000000e+00> : vector<17xf32>
    %222 = vector.multi_reduction <add>, %217, %cst_113 [1] : vector<17x32xf32> to vector<17xf32>
    %223 = vector.shape_cast %222 : vector<17xf32> to vector<17x1xf32>
    %cst_114 = arith.constant 3.200000e+01 : f32
    %224 = vector.broadcast %cst_114 : f32 to vector<17x1xf32>
    %225 = arith.divf %223, %224 : vector<17x1xf32>
    %226 = vector.broadcast %225 : vector<17x1xf32> to vector<17x32xf32>
    %227 = arith.subf %217, %226 : vector<17x32xf32>
    %228 = arith.mulf %227, %227 : vector<17x32xf32>
    %cst_115 = arith.constant dense<0.000000e+00> : vector<17xf32>
    %229 = vector.multi_reduction <add>, %228, %cst_115 [1] : vector<17x32xf32> to vector<17xf32>
    %230 = vector.shape_cast %229 : vector<17xf32> to vector<17x1xf32>
    %cst_116 = arith.constant 3.200000e+01 : f32
    %231 = vector.broadcast %cst_116 : f32 to vector<17x1xf32>
    %232 = arith.divf %230, %231 : vector<17x1xf32>
    %cst_117 = arith.constant 9.99999974E-6 : f32
    %233 = vector.broadcast %cst_117 : f32 to vector<17x1xf32>
    %234 = arith.addf %232, %233 : vector<17x1xf32>
    %235 = math.rsqrt %234 : vector<17x1xf32>
    %236 = vector.broadcast %235 : vector<17x1xf32> to vector<17x32xf32>
    %237 = arith.mulf %227, %236 : vector<17x32xf32>
    %238 = vector.broadcast %219 : vector<1x32xf32> to vector<17x32xf32>
    %239 = arith.mulf %237, %238 : vector<17x32xf32>
    %240 = vector.broadcast %221 : vector<1x32xf32> to vector<17x32xf32>
    %241 = arith.addf %239, %240 : vector<17x32xf32>
    %242 = arith.truncf %241 : vector<17x32xf32> to vector<17x32xbf16>
    %c0_118 = arith.constant 0 : index
    %c0_119 = arith.constant 0 : index
    %c0_120 = arith.constant 0 : index
    %243 = vector.load %arg5[%c0_118, %c0_119, %c0_120] : memref<1x32x32xbf16, #tpu.memory_space<vmem>>, vector<1x32x32xbf16>
    %244 = vector.shape_cast %243 : vector<1x32x32xbf16> to vector<32x32xbf16>
    %cst_121 = arith.constant dense<0.000000e+00> : vector<17x32xf32>
    %245 = tpu.matmul %242, %244, %cst_121 {dimension_numbers = #tpu.dot_dimension_numbers<[1], [0], [0], [1], [0, 0, 1, 1], [], []>} : vector<17x32xbf16>, vector<32x32xbf16>, vector<17x32xf32> -> vector<17x32xf32>
    %c0_122 = arith.constant 0 : index
    %c0_123 = arith.constant 0 : index
    %c0_124 = arith.constant 0 : index
    %246 = vector.load %arg6[%c0_122, %c0_123, %c0_124] : memref<1x1x32xf32, #tpu.memory_space<vmem>>, vector<1x1x32xf32>
    %247 = vector.shape_cast %246 : vector<1x1x32xf32> to vector<1x32xf32>
    %248 = vector.broadcast %247 : vector<1x32xf32> to vector<17x32xf32>
    %249 = arith.addf %245, %248 : vector<17x32xf32>
    %c0_125 = arith.constant 0 : index
    %c0_126 = arith.constant 0 : index
    %c0_127 = arith.constant 0 : index
    %250 = vector.load %arg7[%c0_125, %c0_126, %c0_127] : memref<1x32x32xbf16, #tpu.memory_space<vmem>>, vector<1x32x32xbf16>
    %251 = vector.shape_cast %250 : vector<1x32x32xbf16> to vector<32x32xbf16>
    %cst_128 = arith.constant dense<0.000000e+00> : vector<17x32xf32>
    %252 = tpu.matmul %242, %251, %cst_128 {dimension_numbers = #tpu.dot_dimension_numbers<[1], [0], [0], [1], [0, 0, 1, 1], [], []>} : vector<17x32xbf16>, vector<32x32xbf16>, vector<17x32xf32> -> vector<17x32xf32>
    %c0_129 = arith.constant 0 : index
    %c0_130 = arith.constant 0 : index
    %c0_131 = arith.constant 0 : index
    %253 = vector.load %arg8[%c0_129, %c0_130, %c0_131] : memref<1x1x32xf32, #tpu.memory_space<vmem>>, vector<1x1x32xf32>
    %254 = vector.shape_cast %253 : vector<1x1x32xf32> to vector<1x32xf32>
    %255 = vector.broadcast %254 : vector<1x32xf32> to vector<17x32xf32>
    %256 = arith.addf %252, %255 : vector<17x32xf32>
    %c0_132 = arith.constant 0 : index
    %c0_133 = arith.constant 0 : index
    %c0_134 = arith.constant 0 : index
    %257 = vector.load %arg9[%c0_132, %c0_133, %c0_134] : memref<1x32x32xbf16, #tpu.memory_space<vmem>>, vector<1x32x32xbf16>
    %258 = vector.shape_cast %257 : vector<1x32x32xbf16> to vector<32x32xbf16>
    %cst_135 = arith.constant dense<0.000000e+00> : vector<17x32xf32>
    %259 = tpu.matmul %242, %258, %cst_135 {dimension_numbers = #tpu.dot_dimension_numbers<[1], [0], [0], [1], [0, 0, 1, 1], [], []>} : vector<17x32xbf16>, vector<32x32xbf16>, vector<17x32xf32> -> vector<17x32xf32>
    %c0_136 = arith.constant 0 : index
    %c0_137 = arith.constant 0 : index
    %c0_138 = arith.constant 0 : index
    %260 = vector.load %arg10[%c0_136, %c0_137, %c0_138] : memref<1x1x32xf32, #tpu.memory_space<vmem>>, vector<1x1x32xf32>
    %261 = vector.shape_cast %260 : vector<1x1x32xf32> to vector<1x32xf32>
    %262 = vector.broadcast %261 : vector<1x32xf32> to vector<17x32xf32>
    %263 = arith.addf %259, %262 : vector<17x32xf32>
    %264 = vector.extract_strided_slice %249 {offsets = [0, 0], sizes = [17, 8], strides = [1, 1]} : vector<17x32xf32> to vector<17x8xf32>
    %cst_139 = arith.constant 0.353553385 : f32
    %265 = vector.broadcast %cst_139 : f32 to vector<17x8xf32>
    %266 = arith.mulf %264, %265 : vector<17x8xf32>
    %267 = arith.truncf %266 : vector<17x8xf32> to vector<17x8xbf16>
    %268 = vector.extract_strided_slice %256 {offsets = [0, 0], sizes = [17, 8], strides = [1, 1]} : vector<17x32xf32> to vector<17x8xf32>
    %269 = arith.truncf %268 : vector<17x8xf32> to vector<17x8xbf16>
    %270 = vector.extract_strided_slice %263 {offsets = [0, 0], sizes = [17, 8], strides = [1, 1]} : vector<17x32xf32> to vector<17x8xf32>
    %271 = arith.truncf %270 : vector<17x8xf32> to vector<17x8xbf16>
    %cst_140 = arith.constant dense<0.000000e+00> : vector<17x17xf32>
    %272 = tpu.matmul %267, %269, %cst_140 {dimension_numbers = #tpu.dot_dimension_numbers<[1], [1], [0], [0], [0, 0, 1, 0], [], []>} : vector<17x8xbf16>, vector<17x8xbf16>, vector<17x17xf32> -> vector<17x17xf32>
    %cst_141 = arith.constant dense<0xFF800000> : vector<17xf32>
    %273 = vector.multi_reduction <maximumf>, %272, %cst_141 [1] : vector<17x17xf32> to vector<17xf32>
    %274 = vector.shape_cast %273 : vector<17xf32> to vector<17x1xf32>
    %275 = vector.broadcast %274 : vector<17x1xf32> to vector<17x17xf32>
    %276 = arith.subf %272, %275 : vector<17x17xf32>
    %277 = math.exp %276 : vector<17x17xf32>
    %cst_142 = arith.constant dense<0.000000e+00> : vector<17xf32>
    %278 = vector.multi_reduction <add>, %277, %cst_142 [1] : vector<17x17xf32> to vector<17xf32>
    %279 = vector.shape_cast %278 : vector<17xf32> to vector<17x1xf32>
    %280 = vector.broadcast %279 : vector<17x1xf32> to vector<17x17xf32>
    %281 = arith.divf %277, %280 : vector<17x17xf32>
    %282 = arith.truncf %281 : vector<17x17xf32> to vector<17x17xbf16>
    %cst_143 = arith.constant dense<0.000000e+00> : vector<17x8xf32>
    %283 = tpu.matmul %282, %271, %cst_143 {dimension_numbers = #tpu.dot_dimension_numbers<[1], [0], [0], [1], [0, 0, 1, 1], [], []>} : vector<17x17xbf16>, vector<17x8xbf16>, vector<17x8xf32> -> vector<17x8xf32>
    %284 = arith.truncf %283 : vector<17x8xf32> to vector<17x8xbf16>
    %c0_144 = arith.constant 0 : index
    %c0_145 = arith.constant 0 : index
    %c0_146 = arith.constant 0 : index
    %285 = vector.load %arg11[%c0_144, %c0_145, %c0_146] : memref<1x32x32xbf16, #tpu.memory_space<vmem>>, vector<1x32x32xbf16>
    %286 = vector.shape_cast %285 : vector<1x32x32xbf16> to vector<32x32xbf16>
    %287 = vector.extract_strided_slice %286 {offsets = [0, 0], sizes = [8, 32], strides = [1, 1]} : vector<32x32xbf16> to vector<8x32xbf16>
    %cst_147 = arith.constant dense<0.000000e+00> : vector<17x32xf32>
    %288 = tpu.matmul %284, %287, %cst_147 {dimension_numbers = #tpu.dot_dimension_numbers<[1], [0], [0], [1], [0, 0, 1, 1], [], []>} : vector<17x8xbf16>, vector<8x32xbf16>, vector<17x32xf32> -> vector<17x32xf32>
    %289 = arith.addf %217, %288 : vector<17x32xf32>
    %290 = vector.extract_strided_slice %249 {offsets = [0, 8], sizes = [17, 8], strides = [1, 1]} : vector<17x32xf32> to vector<17x8xf32>
    %cst_148 = arith.constant 0.353553385 : f32
    %291 = vector.broadcast %cst_148 : f32 to vector<17x8xf32>
    %292 = arith.mulf %290, %291 : vector<17x8xf32>
    %293 = arith.truncf %292 : vector<17x8xf32> to vector<17x8xbf16>
    %294 = vector.extract_strided_slice %256 {offsets = [0, 8], sizes = [17, 8], strides = [1, 1]} : vector<17x32xf32> to vector<17x8xf32>
    %295 = arith.truncf %294 : vector<17x8xf32> to vector<17x8xbf16>
    %296 = vector.extract_strided_slice %263 {offsets = [0, 8], sizes = [17, 8], strides = [1, 1]} : vector<17x32xf32> to vector<17x8xf32>
    %297 = arith.truncf %296 : vector<17x8xf32> to vector<17x8xbf16>
    %cst_149 = arith.constant dense<0.000000e+00> : vector<17x17xf32>
    %298 = tpu.matmul %293, %295, %cst_149 {dimension_numbers = #tpu.dot_dimension_numbers<[1], [1], [0], [0], [0, 0, 1, 0], [], []>} : vector<17x8xbf16>, vector<17x8xbf16>, vector<17x17xf32> -> vector<17x17xf32>
    %cst_150 = arith.constant dense<0xFF800000> : vector<17xf32>
    %299 = vector.multi_reduction <maximumf>, %298, %cst_150 [1] : vector<17x17xf32> to vector<17xf32>
    %300 = vector.shape_cast %299 : vector<17xf32> to vector<17x1xf32>
    %301 = vector.broadcast %300 : vector<17x1xf32> to vector<17x17xf32>
    %302 = arith.subf %298, %301 : vector<17x17xf32>
    %303 = math.exp %302 : vector<17x17xf32>
    %cst_151 = arith.constant dense<0.000000e+00> : vector<17xf32>
    %304 = vector.multi_reduction <add>, %303, %cst_151 [1] : vector<17x17xf32> to vector<17xf32>
    %305 = vector.shape_cast %304 : vector<17xf32> to vector<17x1xf32>
    %306 = vector.broadcast %305 : vector<17x1xf32> to vector<17x17xf32>
    %307 = arith.divf %303, %306 : vector<17x17xf32>
    %308 = arith.truncf %307 : vector<17x17xf32> to vector<17x17xbf16>
    %cst_152 = arith.constant dense<0.000000e+00> : vector<17x8xf32>
    %309 = tpu.matmul %308, %297, %cst_152 {dimension_numbers = #tpu.dot_dimension_numbers<[1], [0], [0], [1], [0, 0, 1, 1], [], []>} : vector<17x17xbf16>, vector<17x8xbf16>, vector<17x8xf32> -> vector<17x8xf32>
    %310 = arith.truncf %309 : vector<17x8xf32> to vector<17x8xbf16>
    %c0_153 = arith.constant 0 : index
    %c0_154 = arith.constant 0 : index
    %c0_155 = arith.constant 0 : index
    %311 = vector.load %arg11[%c0_153, %c0_154, %c0_155] : memref<1x32x32xbf16, #tpu.memory_space<vmem>>, vector<1x32x32xbf16>
    %312 = vector.shape_cast %311 : vector<1x32x32xbf16> to vector<32x32xbf16>
    %313 = vector.extract_strided_slice %312 {offsets = [8, 0], sizes = [8, 32], strides = [1, 1]} : vector<32x32xbf16> to vector<8x32xbf16>
    %cst_156 = arith.constant dense<0.000000e+00> : vector<17x32xf32>
    %314 = tpu.matmul %310, %313, %cst_156 {dimension_numbers = #tpu.dot_dimension_numbers<[1], [0], [0], [1], [0, 0, 1, 1], [], []>} : vector<17x8xbf16>, vector<8x32xbf16>, vector<17x32xf32> -> vector<17x32xf32>
    %315 = arith.addf %289, %314 : vector<17x32xf32>
    %316 = vector.extract_strided_slice %249 {offsets = [0, 16], sizes = [17, 8], strides = [1, 1]} : vector<17x32xf32> to vector<17x8xf32>
    %cst_157 = arith.constant 0.353553385 : f32
    %317 = vector.broadcast %cst_157 : f32 to vector<17x8xf32>
    %318 = arith.mulf %316, %317 : vector<17x8xf32>
    %319 = arith.truncf %318 : vector<17x8xf32> to vector<17x8xbf16>
    %320 = vector.extract_strided_slice %256 {offsets = [0, 16], sizes = [17, 8], strides = [1, 1]} : vector<17x32xf32> to vector<17x8xf32>
    %321 = arith.truncf %320 : vector<17x8xf32> to vector<17x8xbf16>
    %322 = vector.extract_strided_slice %263 {offsets = [0, 16], sizes = [17, 8], strides = [1, 1]} : vector<17x32xf32> to vector<17x8xf32>
    %323 = arith.truncf %322 : vector<17x8xf32> to vector<17x8xbf16>
    %cst_158 = arith.constant dense<0.000000e+00> : vector<17x17xf32>
    %324 = tpu.matmul %319, %321, %cst_158 {dimension_numbers = #tpu.dot_dimension_numbers<[1], [1], [0], [0], [0, 0, 1, 0], [], []>} : vector<17x8xbf16>, vector<17x8xbf16>, vector<17x17xf32> -> vector<17x17xf32>
    %cst_159 = arith.constant dense<0xFF800000> : vector<17xf32>
    %325 = vector.multi_reduction <maximumf>, %324, %cst_159 [1] : vector<17x17xf32> to vector<17xf32>
    %326 = vector.shape_cast %325 : vector<17xf32> to vector<17x1xf32>
    %327 = vector.broadcast %326 : vector<17x1xf32> to vector<17x17xf32>
    %328 = arith.subf %324, %327 : vector<17x17xf32>
    %329 = math.exp %328 : vector<17x17xf32>
    %cst_160 = arith.constant dense<0.000000e+00> : vector<17xf32>
    %330 = vector.multi_reduction <add>, %329, %cst_160 [1] : vector<17x17xf32> to vector<17xf32>
    %331 = vector.shape_cast %330 : vector<17xf32> to vector<17x1xf32>
    %332 = vector.broadcast %331 : vector<17x1xf32> to vector<17x17xf32>
    %333 = arith.divf %329, %332 : vector<17x17xf32>
    %334 = arith.truncf %333 : vector<17x17xf32> to vector<17x17xbf16>
    %cst_161 = arith.constant dense<0.000000e+00> : vector<17x8xf32>
    %335 = tpu.matmul %334, %323, %cst_161 {dimension_numbers = #tpu.dot_dimension_numbers<[1], [0], [0], [1], [0, 0, 1, 1], [], []>} : vector<17x17xbf16>, vector<17x8xbf16>, vector<17x8xf32> -> vector<17x8xf32>
    %336 = arith.truncf %335 : vector<17x8xf32> to vector<17x8xbf16>
    %c0_162 = arith.constant 0 : index
    %c0_163 = arith.constant 0 : index
    %c0_164 = arith.constant 0 : index
    %337 = vector.load %arg11[%c0_162, %c0_163, %c0_164] : memref<1x32x32xbf16, #tpu.memory_space<vmem>>, vector<1x32x32xbf16>
    %338 = vector.shape_cast %337 : vector<1x32x32xbf16> to vector<32x32xbf16>
    %339 = vector.extract_strided_slice %338 {offsets = [16, 0], sizes = [8, 32], strides = [1, 1]} : vector<32x32xbf16> to vector<8x32xbf16>
    %cst_165 = arith.constant dense<0.000000e+00> : vector<17x32xf32>
    %340 = tpu.matmul %336, %339, %cst_165 {dimension_numbers = #tpu.dot_dimension_numbers<[1], [0], [0], [1], [0, 0, 1, 1], [], []>} : vector<17x8xbf16>, vector<8x32xbf16>, vector<17x32xf32> -> vector<17x32xf32>
    %341 = arith.addf %315, %340 : vector<17x32xf32>
    %342 = vector.extract_strided_slice %249 {offsets = [0, 24], sizes = [17, 8], strides = [1, 1]} : vector<17x32xf32> to vector<17x8xf32>
    %cst_166 = arith.constant 0.353553385 : f32
    %343 = vector.broadcast %cst_166 : f32 to vector<17x8xf32>
    %344 = arith.mulf %342, %343 : vector<17x8xf32>
    %345 = arith.truncf %344 : vector<17x8xf32> to vector<17x8xbf16>
    %346 = vector.extract_strided_slice %256 {offsets = [0, 24], sizes = [17, 8], strides = [1, 1]} : vector<17x32xf32> to vector<17x8xf32>
    %347 = arith.truncf %346 : vector<17x8xf32> to vector<17x8xbf16>
    %348 = vector.extract_strided_slice %263 {offsets = [0, 24], sizes = [17, 8], strides = [1, 1]} : vector<17x32xf32> to vector<17x8xf32>
    %349 = arith.truncf %348 : vector<17x8xf32> to vector<17x8xbf16>
    %cst_167 = arith.constant dense<0.000000e+00> : vector<17x17xf32>
    %350 = tpu.matmul %345, %347, %cst_167 {dimension_numbers = #tpu.dot_dimension_numbers<[1], [1], [0], [0], [0, 0, 1, 0], [], []>} : vector<17x8xbf16>, vector<17x8xbf16>, vector<17x17xf32> -> vector<17x17xf32>
    %cst_168 = arith.constant dense<0xFF800000> : vector<17xf32>
    %351 = vector.multi_reduction <maximumf>, %350, %cst_168 [1] : vector<17x17xf32> to vector<17xf32>
    %352 = vector.shape_cast %351 : vector<17xf32> to vector<17x1xf32>
    %353 = vector.broadcast %352 : vector<17x1xf32> to vector<17x17xf32>
    %354 = arith.subf %350, %353 : vector<17x17xf32>
    %355 = math.exp %354 : vector<17x17xf32>
    %cst_169 = arith.constant dense<0.000000e+00> : vector<17xf32>
    %356 = vector.multi_reduction <add>, %355, %cst_169 [1] : vector<17x17xf32> to vector<17xf32>
    %357 = vector.shape_cast %356 : vector<17xf32> to vector<17x1xf32>
    %358 = vector.broadcast %357 : vector<17x1xf32> to vector<17x17xf32>
    %359 = arith.divf %355, %358 : vector<17x17xf32>
    %360 = arith.truncf %359 : vector<17x17xf32> to vector<17x17xbf16>
    %cst_170 = arith.constant dense<0.000000e+00> : vector<17x8xf32>
    %361 = tpu.matmul %360, %349, %cst_170 {dimension_numbers = #tpu.dot_dimension_numbers<[1], [0], [0], [1], [0, 0, 1, 1], [], []>} : vector<17x17xbf16>, vector<17x8xbf16>, vector<17x8xf32> -> vector<17x8xf32>
    %362 = arith.truncf %361 : vector<17x8xf32> to vector<17x8xbf16>
    %c0_171 = arith.constant 0 : index
    %c0_172 = arith.constant 0 : index
    %c0_173 = arith.constant 0 : index
    %363 = vector.load %arg11[%c0_171, %c0_172, %c0_173] : memref<1x32x32xbf16, #tpu.memory_space<vmem>>, vector<1x32x32xbf16>
    %364 = vector.shape_cast %363 : vector<1x32x32xbf16> to vector<32x32xbf16>
    %365 = vector.extract_strided_slice %364 {offsets = [24, 0], sizes = [8, 32], strides = [1, 1]} : vector<32x32xbf16> to vector<8x32xbf16>
    %cst_174 = arith.constant dense<0.000000e+00> : vector<17x32xf32>
    %366 = tpu.matmul %362, %365, %cst_174 {dimension_numbers = #tpu.dot_dimension_numbers<[1], [0], [0], [1], [0, 0, 1, 1], [], []>} : vector<17x8xbf16>, vector<8x32xbf16>, vector<17x32xf32> -> vector<17x32xf32>
    %367 = arith.addf %341, %366 : vector<17x32xf32>
    %c0_175 = arith.constant 0 : index
    %c0_176 = arith.constant 0 : index
    %c0_177 = arith.constant 0 : index
    %368 = vector.load %arg12[%c0_175, %c0_176, %c0_177] : memref<1x1x32xf32, #tpu.memory_space<vmem>>, vector<1x1x32xf32>
    %369 = vector.shape_cast %368 : vector<1x1x32xf32> to vector<1x32xf32>
    %370 = vector.broadcast %369 : vector<1x32xf32> to vector<17x32xf32>
    %371 = arith.addf %367, %370 : vector<17x32xf32>
    %c0_178 = arith.constant 0 : index
    %c0_179 = arith.constant 0 : index
    %c0_180 = arith.constant 0 : index
    %372 = vector.load %arg13[%c0_178, %c0_179, %c0_180] : memref<1x1x32xf32, #tpu.memory_space<vmem>>, vector<1x1x32xf32>
    %373 = vector.shape_cast %372 : vector<1x1x32xf32> to vector<1x32xf32>
    %c0_181 = arith.constant 0 : index
    %c0_182 = arith.constant 0 : index
    %c0_183 = arith.constant 0 : index
    %374 = vector.load %arg14[%c0_181, %c0_182, %c0_183] : memref<1x1x32xf32, #tpu.memory_space<vmem>>, vector<1x1x32xf32>
    %375 = vector.shape_cast %374 : vector<1x1x32xf32> to vector<1x32xf32>
    %cst_184 = arith.constant dense<0.000000e+00> : vector<17xf32>
    %376 = vector.multi_reduction <add>, %371, %cst_184 [1] : vector<17x32xf32> to vector<17xf32>
    %377 = vector.shape_cast %376 : vector<17xf32> to vector<17x1xf32>
    %cst_185 = arith.constant 3.200000e+01 : f32
    %378 = vector.broadcast %cst_185 : f32 to vector<17x1xf32>
    %379 = arith.divf %377, %378 : vector<17x1xf32>
    %380 = vector.broadcast %379 : vector<17x1xf32> to vector<17x32xf32>
    %381 = arith.subf %371, %380 : vector<17x32xf32>
    %382 = arith.mulf %381, %381 : vector<17x32xf32>
    %cst_186 = arith.constant dense<0.000000e+00> : vector<17xf32>
    %383 = vector.multi_reduction <add>, %382, %cst_186 [1] : vector<17x32xf32> to vector<17xf32>
    %384 = vector.shape_cast %383 : vector<17xf32> to vector<17x1xf32>
    %cst_187 = arith.constant 3.200000e+01 : f32
    %385 = vector.broadcast %cst_187 : f32 to vector<17x1xf32>
    %386 = arith.divf %384, %385 : vector<17x1xf32>
    %cst_188 = arith.constant 9.99999974E-6 : f32
    %387 = vector.broadcast %cst_188 : f32 to vector<17x1xf32>
    %388 = arith.addf %386, %387 : vector<17x1xf32>
    %389 = math.rsqrt %388 : vector<17x1xf32>
    %390 = vector.broadcast %389 : vector<17x1xf32> to vector<17x32xf32>
    %391 = arith.mulf %381, %390 : vector<17x32xf32>
    %392 = vector.broadcast %373 : vector<1x32xf32> to vector<17x32xf32>
    %393 = arith.mulf %391, %392 : vector<17x32xf32>
    %394 = vector.broadcast %375 : vector<1x32xf32> to vector<17x32xf32>
    %395 = arith.addf %393, %394 : vector<17x32xf32>
    %396 = arith.truncf %395 : vector<17x32xf32> to vector<17x32xbf16>
    %c0_189 = arith.constant 0 : index
    %c0_190 = arith.constant 0 : index
    %c0_191 = arith.constant 0 : index
    %397 = vector.load %arg15[%c0_189, %c0_190, %c0_191] : memref<1x32x128xbf16, #tpu.memory_space<vmem>>, vector<1x32x128xbf16>
    %398 = vector.shape_cast %397 : vector<1x32x128xbf16> to vector<32x128xbf16>
    %cst_192 = arith.constant dense<0.000000e+00> : vector<17x128xf32>
    %399 = tpu.matmul %396, %398, %cst_192 {dimension_numbers = #tpu.dot_dimension_numbers<[1], [0], [0], [1], [0, 0, 1, 1], [], []>} : vector<17x32xbf16>, vector<32x128xbf16>, vector<17x128xf32> -> vector<17x128xf32>
    %c0_193 = arith.constant 0 : index
    %c0_194 = arith.constant 0 : index
    %c0_195 = arith.constant 0 : index
    %400 = vector.load %arg16[%c0_193, %c0_194, %c0_195] : memref<1x1x128xf32, #tpu.memory_space<vmem>>, vector<1x1x128xf32>
    %401 = vector.shape_cast %400 : vector<1x1x128xf32> to vector<1x128xf32>
    %402 = vector.broadcast %401 : vector<1x128xf32> to vector<17x128xf32>
    %403 = arith.addf %399, %402 : vector<17x128xf32>
    %404 = arith.mulf %403, %403 : vector<17x128xf32>
    %405 = arith.mulf %403, %404 : vector<17x128xf32>
    %cst_196 = arith.constant 4.471500e-02 : f32
    %406 = vector.broadcast %cst_196 : f32 to vector<17x128xf32>
    %407 = arith.mulf %406, %405 : vector<17x128xf32>
    %408 = arith.addf %403, %407 : vector<17x128xf32>
    %cst_197 = arith.constant 0.797884583 : f32
    %409 = vector.broadcast %cst_197 : f32 to vector<17x128xf32>
    %410 = arith.mulf %409, %408 : vector<17x128xf32>
    %411 = math.tanh %410 : vector<17x128xf32>
    %cst_198 = arith.constant 1.000000e+00 : f32
    %412 = vector.broadcast %cst_198 : f32 to vector<17x128xf32>
    %413 = arith.addf %412, %411 : vector<17x128xf32>
    %cst_199 = arith.constant 5.000000e-01 : f32
    %414 = vector.broadcast %cst_199 : f32 to vector<17x128xf32>
    %415 = arith.mulf %414, %413 : vector<17x128xf32>
    %416 = arith.mulf %403, %415 : vector<17x128xf32>
    %417 = arith.truncf %416 : vector<17x128xf32> to vector<17x128xbf16>
    %c0_200 = arith.constant 0 : index
    %c0_201 = arith.constant 0 : index
    %c0_202 = arith.constant 0 : index
    %418 = vector.load %arg17[%c0_200, %c0_201, %c0_202] : memref<1x128x32xbf16, #tpu.memory_space<vmem>>, vector<1x128x32xbf16>
    %419 = vector.shape_cast %418 : vector<1x128x32xbf16> to vector<128x32xbf16>
    %cst_203 = arith.constant dense<0.000000e+00> : vector<17x32xf32>
    %420 = tpu.matmul %417, %419, %cst_203 {dimension_numbers = #tpu.dot_dimension_numbers<[1], [0], [0], [1], [0, 0, 1, 1], [], []>} : vector<17x128xbf16>, vector<128x32xbf16>, vector<17x32xf32> -> vector<17x32xf32>
    %421 = arith.addf %371, %420 : vector<17x32xf32>
    %c0_204 = arith.constant 0 : index
    %c0_205 = arith.constant 0 : index
    %c0_206 = arith.constant 0 : index
    %422 = vector.load %arg18[%c0_204, %c0_205, %c0_206] : memref<1x1x32xf32, #tpu.memory_space<vmem>>, vector<1x1x32xf32>
    %423 = vector.shape_cast %422 : vector<1x1x32xf32> to vector<1x32xf32>
    %424 = vector.broadcast %423 : vector<1x32xf32> to vector<17x32xf32>
    %425 = arith.addf %421, %424 : vector<17x32xf32>
    %c1_207 = arith.constant 1 : index
    %c0_208 = arith.constant 0 : index
    %c0_209 = arith.constant 0 : index
    %426 = vector.load %arg24[%c1_207, %c0_208, %c0_209] : memref<2x17x32xf32, #tpu.memory_space<vmem>>, vector<1x17x32xf32>
    %427 = vector.shape_cast %426 : vector<1x17x32xf32> to vector<17x32xf32>
    %428 = vector.shape_cast %425 : vector<17x32xf32> to vector<1x17x32xf32>
    tpu.vector_store %arg24[%c1_207, %c0_208, %c0_209], %428 {strides = array<i32>} : memref<2x17x32xf32, #tpu.memory_space<vmem>>, vector<1x17x32xf32>,
    %c1_i32 = arith.constant 1 : i32
    %429 = arith.cmpi eq, %arg0, %c1_i32 : i32
    %430 = arith.extui %429 : i1 to i32
    %c0_i32_210 = arith.constant 0 : i32
    %431 = arith.cmpi ne, %430, %c0_i32_210 : i32
    scf.if %431 {
      %c0_211 = arith.constant 0 : index
      %c0_212 = arith.constant 0 : index
      %c0_213 = arith.constant 0 : index
      %432 = vector.load %arg24[%c0_211, %c0_212, %c0_213] : memref<2x17x32xf32, #tpu.memory_space<vmem>>, vector<1x17x32xf32>
      %433 = vector.shape_cast %432 : vector<1x17x32xf32> to vector<17x32xf32>
      %c0_214 = arith.constant 0 : index
      %c0_215 = arith.constant 0 : index
      %434 = vector.load %arg19[%c0_214, %c0_215] : memref<1x32xf32, #tpu.memory_space<vmem>>, vector<1x32xf32>
      %c0_216 = arith.constant 0 : index
      %c0_217 = arith.constant 0 : index
      %435 = vector.load %arg20[%c0_216, %c0_217] : memref<1x32xf32, #tpu.memory_space<vmem>>, vector<1x32xf32>
      %cst_218 = arith.constant dense<0.000000e+00> : vector<17xf32>
      %436 = vector.multi_reduction <add>, %433, %cst_218 [1] : vector<17x32xf32> to vector<17xf32>
      %437 = vector.shape_cast %436 : vector<17xf32> to vector<17x1xf32>
      %cst_219 = arith.constant 3.200000e+01 : f32
      %438 = vector.broadcast %cst_219 : f32 to vector<17x1xf32>
      %439 = arith.divf %437, %438 : vector<17x1xf32>
      %440 = vector.broadcast %439 : vector<17x1xf32> to vector<17x32xf32>
      %441 = arith.subf %433, %440 : vector<17x32xf32>
      %442 = arith.mulf %441, %441 : vector<17x32xf32>
      %cst_220 = arith.constant dense<0.000000e+00> : vector<17xf32>
      %443 = vector.multi_reduction <add>, %442, %cst_220 [1] : vector<17x32xf32> to vector<17xf32>
      %444 = vector.shape_cast %443 : vector<17xf32> to vector<17x1xf32>
      %cst_221 = arith.constant 3.200000e+01 : f32
      %445 = vector.broadcast %cst_221 : f32 to vector<17x1xf32>
      %446 = arith.divf %444, %445 : vector<17x1xf32>
      %cst_222 = arith.constant 9.99999974E-6 : f32
      %447 = vector.broadcast %cst_222 : f32 to vector<17x1xf32>
      %448 = arith.addf %446, %447 : vector<17x1xf32>
      %449 = math.rsqrt %448 : vector<17x1xf32>
      %450 = vector.broadcast %449 : vector<17x1xf32> to vector<17x32xf32>
      %451 = arith.mulf %441, %450 : vector<17x32xf32>
      %452 = vector.broadcast %434 : vector<1x32xf32> to vector<17x32xf32>
      %453 = arith.mulf %451, %452 : vector<17x32xf32>
      %454 = vector.broadcast %435 : vector<1x32xf32> to vector<17x32xf32>
      %455 = arith.addf %453, %454 : vector<17x32xf32>
      %456 = arith.truncf %455 : vector<17x32xf32> to vector<17x32xbf16>
      %c0_223 = arith.constant 0 : index
      %c0_224 = arith.constant 0 : index
      %457 = vector.load %arg21[%c0_223, %c0_224] : memref<32x16xbf16, #tpu.memory_space<vmem>>, vector<32x16xbf16>
      %cst_225 = arith.constant dense<0.000000e+00> : vector<17x16xf32>
      %458 = tpu.matmul %456, %457, %cst_225 {dimension_numbers = #tpu.dot_dimension_numbers<[1], [0], [0], [1], [0, 0, 1, 1], [], []>} : vector<17x32xbf16>, vector<32x16xbf16>, vector<17x16xf32> -> vector<17x16xf32>
      %c0_226 = arith.constant 0 : index
      %c0_227 = arith.constant 0 : index
      %459 = vector.load %arg22[%c0_226, %c0_227] : memref<1x16xf32, #tpu.memory_space<vmem>>, vector<1x16xf32>
      %460 = vector.broadcast %459 : vector<1x16xf32> to vector<17x16xf32>
      %461 = arith.addf %458, %460 : vector<17x16xf32>
      %c0_228 = arith.constant 0 : index
      %c0_229 = arith.constant 0 : index
      %c0_230 = arith.constant 0 : index
      %462 = vector.load %arg23[%c0_228, %c0_229, %c0_230] : memref<2x17x16xf32, #tpu.memory_space<vmem>>, vector<1x17x16xf32>
      %463 = vector.shape_cast %462 : vector<1x17x16xf32> to vector<17x16xf32>
      %464 = vector.shape_cast %461 : vector<17x16xf32> to vector<1x17x16xf32>
      tpu.vector_store %arg23[%c0_228, %c0_229, %c0_230], %464 {strides = array<i32>} : memref<2x17x16xf32, #tpu.memory_space<vmem>>, vector<1x17x16xf32>,
      %c1_231 = arith.constant 1 : index
      %c0_232 = arith.constant 0 : index
      %c0_233 = arith.constant 0 : index
      %465 = vector.load %arg24[%c1_231, %c0_232, %c0_233] : memref<2x17x32xf32, #tpu.memory_space<vmem>>, vector<1x17x32xf32>
      %466 = vector.shape_cast %465 : vector<1x17x32xf32> to vector<17x32xf32>
      %c0_234 = arith.constant 0 : index
      %c0_235 = arith.constant 0 : index
      %467 = vector.load %arg19[%c0_234, %c0_235] : memref<1x32xf32, #tpu.memory_space<vmem>>, vector<1x32xf32>
      %c0_236 = arith.constant 0 : index
      %c0_237 = arith.constant 0 : index
      %468 = vector.load %arg20[%c0_236, %c0_237] : memref<1x32xf32, #tpu.memory_space<vmem>>, vector<1x32xf32>
      %cst_238 = arith.constant dense<0.000000e+00> : vector<17xf32>
      %469 = vector.multi_reduction <add>, %466, %cst_238 [1] : vector<17x32xf32> to vector<17xf32>
      %470 = vector.shape_cast %469 : vector<17xf32> to vector<17x1xf32>
      %cst_239 = arith.constant 3.200000e+01 : f32
      %471 = vector.broadcast %cst_239 : f32 to vector<17x1xf32>
      %472 = arith.divf %470, %471 : vector<17x1xf32>
      %473 = vector.broadcast %472 : vector<17x1xf32> to vector<17x32xf32>
      %474 = arith.subf %466, %473 : vector<17x32xf32>
      %475 = arith.mulf %474, %474 : vector<17x32xf32>
      %cst_240 = arith.constant dense<0.000000e+00> : vector<17xf32>
      %476 = vector.multi_reduction <add>, %475, %cst_240 [1] : vector<17x32xf32> to vector<17xf32>
      %477 = vector.shape_cast %476 : vector<17xf32> to vector<17x1xf32>
      %cst_241 = arith.constant 3.200000e+01 : f32
      %478 = vector.broadcast %cst_241 : f32 to vector<17x1xf32>
      %479 = arith.divf %477, %478 : vector<17x1xf32>
      %cst_242 = arith.constant 9.99999974E-6 : f32
      %480 = vector.broadcast %cst_242 : f32 to vector<17x1xf32>
      %481 = arith.addf %479, %480 : vector<17x1xf32>
      %482 = math.rsqrt %481 : vector<17x1xf32>
      %483 = vector.broadcast %482 : vector<17x1xf32> to vector<17x32xf32>
      %484 = arith.mulf %474, %483 : vector<17x32xf32>
      %485 = vector.broadcast %467 : vector<1x32xf32> to vector<17x32xf32>
      %486 = arith.mulf %484, %485 : vector<17x32xf32>
      %487 = vector.broadcast %468 : vector<1x32xf32> to vector<17x32xf32>
      %488 = arith.addf %486, %487 : vector<17x32xf32>
      %489 = arith.truncf %488 : vector<17x32xf32> to vector<17x32xbf16>
      %c0_243 = arith.constant 0 : index
      %c0_244 = arith.constant 0 : index
      %490 = vector.load %arg21[%c0_243, %c0_244] : memref<32x16xbf16, #tpu.memory_space<vmem>>, vector<32x16xbf16>
      %cst_245 = arith.constant dense<0.000000e+00> : vector<17x16xf32>
      %491 = tpu.matmul %489, %490, %cst_245 {dimension_numbers = #tpu.dot_dimension_numbers<[1], [0], [0], [1], [0, 0, 1, 1], [], []>} : vector<17x32xbf16>, vector<32x16xbf16>, vector<17x16xf32> -> vector<17x16xf32>
      %c0_246 = arith.constant 0 : index
      %c0_247 = arith.constant 0 : index
      %492 = vector.load %arg22[%c0_246, %c0_247] : memref<1x16xf32, #tpu.memory_space<vmem>>, vector<1x16xf32>
      %493 = vector.broadcast %492 : vector<1x16xf32> to vector<17x16xf32>
      %494 = arith.addf %491, %493 : vector<17x16xf32>
      %c1_248 = arith.constant 1 : index
      %c0_249 = arith.constant 0 : index
      %c0_250 = arith.constant 0 : index
      %495 = vector.load %arg23[%c1_248, %c0_249, %c0_250] : memref<2x17x16xf32, #tpu.memory_space<vmem>>, vector<1x17x16xf32>
      %496 = vector.shape_cast %495 : vector<1x17x16xf32> to vector<17x16xf32>
      %497 = vector.shape_cast %494 : vector<17x16xf32> to vector<1x17x16xf32>
      tpu.vector_store %arg23[%c1_248, %c0_249, %c0_250], %497 {strides = array<i32>} : memref<2x17x16xf32, #tpu.memory_space<vmem>>, vector<1x17x16xf32>,
    } else {
    }
    return
  }
  func.func @transform_0(%arg0: i32) -> (i32, i32, i32) {
    %c0_i32 = arith.constant 0 : i32
    %c0_i32_0 = arith.constant 0 : i32
    %c0_i32_1 = arith.constant 0 : i32
    %c0_i32_2 = arith.constant 0 : i32
    return %c0_i32, %c0_i32_0, %c0_i32_1 : i32, i32, i32
  }
  func.func @transform_1(%arg0: i32) -> (i32, i32, i32) {
    %c0_i32 = arith.constant 0 : i32
    %c0_i32_0 = arith.constant 0 : i32
    %c0_i32_1 = arith.constant 0 : i32
    %c0_i32_2 = arith.constant 0 : i32
    return %c0_i32, %c0_i32_0, %c0_i32_1 : i32, i32, i32
  }
  func.func @transform_2(%arg0: i32) -> (i32, i32, i32) {
    %c0_i32 = arith.constant 0 : i32
    %c0_i32_0 = arith.constant 0 : i32
    %c0_i32_1 = arith.constant 0 : i32
    return %arg0, %c0_i32, %c0_i32_0 : i32, i32, i32
  }
  func.func @transform_3(%arg0: i32) -> (i32, i32, i32) {
    %c0_i32 = arith.constant 0 : i32
    %c0_i32_0 = arith.constant 0 : i32
    %c0_i32_1 = arith.constant 0 : i32
    return %arg0, %c0_i32, %c0_i32_0 : i32, i32, i32
  }
  func.func @transform_4(%arg0: i32) -> (i32, i32, i32) {
    %c0_i32 = arith.constant 0 : i32
    %c0_i32_0 = arith.constant 0 : i32
    %c0_i32_1 = arith.constant 0 : i32
    return %arg0, %c0_i32, %c0_i32_0 : i32, i32, i32
  }
  func.func @transform_5(%arg0: i32) -> (i32, i32, i32) {
    %c0_i32 = arith.constant 0 : i32
    %c0_i32_0 = arith.constant 0 : i32
    %c0_i32_1 = arith.constant 0 : i32
    return %arg0, %c0_i32, %c0_i32_0 : i32, i32, i32
  }
  func.func @transform_6(%arg0: i32) -> (i32, i32, i32) {
    %c0_i32 = arith.constant 0 : i32
    %c0_i32_0 = arith.constant 0 : i32
    %c0_i32_1 = arith.constant 0 : i32
    return %arg0, %c0_i32, %c0_i32_0 : i32, i32, i32
  }
  func.func @transform_7(%arg0: i32) -> (i32, i32, i32) {
    %c0_i32 = arith.constant 0 : i32
    %c0_i32_0 = arith.constant 0 : i32
    %c0_i32_1 = arith.constant 0 : i32
    return %arg0, %c0_i32, %c0_i32_0 : i32, i32, i32
  }
  func.func @transform_8(%arg0: i32) -> (i32, i32, i32) {
    %c0_i32 = arith.constant 0 : i32
    %c0_i32_0 = arith.constant 0 : i32
    %c0_i32_1 = arith.constant 0 : i32
    return %arg0, %c0_i32, %c0_i32_0 : i32, i32, i32
  }
  func.func @transform_9(%arg0: i32) -> (i32, i32, i32) {
    %c0_i32 = arith.constant 0 : i32
    %c0_i32_0 = arith.constant 0 : i32
    %c0_i32_1 = arith.constant 0 : i32
    return %arg0, %c0_i32, %c0_i32_0 : i32, i32, i32
  }
  func.func @transform_10(%arg0: i32) -> (i32, i32, i32) {
    %c0_i32 = arith.constant 0 : i32
    %c0_i32_0 = arith.constant 0 : i32
    %c0_i32_1 = arith.constant 0 : i32
    return %arg0, %c0_i32, %c0_i32_0 : i32, i32, i32
  }
  func.func @transform_11(%arg0: i32) -> (i32, i32, i32) {
    %c0_i32 = arith.constant 0 : i32
    %c0_i32_0 = arith.constant 0 : i32
    %c0_i32_1 = arith.constant 0 : i32
    return %arg0, %c0_i32, %c0_i32_0 : i32, i32, i32
  }
  func.func @transform_12(%arg0: i32) -> (i32, i32, i32) {
    %c0_i32 = arith.constant 0 : i32
    %c0_i32_0 = arith.constant 0 : i32
    %c0_i32_1 = arith.constant 0 : i32
    return %arg0, %c0_i32, %c0_i32_0 : i32, i32, i32
  }
  func.func @transform_13(%arg0: i32) -> (i32, i32, i32) {
    %c0_i32 = arith.constant 0 : i32
    %c0_i32_0 = arith.constant 0 : i32
    %c0_i32_1 = arith.constant 0 : i32
    return %arg0, %c0_i32, %c0_i32_0 : i32, i32, i32
  }
  func.func @transform_14(%arg0: i32) -> (i32, i32, i32) {
    %c0_i32 = arith.constant 0 : i32
    %c0_i32_0 = arith.constant 0 : i32
    %c0_i32_1 = arith.constant 0 : i32
    return %arg0, %c0_i32, %c0_i32_0 : i32, i32, i32
  }
  func.func @transform_15(%arg0: i32) -> (i32, i32, i32) {
    %c0_i32 = arith.constant 0 : i32
    %c0_i32_0 = arith.constant 0 : i32
    %c0_i32_1 = arith.constant 0 : i32
    return %arg0, %c0_i32, %c0_i32_0 : i32, i32, i32
  }
  func.func @transform_16(%arg0: i32) -> (i32, i32, i32) {
    %c0_i32 = arith.constant 0 : i32
    %c0_i32_0 = arith.constant 0 : i32
    %c0_i32_1 = arith.constant 0 : i32
    return %arg0, %c0_i32, %c0_i32_0 : i32, i32, i32
  }
  func.func @transform_17(%arg0: i32) -> (i32, i32, i32) {
    %c0_i32 = arith.constant 0 : i32
    %c0_i32_0 = arith.constant 0 : i32
    %c0_i32_1 = arith.constant 0 : i32
    return %arg0, %c0_i32, %c0_i32_0 : i32, i32, i32
  }
  func.func @transform_18(%arg0: i32) -> (i32, i32) {
    %c0_i32 = arith.constant 0 : i32
    %c0_i32_0 = arith.constant 0 : i32
    %c0_i32_1 = arith.constant 0 : i32
    return %c0_i32, %c0_i32_0 : i32, i32
  }
  func.func @transform_19(%arg0: i32) -> (i32, i32) {
    %c0_i32 = arith.constant 0 : i32
    %c0_i32_0 = arith.constant 0 : i32
    %c0_i32_1 = arith.constant 0 : i32
    return %c0_i32, %c0_i32_0 : i32, i32
  }
  func.func @transform_20(%arg0: i32) -> (i32, i32) {
    %c0_i32 = arith.constant 0 : i32
    %c0_i32_0 = arith.constant 0 : i32
    %c0_i32_1 = arith.constant 0 : i32
    return %c0_i32, %c0_i32_0 : i32, i32
  }
  func.func @transform_21(%arg0: i32) -> (i32, i32) {
    %c0_i32 = arith.constant 0 : i32
    %c0_i32_0 = arith.constant 0 : i32
    %c0_i32_1 = arith.constant 0 : i32
    return %c0_i32, %c0_i32_0 : i32, i32
  }
  func.func @transform_22(%arg0: i32) -> (i32, i32, i32) {
    %c0_i32 = arith.constant 0 : i32
    %c0_i32_0 = arith.constant 0 : i32
    %c0_i32_1 = arith.constant 0 : i32
    %c0_i32_2 = arith.constant 0 : i32
    return %c0_i32, %c0_i32_0, %c0_i32_1 : i32, i32, i32
  }
}

</mosaic_0001>

<llo_original>
// kernel: _lambda_.3
$region0: #{_lambda_.3}
  #allocation0 [shape = 'u32[]', space=smem, size = 0x4, offset = 0x4, fixed_abs, tag = 'smem constant byte address 0x4 - core index']
  #allocation1 [shape = 'u32[144,128]{1,0:T(1,128)}', space=vmem, size = 0x12000, scoped, tag = 'internal scratch']
  %s0 = inlined_call_operand.vmem [shape: f32[2,16,16], index: 0, kind: input, shape index: {}]
  %s1 = inlined_call_operand.vmem [shape: bf16[16,32], index: 1, kind: input, shape index: {}]
  %s2 = inlined_call_operand.vmem [shape: f32[1,32], index: 2, kind: input, shape index: {}]
  %s3 = inlined_call_operand.vmem [shape: f32[1,16,32], index: 3, kind: input, shape index: {}]
  %s4 = inlined_call_operand.vmem [shape: f32[2,16,32], index: 4, kind: output, shape index: {}]
  %s5 = sld [smem:[#allocation0]]
  $region49: #{_lambda_.3} parent=0
    _
  %s7 = ssub.s32 1, %s5
  %s8 = scalar_select 0, %s7, %s5
  loop: start=0, step=1, limit=4
  $region2: #{_lambda_.3} parent=0 // loop_pre_header
    _
  $region3: #{_lambda_.3} parent=0 // loop_header
    %s10 = sphi 0, %s14
    %p11 = scmp.ge.s32.totalorder %s10, 4
    %s20 = sphi 0, %s22
    %s23 = sphi 0, %s20
    %s24 = sphi 0, %s23
    %s40 = sphi 0, %s24
    %s44 = sphi 0, %s44
    %s46 = sphi 0, %s44
    %s47 = sphi 0, %s46
    %s61 = sphi 0, %s47
    %s65 = sphi 0, %s65
    %s67 = sphi 0, %s65
    %s68 = sphi 0, %s67
    %s82 = sphi 0, %s68
    %s86 = sphi 0, %s86
    %s88 = sphi 0, %s86
    %s89 = sphi 0, %s88
    %s103 = sphi 0, %s89
    %s109 = sphi 0, %s111
    %s112 = sphi 0, %s109
    %s113 = sphi 0, %s112
    %s129 = sphi 0, %s113
  $region4: #{_lambda_.3} parent=0 // loop_header_branch
    %13 = sbr.rel (%p11) target = $region8
  $region5: #{_lambda_.3} parent=0 // loop_body
    %s15 = ssub.s32 %s10, 1
    %s16 = ssub.s32 %s10, 2
    %s17 = sadd.s32 %s10, 1
    %s18 = ssub.s32 %s10, %s17
    %p19 = scmp.eq.s32.totalorder %s18, 0
    %s21 = sadd.s32 %s20, 1
    %s22 = scalar_select %p19, %s20, %s21
    %p25 = pneg %p19
    %p26 = scmp.eq.s32.totalorder %s10, 1
    %p27 = por %p25, %p26
    %p28 = scmp.ne.s32.totalorder %s20, %s23
    %p29 = scmp.eq.s32.totalorder %s10, 0
    %p30 = por %p28, %p29
    %p31 = scmp.ne.s32.totalorder %s20, %s23
    %p32 = scmp.eq.s32.totalorder %s15, 1
    %p33 = por %p31, %p32
    %p34 = scmp.ne.s32.totalorder %s23, %s24
    %p35 = scmp.eq.s32.totalorder %s15, 0
    %p36 = por %p34, %p35
    %p37 = scmp.ne.s32.totalorder %s23, %s24
    %p38 = scmp.eq.s32.totalorder %s16, 1
    %p39 = por %p37, %p38
    %p41 = scmp.ne.s32.totalorder %s24, %s40
    %p42 = scmp.eq.s32.totalorder %s16, 0
    %p43 = por %p41, %p42
    %s45 = sadd.s32 %s44, 1
    %p48 = scmp.eq.s32.totalorder %s10, 1
    %p49 = scmp.ne.s32.totalorder %s44, %s46
    %p50 = scmp.eq.s32.totalorder %s10, 0
    %p51 = por %p49, %p50
    %p52 = scmp.ne.s32.totalorder %s44, %s46
    %p53 = scmp.eq.s32.totalorder %s15, 1
    %p54 = por %p52, %p53
    %p55 = scmp.ne.s32.totalorder %s46, %s47
    %p56 = scmp.eq.s32.totalorder %s15, 0
    %p57 = por %p55, %p56
    %p58 = scmp.ne.s32.totalorder %s46, %s47
    %p59 = scmp.eq.s32.totalorder %s16, 1
    %p60 = por %p58, %p59
    %p62 = scmp.ne.s32.totalorder %s47, %s61
    %p63 = scmp.eq.s32.totalorder %s16, 0
    %p64 = por %p62, %p63
    %s66 = sadd.s32 %s65, 1
    %p69 = scmp.eq.s32.totalorder %s10, 1
    %p70 = scmp.ne.s32.totalorder %s65, %s67
    %p71 = scmp.eq.s32.totalorder %s10, 0
    %p72 = por %p70, %p71
    %p73 = scmp.ne.s32.totalorder %s65, %s67
    %p74 = scmp.eq.s32.totalorder %s15, 1
    %p75 = por %p73, %p74
    %p76 = scmp.ne.s32.totalorder %s67, %s68
    %p77 = scmp.eq.s32.totalorder %s15, 0
    %p78 = por %p76, %p77
    %p79 = scmp.ne.s32.totalorder %s67, %s68
    %p80 = scmp.eq.s32.totalorder %s16, 1
    %p81 = por %p79, %p80
    %p83 = scmp.ne.s32.totalorder %s68, %s82
    %p84 = scmp.eq.s32.totalorder %s16, 0
    %p85 = por %p83, %p84
    %s87 = sadd.s32 %s86, 1
    %p90 = scmp.eq.s32.totalorder %s10, 1
    %p91 = scmp.ne.s32.totalorder %s86, %s88
    %p92 = scmp.eq.s32.totalorder %s10, 0
    %p93 = por %p91, %p92
    %p94 = scmp.ne.s32.totalorder %s86, %s88
    %p95 = scmp.eq.s32.totalorder %s15, 1
    %p96 = por %p94, %p95
    %p97 = scmp.ne.s32.totalorder %s88, %s89
    %p98 = scmp.eq.s32.totalorder %s15, 0
    %p99 = por %p97, %p98
    %p100 = scmp.ne.s32.totalorder %s88, %s89
    %p101 = scmp.eq.s32.totalorder %s16, 1
    %p102 = por %p100, %p101
    %p104 = scmp.ne.s32.totalorder %s89, %s103
    %p105 = scmp.eq.s32.totalorder %s16, 0
    %p106 = por %p104, %p105
    %s107 = ssub.s32 %s10, %s17
    %p108 = scmp.eq.s32.totalorder %s107, 0
    %s110 = sadd.s32 %s109, 1
    %s111 = scalar_select %p108, %s109, %s110
    %p114 = pneg %p108
    %p115 = scmp.eq.s32.totalorder %s10, 1
    %p116 = por %p114, %p115
    %p117 = scmp.ne.s32.totalorder %s109, %s112
    %p118 = scmp.eq.s32.totalorder %s10, 0
    %p119 = por %p117, %p118
    %p120 = scmp.ne.s32.totalorder %s109, %s112
    %p121 = scmp.eq.s32.totalorder %s15, 1
    %p122 = por %p120, %p121
    %p123 = scmp.ne.s32.totalorder %s112, %s113
    %p124 = scmp.eq.s32.totalorder %s15, 0
    %p125 = por %p123, %p124
    %p126 = scmp.ne.s32.totalorder %s112, %s113
    %p127 = scmp.eq.s32.totalorder %s16, 1
    %p128 = por %p126, %p127
    %p130 = scmp.ne.s32.totalorder %s113, %s129
    %p131 = scmp.eq.s32.totalorder %s16, 0
    %p132 = por %p130, %p131
    %p133 = scmp.le.s32.totalorder 1, %s10
    %p134 = scmp.lt.s32.totalorder %s10, 3
    %p135 = pnand %p133, %p134
    %p136 = pneg %p135
    // Predicated region
    $region9: #{_lambda_.3} parent=5 // pred_check
      _
    $region10: #{_lambda_.3} parent=5 // pred_check_branch
      %138 = sbr.rel (%p135) target = $region12
    $region11: #{_lambda_.3} parent=5 // pred_region
      %s139 = ssub.s32 %s10, 1
      // Predicated region
      $region13: #{_lambda_.3} parent=11 // pred_check
        %p140 = pneg %p57
      $region14: #{_lambda_.3} parent=11 // pred_check_branch
        %142 = sbr.rel (%p140) target = $region16
      $region15: #{_lambda_.3} parent=11 // pred_region
        _
      $region16: #{_lambda_.3} parent=11 // pred_fallthru
        _
      // Predicated region
      $region17: #{_lambda_.3} parent=11 // pred_check
        %p143 = pneg %p78
      $region18: #{_lambda_.3} parent=11 // pred_check_branch
        %145 = sbr.rel (%p143) target = $region20
      $region19: #{_lambda_.3} parent=11 // pred_region
        _
      $region20: #{_lambda_.3} parent=11 // pred_fallthru
        _
      // Predicated region
      $region21: #{_lambda_.3} parent=11 // pred_check
        %p146 = pneg %p99
      $region22: #{_lambda_.3} parent=11 // pred_check_branch
        %148 = sbr.rel (%p146) target = $region24
      $region23: #{_lambda_.3} parent=11 // pred_region
        _
      $region24: #{_lambda_.3} parent=11 // pred_fallthru
        _
    $region12: #{_lambda_.3} parent=5 // pred_fallthru
      _
    %p149 = scmp.lt.s32.totalorder %s10, 2
    // Predicated region
    $region25: #{_lambda_.3} parent=5 // pred_check
      %p150 = pneg %p149
    $region26: #{_lambda_.3} parent=5 // pred_check_branch
      %152 = sbr.rel (%p150) target = $region28
    $region27: #{_lambda_.3} parent=5 // pred_region
      // Predicated region
      $region29: #{_lambda_.3} parent=27 // pred_check
        %p153 = pneg %p30
      $region30: #{_lambda_.3} parent=27 // pred_check_branch
        %155 = sbr.rel (%p153) target = $region32
      $region31: #{_lambda_.3} parent=27 // pred_region
        %p156 = scmp.lt.s32.totalorder %s10, 1
        %s157 = scalar_select %p156, %s10, 1
        %s158 = smul.addr %s157, 2
        %s159 = smul.addr %s158, 8
        %s160 = scalar_lea.vmem %s0, %s159
      $region32: #{_lambda_.3} parent=27 // pred_fallthru
        _
    $region28: #{_lambda_.3} parent=5 // pred_fallthru
      _
    %p161 = scmp.le.s32.totalorder 1, %s10
    %p162 = scmp.lt.s32.totalorder %s10, 3
    %p163 = pnand %p161, %p162
    %p164 = pneg %p163
    // Predicated region
    $region33: #{_lambda_.3} parent=5 // pred_check
      _
    $region34: #{_lambda_.3} parent=5 // pred_check_branch
      %166 = sbr.rel (%p163) target = $region36
    $region35: #{_lambda_.3} parent=5 // pred_region
      %s167 = ssub.s32 %s10, 1
      %p168 = scmp.lt.s32.totalorder %s15, 1
      %s169 = scalar_select %p168, %s15, 1
      %s170 = smul.addr %s169, 2
      %s171 = smul.addr %s170, 8
      %s172 = scalar_lea.vmem %s0, %s171
      %p173 = pneg %p36
      %p174 = pneg %p33
      %p175 = pneg %p57
      %p176 = pneg %p54
      %p177 = pneg %p78
      %p178 = pneg %p75
      %p179 = pneg %p99
      %p180 = pneg %p96
      %p181 = pneg %p125
      %p182 = pneg %p122
      %p183 = scmp.lt.s32.totalorder %s15, 1
      %s184 = scalar_select %p183, %s15, 1
      %s185 = smul.addr %s184, 2
      %s186 = smul.addr %s185, 8
      %s187 = scalar_lea.vmem %s4, %s186
      %p188 = scmp.lt.s32.totalorder %s15, 1
      %s189 = scalar_select %p188, %s15, 1
      %s190 = smul.addr %s189, 2
      %s191 = smul.addr %s190, 8
      %s192 = scalar_lea.vmem %s0, %s191
      %p193 = scmp.lt.s32.totalorder %s15, 1
      %s194 = scalar_select %p193, %s15, 1
      %s195 = smul.addr %s194, 2
      %s196 = smul.addr %s195, 8
      %s197 = scalar_lea.vmem %s4, %s196
      %v199 = vld [vmem:[%s192] sm:$0xff]
      %v200 = vld [vmem:[%s192 + $0x8] sm:$0xff]
      %v201 = vpack.c.bf16 %v200, %v199
      %v202 = vld [vmem:[%s1] sm:$0xf]
      %v203 = vld [vmem:[%s1 + $0x4] sm:$0xf]
      %v204 = vld [vmem:[%s2] sm:$0x1]
      %v206 = vlaneseq
      %v207 = vshrl.u32 %v206, 7
      %v208 = vsub.s32 0, %v207
      %v209 = vrot.slane %v204, %v208
      %v213 = vunpack.c.l.b16 %v202
      %v214 = vunpack.c.l.b16 %v203
      %v215 = vpack.c.b16 %v214, %v213
      %vm217 = vcmask 130048
      %v219 = vsel %vm217, %v201, 0
      %221 = vmatprep.subr.bf16.mxu0 0
      %222 = vmatpush1.bf16.msra.mxu0 %v215
      %223 = vmatprep.subr.bf16.mxu0 0
      %224 = vmatpush1.bf16.msra.mxu0 0
      %225 = vmatprep.subr.bf16.mxu0 0
      %226 = vmatpush1.bf16.msra.mxu0 0
      %227 = vmatprep.subr.bf16.mxu0 0
      %228 = vmatpush1.bf16.msra.mxu0 0
      %229 = vmatprep.subr.bf16.mxu0 0
      %230 = vmatpush1.bf16.msra.mxu0 0
      %231 = vmatprep.subr.bf16.mxu0 0
      %232 = vmatpush1.bf16.msra.mxu0 0
      %233 = vmatprep.subr.bf16.mxu0 0
      %234 = vmatpush1.bf16.msra.mxu0 0
      %235 = vmatprep.subr.bf16.mxu0 0
      %236 = vmatpush1.bf16.msra.mxu0 0
      %237 = vmatprep.subr.bf16.mxu0 0
      %238 = vmatpush1.bf16.msra.mxu0 0
      %239 = vmatprep.subr.bf16.mxu0 0
      %240 = vmatpush1.bf16.msra.mxu0 0
      %241 = vmatprep.subr.bf16.mxu0 0
      %242 = vmatpush1.bf16.msra.mxu0 0
      %243 = vmatprep.subr.bf16.mxu0 0
      %244 = vmatpush1.bf16.msra.mxu0 0
      %245 = vmatprep.subr.bf16.mxu0 0
      %246 = vmatpush1.bf16.msra.mxu0 0
      %247 = vmatprep.subr.bf16.mxu0 0
      %248 = vmatpush1.bf16.msra.mxu0 0
      %249 = vmatprep.subr.bf16.mxu0 0
      %250 = vmatpush1.bf16.msra.mxu0 0
      %251 = vmatprep.subr.bf16.mxu0 0
      %252 = vmatpush1.bf16.msra.mxu0 0
      %253 = vmatprep.mubr.bf16.mxu0 0
      %254 = vmatmul.mubr.bf16.gmra.mrb[0].mxu0 %v219
      %v255 = vpop.f32.mrb[0].mxu0
      %v256 = vadd.f32 %v209, %v255
      %v257 = vpop.f32.mrb[0].mxu0
      %v258 = vpop.f32.mrb[0].mxu0
      %v259 = vadd.f32 %v209, %v258
      %v260 = vpop.f32.mrb[0].mxu0
      %261 = vdwg.mxu0
      %v262 = vld [vmem:[%s3] sm:$0xff]
      %v263 = vld [vmem:[%s3 + $0x8] sm:$0xff]
      %v264 = vadd.f32 %v256, %v262
      %v265 = vadd.f32 %v259, %v263
      %vm266 = vcmask 261120
      %267 = vst.msk [vmem:[%s197] sm:$0xff] %vm266, %v264
      %268 = vst.msk [vmem:[%s197 + $0x8] sm:$0xff] %vm266, %v265
      %p269 = scmp.lt.s32.totalorder %s15, 1
      %s270 = scalar_select %p269, %s15, 1
      %s271 = smul.addr %s270, 2
      %s272 = smul.addr %s271, 8
      %s273 = scalar_lea.vmem %s4, %s272
      // Predicated region
      $region37: #{_lambda_.3} parent=35 // pred_check
        %p274 = pneg %p122
      $region38: #{_lambda_.3} parent=35 // pred_check_branch
        %276 = sbr.rel (%p274) target = $region40
      $region39: #{_lambda_.3} parent=35 // pred_region
        _
      $region40: #{_lambda_.3} parent=35 // pred_fallthru
        _
    $region36: #{_lambda_.3} parent=5 // pred_fallthru
      _
    %p277 = scmp.le.s32.totalorder 2, %s10
    // Predicated region
    $region41: #{_lambda_.3} parent=5 // pred_check
      %p278 = pneg %p277
    $region42: #{_lambda_.3} parent=5 // pred_check_branch
      %280 = sbr.rel (%p278) target = $region44
    $region43: #{_lambda_.3} parent=5 // pred_region
      %s281 = ssub.s32 %s10, 2
      // Predicated region
      $region45: #{_lambda_.3} parent=43 // pred_check
        %p282 = pneg %p128
      $region46: #{_lambda_.3} parent=43 // pred_check_branch
        %284 = sbr.rel (%p282) target = $region48
      $region47: #{_lambda_.3} parent=43 // pred_region
        %p285 = scmp.lt.s32.totalorder %s16, 1
        %s286 = scalar_select %p285, %s16, 1
        %s287 = smul.addr %s286, 2
        %s288 = smul.addr %s287, 8
        %s289 = scalar_lea.vmem %s4, %s288
      $region48: #{_lambda_.3} parent=43 // pred_fallthru
        _
    $region44: #{_lambda_.3} parent=5 // pred_fallthru
      _
  $region6: #{_lambda_.3} parent=0 // loop_footer
    %s14 = sadd.s32 1, %s10
  $region7: #{_lambda_.3} parent=0 // loop_footer_branch
    %9 = sbr.rel target = $region3
  $region8: #{_lambda_.3} parent=0 // loop_exit
    _

// kernel: _lambda_.4
$region0: #{_lambda_.4}
  #allocation0 [shape = 'u32[]', space=smem, size = 0x4, offset = 0x4, fixed_abs, tag = 'smem constant byte address 0x4 - core index']
  #allocation1 [shape = 'u32[144,128]{1,0:T(1,128)}', space=vmem, size = 0x12000, scoped, tag = 'internal scratch']
  #allocation2 [shape = 'f32[2,13,32]{2,1,0:T(8,128)}', space=vmem, size = 0x4000, scoped, tag = 'scratch operand']
  %s0 = inlined_call_operand.vmem [shape: f32[2,13,32], index: 0, kind: input, shape index: {}]
  %s1 = inlined_call_operand.vmem [shape: f32[2,1,32], index: 1, kind: input, shape index: {}]
  %s2 = inlined_call_operand.vmem [shape: f32[2,1,32], index: 2, kind: input, shape index: {}]
  %s3 = inlined_call_operand.vmem [shape: bf16[2,32,32], index: 3, kind: input, shape index: {}]
  %s4 = inlined_call_operand.vmem [shape: f32[2,1,32], index: 4, kind: input, shape index: {}]
  %s5 = inlined_call_operand.vmem [shape: bf16[2,32,32], index: 5, kind: input, shape index: {}]
  %s6 = inlined_call_operand.vmem [shape: f32[2,1,32], index: 6, kind: input, shape index: {}]
  %s7 = inlined_call_operand.vmem [shape: bf16[2,32,32], index: 7, kind: input, shape index: {}]
  %s8 = inlined_call_operand.vmem [shape: f32[2,1,32], index: 8, kind: input, shape index: {}]
  %s9 = inlined_call_operand.vmem [shape: bf16[2,32,32], index: 9, kind: input, shape index: {}]
  %s10 = inlined_call_operand.vmem [shape: f32[2,1,32], index: 10, kind: input, shape index: {}]
  %s11 = inlined_call_operand.vmem [shape: f32[2,1,32], index: 11, kind: input, shape index: {}]
  %s12 = inlined_call_operand.vmem [shape: f32[2,1,32], index: 12, kind: input, shape index: {}]
  %s13 = inlined_call_operand.vmem [shape: bf16[2,32,128], index: 13, kind: input, shape index: {}]
  %s14 = inlined_call_operand.vmem [shape: f32[2,1,128], index: 14, kind: input, shape index: {}]
  %s15 = inlined_call_operand.vmem [shape: bf16[2,128,32], index: 15, kind: input, shape index: {}]
  %s16 = inlined_call_operand.vmem [shape: f32[2,1,32], index: 16, kind: input, shape index: {}]
  %s17 = inlined_call_operand.vmem [shape: f32[1,32], index: 17, kind: input, shape index: {}]
  %s18 = inlined_call_operand.vmem [shape: f32[1,32], index: 18, kind: input, shape index: {}]
  %s19 = inlined_call_operand.vmem [shape: bf16[32,32], index: 19, kind: input, shape index: {}]
  %s20 = inlined_call_operand.vmem [shape: f32[1,32], index: 20, kind: input, shape index: {}]
  %s21 = inlined_call_operand.vmem [shape: bf16[2,13,32], index: 21, kind: output, shape index: {}]
  %s22 = sld [smem:[#allocation0]]
  $region125: #{_lambda_.4} parent=0
    _
  %s24 = ssub.s32 1, %s22
  %s25 = scalar_select 0, %s24, %s22
  loop: start=0, step=1, limit=4
  $region2: #{_lambda_.4} parent=0 // loop_pre_header
    _
  $region3: #{_lambda_.4} parent=0 // loop_header
    %s27 = sphi 0, %s31
    %p28 = scmp.ge.s32.totalorder %s27, 4
    %s35 = sphi 0, %s35
    %s37 = sphi 0, %s35
    %s38 = sphi 0, %s37
    %s52 = sphi 0, %s38
    %s58 = sphi 0, %s60
    %s61 = sphi 0, %s58
    %s62 = sphi 0, %s61
    %s78 = sphi 0, %s62
    %s84 = sphi 0, %s86
    %s87 = sphi 0, %s84
    %s88 = sphi 0, %s87
    %s104 = sphi 0, %s88
    %s110 = sphi 0, %s112
    %s113 = sphi 0, %s110
    %s114 = sphi 0, %s113
    %s130 = sphi 0, %s114
    %s136 = sphi 0, %s138
    %s139 = sphi 0, %s136
    %s140 = sphi 0, %s139
    %s156 = sphi 0, %s140
    %s162 = sphi 0, %s164
    %s165 = sphi 0, %s162
    %s166 = sphi 0, %s165
    %s182 = sphi 0, %s166
    %s188 = sphi 0, %s190
    %s191 = sphi 0, %s188
    %s192 = sphi 0, %s191
    %s208 = sphi 0, %s192
    %s214 = sphi 0, %s216
    %s217 = sphi 0, %s214
    %s218 = sphi 0, %s217
    %s234 = sphi 0, %s218
    %s240 = sphi 0, %s242
    %s243 = sphi 0, %s240
    %s244 = sphi 0, %s243
    %s260 = sphi 0, %s244
    %s266 = sphi 0, %s268
    %s269 = sphi 0, %s266
    %s270 = sphi 0, %s269
    %s286 = sphi 0, %s270
    %s292 = sphi 0, %s294
    %s295 = sphi 0, %s292
    %s296 = sphi 0, %s295
    %s312 = sphi 0, %s296
    %s318 = sphi 0, %s320
    %s321 = sphi 0, %s318
    %s322 = sphi 0, %s321
    %s338 = sphi 0, %s322
    %s344 = sphi 0, %s346
    %s347 = sphi 0, %s344
    %s348 = sphi 0, %s347
    %s364 = sphi 0, %s348
    %s370 = sphi 0, %s372
    %s373 = sphi 0, %s370
    %s374 = sphi 0, %s373
    %s390 = sphi 0, %s374
    %s396 = sphi 0, %s398
    %s399 = sphi 0, %s396
    %s400 = sphi 0, %s399
    %s416 = sphi 0, %s400
    %s422 = sphi 0, %s424
    %s425 = sphi 0, %s422
    %s426 = sphi 0, %s425
    %s442 = sphi 0, %s426
    %s448 = sphi 0, %s450
    %s451 = sphi 0, %s448
    %s452 = sphi 0, %s451
    %s468 = sphi 0, %s452
    %s472 = sphi 0, %s472
    %s474 = sphi 0, %s472
    %s475 = sphi 0, %s474
    %s489 = sphi 0, %s475
    %s493 = sphi 0, %s493
    %s495 = sphi 0, %s493
    %s496 = sphi 0, %s495
    %s510 = sphi 0, %s496
    %s514 = sphi 0, %s514
    %s516 = sphi 0, %s514
    %s517 = sphi 0, %s516
    %s531 = sphi 0, %s517
    %s535 = sphi 0, %s535
    %s537 = sphi 0, %s535
    %s538 = sphi 0, %s537
    %s552 = sphi 0, %s538
    %s556 = sphi 0, %s556
    %s558 = sphi 0, %s556
    %s559 = sphi 0, %s558
    %s573 = sphi 0, %s559
  $region4: #{_lambda_.4} parent=0 // loop_header_branch
    %30 = sbr.rel (%p28) target = $region8
  $region5: #{_lambda_.4} parent=0 // loop_body
    %s32 = ssub.s32 %s27, 1
    %s33 = ssub.s32 %s27, 2
    %s34 = sadd.s32 %s27, 1
    %s36 = sadd.s32 %s35, 1
    %p39 = scmp.eq.s32.totalorder %s27, 1
    %p40 = scmp.ne.s32.totalorder %s35, %s37
    %p41 = scmp.eq.s32.totalorder %s27, 0
    %p42 = por %p40, %p41
    %p43 = scmp.ne.s32.totalorder %s35, %s37
    %p44 = scmp.eq.s32.totalorder %s32, 1
    %p45 = por %p43, %p44
    %p46 = scmp.ne.s32.totalorder %s37, %s38
    %p47 = scmp.eq.s32.totalorder %s32, 0
    %p48 = por %p46, %p47
    %p49 = scmp.ne.s32.totalorder %s37, %s38
    %p50 = scmp.eq.s32.totalorder %s33, 1
    %p51 = por %p49, %p50
    %p53 = scmp.ne.s32.totalorder %s38, %s52
    %p54 = scmp.eq.s32.totalorder %s33, 0
    %p55 = por %p53, %p54
    %s56 = ssub.s32 %s27, %s34
    %p57 = scmp.eq.s32.totalorder %s56, 0
    %s59 = sadd.s32 %s58, 1
    %s60 = scalar_select %p57, %s58, %s59
    %p63 = pneg %p57
    %p64 = scmp.eq.s32.totalorder %s27, 1
    %p65 = por %p63, %p64
    %p66 = scmp.ne.s32.totalorder %s58, %s61
    %p67 = scmp.eq.s32.totalorder %s27, 0
    %p68 = por %p66, %p67
    %p69 = scmp.ne.s32.totalorder %s58, %s61
    %p70 = scmp.eq.s32.totalorder %s32, 1
    %p71 = por %p69, %p70
    %p72 = scmp.ne.s32.totalorder %s61, %s62
    %p73 = scmp.eq.s32.totalorder %s32, 0
    %p74 = por %p72, %p73
    %p75 = scmp.ne.s32.totalorder %s61, %s62
    %p76 = scmp.eq.s32.totalorder %s33, 1
    %p77 = por %p75, %p76
    %p79 = scmp.ne.s32.totalorder %s62, %s78
    %p80 = scmp.eq.s32.totalorder %s33, 0
    %p81 = por %p79, %p80
    %s82 = ssub.s32 %s27, %s34
    %p83 = scmp.eq.s32.totalorder %s82, 0
    %s85 = sadd.s32 %s84, 1
    %s86 = scalar_select %p83, %s84, %s85
    %p89 = pneg %p83
    %p90 = scmp.eq.s32.totalorder %s27, 1
    %p91 = por %p89, %p90
    %p92 = scmp.ne.s32.totalorder %s84, %s87
    %p93 = scmp.eq.s32.totalorder %s27, 0
    %p94 = por %p92, %p93
    %p95 = scmp.ne.s32.totalorder %s84, %s87
    %p96 = scmp.eq.s32.totalorder %s32, 1
    %p97 = por %p95, %p96
    %p98 = scmp.ne.s32.totalorder %s87, %s88
    %p99 = scmp.eq.s32.totalorder %s32, 0
    %p100 = por %p98, %p99
    %p101 = scmp.ne.s32.totalorder %s87, %s88
    %p102 = scmp.eq.s32.totalorder %s33, 1
    %p103 = por %p101, %p102
    %p105 = scmp.ne.s32.totalorder %s88, %s104
    %p106 = scmp.eq.s32.totalorder %s33, 0
    %p107 = por %p105, %p106
    %s108 = ssub.s32 %s27, %s34
    %p109 = scmp.eq.s32.totalorder %s108, 0
    %s111 = sadd.s32 %s110, 1
    %s112 = scalar_select %p109, %s110, %s111
    %p115 = pneg %p109
    %p116 = scmp.eq.s32.totalorder %s27, 1
    %p117 = por %p115, %p116
    %p118 = scmp.ne.s32.totalorder %s110, %s113
    %p119 = scmp.eq.s32.totalorder %s27, 0
    %p120 = por %p118, %p119
    %p121 = scmp.ne.s32.totalorder %s110, %s113
    %p122 = scmp.eq.s32.totalorder %s32, 1
    %p123 = por %p121, %p122
    %p124 = scmp.ne.s32.totalorder %s113, %s114
    %p125 = scmp.eq.s32.totalorder %s32, 0
    %p126 = por %p124, %p125
    %p127 = scmp.ne.s32.totalorder %s113, %s114
    %p128 = scmp.eq.s32.totalorder %s33, 1
    %p129 = por %p127, %p128
    %p131 = scmp.ne.s32.totalorder %s114, %s130
    %p132 = scmp.eq.s32.totalorder %s33, 0
    %p133 = por %p131, %p132
    %s134 = ssub.s32 %s27, %s34
    %p135 = scmp.eq.s32.totalorder %s134, 0
    %s137 = sadd.s32 %s136, 1
    %s138 = scalar_select %p135, %s136, %s137
    %p141 = pneg %p135
    %p142 = scmp.eq.s32.totalorder %s27, 1
    %p143 = por %p141, %p142
    %p144 = scmp.ne.s32.totalorder %s136, %s139
    %p145 = scmp.eq.s32.totalorder %s27, 0
    %p146 = por %p144, %p145
    %p147 = scmp.ne.s32.totalorder %s136, %s139
    %p148 = scmp.eq.s32.totalorder %s32, 1
    %p149 = por %p147, %p148
    %p150 = scmp.ne.s32.totalorder %s139, %s140
    %p151 = scmp.eq.s32.totalorder %s32, 0
    %p152 = por %p150, %p151
    %p153 = scmp.ne.s32.totalorder %s139, %s140
    %p154 = scmp.eq.s32.totalorder %s33, 1
    %p155 = por %p153, %p154
    %p157 = scmp.ne.s32.totalorder %s140, %s156
    %p158 = scmp.eq.s32.totalorder %s33, 0
    %p159 = por %p157, %p158
    %s160 = ssub.s32 %s27, %s34
    %p161 = scmp.eq.s32.totalorder %s160, 0
    %s163 = sadd.s32 %s162, 1
    %s164 = scalar_select %p161, %s162, %s163
    %p167 = pneg %p161
    %p168 = scmp.eq.s32.totalorder %s27, 1
    %p169 = por %p167, %p168
    %p170 = scmp.ne.s32.totalorder %s162, %s165
    %p171 = scmp.eq.s32.totalorder %s27, 0
    %p172 = por %p170, %p171
    %p173 = scmp.ne.s32.totalorder %s162, %s165
    %p174 = scmp.eq.s32.totalorder %s32, 1
    %p175 = por %p173, %p174
    %p176 = scmp.ne.s32.totalorder %s165, %s166
    %p177 = scmp.eq.s32.totalorder %s32, 0
    %p178 = por %p176, %p177
    %p179 = scmp.ne.s32.totalorder %s165, %s166
    %p180 = scmp.eq.s32.totalorder %s33, 1
    %p181 = por %p179, %p180
    %p183 = scmp.ne.s32.totalorder %s166, %s182
    %p184 = scmp.eq.s32.totalorder %s33, 0
    %p185 = por %p183, %p184
    %s186 = ssub.s32 %s27, %s34
    %p187 = scmp.eq.s32.totalorder %s186, 0
    %s189 = sadd.s32 %s188, 1
    %s190 = scalar_select %p187, %s188, %s189
    %p193 = pneg %p187
    %p194 = scmp.eq.s32.totalorder %s27, 1
    %p195 = por %p193, %p194
    %p196 = scmp.ne.s32.totalorder %s188, %s191
    %p197 = scmp.eq.s32.totalorder %s27, 0
    %p198 = por %p196, %p197
    %p199 = scmp.ne.s32.totalorder %s188, %s191
    %p200 = scmp.eq.s32.totalorder %s32, 1
    %p201 = por %p199, %p200
    %p202 = scmp.ne.s32.totalorder %s191, %s192
    %p203 = scmp.eq.s32.totalorder %s32, 0
    %p204 = por %p202, %p203
    %p205 = scmp.ne.s32.totalorder %s191, %s192
    %p206 = scmp.eq.s32.totalorder %s33, 1
    %p207 = por %p205, %p206
    %p209 = scmp.ne.s32.totalorder %s192, %s208
    %p210 = scmp.eq.s32.totalorder %s33, 0
    %p211 = por %p209, %p210
    %s212 = ssub.s32 %s27, %s34
    %p213 = scmp.eq.s32.totalorder %s212, 0
    %s215 = sadd.s32 %s214, 1
    %s216 = scalar_select %p213, %s214, %s215
    %p219 = pneg %p213
    %p220 = scmp.eq.s32.totalorder %s27, 1
    %p221 = por %p219, %p220
    %p222 = scmp.ne.s32.totalorder %s214, %s217
    %p223 = scmp.eq.s32.totalorder %s27, 0
    %p224 = por %p222, %p223
    %p225 = scmp.ne.s32.totalorder %s214, %s217
    %p226 = scmp.eq.s32.totalorder %s32, 1
    %p227 = por %p225, %p226
    %p228 = scmp.ne.s32.totalorder %s217, %s218
    %p229 = scmp.eq.s32.totalorder %s32, 0
    %p230 = por %p228, %p229
    %p231 = scmp.ne.s32.totalorder %s217, %s218
    %p232 = scmp.eq.s32.totalorder %s33, 1
    %p233 = por %p231, %p232
    %p235 = scmp.ne.s32.totalorder %s218, %s234
    %p236 = scmp.eq.s32.totalorder %s33, 0
    %p237 = por %p235, %p236
    %s238 = ssub.s32 %s27, %s34
    %p239 = scmp.eq.s32.totalorder %s238, 0
    %s241 = sadd.s32 %s240, 1
    %s242 = scalar_select %p239, %s240, %s241
    %p245 = pneg %p239
    %p246 = scmp.eq.s32.totalorder %s27, 1
    %p247 = por %p245, %p246
    %p248 = scmp.ne.s32.totalorder %s240, %s243
    %p249 = scmp.eq.s32.totalorder %s27, 0
    %p250 = por %p248, %p249
    %p251 = scmp.ne.s32.totalorder %s240, %s243
    %p252 = scmp.eq.s32.totalorder %s32, 1
    %p253 = por %p251, %p252
    %p254 = scmp.ne.s32.totalorder %s243, %s244
    %p255 = scmp.eq.s32.totalorder %s32, 0
    %p256 = por %p254, %p255
    %p257 = scmp.ne.s32.totalorder %s243, %s244
    %p258 = scmp.eq.s32.totalorder %s33, 1
    %p259 = por %p257, %p258
    %p261 = scmp.ne.s32.totalorder %s244, %s260
    %p262 = scmp.eq.s32.totalorder %s33, 0
    %p263 = por %p261, %p262
    %s264 = ssub.s32 %s27, %s34
    %p265 = scmp.eq.s32.totalorder %s264, 0
    %s267 = sadd.s32 %s266, 1
    %s268 = scalar_select %p265, %s266, %s267
    %p271 = pneg %p265
    %p272 = scmp.eq.s32.totalorder %s27, 1
    %p273 = por %p271, %p272
    %p274 = scmp.ne.s32.totalorder %s266, %s269
    %p275 = scmp.eq.s32.totalorder %s27, 0
    %p276 = por %p274, %p275
    %p277 = scmp.ne.s32.totalorder %s266, %s269
    %p278 = scmp.eq.s32.totalorder %s32, 1
    %p279 = por %p277, %p278
    %p280 = scmp.ne.s32.totalorder %s269, %s270
    %p281 = scmp.eq.s32.totalorder %s32, 0
    %p282 = por %p280, %p281
    %p283 = scmp.ne.s32.totalorder %s269, %s270
    %p284 = scmp.eq.s32.totalorder %s33, 1
    %p285 = por %p283, %p284
    %p287 = scmp.ne.s32.totalorder %s270, %s286
    %p288 = scmp.eq.s32.totalorder %s33, 0
    %p289 = por %p287, %p288
    %s290 = ssub.s32 %s27, %s34
    %p291 = scmp.eq.s32.totalorder %s290, 0
    %s293 = sadd.s32 %s292, 1
    %s294 = scalar_select %p291, %s292, %s293
    %p297 = pneg %p291
    %p298 = scmp.eq.s32.totalorder %s27, 1
    %p299 = por %p297, %p298
    %p300 = scmp.ne.s32.totalorder %s292, %s295
    %p301 = scmp.eq.s32.totalorder %s27, 0
    %p302 = por %p300, %p301
    %p303 = scmp.ne.s32.totalorder %s292, %s295
    %p304 = scmp.eq.s32.totalorder %s32, 1
    %p305 = por %p303, %p304
    %p306 = scmp.ne.s32.totalorder %s295, %s296
    %p307 = scmp.eq.s32.totalorder %s32, 0
    %p308 = por %p306, %p307
    %p309 = scmp.ne.s32.totalorder %s295, %s296
    %p310 = scmp.eq.s32.totalorder %s33, 1
    %p311 = por %p309, %p310
    %p313 = scmp.ne.s32.totalorder %s296, %s312
    %p314 = scmp.eq.s32.totalorder %s33, 0
    %p315 = por %p313, %p314
    %s316 = ssub.s32 %s27, %s34
    %p317 = scmp.eq.s32.totalorder %s316, 0
    %s319 = sadd.s32 %s318, 1
    %s320 = scalar_select %p317, %s318, %s319
    %p323 = pneg %p317
    %p324 = scmp.eq.s32.totalorder %s27, 1
    %p325 = por %p323, %p324
    %p326 = scmp.ne.s32.totalorder %s318, %s321
    %p327 = scmp.eq.s32.totalorder %s27, 0
    %p328 = por %p326, %p327
    %p329 = scmp.ne.s32.totalorder %s318, %s321
    %p330 = scmp.eq.s32.totalorder %s32, 1
    %p331 = por %p329, %p330
    %p332 = scmp.ne.s32.totalorder %s321, %s322
    %p333 = scmp.eq.s32.totalorder %s32, 0
    %p334 = por %p332, %p333
    %p335 = scmp.ne.s32.totalorder %s321, %s322
    %p336 = scmp.eq.s32.totalorder %s33, 1
    %p337 = por %p335, %p336
    %p339 = scmp.ne.s32.totalorder %s322, %s338
    %p340 = scmp.eq.s32.totalorder %s33, 0
    %p341 = por %p339, %p340
    %s342 = ssub.s32 %s27, %s34
    %p343 = scmp.eq.s32.totalorder %s342, 0
    %s345 = sadd.s32 %s344, 1
    %s346 = scalar_select %p343, %s344, %s345
    %p349 = pneg %p343
    %p350 = scmp.eq.s32.totalorder %s27, 1
    %p351 = por %p349, %p350
    %p352 = scmp.ne.s32.totalorder %s344, %s347
    %p353 = scmp.eq.s32.totalorder %s27, 0
    %p354 = por %p352, %p353
    %p355 = scmp.ne.s32.totalorder %s344, %s347
    %p356 = scmp.eq.s32.totalorder %s32, 1
    %p357 = por %p355, %p356
    %p358 = scmp.ne.s32.totalorder %s347, %s348
    %p359 = scmp.eq.s32.totalorder %s32, 0
    %p360 = por %p358, %p359
    %p361 = scmp.ne.s32.totalorder %s347, %s348
    %p362 = scmp.eq.s32.totalorder %s33, 1
    %p363 = por %p361, %p362
    %p365 = scmp.ne.s32.totalorder %s348, %s364
    %p366 = scmp.eq.s32.totalorder %s33, 0
    %p367 = por %p365, %p366
    %s368 = ssub.s32 %s27, %s34
    %p369 = scmp.eq.s32.totalorder %s368, 0
    %s371 = sadd.s32 %s370, 1
    %s372 = scalar_select %p369, %s370, %s371
    %p375 = pneg %p369
    %p376 = scmp.eq.s32.totalorder %s27, 1
    %p377 = por %p375, %p376
    %p378 = scmp.ne.s32.totalorder %s370, %s373
    %p379 = scmp.eq.s32.totalorder %s27, 0
    %p380 = por %p378, %p379
    %p381 = scmp.ne.s32.totalorder %s370, %s373
    %p382 = scmp.eq.s32.totalorder %s32, 1
    %p383 = por %p381, %p382
    %p384 = scmp.ne.s32.totalorder %s373, %s374
    %p385 = scmp.eq.s32.totalorder %s32, 0
    %p386 = por %p384, %p385
    %p387 = scmp.ne.s32.totalorder %s373, %s374
    %p388 = scmp.eq.s32.totalorder %s33, 1
    %p389 = por %p387, %p388
    %p391 = scmp.ne.s32.totalorder %s374, %s390
    %p392 = scmp.eq.s32.totalorder %s33, 0
    %p393 = por %p391, %p392
    %s394 = ssub.s32 %s27, %s34
    %p395 = scmp.eq.s32.totalorder %s394, 0
    %s397 = sadd.s32 %s396, 1
    %s398 = scalar_select %p395, %s396, %s397
    %p401 = pneg %p395
    %p402 = scmp.eq.s32.totalorder %s27, 1
    %p403 = por %p401, %p402
    %p404 = scmp.ne.s32.totalorder %s396, %s399
    %p405 = scmp.eq.s32.totalorder %s27, 0
    %p406 = por %p404, %p405
    %p407 = scmp.ne.s32.totalorder %s396, %s399
    %p408 = scmp.eq.s32.totalorder %s32, 1
    %p409 = por %p407, %p408
    %p410 = scmp.ne.s32.totalorder %s399, %s400
    %p411 = scmp.eq.s32.totalorder %s32, 0
    %p412 = por %p410, %p411
    %p413 = scmp.ne.s32.totalorder %s399, %s400
    %p414 = scmp.eq.s32.totalorder %s33, 1
    %p415 = por %p413, %p414
    %p417 = scmp.ne.s32.totalorder %s400, %s416
    %p418 = scmp.eq.s32.totalorder %s33, 0
    %p419 = por %p417, %p418
    %s420 = ssub.s32 %s27, %s34
    %p421 = scmp.eq.s32.totalorder %s420, 0
    %s423 = sadd.s32 %s422, 1
    %s424 = scalar_select %p421, %s422, %s423
    %p427 = pneg %p421
    %p428 = scmp.eq.s32.totalorder %s27, 1
    %p429 = por %p427, %p428
    %p430 = scmp.ne.s32.totalorder %s422, %s425
    %p431 = scmp.eq.s32.totalorder %s27, 0
    %p432 = por %p430, %p431
    %p433 = scmp.ne.s32.totalorder %s422, %s425
    %p434 = scmp.eq.s32.totalorder %s32, 1
    %p435 = por %p433, %p434
    %p436 = scmp.ne.s32.totalorder %s425, %s426
    %p437 = scmp.eq.s32.totalorder %s32, 0
    %p438 = por %p436, %p437
    %p439 = scmp.ne.s32.totalorder %s425, %s426
    %p440 = scmp.eq.s32.totalorder %s33, 1
    %p441 = por %p439, %p440
    %p443 = scmp.ne.s32.totalorder %s426, %s442
    %p444 = scmp.eq.s32.totalorder %s33, 0
    %p445 = por %p443, %p444
    %s446 = ssub.s32 %s27, %s34
    %p447 = scmp.eq.s32.totalorder %s446, 0
    %s449 = sadd.s32 %s448, 1
    %s450 = scalar_select %p447, %s448, %s449
    %p453 = pneg %p447
    %p454 = scmp.eq.s32.totalorder %s27, 1
    %p455 = por %p453, %p454
    %p456 = scmp.ne.s32.totalorder %s448, %s451
    %p457 = scmp.eq.s32.totalorder %s27, 0
    %p458 = por %p456, %p457
    %p459 = scmp.ne.s32.totalorder %s448, %s451
    %p460 = scmp.eq.s32.totalorder %s32, 1
    %p461 = por %p459, %p460
    %p462 = scmp.ne.s32.totalorder %s451, %s452
    %p463 = scmp.eq.s32.totalorder %s32, 0
    %p464 = por %p462, %p463
    %p465 = scmp.ne.s32.totalorder %s451, %s452
    %p466 = scmp.eq.s32.totalorder %s33, 1
    %p467 = por %p465, %p466
    %p469 = scmp.ne.s32.totalorder %s452, %s468
    %p470 = scmp.eq.s32.totalorder %s33, 0
    %p471 = por %p469, %p470
    %s473 = sadd.s32 %s472, 1
    %p476 = scmp.eq.s32.totalorder %s27, 1
    %p477 = scmp.ne.s32.totalorder %s472, %s474
    %p478 = scmp.eq.s32.totalorder %s27, 0
    %p479 = por %p477, %p478
    %p480 = scmp.ne.s32.totalorder %s472, %s474
    %p481 = scmp.eq.s32.totalorder %s32, 1
    %p482 = por %p480, %p481
    %p483 = scmp.ne.s32.totalorder %s474, %s475
    %p484 = scmp.eq.s32.totalorder %s32, 0
    %p485 = por %p483, %p484
    %p486 = scmp.ne.s32.totalorder %s474, %s475
    %p487 = scmp.eq.s32.totalorder %s33, 1
    %p488 = por %p486, %p487
    %p490 = scmp.ne.s32.totalorder %s475, %s489
    %p491 = scmp.eq.s32.totalorder %s33, 0
    %p492 = por %p490, %p491
    %s494 = sadd.s32 %s493, 1
    %p497 = scmp.eq.s32.totalorder %s27, 1
    %p498 = scmp.ne.s32.totalorder %s493, %s495
    %p499 = scmp.eq.s32.totalorder %s27, 0
    %p500 = por %p498, %p499
    %p501 = scmp.ne.s32.totalorder %s493, %s495
    %p502 = scmp.eq.s32.totalorder %s32, 1
    %p503 = por %p501, %p502
    %p504 = scmp.ne.s32.totalorder %s495, %s496
    %p505 = scmp.eq.s32.totalorder %s32, 0
    %p506 = por %p504, %p505
    %p507 = scmp.ne.s32.totalorder %s495, %s496
    %p508 = scmp.eq.s32.totalorder %s33, 1
    %p509 = por %p507, %p508
    %p511 = scmp.ne.s32.totalorder %s496, %s510
    %p512 = scmp.eq.s32.totalorder %s33, 0
    %p513 = por %p511, %p512
    %s515 = sadd.s32 %s514, 1
    %p518 = scmp.eq.s32.totalorder %s27, 1
    %p519 = scmp.ne.s32.totalorder %s514, %s516
    %p520 = scmp.eq.s32.totalorder %s27, 0
    %p521 = por %p519, %p520
    %p522 = scmp.ne.s32.totalorder %s514, %s516
    %p523 = scmp.eq.s32.totalorder %s32, 1
    %p524 = por %p522, %p523
    %p525 = scmp.ne.s32.totalorder %s516, %s517
    %p526 = scmp.eq.s32.totalorder %s32, 0
    %p527 = por %p525, %p526
    %p528 = scmp.ne.s32.totalorder %s516, %s517
    %p529 = scmp.eq.s32.totalorder %s33, 1
    %p530 = por %p528, %p529
    %p532 = scmp.ne.s32.totalorder %s517, %s531
    %p533 = scmp.eq.s32.totalorder %s33, 0
    %p534 = por %p532, %p533
    %s536 = sadd.s32 %s535, 1
    %p539 = scmp.eq.s32.totalorder %s27, 1
    %p540 = scmp.ne.s32.totalorder %s535, %s537
    %p541 = scmp.eq.s32.totalorder %s27, 0
    %p542 = por %p540, %p541
    %p543 = scmp.ne.s32.totalorder %s535, %s537
    %p544 = scmp.eq.s32.totalorder %s32, 1
    %p545 = por %p543, %p544
    %p546 = scmp.ne.s32.totalorder %s537, %s538
    %p547 = scmp.eq.s32.totalorder %s32, 0
    %p548 = por %p546, %p547
    %p549 = scmp.ne.s32.totalorder %s537, %s538
    %p550 = scmp.eq.s32.totalorder %s33, 1
    %p551 = por %p549, %p550
    %p553 = scmp.ne.s32.totalorder %s538, %s552
    %p554 = scmp.eq.s32.totalorder %s33, 0
    %p555 = por %p553, %p554
    %s557 = sadd.s32 %s556, 1
    %p560 = scmp.eq.s32.totalorder %s27, 1
    %p561 = scmp.ne.s32.totalorder %s556, %s558
    %p562 = scmp.eq.s32.totalorder %s27, 0
    %p563 = por %p561, %p562
    %p564 = scmp.ne.s32.totalorder %s556, %s558
    %p565 = scmp.eq.s32.totalorder %s32, 1
    %p566 = por %p564, %p565
    %p567 = scmp.ne.s32.totalorder %s558, %s559
    %p568 = scmp.eq.s32.totalorder %s32, 0
    %p569 = por %p567, %p568
    %p570 = scmp.ne.s32.totalorder %s558, %s559
    %p571 = scmp.eq.s32.totalorder %s33, 1
    %p572 = por %p570, %p571
    %p574 = scmp.ne.s32.totalorder %s559, %s573
    %p575 = scmp.eq.s32.totalorder %s33, 0
    %p576 = por %p574, %p575
    %p577 = scmp.le.s32.totalorder 1, %s27
    %p578 = scmp.lt.s32.totalorder %s27, 3
    %p579 = pnand %p577, %p578
    %p580 = pneg %p579
    // Predicated region
    $region9: #{_lambda_.4} parent=5 // pred_check
      _
    $region10: #{_lambda_.4} parent=5 // pred_check_branch
      %582 = sbr.rel (%p579) target = $region12
    $region11: #{_lambda_.4} parent=5 // pred_region
      %s583 = ssub.s32 %s27, 1
      // Predicated region
      $region13: #{_lambda_.4} parent=11 // pred_check
        %p584 = pneg %p48
      $region14: #{_lambda_.4} parent=11 // pred_check_branch
        %586 = sbr.rel (%p584) target = $region16
      $region15: #{_lambda_.4} parent=11 // pred_region
        _
      $region16: #{_lambda_.4} parent=11 // pred_fallthru
        _
      // Predicated region
      $region17: #{_lambda_.4} parent=11 // pred_check
        %p587 = pneg %p485
      $region18: #{_lambda_.4} parent=11 // pred_check_branch
        %589 = sbr.rel (%p587) target = $region20
      $region19: #{_lambda_.4} parent=11 // pred_region
        _
      $region20: #{_lambda_.4} parent=11 // pred_fallthru
        _
      // Predicated region
      $region21: #{_lambda_.4} parent=11 // pred_check
        %p590 = pneg %p506
      $region22: #{_lambda_.4} parent=11 // pred_check_branch
        %592 = sbr.rel (%p590) target = $region24
      $region23: #{_lambda_.4} parent=11 // pred_region
        _
      $region24: #{_lambda_.4} parent=11 // pred_fallthru
        _
      // Predicated region
      $region25: #{_lambda_.4} parent=11 // pred_check
        %p593 = pneg %p527
      $region26: #{_lambda_.4} parent=11 // pred_check_branch
        %595 = sbr.rel (%p593) target = $region28
      $region27: #{_lambda_.4} parent=11 // pred_region
        _
      $region28: #{_lambda_.4} parent=11 // pred_fallthru
        _
      // Predicated region
      $region29: #{_lambda_.4} parent=11 // pred_check
        %p596 = pneg %p548
      $region30: #{_lambda_.4} parent=11 // pred_check_branch
        %598 = sbr.rel (%p596) target = $region32
      $region31: #{_lambda_.4} parent=11 // pred_region
        _
      $region32: #{_lambda_.4} parent=11 // pred_fallthru
        _
    $region12: #{_lambda_.4} parent=5 // pred_fallthru
      _
    %p599 = scmp.lt.s32.totalorder %s27, 2
    // Predicated region
    $region33: #{_lambda_.4} parent=5 // pred_check
      %p600 = pneg %p599
    $region34: #{_lambda_.4} parent=5 // pred_check_branch
      %602 = sbr.rel (%p600) target = $region36
    $region35: #{_lambda_.4} parent=5 // pred_region
      // Predicated region
      $region37: #{_lambda_.4} parent=35 // pred_check
        %p603 = pneg %p68
      $region38: #{_lambda_.4} parent=35 // pred_check_branch
        %605 = sbr.rel (%p603) target = $region40
      $region39: #{_lambda_.4} parent=35 // pred_region
        %p606 = scmp.lt.s32.totalorder %s27, 1
        %s607 = scalar_select %p606, %s27, 1
        %s608 = scalar_lea.vmem %s1, %s607
      $region40: #{_lambda_.4} parent=35 // pred_fallthru
        _
      // Predicated region
      $region41: #{_lambda_.4} parent=35 // pred_check
        %p609 = pneg %p94
      $region42: #{_lambda_.4} parent=35 // pred_check_branch
        %611 = sbr.rel (%p609) target = $region44
      $region43: #{_lambda_.4} parent=35 // pred_region
        %p612 = scmp.lt.s32.totalorder %s27, 1
        %s613 = scalar_select %p612, %s27, 1
        %s614 = scalar_lea.vmem %s2, %s613
      $region44: #{_lambda_.4} parent=35 // pred_fallthru
        _
      // Predicated region
      $region45: #{_lambda_.4} parent=35 // pred_check
        %p615 = pneg %p120
      $region46: #{_lambda_.4} parent=35 // pred_check_branch
        %617 = sbr.rel (%p615) target = $region48
      $region47: #{_lambda_.4} parent=35 // pred_region
        %p618 = scmp.lt.s32.totalorder %s27, 1
        %s619 = scalar_select %p618, %s27, 1
        %s620 = smul.addr %s619, 4
        %s621 = smul.addr %s620, 4
        %s622 = scalar_lea.vmem %s3, %s621
      $region48: #{_lambda_.4} parent=35 // pred_fallthru
        _
      // Predicated region
      $region49: #{_lambda_.4} parent=35 // pred_check
        %p623 = pneg %p146
      $region50: #{_lambda_.4} parent=35 // pred_check_branch
        %625 = sbr.rel (%p623) target = $region52
      $region51: #{_lambda_.4} parent=35 // pred_region
        %p626 = scmp.lt.s32.totalorder %s27, 1
        %s627 = scalar_select %p626, %s27, 1
        %s628 = scalar_lea.vmem %s4, %s627
      $region52: #{_lambda_.4} parent=35 // pred_fallthru
        _
      // Predicated region
      $region53: #{_lambda_.4} parent=35 // pred_check
        %p629 = pneg %p172
      $region54: #{_lambda_.4} parent=35 // pred_check_branch
        %631 = sbr.rel (%p629) target = $region56
      $region55: #{_lambda_.4} parent=35 // pred_region
        %p632 = scmp.lt.s32.totalorder %s27, 1
        %s633 = scalar_select %p632, %s27, 1
        %s634 = smul.addr %s633, 4
        %s635 = smul.addr %s634, 4
        %s636 = scalar_lea.vmem %s5, %s635
      $region56: #{_lambda_.4} parent=35 // pred_fallthru
        _
      // Predicated region
      $region57: #{_lambda_.4} parent=35 // pred_check
        %p637 = pneg %p198
      $region58: #{_lambda_.4} parent=35 // pred_check_branch
        %639 = sbr.rel (%p637) target = $region60
      $region59: #{_lambda_.4} parent=35 // pred_region
        %p640 = scmp.lt.s32.totalorder %s27, 1
        %s641 = scalar_select %p640, %s27, 1
        %s642 = scalar_lea.vmem %s6, %s641
      $region60: #{_lambda_.4} parent=35 // pred_fallthru
        _
      // Predicated region
      $region61: #{_lambda_.4} parent=35 // pred_check
        %p643 = pneg %p224
      $region62: #{_lambda_.4} parent=35 // pred_check_branch
        %645 = sbr.rel (%p643) target = $region64
      $region63: #{_lambda_.4} parent=35 // pred_region
        %p646 = scmp.lt.s32.totalorder %s27, 1
        %s647 = scalar_select %p646, %s27, 1
        %s648 = smul.addr %s647, 4
        %s649 = smul.addr %s648, 4
        %s650 = scalar_lea.vmem %s7, %s649
      $region64: #{_lambda_.4} parent=35 // pred_fallthru
        _
      // Predicated region
      $region65: #{_lambda_.4} parent=35 // pred_check
        %p651 = pneg %p250
      $region66: #{_lambda_.4} parent=35 // pred_check_branch
        %653 = sbr.rel (%p651) target = $region68
      $region67: #{_lambda_.4} parent=35 // pred_region
        %p654 = scmp.lt.s32.totalorder %s27, 1
        %s655 = scalar_select %p654, %s27, 1
        %s656 = scalar_lea.vmem %s8, %s655
      $region68: #{_lambda_.4} parent=35 // pred_fallthru
        _
      // Predicated region
      $region69: #{_lambda_.4} parent=35 // pred_check
        %p657 = pneg %p276
      $region70: #{_lambda_.4} parent=35 // pred_check_branch
        %659 = sbr.rel (%p657) target = $region72
      $region71: #{_lambda_.4} parent=35 // pred_region
        %p660 = scmp.lt.s32.totalorder %s27, 1
        %s661 = scalar_select %p660, %s27, 1
        %s662 = smul.addr %s661, 4
        %s663 = smul.addr %s662, 4
        %s664 = scalar_lea.vmem %s9, %s663
      $region72: #{_lambda_.4} parent=35 // pred_fallthru
        _
      // Predicated region
      $region73: #{_lambda_.4} parent=35 // pred_check
        %p665 = pneg %p302
      $region74: #{_lambda_.4} parent=35 // pred_check_branch
        %667 = sbr.rel (%p665) target = $region76
      $region75: #{_lambda_.4} parent=35 // pred_region
        %p668 = scmp.lt.s32.totalorder %s27, 1
        %s669 = scalar_select %p668, %s27, 1
        %s670 = scalar_lea.vmem %s10, %s669
      $region76: #{_lambda_.4} parent=35 // pred_fallthru
        _
      // Predicated region
      $region77: #{_lambda_.4} parent=35 // pred_check
        %p671 = pneg %p328
      $region78: #{_lambda_.4} parent=35 // pred_check_branch
        %673 = sbr.rel (%p671) target = $region80
      $region79: #{_lambda_.4} parent=35 // pred_region
        %p674 = scmp.lt.s32.totalorder %s27, 1
        %s675 = scalar_select %p674, %s27, 1
        %s676 = scalar_lea.vmem %s11, %s675
      $region80: #{_lambda_.4} parent=35 // pred_fallthru
        _
      // Predicated region
      $region81: #{_lambda_.4} parent=35 // pred_check
        %p677 = pneg %p354
      $region82: #{_lambda_.4} parent=35 // pred_check_branch
        %679 = sbr.rel (%p677) target = $region84
      $region83: #{_lambda_.4} parent=35 // pred_region
        %p680 = scmp.lt.s32.totalorder %s27, 1
        %s681 = scalar_select %p680, %s27, 1
        %s682 = scalar_lea.vmem %s12, %s681
      $region84: #{_lambda_.4} parent=35 // pred_fallthru
        _
      // Predicated region
      $region85: #{_lambda_.4} parent=35 // pred_check
        %p683 = pneg %p380
      $region86: #{_lambda_.4} parent=35 // pred_check_branch
        %685 = sbr.rel (%p683) target = $region88
      $region87: #{_lambda_.4} parent=35 // pred_region
        %p686 = scmp.lt.s32.totalorder %s27, 1
        %s687 = scalar_select %p686, %s27, 1
        %s688 = smul.addr %s687, 4
        %s689 = smul.addr %s688, 4
        %s690 = scalar_lea.vmem %s13, %s689
      $region88: #{_lambda_.4} parent=35 // pred_fallthru
        _
      // Predicated region
      $region89: #{_lambda_.4} parent=35 // pred_check
        %p691 = pneg %p406
      $region90: #{_lambda_.4} parent=35 // pred_check_branch
        %693 = sbr.rel (%p691) target = $region92
      $region91: #{_lambda_.4} parent=35 // pred_region
        %p694 = scmp.lt.s32.totalorder %s27, 1
        %s695 = scalar_select %p694, %s27, 1
        %s696 = scalar_lea.vmem %s14, %s695
      $region92: #{_lambda_.4} parent=35 // pred_fallthru
        _
      // Predicated region
      $region93: #{_lambda_.4} parent=35 // pred_check
        %p697 = pneg %p432
      $region94: #{_lambda_.4} parent=35 // pred_check_branch
        %699 = sbr.rel (%p697) target = $region96
      $region95: #{_lambda_.4} parent=35 // pred_region
        %p700 = scmp.lt.s32.totalorder %s27, 1
        %s701 = scalar_select %p700, %s27, 1
        %s702 = smul.addr %s701, 16
        %s703 = smul.addr %s702, 4
        %s704 = scalar_lea.vmem %s15, %s703
      $region96: #{_lambda_.4} parent=35 // pred_fallthru
        _
      // Predicated region
      $region97: #{_lambda_.4} parent=35 // pred_check
        %p705 = pneg %p458
      $region98: #{_lambda_.4} parent=35 // pred_check_branch
        %707 = sbr.rel (%p705) target = $region100
      $region99: #{_lambda_.4} parent=35 // pred_region
        %p708 = scmp.lt.s32.totalorder %s27, 1
        %s709 = scalar_select %p708, %s27, 1
        %s710 = scalar_lea.vmem %s16, %s709
      $region100: #{_lambda_.4} parent=35 // pred_fallthru
        _
    $region36: #{_lambda_.4} parent=5 // pred_fallthru
      _
    %p711 = scmp.le.s32.totalorder 1, %s27
    %p712 = scmp.lt.s32.totalorder %s27, 3
    %p713 = pnand %p711, %p712
    %p714 = pneg %p713
    // Predicated region
    $region101: #{_lambda_.4} parent=5 // pred_check
      _
    $region102: #{_lambda_.4} parent=5 // pred_check_branch
      %716 = sbr.rel (%p713) target = $region104
    $region103: #{_lambda_.4} parent=5 // pred_region
      %s717 = ssub.s32 %s27, 1
      %p718 = pneg %p48
      %p719 = pneg %p45
      %p720 = scmp.lt.s32.totalorder %s32, 1
      %s721 = scalar_select %p720, %s32, 1
      %s722 = scalar_lea.vmem %s1, %s721
      %p723 = pneg %p74
      %p724 = pneg %p71
      %p725 = scmp.lt.s32.totalorder %s32, 1
      %s726 = scalar_select %p725, %s32, 1
      %s727 = scalar_lea.vmem %s2, %s726
      %p728 = pneg %p100
      %p729 = pneg %p97
      %p730 = scmp.lt.s32.totalorder %s32, 1
      %s731 = scalar_select %p730, %s32, 1
      %s732 = smul.addr %s731, 4
      %s733 = smul.addr %s732, 4
      %s734 = scalar_lea.vmem %s3, %s733
      %p735 = pneg %p126
      %p736 = pneg %p123
      %p737 = scmp.lt.s32.totalorder %s32, 1
      %s738 = scalar_select %p737, %s32, 1
      %s739 = scalar_lea.vmem %s4, %s738
      %p740 = pneg %p152
      %p741 = pneg %p149
      %p742 = scmp.lt.s32.totalorder %s32, 1
      %s743 = scalar_select %p742, %s32, 1
      %s744 = smul.addr %s743, 4
      %s745 = smul.addr %s744, 4
      %s746 = scalar_lea.vmem %s5, %s745
      %p747 = pneg %p178
      %p748 = pneg %p175
      %p749 = scmp.lt.s32.totalorder %s32, 1
      %s750 = scalar_select %p749, %s32, 1
      %s751 = scalar_lea.vmem %s6, %s750
      %p752 = pneg %p204
      %p753 = pneg %p201
      %p754 = scmp.lt.s32.totalorder %s32, 1
      %s755 = scalar_select %p754, %s32, 1
      %s756 = smul.addr %s755, 4
      %s757 = smul.addr %s756, 4
      %s758 = scalar_lea.vmem %s7, %s757
      %p759 = pneg %p230
      %p760 = pneg %p227
      %p761 = scmp.lt.s32.totalorder %s32, 1
      %s762 = scalar_select %p761, %s32, 1
      %s763 = scalar_lea.vmem %s8, %s762
      %p764 = pneg %p256
      %p765 = pneg %p253
      %p766 = scmp.lt.s32.totalorder %s32, 1
      %s767 = scalar_select %p766, %s32, 1
      %s768 = smul.addr %s767, 4
      %s769 = smul.addr %s768, 4
      %s770 = scalar_lea.vmem %s9, %s769
      %p771 = pneg %p282
      %p772 = pneg %p279
      %p773 = scmp.lt.s32.totalorder %s32, 1
      %s774 = scalar_select %p773, %s32, 1
      %s775 = scalar_lea.vmem %s10, %s774
      %p776 = pneg %p308
      %p777 = pneg %p305
      %p778 = scmp.lt.s32.totalorder %s32, 1
      %s779 = scalar_select %p778, %s32, 1
      %s780 = scalar_lea.vmem %s11, %s779
      %p781 = pneg %p334
      %p782 = pneg %p331
      %p783 = scmp.lt.s32.totalorder %s32, 1
      %s784 = scalar_select %p783, %s32, 1
      %s785 = scalar_lea.vmem %s12, %s784
      %p786 = pneg %p360
      %p787 = pneg %p357
      %p788 = scmp.lt.s32.totalorder %s32, 1
      %s789 = scalar_select %p788, %s32, 1
      %s790 = smul.addr %s789, 4
      %s791 = smul.addr %s790, 4
      %s792 = scalar_lea.vmem %s13, %s791
      %p793 = pneg %p386
      %p794 = pneg %p383
      %p795 = scmp.lt.s32.totalorder %s32, 1
      %s796 = scalar_select %p795, %s32, 1
      %s797 = scalar_lea.vmem %s14, %s796
      %p798 = pneg %p412
      %p799 = pneg %p409
      %p800 = scmp.lt.s32.totalorder %s32, 1
      %s801 = scalar_select %p800, %s32, 1
      %s802 = smul.addr %s801, 16
      %s803 = smul.addr %s802, 4
      %s804 = scalar_lea.vmem %s15, %s803
      %p805 = pneg %p438
      %p806 = pneg %p435
      %p807 = scmp.lt.s32.totalorder %s32, 1
      %s808 = scalar_select %p807, %s32, 1
      %s809 = scalar_lea.vmem %s16, %s808
      %p810 = pneg %p464
      %p811 = pneg %p461
      %p812 = pneg %p485
      %p813 = pneg %p482
      %p814 = pneg %p506
      %p815 = pneg %p503
      %p816 = pneg %p527
      %p817 = pneg %p524
      %p818 = pneg %p548
      %p819 = pneg %p545
      %p820 = pneg %p569
      %p821 = pneg %p566
      %p822 = scmp.lt.s32.totalorder %s32, 1
      %s823 = scalar_select %p822, %s32, 1
      %s824 = scalar_lea.vmem %s1, %s823
      %p825 = scmp.lt.s32.totalorder %s32, 1
      %s826 = scalar_select %p825, %s32, 1
      %s827 = scalar_lea.vmem %s2, %s826
      %p828 = scmp.lt.s32.totalorder %s32, 1
      %s829 = scalar_select %p828, %s32, 1
      %s830 = smul.addr %s829, 4
      %s831 = smul.addr %s830, 4
      %s832 = scalar_lea.vmem %s3, %s831
      %p833 = scmp.lt.s32.totalorder %s32, 1
      %s834 = scalar_select %p833, %s32, 1
      %s835 = scalar_lea.vmem %s4, %s834
      %p836 = scmp.lt.s32.totalorder %s32, 1
      %s837 = scalar_select %p836, %s32, 1
      %s838 = smul.addr %s837, 4
      %s839 = smul.addr %s838, 4
      %s840 = scalar_lea.vmem %s5, %s839
      %p841 = scmp.lt.s32.totalorder %s32, 1
      %s842 = scalar_select %p841, %s32, 1
      %s843 = scalar_lea.vmem %s6, %s842
      %p844 = scmp.lt.s32.totalorder %s32, 1
      %s845 = scalar_select %p844, %s32, 1
      %s846 = smul.addr %s845, 4
      %s847 = smul.addr %s846, 4
      %s848 = scalar_lea.vmem %s7, %s847
      %p849 = scmp.lt.s32.totalorder %s32, 1
      %s850 = scalar_select %p849, %s32, 1
      %s851 = scalar_lea.vmem %s8, %s850
      %p852 = scmp.lt.s32.totalorder %s32, 1
      %s853 = scalar_select %p852, %s32, 1
      %s854 = smul.addr %s853, 4
      %s855 = smul.addr %s854, 4
      %s856 = scalar_lea.vmem %s9, %s855
      %p857 = scmp.lt.s32.totalorder %s32, 1
      %s858 = scalar_select %p857, %s32, 1
      %s859 = scalar_lea.vmem %s10, %s858
      %p860 = scmp.lt.s32.totalorder %s32, 1
      %s861 = scalar_select %p860, %s32, 1
      %s862 = scalar_lea.vmem %s11, %s861
      %p863 = scmp.lt.s32.totalorder %s32, 1
      %s864 = scalar_select %p863, %s32, 1
      %s865 = scalar_lea.vmem %s12, %s864
      %p866 = scmp.lt.s32.totalorder %s32, 1
      %s867 = scalar_select %p866, %s32, 1
      %s868 = smul.addr %s867, 4
      %s869 = smul.addr %s868, 4
      %s870 = scalar_lea.vmem %s13, %s869
      %p871 = scmp.lt.s32.totalorder %s32, 1
      %s872 = scalar_select %p871, %s32, 1
      %s873 = scalar_lea.vmem %s14, %s872
      %p874 = scmp.lt.s32.totalorder %s32, 1
      %s875 = scalar_select %p874, %s32, 1
      %s876 = smul.addr %s875, 16
      %s877 = smul.addr %s876, 4
      %s878 = scalar_lea.vmem %s15, %s877
      %p879 = scmp.lt.s32.totalorder %s32, 1
      %s880 = scalar_select %p879, %s32, 1
      %s881 = scalar_lea.vmem %s16, %s880
      %p883 = scmp.eq.s32.totalorder %s32, 0
      // Predicated region
      $region105: #{_lambda_.4} parent=103 // pred_check
        %p884 = pneg %p883
      $region106: #{_lambda_.4} parent=103 // pred_check_branch
        %886 = sbr.rel (%p884) target = $region108
      $region107: #{_lambda_.4} parent=103 // pred_region
        %v887 = vld [vmem:[%s0] sm:$0xff]
        %v888 = vld [vmem:[%s0 + $0x8] sm:$0x1f]
        %v889 = vld [vmem:[%s0 + $0x10] sm:$0xff]
        %v890 = vld [vmem:[%s0 + $0x18] sm:$0x1f]
        %vm891 = vcmask 261120
        %892 = vst.msk [vmem:[#allocation2] sm:$0xff] %vm891, %v887
        %vm893 = vcmask 258048
        %894 = vst.msk [vmem:[#allocation2 + $0x8] sm:$0x1f] %vm893, %v888
        %895 = vst.msk [vmem:[#allocation2 + $0x10] sm:$0xff] %vm891, %v889
        %896 = vst.msk [vmem:[#allocation2 + $0x18] sm:$0x1f] %vm893, %v890
      $region108: #{_lambda_.4} parent=103 // pred_fallthru
        _
      %v897 = vld [vmem:[#allocation2] sm:$0xff]
      %v898 = vld [vmem:[#allocation2 + $0x8] sm:$0x1f]
      %v899 = vld [vmem:[%s824] sm:$0x1]
      %v900 = vld [vmem:[%s827] sm:$0x1]
      %vm901 = vcmask 261120
      %v902 = vsel %vm901, %v897, 0.0
      %903 = vadd.xlane.f32.xlu0 %v902
      %v904 = vpop.xlane.xlu0 %903
      %vm905 = vcmask 258048
      %v906 = vsel %vm905, %v898, 0.0
      %907 = vadd.xlane.f32.xlu0 %v906
      %v908 = vpop.xlane.xlu0 %907
      %v909 = vrcp.pop 32.0
      %v910 = vmul.f32 %v904, %v909
      %v911 = vmul.f32 %v908, %v909
      %v912 = vsub.f32 %v897, %v910
      %v913 = vsub.f32 %v898, %v911
      %v914 = vmul.f32 %v912, %v912
      %v915 = vmul.f32 %v913, %v913
      %v916 = vsel %vm901, %v914, 0.0
      %917 = vadd.xlane.f32.xlu0 %v916
      %v918 = vpop.xlane.xlu0 %917
      %v919 = vsel %vm905, %v915, 0.0
      %920 = vadd.xlane.f32.xlu0 %v919
      %v921 = vpop.xlane.xlu0 %920
      %v922 = vmul.f32 %v918, %v909
      %v923 = vmul.f32 %v921, %v909
      %v924 = vadd.f32 %v922, 1e-05
      %v925 = vadd.f32 %v923, 1e-05
      %v926 = vrsqrt.pop %v924
      %v927 = vrsqrt.pop %v925
      %v928 = vmul.f32 %v912, %v926
      %v929 = vmul.f32 %v913, %v927
      %v931 = vlaneseq
      %v932 = vshrl.u32 %v931, 7
      %v933 = vsub.s32 0, %v932
      %v934 = vrot.slane %v899, %v933
      %v936 = vmul.f32 %v928, %v934
      %v937 = vmul.f32 %v929, %v934
      %v939 = vlaneseq
      %v940 = vshrl.u32 %v939, 7
      %v941 = vsub.s32 0, %v940
      %v942 = vrot.slane %v900, %v941
      %v944 = vadd.f32 %v936, %v942
      %v945 = vadd.f32 %v937, %v942
      %v946 = vpack.c.bf16 %v945, %v944
      %v947 = vld [vmem:[%s832] sm:$0xf]
      %v948 = vld [vmem:[%s832 + $0x4] sm:$0xf]
      %v949 = vld [vmem:[%s832 + $0x8] sm:$0xf]
      %v950 = vld [vmem:[%s832 + $0xc] sm:$0xf]
      %v951 = vld [vmem:[%s835] sm:$0x1]
      %v953 = vlaneseq
      %v954 = vshrl.u32 %v953, 7
      %v955 = vsub.s32 0, %v954
      %v956 = vrot.slane %v951, %v955
      %v962 = vunpack.c.l.b16 %v947
      %v963 = vunpack.c.l.b16 %v948
      %v964 = vunpack.c.l.b16 %v949
      %v965 = vunpack.c.l.b16 %v950
      %v966 = vpack.c.b16 %v963, %v962
      %v967 = vpack.c.b16 %v965, %v964
      %v971 = vsel %vm901, %v946, 0
      %973 = vmatprep.subr.bf16.mxu0 0
      %974 = vmatpush1.bf16.msra.mxu0 %v966
      %975 = vmatprep.subr.bf16.mxu0 0
      %976 = vmatpush1.bf16.msra.mxu0 %v967
      %977 = vmatprep.subr.bf16.mxu0 0
      %978 = vmatpush1.bf16.msra.mxu0 0
      %979 = vmatprep.subr.bf16.mxu0 0
      %980 = vmatpush1.bf16.msra.mxu0 0
      %981 = vmatprep.subr.bf16.mxu0 0
      %982 = vmatpush1.bf16.msra.mxu0 0
      %983 = vmatprep.subr.bf16.mxu0 0
      %984 = vmatpush1.bf16.msra.mxu0 0
      %985 = vmatprep.subr.bf16.mxu0 0
      %986 = vmatpush1.bf16.msra.mxu0 0
      %987 = vmatprep.subr.bf16.mxu0 0
      %988 = vmatpush1.bf16.msra.mxu0 0
      %989 = vmatprep.subr.bf16.mxu0 0
      %990 = vmatpush1.bf16.msra.mxu0 0
      %991 = vmatprep.subr.bf16.mxu0 0
      %992 = vmatpush1.bf16.msra.mxu0 0
      %993 = vmatprep.subr.bf16.mxu0 0
      %994 = vmatpush1.bf16.msra.mxu0 0
      %995 = vmatprep.subr.bf16.mxu0 0
      %996 = vmatpush1.bf16.msra.mxu0 0
      %997 = vmatprep.subr.bf16.mxu0 0
      %998 = vmatpush1.bf16.msra.mxu0 0
      %999 = vmatprep.subr.bf16.mxu0 0
      %1000 = vmatpush1.bf16.msra.mxu0 0
      %1001 = vmatprep.subr.bf16.mxu0 0
      %1002 = vmatpush1.bf16.msra.mxu0 0
      %1003 = vmatprep.subr.bf16.mxu0 0
      %1004 = vmatpush1.bf16.msra.mxu0 0
      %1005 = vmatprep.mubr.bf16.mxu0 0
      %1006 = vmatmul.mubr.bf16.gmra.mrb[0].mxu0 %v971
      %v1007 = vpop.f32.mrb[0].mxu0
      %v1008 = vadd.f32 %v956, %v1007
      %v1009 = vpop.f32.mrb[0].mxu0
      %v1010 = vpop.f32.mrb[0].mxu0
      %v1011 = vadd.f32 %v956, %v1010
      %v1012 = vpop.f32.mrb[0].mxu0
      %1013 = vdwg.mxu0
      %v1014 = vld [vmem:[%s840] sm:$0xf]
      %v1015 = vld [vmem:[%s840 + $0x4] sm:$0xf]
      %v1016 = vld [vmem:[%s840 + $0x8] sm:$0xf]
      %v1017 = vld [vmem:[%s840 + $0xc] sm:$0xf]
      %v1018 = vld [vmem:[%s843] sm:$0x1]
      %v1020 = vlaneseq
      %v1021 = vshrl.u32 %v1020, 7
      %v1022 = vsub.s32 0, %v1021
      %v1023 = vrot.slane %v1018, %v1022
      %v1029 = vunpack.c.l.b16 %v1014
      %v1030 = vunpack.c.l.b16 %v1015
      %v1031 = vunpack.c.l.b16 %v1016
      %v1032 = vunpack.c.l.b16 %v1017
      %v1033 = vpack.c.b16 %v1030, %v1029
      %v1034 = vpack.c.b16 %v1032, %v1031
      %1037 = vmatprep.subr.bf16.mxu0 0
      %1038 = vmatpush1.bf16.msra.mxu0 %v1033
      %1039 = vmatprep.subr.bf16.mxu0 0
      %1040 = vmatpush1.bf16.msra.mxu0 %v1034
      %1041 = vmatprep.subr.bf16.mxu0 0
      %1042 = vmatpush1.bf16.msra.mxu0 0
      %1043 = vmatprep.subr.bf16.mxu0 0
      %1044 = vmatpush1.bf16.msra.mxu0 0
      %1045 = vmatprep.subr.bf16.mxu0 0
      %1046 = vmatpush1.bf16.msra.mxu0 0
      %1047 = vmatprep.subr.bf16.mxu0 0
      %1048 = vmatpush1.bf16.msra.mxu0 0
      %1049 = vmatprep.subr.bf16.mxu0 0
      %1050 = vmatpush1.bf16.msra.mxu0 0
      %1051 = vmatprep.subr.bf16.mxu0 0
      %1052 = vmatpush1.bf16.msra.mxu0 0
      %1053 = vmatprep.subr.bf16.mxu0 0
      %1054 = vmatpush1.bf16.msra.mxu0 0
      %1055 = vmatprep.subr.bf16.mxu0 0
      %1056 = vmatpush1.bf16.msra.mxu0 0
      %1057 = vmatprep.subr.bf16.mxu0 0
      %1058 = vmatpush1.bf16.msra.mxu0 0
      %1059 = vmatprep.subr.bf16.mxu0 0
      %1060 = vmatpush1.bf16.msra.mxu0 0
      %1061 = vmatprep.subr.bf16.mxu0 0
      %1062 = vmatpush1.bf16.msra.mxu0 0
      %1063 = vmatprep.subr.bf16.mxu0 0
      %1064 = vmatpush1.bf16.msra.mxu0 0
      %1065 = vmatprep.subr.bf16.mxu0 0
      %1066 = vmatpush1.bf16.msra.mxu0 0
      %1067 = vmatprep.subr.bf16.mxu0 0
      %1068 = vmatpush1.bf16.msra.mxu0 0
      %1069 = vmatprep.mubr.bf16.mxu0 0
      %1070 = vmatmul.mubr.bf16.gmra.mrb[0].mxu0 %v971
      %v1071 = vpop.f32.mrb[0].mxu0
      %v1072 = vadd.f32 %v1023, %v1071
      %v1073 = vpop.f32.mrb[0].mxu0
      %v1074 = vpop.f32.mrb[0].mxu0
      %v1075 = vadd.f32 %v1023, %v1074
      %v1076 = vpop.f32.mrb[0].mxu0
      %1077 = vdwg.mxu0
      %v1078 = vld [vmem:[%s848] sm:$0xf]
      %v1079 = vld [vmem:[%s848 + $0x4] sm:$0xf]
      %v1080 = vld [vmem:[%s848 + $0x8] sm:$0xf]
      %v1081 = vld [vmem:[%s848 + $0xc] sm:$0xf]
      %v1082 = vld [vmem:[%s851] sm:$0x1]
      %v1084 = vlaneseq
      %v1085 = vshrl.u32 %v1084, 7
      %v1086 = vsub.s32 0, %v1085
      %v1087 = vrot.slane %v1082, %v1086
      %v1093 = vunpack.c.l.b16 %v1078
      %v1094 = vunpack.c.l.b16 %v1079
      %v1095 = vunpack.c.l.b16 %v1080
      %v1096 = vunpack.c.l.b16 %v1081
      %v1097 = vpack.c.b16 %v1094, %v1093
      %v1098 = vpack.c.b16 %v1096, %v1095
      %1101 = vmatprep.subr.bf16.mxu0 0
      %1102 = vmatpush1.bf16.msra.mxu0 %v1097
      %1103 = vmatprep.subr.bf16.mxu0 0
      %1104 = vmatpush1.bf16.msra.mxu0 %v1098
      %1105 = vmatprep.subr.bf16.mxu0 0
      %1106 = vmatpush1.bf16.msra.mxu0 0
      %1107 = vmatprep.subr.bf16.mxu0 0
      %1108 = vmatpush1.bf16.msra.mxu0 0
      %1109 = vmatprep.subr.bf16.mxu0 0
      %1110 = vmatpush1.bf16.msra.mxu0 0
      %1111 = vmatprep.subr.bf16.mxu0 0
      %1112 = vmatpush1.bf16.msra.mxu0 0
      %1113 = vmatprep.subr.bf16.mxu0 0
      %1114 = vmatpush1.bf16.msra.mxu0 0
      %1115 = vmatprep.subr.bf16.mxu0 0
      %1116 = vmatpush1.bf16.msra.mxu0 0
      %1117 = vmatprep.subr.bf16.mxu0 0
      %1118 = vmatpush1.bf16.msra.mxu0 0
      %1119 = vmatprep.subr.bf16.mxu0 0
      %1120 = vmatpush1.bf16.msra.mxu0 0
      %1121 = vmatprep.subr.bf16.mxu0 0
      %1122 = vmatpush1.bf16.msra.mxu0 0
      %1123 = vmatprep.subr.bf16.mxu0 0
      %1124 = vmatpush1.bf16.msra.mxu0 0
      %1125 = vmatprep.subr.bf16.mxu0 0
      %1126 = vmatpush1.bf16.msra.mxu0 0
      %1127 = vmatprep.subr.bf16.mxu0 0
      %1128 = vmatpush1.bf16.msra.mxu0 0
      %1129 = vmatprep.subr.bf16.mxu0 0
      %1130 = vmatpush1.bf16.msra.mxu0 0
      %1131 = vmatprep.subr.bf16.mxu0 0
      %1132 = vmatpush1.bf16.msra.mxu0 0
      %1133 = vmatprep.mubr.bf16.mxu0 0
      %1134 = vmatmul.mubr.bf16.gmra.mrb[0].mxu0 %v971
      %v1135 = vpop.f32.mrb[0].mxu0
      %v1136 = vadd.f32 %v1087, %v1135
      %v1137 = vpop.f32.mrb[0].mxu0
      %v1138 = vpop.f32.mrb[0].mxu0
      %v1139 = vadd.f32 %v1087, %v1138
      %v1140 = vpop.f32.mrb[0].mxu0
      %1141 = vdwg.mxu0
      %v1142 = vmul.f32 %v1008, 0.35355338
      %v1143 = vmul.f32 %v1011, 0.35355338
      %v1144 = vpack.c.bf16 %v1143, %v1142
      %v1145 = vpack.c.bf16 %v1075, %v1072
      %v1146 = vpack.c.bf16 %v1139, %v1136
      %vm1147 = vcmask 64512
      %v1149 = vsel %vm1147, %v1144, 0
      %v1152 = vsel %vm1147, %v1145, 0
      %1154 = vmatprep.subr.bf16.mxu0 0
      %1155 = vmatpush1.bf16.xpose.msra.mxu0 %v1152
      %1156 = vmatprep.subr.bf16.mxu0 0
      %1157 = vmatpush1.bf16.xpose.msra.mxu0 0
      %1158 = vmatprep.subr.bf16.mxu0 0
      %1159 = vmatpush1.bf16.xpose.msra.mxu0 0
      %1160 = vmatprep.subr.bf16.mxu0 0
      %1161 = vmatpush1.bf16.xpose.msra.mxu0 0
      %1162 = vmatprep.subr.bf16.mxu0 0
      %1163 = vmatpush1.bf16.xpose.msra.mxu0 0
      %1164 = vmatprep.subr.bf16.mxu0 0
      %1165 = vmatpush1.bf16.xpose.msra.mxu0 0
      %1166 = vmatprep.subr.bf16.mxu0 0
      %1167 = vmatpush1.bf16.xpose.msra.mxu0 0
      %1168 = vmatprep.subr.bf16.mxu0 0
      %1169 = vmatpush1.bf16.xpose.msra.mxu0 0
      %1170 = vmatprep.subr.bf16.mxu0 0
      %1171 = vmatpush1.bf16.xpose.msra.mxu0 0
      %1172 = vmatprep.subr.bf16.mxu0 0
      %1173 = vmatpush1.bf16.xpose.msra.mxu0 0
      %1174 = vmatprep.subr.bf16.mxu0 0
      %1175 = vmatpush1.bf16.xpose.msra.mxu0 0
      %1176 = vmatprep.subr.bf16.mxu0 0
      %1177 = vmatpush1.bf16.xpose.msra.mxu0 0
      %1178 = vmatprep.subr.bf16.mxu0 0
      %1179 = vmatpush1.bf16.xpose.msra.mxu0 0
      %1180 = vmatprep.subr.bf16.mxu0 0
      %1181 = vmatpush1.bf16.xpose.msra.mxu0 0
      %1182 = vmatprep.subr.bf16.mxu0 0
      %1183 = vmatpush1.bf16.xpose.msra.mxu0 0
      %1184 = vmatprep.subr.bf16.mxu0 0
      %1185 = vmatpush1.bf16.xpose.msra.mxu0 0
      %1186 = vmatprep.mubr.bf16.mxu0 0
      %1187 = vmatmul.mubr.bf16.gmra.mrb[0].mxu0 %v1149
      %v1188 = vpop.f32.mrb[0].mxu0
      %v1189 = vadd.f32 0.0, %v1188
      %v1190 = vpop.f32.mrb[0].mxu0
      %v1191 = vpop.f32.mrb[0].mxu0
      %v1192 = vadd.f32 0.0, %v1191
      %v1193 = vpop.f32.mrb[0].mxu0
      %1194 = vdwg.mxu0
      %vm1195 = vcmask 105472
      %v1196 = vsel %vm1195, %v1189, -inf
      %1197 = vmax.xlane.f32.xlu0 %v1196
      %v1198 = vpop.xlane.xlu0 %1197
      %vm1199 = vcmask 102400
      %v1200 = vsel %vm1199, %v1192, -inf
      %1201 = vmax.xlane.f32.xlu0 %v1200
      %v1202 = vpop.xlane.xlu0 %1201
      %v1203 = vsub.f32 %v1189, %v1198
      %v1204 = vsub.f32 %v1192, %v1202
      %v1205 = vmul.f32 %v1203, 1.442695
      %v1206 = vpow.pop %v1205
      %v1207 = vmul.f32 %v1204, 1.442695
      %v1208 = vpow.pop %v1207
      %v1209 = vsel %vm1195, %v1206, 0.0
      %1210 = vadd.xlane.f32.xlu0 %v1209
      %v1211 = vpop.xlane.xlu0 %1210
      %v1212 = vsel %vm1199, %v1208, 0.0
      %1213 = vadd.xlane.f32.xlu0 %v1212
      %v1214 = vpop.xlane.xlu0 %1213
      %v1215 = vrcp.pop %v1211
      %v1216 = vmul.f32 %v1206, %v1215
      %v1217 = vrcp.pop %v1214
      %v1218 = vmul.f32 %v1208, %v1217
      %v1219 = vpack.c.bf16 %v1218, %v1216
      %v1221 = vsel %vm1195, %v1219, 0
      %vm1223 = vcmask 1045504
      %vm1224 = vcmask 1046528
      %v1225 = vsel %vm1223, 4294967295, 65535
      %v1226 = vsel %vm1224, %v1225, 0
      %v1228 = vand.u32 %v1146, %v1226
      %1230 = vmatprep.subr.bf16.mxu0 0
      %1231 = vmatpush1.bf16.msra.mxu0 %v1228
      %1232 = vmatprep.subr.bf16.mxu0 0
      %1233 = vmatpush1.bf16.msra.mxu0 0
      %1234 = vmatprep.subr.bf16.mxu0 0
      %1235 = vmatpush1.bf16.msra.mxu0 0
      %1236 = vmatprep.subr.bf16.mxu0 0
      %1237 = vmatpush1.bf16.msra.mxu0 0
      %1238 = vmatprep.subr.bf16.mxu0 0
      %1239 = vmatpush1.bf16.msra.mxu0 0
      %1240 = vmatprep.subr.bf16.mxu0 0
      %1241 = vmatpush1.bf16.msra.mxu0 0
      %1242 = vmatprep.subr.bf16.mxu0 0
      %1243 = vmatpush1.bf16.msra.mxu0 0
      %1244 = vmatprep.subr.bf16.mxu0 0
      %1245 = vmatpush1.bf16.msra.mxu0 0
      %1246 = vmatprep.subr.bf16.mxu0 0
      %1247 = vmatpush1.bf16.msra.mxu0 0
      %1248 = vmatprep.subr.bf16.mxu0 0
      %1249 = vmatpush1.bf16.msra.mxu0 0
      %1250 = vmatprep.subr.bf16.mxu0 0
      %1251 = vmatpush1.bf16.msra.mxu0 0
      %1252 = vmatprep.subr.bf16.mxu0 0
      %1253 = vmatpush1.bf16.msra.mxu0 0
      %1254 = vmatprep.subr.bf16.mxu0 0
      %1255 = vmatpush1.bf16.msra.mxu0 0
      %1256 = vmatprep.subr.bf16.mxu0 0
      %1257 = vmatpush1.bf16.msra.mxu0 0
      %1258 = vmatprep.subr.bf16.mxu0 0
      %1259 = vmatpush1.bf16.msra.mxu0 0
      %1260 = vmatprep.subr.bf16.mxu0 0
      %1261 = vmatpush1.bf16.msra.mxu0 0
      %1262 = vmatprep.mubr.bf16.mxu0 0
      %1263 = vmatmul.mubr.bf16.gmra.mrb[0].mxu0 %v1221
      %v1264 = vpop.f32.mrb[0].mxu0
      %v1265 = vadd.f32 0.0, %v1264
      %v1266 = vpop.f32.mrb[0].mxu0
      %v1267 = vpop.f32.mrb[0].mxu0
      %v1268 = vadd.f32 0.0, %v1267
      %v1269 = vpop.f32.mrb[0].mxu0
      %1270 = vdwg.mxu0
      %v1271 = vpack.c.bf16 %v1268, %v1265
      %v1272 = vld [vmem:[%s856] sm:$0xf]
      %v1273 = vld [vmem:[%s856 + $0x4] sm:$0xf]
      %v1274 = vld [vmem:[%s856 + $0x8] sm:$0xf]
      %v1275 = vld [vmem:[%s856 + $0xc] sm:$0xf]
      %v1277 = vsel %vm1147, %v1271, 0
      %vm1279 = vcmask 1043456
      %v1281 = vsel %vm1279, %v1272, 0
      %1283 = vmatprep.subr.bf16.mxu0 0
      %1284 = vmatpush1.bf16.msra.mxu0 %v1281
      %1285 = vmatprep.subr.bf16.mxu0 0
      %1286 = vmatpush1.bf16.msra.mxu0 0
      %1287 = vmatprep.subr.bf16.mxu0 0
      %1288 = vmatpush1.bf16.msra.mxu0 0
      %1289 = vmatprep.subr.bf16.mxu0 0
      %1290 = vmatpush1.bf16.msra.mxu0 0
      %1291 = vmatprep.subr.bf16.mxu0 0
      %1292 = vmatpush1.bf16.msra.mxu0 0
      %1293 = vmatprep.subr.bf16.mxu0 0
      %1294 = vmatpush1.bf16.msra.mxu0 0
      %1295 = vmatprep.subr.bf16.mxu0 0
      %1296 = vmatpush1.bf16.msra.mxu0 0
      %1297 = vmatprep.subr.bf16.mxu0 0
      %1298 = vmatpush1.bf16.msra.mxu0 0
      %1299 = vmatprep.subr.bf16.mxu0 0
      %1300 = vmatpush1.bf16.msra.mxu0 0
      %1301 = vmatprep.subr.bf16.mxu0 0
      %1302 = vmatpush1.bf16.msra.mxu0 0
      %1303 = vmatprep.subr.bf16.mxu0 0
      %1304 = vmatpush1.bf16.msra.mxu0 0
      %1305 = vmatprep.subr.bf16.mxu0 0
      %1306 = vmatpush1.bf16.msra.mxu0 0
      %1307 = vmatprep.subr.bf16.mxu0 0
      %1308 = vmatpush1.bf16.msra.mxu0 0
      %1309 = vmatprep.subr.bf16.mxu0 0
      %1310 = vmatpush1.bf16.msra.mxu0 0
      %1311 = vmatprep.subr.bf16.mxu0 0
      %1312 = vmatpush1.bf16.msra.mxu0 0
      %1313 = vmatprep.subr.bf16.mxu0 0
      %1314 = vmatpush1.bf16.msra.mxu0 0
      %1315 = vmatprep.mubr.bf16.mxu0 0
      %1316 = vmatmul.mubr.bf16.gmra.mrb[0].mxu0 %v1277
      %v1317 = vpop.f32.mrb[0].mxu0
      %v1318 = vadd.f32 0.0, %v1317
      %v1319 = vpop.f32.mrb[0].mxu0
      %v1320 = vpop.f32.mrb[0].mxu0
      %v1321 = vadd.f32 0.0, %v1320
      %v1322 = vpop.f32.mrb[0].mxu0
      %1323 = vdwg.mxu0
      %v1324 = vadd.f32 %v897, %v1318
      %v1325 = vadd.f32 %v898, %v1321
      %1327 = vrot.lane.b32.xlu0 %v1144, 120
      %v1328 = vpop.permute.xlu0 %1327
      %1330 = vrot.lane.b32.xlu0 %v1145, 120
      %v1331 = vpop.permute.xlu0 %1330
      %v1333 = vsel %vm1147, %v1328, 0
      %v1336 = vsel %vm1147, %v1331, 0
      %1338 = vmatprep.subr.bf16.mxu0 0
      %1339 = vmatpush1.bf16.xpose.msra.mxu0 %v1336
      %1340 = vmatprep.subr.bf16.mxu0 0
      %1341 = vmatpush1.bf16.xpose.msra.mxu0 0
      %1342 = vmatprep.subr.bf16.mxu0 0
      %1343 = vmatpush1.bf16.xpose.msra.mxu0 0
      %1344 = vmatprep.subr.bf16.mxu0 0
      %1345 = vmatpush1.bf16.xpose.msra.mxu0 0
      %1346 = vmatprep.subr.bf16.mxu0 0
      %1347 = vmatpush1.bf16.xpose.msra.mxu0 0
      %1348 = vmatprep.subr.bf16.mxu0 0
      %1349 = vmatpush1.bf16.xpose.msra.mxu0 0
      %1350 = vmatprep.subr.bf16.mxu0 0
      %1351 = vmatpush1.bf16.xpose.msra.mxu0 0
      %1352 = vmatprep.subr.bf16.mxu0 0
      %1353 = vmatpush1.bf16.xpose.msra.mxu0 0
      %1354 = vmatprep.subr.bf16.mxu0 0
      %1355 = vmatpush1.bf16.xpose.msra.mxu0 0
      %1356 = vmatprep.subr.bf16.mxu0 0
      %1357 = vmatpush1.bf16.xpose.msra.mxu0 0
      %1358 = vmatprep.subr.bf16.mxu0 0
      %1359 = vmatpush1.bf16.xpose.msra.mxu0 0
      %1360 = vmatprep.subr.bf16.mxu0 0
      %1361 = vmatpush1.bf16.xpose.msra.mxu0 0
      %1362 = vmatprep.subr.bf16.mxu0 0
      %1363 = vmatpush1.bf16.xpose.msra.mxu0 0
      %1364 = vmatprep.subr.bf16.mxu0 0
      %1365 = vmatpush1.bf16.xpose.msra.mxu0 0
      %1366 = vmatprep.subr.bf16.mxu0 0
      %1367 = vmatpush1.bf16.xpose.msra.mxu0 0
      %1368 = vmatprep.subr.bf16.mxu0 0
      %1369 = vmatpush1.bf16.xpose.msra.mxu0 0
      %1370 = vmatprep.mubr.bf16.mxu0 0
      %1371 = vmatmul.mubr.bf16.gmra.mrb[0].mxu0 %v1333
      %v1372 = vpop.f32.mrb[0].mxu0
      %v1373 = vadd.f32 0.0, %v1372
      %v1374 = vpop.f32.mrb[0].mxu0
      %v1375 = vpop.f32.mrb[0].mxu0
      %v1376 = vadd.f32 0.0, %v1375
      %v1377 = vpop.f32.mrb[0].mxu0
      %1378 = vdwg.mxu0
      %v1379 = vsel %vm1195, %v1373, -inf
      %1380 = vmax.xlane.f32.xlu0 %v1379
      %v1381 = vpop.xlane.xlu0 %1380
      %v1382 = vsel %vm1199, %v1376, -inf
      %1383 = vmax.xlane.f32.xlu0 %v1382
      %v1384 = vpop.xlane.xlu0 %1383
      %v1385 = vsub.f32 %v1373, %v1381
      %v1386 = vsub.f32 %v1376, %v1384
      %v1387 = vmul.f32 %v1385, 1.442695
      %v1388 = vpow.pop %v1387
      %v1389 = vmul.f32 %v1386, 1.442695
      %v1390 = vpow.pop %v1389
      %v1391 = vsel %vm1195, %v1388, 0.0
      %1392 = vadd.xlane.f32.xlu0 %v1391
      %v1393 = vpop.xlane.xlu0 %1392
      %v1394 = vsel %vm1199, %v1390, 0.0
      %1395 = vadd.xlane.f32.xlu0 %v1394
      %v1396 = vpop.xlane.xlu0 %1395
      %v1397 = vrcp.pop %v1393
      %v1398 = vmul.f32 %v1388, %v1397
      %v1399 = vrcp.pop %v1396
      %v1400 = vmul.f32 %v1390, %v1399
      %v1401 = vpack.c.bf16 %v1400, %v1398
      %1403 = vrot.lane.b32.xlu0 %v1146, 120
      %v1404 = vpop.permute.xlu0 %1403
      %v1406 = vsel %vm1195, %v1401, 0
      %v1409 = vand.u32 %v1404, %v1226
      %1411 = vmatprep.subr.bf16.mxu0 0
      %1412 = vmatpush1.bf16.msra.mxu0 %v1409
      %1413 = vmatprep.subr.bf16.mxu0 0
      %1414 = vmatpush1.bf16.msra.mxu0 0
      %1415 = vmatprep.subr.bf16.mxu0 0
      %1416 = vmatpush1.bf16.msra.mxu0 0
      %1417 = vmatprep.subr.bf16.mxu0 0
      %1418 = vmatpush1.bf16.msra.mxu0 0
      %1419 = vmatprep.subr.bf16.mxu0 0
      %1420 = vmatpush1.bf16.msra.mxu0 0
      %1421 = vmatprep.subr.bf16.mxu0 0
      %1422 = vmatpush1.bf16.msra.mxu0 0
      %1423 = vmatprep.subr.bf16.mxu0 0
      %1424 = vmatpush1.bf16.msra.mxu0 0
      %1425 = vmatprep.subr.bf16.mxu0 0
      %1426 = vmatpush1.bf16.msra.mxu0 0
      %1427 = vmatprep.subr.bf16.mxu0 0
      %1428 = vmatpush1.bf16.msra.mxu0 0
      %1429 = vmatprep.subr.bf16.mxu0 0
      %1430 = vmatpush1.bf16.msra.mxu0 0
      %1431 = vmatprep.subr.bf16.mxu0 0
      %1432 = vmatpush1.bf16.msra.mxu0 0
      %1433 = vmatprep.subr.bf16.mxu0 0
      %1434 = vmatpush1.bf16.msra.mxu0 0
      %1435 = vmatprep.subr.bf16.mxu0 0
      %1436 = vmatpush1.bf16.msra.mxu0 0
      %1437 = vmatprep.subr.bf16.mxu0 0
      %1438 = vmatpush1.bf16.msra.mxu0 0
      %1439 = vmatprep.subr.bf16.mxu0 0
      %1440 = vmatpush1.bf16.msra.mxu0 0
      %1441 = vmatprep.subr.bf16.mxu0 0
      %1442 = vmatpush1.bf16.msra.mxu0 0
      %1443 = vmatprep.mubr.bf16.mxu0 0
      %1444 = vmatmul.mubr.bf16.gmra.mrb[0].mxu0 %v1406
      %v1445 = vpop.f32.mrb[0].mxu0
      %v1446 = vadd.f32 0.0, %v1445
      %v1447 = vpop.f32.mrb[0].mxu0
      %v1448 = vpop.f32.mrb[0].mxu0
      %v1449 = vadd.f32 0.0, %v1448
      %v1450 = vpop.f32.mrb[0].mxu0
      %1451 = vdwg.mxu0
      %v1452 = vpack.c.bf16 %v1449, %v1446
      %v1454 = vsel %vm1147, %v1452, 0
      %v1457 = vsel %vm1279, %v1273, 0
      %1459 = vmatprep.subr.bf16.mxu0 0
      %1460 = vmatpush1.bf16.msra.mxu0 %v1457
      %1461 = vmatprep.subr.bf16.mxu0 0
      %1462 = vmatpush1.bf16.msra.mxu0 0
      %1463 = vmatprep.subr.bf16.mxu0 0
      %1464 = vmatpush1.bf16.msra.mxu0 0
      %1465 = vmatprep.subr.bf16.mxu0 0
      %1466 = vmatpush1.bf16.msra.mxu0 0
      %1467 = vmatprep.subr.bf16.mxu0 0
      %1468 = vmatpush1.bf16.msra.mxu0 0
      %1469 = vmatprep.subr.bf16.mxu0 0
      %1470 = vmatpush1.bf16.msra.mxu0 0
      %1471 = vmatprep.subr.bf16.mxu0 0
      %1472 = vmatpush1.bf16.msra.mxu0 0
      %1473 = vmatprep.subr.bf16.mxu0 0
      %1474 = vmatpush1.bf16.msra.mxu0 0
      %1475 = vmatprep.subr.bf16.mxu0 0
      %1476 = vmatpush1.bf16.msra.mxu0 0
      %1477 = vmatprep.subr.bf16.mxu0 0
      %1478 = vmatpush1.bf16.msra.mxu0 0
      %1479 = vmatprep.subr.bf16.mxu0 0
      %1480 = vmatpush1.bf16.msra.mxu0 0
      %1481 = vmatprep.subr.bf16.mxu0 0
      %1482 = vmatpush1.bf16.msra.mxu0 0
      %1483 = vmatprep.subr.bf16.mxu0 0
      %1484 = vmatpush1.bf16.msra.mxu0 0
      %1485 = vmatprep.subr.bf16.mxu0 0
      %1486 = vmatpush1.bf16.msra.mxu0 0
      %1487 = vmatprep.subr.bf16.mxu0 0
      %1488 = vmatpush1.bf16.msra.mxu0 0
      %1489 = vmatprep.subr.bf16.mxu0 0
      %1490 = vmatpush1.bf16.msra.mxu0 0
      %1491 = vmatprep.mubr.bf16.mxu0 0
      %1492 = vmatmul.mubr.bf16.gmra.mrb[0].mxu0 %v1454
      %v1493 = vpop.f32.mrb[0].mxu0
      %v1494 = vadd.f32 0.0, %v1493
      %v1495 = vpop.f32.mrb[0].mxu0
      %v1496 = vpop.f32.mrb[0].mxu0
      %v1497 = vadd.f32 0.0, %v1496
      %v1498 = vpop.f32.mrb[0].mxu0
      %1499 = vdwg.mxu0
      %v1500 = vadd.f32 %v1324, %v1494
      %v1501 = vadd.f32 %v1325, %v1497
      %1502 = vrot.lane.b32.xlu0 %v1144, 112
      %v1503 = vpop.permute.xlu0 %1502
      %1504 = vrot.lane.b32.xlu0 %v1145, 112
      %v1505 = vpop.permute.xlu0 %1504
      %v1507 = vsel %vm1147, %v1503, 0
      %v1510 = vsel %vm1147, %v1505, 0
      %1512 = vmatprep.subr.bf16.mxu0 0
      %1513 = vmatpush1.bf16.xpose.msra.mxu0 %v1510
      %1514 = vmatprep.subr.bf16.mxu0 0
      %1515 = vmatpush1.bf16.xpose.msra.mxu0 0
      %1516 = vmatprep.subr.bf16.mxu0 0
      %1517 = vmatpush1.bf16.xpose.msra.mxu0 0
      %1518 = vmatprep.subr.bf16.mxu0 0
      %1519 = vmatpush1.bf16.xpose.msra.mxu0 0
      %1520 = vmatprep.subr.bf16.mxu0 0
      %1521 = vmatpush1.bf16.xpose.msra.mxu0 0
      %1522 = vmatprep.subr.bf16.mxu0 0
      %1523 = vmatpush1.bf16.xpose.msra.mxu0 0
      %1524 = vmatprep.subr.bf16.mxu0 0
      %1525 = vmatpush1.bf16.xpose.msra.mxu0 0
      %1526 = vmatprep.subr.bf16.mxu0 0
      %1527 = vmatpush1.bf16.xpose.msra.mxu0 0
      %1528 = vmatprep.subr.bf16.mxu0 0
      %1529 = vmatpush1.bf16.xpose.msra.mxu0 0
      %1530 = vmatprep.subr.bf16.mxu0 0
      %1531 = vmatpush1.bf16.xpose.msra.mxu0 0
      %1532 = vmatprep.subr.bf16.mxu0 0
      %1533 = vmatpush1.bf16.xpose.msra.mxu0 0
      %1534 = vmatprep.subr.bf16.mxu0 0
      %1535 = vmatpush1.bf16.xpose.msra.mxu0 0
      %1536 = vmatprep.subr.bf16.mxu0 0
      %1537 = vmatpush1.bf16.xpose.msra.mxu0 0
      %1538 = vmatprep.subr.bf16.mxu0 0
      %1539 = vmatpush1.bf16.xpose.msra.mxu0 0
      %1540 = vmatprep.subr.bf16.mxu0 0
      %1541 = vmatpush1.bf16.xpose.msra.mxu0 0
      %1542 = vmatprep.subr.bf16.mxu0 0
      %1543 = vmatpush1.bf16.xpose.msra.mxu0 0
      %1544 = vmatprep.mubr.bf16.mxu0 0
      %1545 = vmatmul.mubr.bf16.gmra.mrb[0].mxu0 %v1507
      %v1546 = vpop.f32.mrb[0].mxu0
      %v1547 = vadd.f32 0.0, %v1546
      %v1548 = vpop.f32.mrb[0].mxu0
      %v1549 = vpop.f32.mrb[0].mxu0
      %v1550 = vadd.f32 0.0, %v1549
      %v1551 = vpop.f32.mrb[0].mxu0
      %1552 = vdwg.mxu0
      %v1553 = vsel %vm1195, %v1547, -inf
      %1554 = vmax.xlane.f32.xlu0 %v1553
      %v1555 = vpop.xlane.xlu0 %1554
      %v1556 = vsel %vm1199, %v1550, -inf
      %1557 = vmax.xlane.f32.xlu0 %v1556
      %v1558 = vpop.xlane.xlu0 %1557
      %v1559 = vsub.f32 %v1547, %v1555
      %v1560 = vsub.f32 %v1550, %v1558
      %v1561 = vmul.f32 %v1559, 1.442695
      %v1562 = vpow.pop %v1561
      %v1563 = vmul.f32 %v1560, 1.442695
      %v1564 = vpow.pop %v1563
      %v1565 = vsel %vm1195, %v1562, 0.0
      %1566 = vadd.xlane.f32.xlu0 %v1565
      %v1567 = vpop.xlane.xlu0 %1566
      %v1568 = vsel %vm1199, %v1564, 0.0
      %1569 = vadd.xlane.f32.xlu0 %v1568
      %v1570 = vpop.xlane.xlu0 %1569
      %v1571 = vrcp.pop %v1567
      %v1572 = vmul.f32 %v1562, %v1571
      %v1573 = vrcp.pop %v1570
      %v1574 = vmul.f32 %v1564, %v1573
      %v1575 = vpack.c.bf16 %v1574, %v1572
      %1576 = vrot.lane.b32.xlu0 %v1146, 112
      %v1577 = vpop.permute.xlu0 %1576
      %v1579 = vsel %vm1195, %v1575, 0
      %v1582 = vand.u32 %v1577, %v1226
      %1584 = vmatprep.subr.bf16.mxu0 0
      %1585 = vmatpush1.bf16.msra.mxu0 %v1582
      %1586 = vmatprep.subr.bf16.mxu0 0
      %1587 = vmatpush1.bf16.msra.mxu0 0
      %1588 = vmatprep.subr.bf16.mxu0 0
      %1589 = vmatpush1.bf16.msra.mxu0 0
      %1590 = vmatprep.subr.bf16.mxu0 0
      %1591 = vmatpush1.bf16.msra.mxu0 0
      %1592 = vmatprep.subr.bf16.mxu0 0
      %1593 = vmatpush1.bf16.msra.mxu0 0
      %1594 = vmatprep.subr.bf16.mxu0 0
      %1595 = vmatpush1.bf16.msra.mxu0 0
      %1596 = vmatprep.subr.bf16.mxu0 0
      %1597 = vmatpush1.bf16.msra.mxu0 0
      %1598 = vmatprep.subr.bf16.mxu0 0
      %1599 = vmatpush1.bf16.msra.mxu0 0
      %1600 = vmatprep.subr.bf16.mxu0 0
      %1601 = vmatpush1.bf16.msra.mxu0 0
      %1602 = vmatprep.subr.bf16.mxu0 0
      %1603 = vmatpush1.bf16.msra.mxu0 0
      %1604 = vmatprep.subr.bf16.mxu0 0
      %1605 = vmatpush1.bf16.msra.mxu0 0
      %1606 = vmatprep.subr.bf16.mxu0 0
      %1607 = vmatpush1.bf16.msra.mxu0 0
      %1608 = vmatprep.subr.bf16.mxu0 0
      %1609 = vmatpush1.bf16.msra.mxu0 0
      %1610 = vmatprep.subr.bf16.mxu0 0
      %1611 = vmatpush1.bf16.msra.mxu0 0
      %1612 = vmatprep.subr.bf16.mxu0 0
      %1613 = vmatpush1.bf16.msra.mxu0 0
      %1614 = vmatprep.subr.bf16.mxu0 0
      %1615 = vmatpush1.bf16.msra.mxu0 0
      %1616 = vmatprep.mubr.bf16.mxu0 0
      %1617 = vmatmul.mubr.bf16.gmra.mrb[0].mxu0 %v1579
      %v1618 = vpop.f32.mrb[0].mxu0
      %v1619 = vadd.f32 0.0, %v1618
      %v1620 = vpop.f32.mrb[0].mxu0
      %v1621 = vpop.f32.mrb[0].mxu0
      %v1622 = vadd.f32 0.0, %v1621
      %v1623 = vpop.f32.mrb[0].mxu0
      %1624 = vdwg.mxu0
      %v1625 = vpack.c.bf16 %v1622, %v1619
      %v1627 = vsel %vm1147, %v1625, 0
      %v1630 = vsel %vm1279, %v1274, 0
      %1632 = vmatprep.subr.bf16.mxu0 0
      %1633 = vmatpush1.bf16.msra.mxu0 %v1630
      %1634 = vmatprep.subr.bf16.mxu0 0
      %1635 = vmatpush1.bf16.msra.mxu0 0
      %1636 = vmatprep.subr.bf16.mxu0 0
      %1637 = vmatpush1.bf16.msra.mxu0 0
      %1638 = vmatprep.subr.bf16.mxu0 0
      %1639 = vmatpush1.bf16.msra.mxu0 0
      %1640 = vmatprep.subr.bf16.mxu0 0
      %1641 = vmatpush1.bf16.msra.mxu0 0
      %1642 = vmatprep.subr.bf16.mxu0 0
      %1643 = vmatpush1.bf16.msra.mxu0 0
      %1644 = vmatprep.subr.bf16.mxu0 0
      %1645 = vmatpush1.bf16.msra.mxu0 0
      %1646 = vmatprep.subr.bf16.mxu0 0
      %1647 = vmatpush1.bf16.msra.mxu0 0
      %1648 = vmatprep.subr.bf16.mxu0 0
      %1649 = vmatpush1.bf16.msra.mxu0 0
      %1650 = vmatprep.subr.bf16.mxu0 0
      %1651 = vmatpush1.bf16.msra.mxu0 0
      %1652 = vmatprep.subr.bf16.mxu0 0
      %1653 = vmatpush1.bf16.msra.mxu0 0
      %1654 = vmatprep.subr.bf16.mxu0 0
      %1655 = vmatpush1.bf16.msra.mxu0 0
      %1656 = vmatprep.subr.bf16.mxu0 0
      %1657 = vmatpush1.bf16.msra.mxu0 0
      %1658 = vmatprep.subr.bf16.mxu0 0
      %1659 = vmatpush1.bf16.msra.mxu0 0
      %1660 = vmatprep.subr.bf16.mxu0 0
      %1661 = vmatpush1.bf16.msra.mxu0 0
      %1662 = vmatprep.subr.bf16.mxu0 0
      %1663 = vmatpush1.bf16.msra.mxu0 0
      %1664 = vmatprep.mubr.bf16.mxu0 0
      %1665 = vmatmul.mubr.bf16.gmra.mrb[0].mxu0 %v1627
      %v1666 = vpop.f32.mrb[0].mxu0
      %v1667 = vadd.f32 0.0, %v1666
      %v1668 = vpop.f32.mrb[0].mxu0
      %v1669 = vpop.f32.mrb[0].mxu0
      %v1670 = vadd.f32 0.0, %v1669
      %v1671 = vpop.f32.mrb[0].mxu0
      %1672 = vdwg.mxu0
      %v1673 = vadd.f32 %v1500, %v1667
      %v1674 = vadd.f32 %v1501, %v1670
      %1675 = vrot.lane.b32.xlu0 %v1144, 104
      %v1676 = vpop.permute.xlu0 %1675
      %1677 = vrot.lane.b32.xlu0 %v1145, 104
      %v1678 = vpop.permute.xlu0 %1677
      %v1680 = vsel %vm1147, %v1676, 0
      %v1683 = vsel %vm1147, %v1678, 0
      %1685 = vmatprep.subr.bf16.mxu0 0
      %1686 = vmatpush1.bf16.xpose.msra.mxu0 %v1683
      %1687 = vmatprep.subr.bf16.mxu0 0
      %1688 = vmatpush1.bf16.xpose.msra.mxu0 0
      %1689 = vmatprep.subr.bf16.mxu0 0
      %1690 = vmatpush1.bf16.xpose.msra.mxu0 0
      %1691 = vmatprep.subr.bf16.mxu0 0
      %1692 = vmatpush1.bf16.xpose.msra.mxu0 0
      %1693 = vmatprep.subr.bf16.mxu0 0
      %1694 = vmatpush1.bf16.xpose.msra.mxu0 0
      %1695 = vmatprep.subr.bf16.mxu0 0
      %1696 = vmatpush1.bf16.xpose.msra.mxu0 0
      %1697 = vmatprep.subr.bf16.mxu0 0
      %1698 = vmatpush1.bf16.xpose.msra.mxu0 0
      %1699 = vmatprep.subr.bf16.mxu0 0
      %1700 = vmatpush1.bf16.xpose.msra.mxu0 0
      %1701 = vmatprep.subr.bf16.mxu0 0
      %1702 = vmatpush1.bf16.xpose.msra.mxu0 0
      %1703 = vmatprep.subr.bf16.mxu0 0
      %1704 = vmatpush1.bf16.xpose.msra.mxu0 0
      %1705 = vmatprep.subr.bf16.mxu0 0
      %1706 = vmatpush1.bf16.xpose.msra.mxu0 0
      %1707 = vmatprep.subr.bf16.mxu0 0
      %1708 = vmatpush1.bf16.xpose.msra.mxu0 0
      %1709 = vmatprep.subr.bf16.mxu0 0
      %1710 = vmatpush1.bf16.xpose.msra.mxu0 0
      %1711 = vmatprep.subr.bf16.mxu0 0
      %1712 = vmatpush1.bf16.xpose.msra.mxu0 0
      %1713 = vmatprep.subr.bf16.mxu0 0
      %1714 = vmatpush1.bf16.xpose.msra.mxu0 0
      %1715 = vmatprep.subr.bf16.mxu0 0
      %1716 = vmatpush1.bf16.xpose.msra.mxu0 0
      %1717 = vmatprep.mubr.bf16.mxu0 0
      %1718 = vmatmul.mubr.bf16.gmra.mrb[0].mxu0 %v1680
      %v1719 = vpop.f32.mrb[0].mxu0
      %v1720 = vadd.f32 0.0, %v1719
      %v1721 = vpop.f32.mrb[0].mxu0
      %v1722 = vpop.f32.mrb[0].mxu0
      %v1723 = vadd.f32 0.0, %v1722
      %v1724 = vpop.f32.mrb[0].mxu0
      %1725 = vdwg.mxu0
      %v1726 = vsel %vm1195, %v1720, -inf
      %1727 = vmax.xlane.f32.xlu0 %v1726
      %v1728 = vpop.xlane.xlu0 %1727
      %v1729 = vsel %vm1199, %v1723, -inf
      %1730 = vmax.xlane.f32.xlu0 %v1729
      %v1731 = vpop.xlane.xlu0 %1730
      %v1732 = vsub.f32 %v1720, %v1728
      %v1733 = vsub.f32 %v1723, %v1731
      %v1734 = vmul.f32 %v1732, 1.442695
      %v1735 = vpow.pop %v1734
      %v1736 = vmul.f32 %v1733, 1.442695
      %v1737 = vpow.pop %v1736
      %v1738 = vsel %vm1195, %v1735, 0.0
      %1739 = vadd.xlane.f32.xlu0 %v1738
      %v1740 = vpop.xlane.xlu0 %1739
      %v1741 = vsel %vm1199, %v1737, 0.0
      %1742 = vadd.xlane.f32.xlu0 %v1741
      %v1743 = vpop.xlane.xlu0 %1742
      %v1744 = vrcp.pop %v1740
      %v1745 = vmul.f32 %v1735, %v1744
      %v1746 = vrcp.pop %v1743
      %v1747 = vmul.f32 %v1737, %v1746
      %v1748 = vpack.c.bf16 %v1747, %v1745
      %1749 = vrot.lane.b32.xlu0 %v1146, 104
      %v1750 = vpop.permute.xlu0 %1749
      %v1752 = vsel %vm1195, %v1748, 0
      %v1755 = vand.u32 %v1750, %v1226
      %1757 = vmatprep.subr.bf16.mxu0 0
      %1758 = vmatpush1.bf16.msra.mxu0 %v1755
      %1759 = vmatprep.subr.bf16.mxu0 0
      %1760 = vmatpush1.bf16.msra.mxu0 0
      %1761 = vmatprep.subr.bf16.mxu0 0
      %1762 = vmatpush1.bf16.msra.mxu0 0
      %1763 = vmatprep.subr.bf16.mxu0 0
      %1764 = vmatpush1.bf16.msra.mxu0 0
      %1765 = vmatprep.subr.bf16.mxu0 0
      %1766 = vmatpush1.bf16.msra.mxu0 0
      %1767 = vmatprep.subr.bf16.mxu0 0
      %1768 = vmatpush1.bf16.msra.mxu0 0
      %1769 = vmatprep.subr.bf16.mxu0 0
      %1770 = vmatpush1.bf16.msra.mxu0 0
      %1771 = vmatprep.subr.bf16.mxu0 0
      %1772 = vmatpush1.bf16.msra.mxu0 0
      %1773 = vmatprep.subr.bf16.mxu0 0
      %1774 = vmatpush1.bf16.msra.mxu0 0
      %1775 = vmatprep.subr.bf16.mxu0 0
      %1776 = vmatpush1.bf16.msra.mxu0 0
      %1777 = vmatprep.subr.bf16.mxu0 0
      %1778 = vmatpush1.bf16.msra.mxu0 0
      %1779 = vmatprep.subr.bf16.mxu0 0
      %1780 = vmatpush1.bf16.msra.mxu0 0
      %1781 = vmatprep.subr.bf16.mxu0 0
      %1782 = vmatpush1.bf16.msra.mxu0 0
      %1783 = vmatprep.subr.bf16.mxu0 0
      %1784 = vmatpush1.bf16.msra.mxu0 0
      %1785 = vmatprep.subr.bf16.mxu0 0
      %1786 = vmatpush1.bf16.msra.mxu0 0
      %1787 = vmatprep.subr.bf16.mxu0 0
      %1788 = vmatpush1.bf16.msra.mxu0 0
      %1789 = vmatprep.mubr.bf16.mxu0 0
      %1790 = vmatmul.mubr.bf16.gmra.mrb[0].mxu0 %v1752
      %v1791 = vpop.f32.mrb[0].mxu0
      %v1792 = vadd.f32 0.0, %v1791
      %v1793 = vpop.f32.mrb[0].mxu0
      %v1794 = vpop.f32.mrb[0].mxu0
      %v1795 = vadd.f32 0.0, %v1794
      %v1796 = vpop.f32.mrb[0].mxu0
      %1797 = vdwg.mxu0
      %v1798 = vpack.c.bf16 %v1795, %v1792
      %v1800 = vsel %vm1147, %v1798, 0
      %v1803 = vsel %vm1279, %v1275, 0
      %1805 = vmatprep.subr.bf16.mxu0 0
      %1806 = vmatpush1.bf16.msra.mxu0 %v1803
      %1807 = vmatprep.subr.bf16.mxu0 0
      %1808 = vmatpush1.bf16.msra.mxu0 0
      %1809 = vmatprep.subr.bf16.mxu0 0
      %1810 = vmatpush1.bf16.msra.mxu0 0
      %1811 = vmatprep.subr.bf16.mxu0 0
      %1812 = vmatpush1.bf16.msra.mxu0 0
      %1813 = vmatprep.subr.bf16.mxu0 0
      %1814 = vmatpush1.bf16.msra.mxu0 0
      %1815 = vmatprep.subr.bf16.mxu0 0
      %1816 = vmatpush1.bf16.msra.mxu0 0
      %1817 = vmatprep.subr.bf16.mxu0 0
      %1818 = vmatpush1.bf16.msra.mxu0 0
      %1819 = vmatprep.subr.bf16.mxu0 0
      %1820 = vmatpush1.bf16.msra.mxu0 0
      %1821 = vmatprep.subr.bf16.mxu0 0
      %1822 = vmatpush1.bf16.msra.mxu0 0
      %1823 = vmatprep.subr.bf16.mxu0 0
      %1824 = vmatpush1.bf16.msra.mxu0 0
      %1825 = vmatprep.subr.bf16.mxu0 0
      %1826 = vmatpush1.bf16.msra.mxu0 0
      %1827 = vmatprep.subr.bf16.mxu0 0
      %1828 = vmatpush1.bf16.msra.mxu0 0
      %1829 = vmatprep.subr.bf16.mxu0 0
      %1830 = vmatpush1.bf16.msra.mxu0 0
      %1831 = vmatprep.subr.bf16.mxu0 0
      %1832 = vmatpush1.bf16.msra.mxu0 0
      %1833 = vmatprep.subr.bf16.mxu0 0
      %1834 = vmatpush1.bf16.msra.mxu0 0
      %1835 = vmatprep.subr.bf16.mxu0 0
      %1836 = vmatpush1.bf16.msra.mxu0 0
      %1837 = vmatprep.mubr.bf16.mxu0 0
      %1838 = vmatmul.mubr.bf16.gmra.mrb[0].mxu0 %v1800
      %v1839 = vpop.f32.mrb[0].mxu0
      %v1840 = vadd.f32 0.0, %v1839
      %v1841 = vpop.f32.mrb[0].mxu0
      %v1842 = vpop.f32.mrb[0].mxu0
      %v1843 = vadd.f32 0.0, %v1842
      %v1844 = vpop.f32.mrb[0].mxu0
      %1845 = vdwg.mxu0
      %v1846 = vadd.f32 %v1673, %v1840
      %v1847 = vadd.f32 %v1674, %v1843
      %v1848 = vld [vmem:[%s859] sm:$0x1]
      %v1850 = vlaneseq
      %v1851 = vshrl.u32 %v1850, 7
      %v1852 = vsub.s32 0, %v1851
      %v1853 = vrot.slane %v1848, %v1852
      %v1855 = vadd.f32 %v1846, %v1853
      %v1856 = vadd.f32 %v1847, %v1853
      %v1857 = vld [vmem:[%s862] sm:$0x1]
      %v1858 = vld [vmem:[%s865] sm:$0x1]
      %v1859 = vsel %vm901, %v1855, 0.0
      %1860 = vadd.xlane.f32.xlu0 %v1859
      %v1861 = vpop.xlane.xlu0 %1860
      %v1862 = vsel %vm905, %v1856, 0.0
      %1863 = vadd.xlane.f32.xlu0 %v1862
      %v1864 = vpop.xlane.xlu0 %1863
      %v1865 = vmul.f32 %v1861, %v909
      %v1866 = vmul.f32 %v1864, %v909
      %v1867 = vsub.f32 %v1855, %v1865
      %v1868 = vsub.f32 %v1856, %v1866
      %v1869 = vmul.f32 %v1867, %v1867
      %v1870 = vmul.f32 %v1868, %v1868
      %v1871 = vsel %vm901, %v1869, 0.0
      %1872 = vadd.xlane.f32.xlu0 %v1871
      %v1873 = vpop.xlane.xlu0 %1872
      %v1874 = vsel %vm905, %v1870, 0.0
      %1875 = vadd.xlane.f32.xlu0 %v1874
      %v1876 = vpop.xlane.xlu0 %1875
      %v1877 = vmul.f32 %v1873, %v909
      %v1878 = vmul.f32 %v1876, %v909
      %v1879 = vadd.f32 %v1877, 1e-05
      %v1880 = vadd.f32 %v1878, 1e-05
      %v1881 = vrsqrt.pop %v1879
      %v1882 = vrsqrt.pop %v1880
      %v1883 = vmul.f32 %v1867, %v1881
      %v1884 = vmul.f32 %v1868, %v1882
      %v1886 = vlaneseq
      %v1887 = vshrl.u32 %v1886, 7
      %v1888 = vsub.s32 0, %v1887
      %v1889 = vrot.slane %v1857, %v1888
      %v1891 = vmul.f32 %v1883, %v1889
      %v1892 = vmul.f32 %v1884, %v1889
      %v1894 = vlaneseq
      %v1895 = vshrl.u32 %v1894, 7
      %v1896 = vsub.s32 0, %v1895
      %v1897 = vrot.slane %v1858, %v1896
      %v1899 = vadd.f32 %v1891, %v1897
      %v1900 = vadd.f32 %v1892, %v1897
      %v1901 = vpack.c.bf16 %v1900, %v1899
      %v1902 = vld [vmem:[%s870] sm:$0xf]
      %v1903 = vld [vmem:[%s870 + $0x4] sm:$0xf]
      %v1904 = vld [vmem:[%s870 + $0x8] sm:$0xf]
      %v1905 = vld [vmem:[%s870 + $0xc] sm:$0xf]
      %v1906 = vld [vmem:[%s873] sm:$0x1]
      %v1908 = vlaneseq
      %v1909 = vshrl.u32 %v1908, 7
      %v1910 = vsub.s32 0, %v1909
      %v1911 = vrot.slane %v1906, %v1910
      %v1917 = vunpack.c.l.b16 %v1902
      %v1918 = vunpack.c.l.b16 %v1903
      %v1919 = vunpack.c.l.b16 %v1904
      %v1920 = vunpack.c.l.b16 %v1905
      %v1921 = vpack.c.b16 %v1918, %v1917
      %v1922 = vpack.c.b16 %v1920, %v1919
      %v1926 = vsel %vm901, %v1901, 0
      %1928 = vmatprep.subr.bf16.mxu0 0
      %1929 = vmatpush1.bf16.msra.mxu0 %v1921
      %1930 = vmatprep.subr.bf16.mxu0 0
      %1931 = vmatpush1.bf16.msra.mxu0 %v1922
      %1932 = vmatprep.subr.bf16.mxu0 0
      %1933 = vmatpush1.bf16.msra.mxu0 0
      %1934 = vmatprep.subr.bf16.mxu0 0
      %1935 = vmatpush1.bf16.msra.mxu0 0
      %1936 = vmatprep.subr.bf16.mxu0 0
      %1937 = vmatpush1.bf16.msra.mxu0 0
      %1938 = vmatprep.subr.bf16.mxu0 0
      %1939 = vmatpush1.bf16.msra.mxu0 0
      %1940 = vmatprep.subr.bf16.mxu0 0
      %1941 = vmatpush1.bf16.msra.mxu0 0
      %1942 = vmatprep.subr.bf16.mxu0 0
      %1943 = vmatpush1.bf16.msra.mxu0 0
      %1944 = vmatprep.subr.bf16.mxu0 0
      %1945 = vmatpush1.bf16.msra.mxu0 0
      %1946 = vmatprep.subr.bf16.mxu0 0
      %1947 = vmatpush1.bf16.msra.mxu0 0
      %1948 = vmatprep.subr.bf16.mxu0 0
      %1949 = vmatpush1.bf16.msra.mxu0 0
      %1950 = vmatprep.subr.bf16.mxu0 0
      %1951 = vmatpush1.bf16.msra.mxu0 0
      %1952 = vmatprep.subr.bf16.mxu0 0
      %1953 = vmatpush1.bf16.msra.mxu0 0
      %1954 = vmatprep.subr.bf16.mxu0 0
      %1955 = vmatpush1.bf16.msra.mxu0 0
      %1956 = vmatprep.subr.bf16.mxu0 0
      %1957 = vmatpush1.bf16.msra.mxu0 0
      %1958 = vmatprep.subr.bf16.mxu0 0
      %1959 = vmatpush1.bf16.msra.mxu0 0
      %1960 = vmatprep.mubr.bf16.mxu0 0
      %1961 = vmatmul.mubr.bf16.gmra.mrb[0].mxu0 %v1926
      %v1962 = vpop.f32.mrb[0].mxu0
      %v1963 = vadd.f32 %v1911, %v1962
      %v1964 = vpop.f32.mrb[0].mxu0
      %v1965 = vpop.f32.mrb[0].mxu0
      %v1966 = vadd.f32 %v1911, %v1965
      %v1967 = vpop.f32.mrb[0].mxu0
      %1968 = vdwg.mxu0
      %v1969 = vmul.f32 %v1963, %v1963
      %v1970 = vmul.f32 %v1966, %v1966
      %v1971 = vmul.f32 %v1963, %v1969
      %v1972 = vmul.f32 %v1966, %v1970
      %v1973 = vmul.f32 %v1971, 0.044715
      %v1974 = vmul.f32 %v1972, 0.044715
      %v1975 = vadd.f32 %v1963, %v1973
      %v1976 = vadd.f32 %v1966, %v1974
      %v1977 = vmul.f32 %v1975, 0.7978846
      %v1978 = vmul.f32 %v1976, 0.7978846
      %v1979 = vtanh.pop %v1977
      %v1980 = vtanh.pop %v1978
      %v1981 = vadd.f32 %v1979, 1.0
      %v1982 = vadd.f32 %v1980, 1.0
      %v1983 = vmul.f32 %v1981, 0.5
      %v1984 = vmul.f32 %v1982, 0.5
      %v1985 = vmul.f32 %v1963, %v1983
      %v1986 = vmul.f32 %v1966, %v1984
      %v1987 = vpack.c.bf16 %v1986, %v1985
      %v1988 = vld [vmem:[%s878] sm:$0xf]
      %v1989 = vld [vmem:[%s878 + $0x4] sm:$0xf]
      %v1990 = vld [vmem:[%s878 + $0x8] sm:$0xf]
      %v1991 = vld [vmem:[%s878 + $0xc] sm:$0xf]
      %v1992 = vld [vmem:[%s878 + $0x10] sm:$0xf]
      %v1993 = vld [vmem:[%s878 + $0x14] sm:$0xf]
      %v1994 = vld [vmem:[%s878 + $0x18] sm:$0xf]
      %v1995 = vld [vmem:[%s878 + $0x1c] sm:$0xf]
      %v1996 = vld [vmem:[%s878 + $0x20] sm:$0xf]
      %v1997 = vld [vmem:[%s878 + $0x24] sm:$0xf]
      %v1998 = vld [vmem:[%s878 + $0x28] sm:$0xf]
      %v1999 = vld [vmem:[%s878 + $0x2c] sm:$0xf]
      %v2000 = vld [vmem:[%s878 + $0x30] sm:$0xf]
      %v2001 = vld [vmem:[%s878 + $0x34] sm:$0xf]
      %v2002 = vld [vmem:[%s878 + $0x38] sm:$0xf]
      %v2003 = vld [vmem:[%s878 + $0x3c] sm:$0xf]
      %v2020 = vunpack.c.l.b16 %v1988
      %v2021 = vunpack.c.l.b16 %v1989
      %v2022 = vunpack.c.l.b16 %v1990
      %v2023 = vunpack.c.l.b16 %v1991
      %v2024 = vunpack.c.l.b16 %v1992
      %v2025 = vunpack.c.l.b16 %v1993
      %v2026 = vunpack.c.l.b16 %v1994
      %v2027 = vunpack.c.l.b16 %v1995
      %v2028 = vunpack.c.l.b16 %v1996
      %v2029 = vunpack.c.l.b16 %v1997
      %v2030 = vunpack.c.l.b16 %v1998
      %v2031 = vunpack.c.l.b16 %v1999
      %v2032 = vunpack.c.l.b16 %v2000
      %v2033 = vunpack.c.l.b16 %v2001
      %v2034 = vunpack.c.l.b16 %v2002
      %v2035 = vunpack.c.l.b16 %v2003
      %v2036 = vpack.c.b16 %v2021, %v2020
      %v2037 = vpack.c.b16 %v2023, %v2022
      %v2038 = vpack.c.b16 %v2025, %v2024
      %v2039 = vpack.c.b16 %v2027, %v2026
      %v2040 = vpack.c.b16 %v2029, %v2028
      %v2041 = vpack.c.b16 %v2031, %v2030
      %v2042 = vpack.c.b16 %v2033, %v2032
      %v2043 = vpack.c.b16 %v2035, %v2034
      %2052 = vmatprep.subr.bf16.mxu0 0
      %2053 = vmatpush1.bf16.msra.mxu0 %v2036
      %2054 = vmatprep.subr.bf16.mxu0 0
      %2055 = vmatpush1.bf16.msra.mxu0 %v2037
      %2056 = vmatprep.subr.bf16.mxu0 0
      %2057 = vmatpush1.bf16.msra.mxu0 %v2038
      %2058 = vmatprep.subr.bf16.mxu0 0
      %2059 = vmatpush1.bf16.msra.mxu0 %v2039
      %2060 = vmatprep.subr.bf16.mxu0 0
      %2061 = vmatpush1.bf16.msra.mxu0 %v2040
      %2062 = vmatprep.subr.bf16.mxu0 0
      %2063 = vmatpush1.bf16.msra.mxu0 %v2041
      %2064 = vmatprep.subr.bf16.mxu0 0
      %2065 = vmatpush1.bf16.msra.mxu0 %v2042
      %2066 = vmatprep.subr.bf16.mxu0 0
      %2067 = vmatpush1.bf16.msra.mxu0 %v2043
      %2068 = vmatprep.subr.bf16.mxu0 0
      %2069 = vmatpush1.bf16.msra.mxu0 0
      %2070 = vmatprep.subr.bf16.mxu0 0
      %2071 = vmatpush1.bf16.msra.mxu0 0
      %2072 = vmatprep.subr.bf16.mxu0 0
      %2073 = vmatpush1.bf16.msra.mxu0 0
      %2074 = vmatprep.subr.bf16.mxu0 0
      %2075 = vmatpush1.bf16.msra.mxu0 0
      %2076 = vmatprep.subr.bf16.mxu0 0
      %2077 = vmatpush1.bf16.msra.mxu0 0
      %2078 = vmatprep.subr.bf16.mxu0 0
      %2079 = vmatpush1.bf16.msra.mxu0 0
      %2080 = vmatprep.subr.bf16.mxu0 0
      %2081 = vmatpush1.bf16.msra.mxu0 0
      %2082 = vmatprep.subr.bf16.mxu0 0
      %2083 = vmatpush1.bf16.msra.mxu0 0
      %2084 = vmatprep.mubr.bf16.mxu0 0
      %2085 = vmatmul.mubr.bf16.gmra.mrb[0].mxu0 %v1987
      %v2086 = vpop.f32.mrb[0].mxu0
      %v2087 = vadd.f32 0.0, %v2086
      %v2088 = vpop.f32.mrb[0].mxu0
      %v2089 = vpop.f32.mrb[0].mxu0
      %v2090 = vadd.f32 0.0, %v2089
      %v2091 = vpop.f32.mrb[0].mxu0
      %2092 = vdwg.mxu0
      %v2093 = vadd.f32 %v1855, %v2087
      %v2094 = vadd.f32 %v1856, %v2090
      %v2095 = vld [vmem:[%s881] sm:$0x1]
      %v2097 = vlaneseq
      %v2098 = vshrl.u32 %v2097, 7
      %v2099 = vsub.s32 0, %v2098
      %v2100 = vrot.slane %v2095, %v2099
      %v2102 = vadd.f32 %v2093, %v2100
      %v2103 = vadd.f32 %v2094, %v2100
      %2104 = vst.msk [vmem:[#allocation2] sm:$0xff] %vm901, %v2102
      %2105 = vst.msk [vmem:[#allocation2 + $0x8] sm:$0x1f] %vm905, %v2103
      %s2106 = scalar_lea.vmem [#allocation2], 16
      %v2107 = vld [vmem:[%s2106] sm:$0xff]
      %v2108 = vld [vmem:[%s2106 + $0x8] sm:$0x1f]
      %v2109 = vld [vmem:[%s824] sm:$0x1]
      %v2110 = vld [vmem:[%s827] sm:$0x1]
      %v2111 = vsel %vm901, %v2107, 0.0
      %2112 = vadd.xlane.f32.xlu0 %v2111
      %v2113 = vpop.xlane.xlu0 %2112
      %v2114 = vsel %vm905, %v2108, 0.0
      %2115 = vadd.xlane.f32.xlu0 %v2114
      %v2116 = vpop.xlane.xlu0 %2115
      %v2117 = vmul.f32 %v2113, %v909
      %v2118 = vmul.f32 %v2116, %v909
      %v2119 = vsub.f32 %v2107, %v2117
      %v2120 = vsub.f32 %v2108, %v2118
      %v2121 = vmul.f32 %v2119, %v2119
      %v2122 = vmul.f32 %v2120, %v2120
      %v2123 = vsel %vm901, %v2121, 0.0
      %2124 = vadd.xlane.f32.xlu0 %v2123
      %v2125 = vpop.xlane.xlu0 %2124
      %v2126 = vsel %vm905, %v2122, 0.0
      %2127 = vadd.xlane.f32.xlu0 %v2126
      %v2128 = vpop.xlane.xlu0 %2127
      %v2129 = vmul.f32 %v2125, %v909
      %v2130 = vmul.f32 %v2128, %v909
      %v2131 = vadd.f32 %v2129, 1e-05
      %v2132 = vadd.f32 %v2130, 1e-05
      %v2133 = vrsqrt.pop %v2131
      %v2134 = vrsqrt.pop %v2132
      %v2135 = vmul.f32 %v2119, %v2133
      %v2136 = vmul.f32 %v2120, %v2134
      %v2138 = vlaneseq
      %v2139 = vshrl.u32 %v2138, 7
      %v2140 = vsub.s32 0, %v2139
      %v2141 = vrot.slane %v2109, %v2140
      %v2143 = vmul.f32 %v2135, %v2141
      %v2144 = vmul.f32 %v2136, %v2141
      %v2146 = vlaneseq
      %v2147 = vshrl.u32 %v2146, 7
      %v2148 = vsub.s32 0, %v2147
      %v2149 = vrot.slane %v2110, %v2148
      %v2151 = vadd.f32 %v2143, %v2149
      %v2152 = vadd.f32 %v2144, %v2149
      %v2153 = vpack.c.bf16 %v2152, %v2151
      %v2154 = vld [vmem:[%s832] sm:$0xf]
      %v2155 = vld [vmem:[%s832 + $0x4] sm:$0xf]
      %v2156 = vld [vmem:[%s832 + $0x8] sm:$0xf]
      %v2157 = vld [vmem:[%s832 + $0xc] sm:$0xf]
      %v2158 = vld [vmem:[%s835] sm:$0x1]
      %v2160 = vlaneseq
      %v2161 = vshrl.u32 %v2160, 7
      %v2162 = vsub.s32 0, %v2161
      %v2163 = vrot.slane %v2158, %v2162
      %v2169 = vunpack.c.l.b16 %v2154
      %v2170 = vunpack.c.l.b16 %v2155
      %v2171 = vunpack.c.l.b16 %v2156
      %v2172 = vunpack.c.l.b16 %v2157
      %v2173 = vpack.c.b16 %v2170, %v2169
      %v2174 = vpack.c.b16 %v2172, %v2171
      %v2178 = vsel %vm901, %v2153, 0
      %2180 = vmatprep.subr.bf16.mxu0 0
      %2181 = vmatpush1.bf16.msra.mxu0 %v2173
      %2182 = vmatprep.subr.bf16.mxu0 0
      %2183 = vmatpush1.bf16.msra.mxu0 %v2174
      %2184 = vmatprep.subr.bf16.mxu0 0
      %2185 = vmatpush1.bf16.msra.mxu0 0
      %2186 = vmatprep.subr.bf16.mxu0 0
      %2187 = vmatpush1.bf16.msra.mxu0 0
      %2188 = vmatprep.subr.bf16.mxu0 0
      %2189 = vmatpush1.bf16.msra.mxu0 0
      %2190 = vmatprep.subr.bf16.mxu0 0
      %2191 = vmatpush1.bf16.msra.mxu0 0
      %2192 = vmatprep.subr.bf16.mxu0 0
      %2193 = vmatpush1.bf16.msra.mxu0 0
      %2194 = vmatprep.subr.bf16.mxu0 0
      %2195 = vmatpush1.bf16.msra.mxu0 0
      %2196 = vmatprep.subr.bf16.mxu0 0
      %2197 = vmatpush1.bf16.msra.mxu0 0
      %2198 = vmatprep.subr.bf16.mxu0 0
      %2199 = vmatpush1.bf16.msra.mxu0 0
      %2200 = vmatprep.subr.bf16.mxu0 0
      %2201 = vmatpush1.bf16.msra.mxu0 0
      %2202 = vmatprep.subr.bf16.mxu0 0
      %2203 = vmatpush1.bf16.msra.mxu0 0
      %2204 = vmatprep.subr.bf16.mxu0 0
      %2205 = vmatpush1.bf16.msra.mxu0 0
      %2206 = vmatprep.subr.bf16.mxu0 0
      %2207 = vmatpush1.bf16.msra.mxu0 0
      %2208 = vmatprep.subr.bf16.mxu0 0
      %2209 = vmatpush1.bf16.msra.mxu0 0
      %2210 = vmatprep.subr.bf16.mxu0 0
      %2211 = vmatpush1.bf16.msra.mxu0 0
      %2212 = vmatprep.mubr.bf16.mxu0 0
      %2213 = vmatmul.mubr.bf16.gmra.mrb[0].mxu0 %v2178
      %v2214 = vpop.f32.mrb[0].mxu0
      %v2215 = vadd.f32 %v2163, %v2214
      %v2216 = vpop.f32.mrb[0].mxu0
      %v2217 = vpop.f32.mrb[0].mxu0
      %v2218 = vadd.f32 %v2163, %v2217
      %v2219 = vpop.f32.mrb[0].mxu0
      %2220 = vdwg.mxu0
      %v2221 = vld [vmem:[%s840] sm:$0xf]
      %v2222 = vld [vmem:[%s840 + $0x4] sm:$0xf]
      %v2223 = vld [vmem:[%s840 + $0x8] sm:$0xf]
      %v2224 = vld [vmem:[%s840 + $0xc] sm:$0xf]
      %v2225 = vld [vmem:[%s843] sm:$0x1]
      %v2227 = vlaneseq
      %v2228 = vshrl.u32 %v2227, 7
      %v2229 = vsub.s32 0, %v2228
      %v2230 = vrot.slane %v2225, %v2229
      %v2236 = vunpack.c.l.b16 %v2221
      %v2237 = vunpack.c.l.b16 %v2222
      %v2238 = vunpack.c.l.b16 %v2223
      %v2239 = vunpack.c.l.b16 %v2224
      %v2240 = vpack.c.b16 %v2237, %v2236
      %v2241 = vpack.c.b16 %v2239, %v2238
      %2244 = vmatprep.subr.bf16.mxu0 0
      %2245 = vmatpush1.bf16.msra.mxu0 %v2240
      %2246 = vmatprep.subr.bf16.mxu0 0
      %2247 = vmatpush1.bf16.msra.mxu0 %v2241
      %2248 = vmatprep.subr.bf16.mxu0 0
      %2249 = vmatpush1.bf16.msra.mxu0 0
      %2250 = vmatprep.subr.bf16.mxu0 0
      %2251 = vmatpush1.bf16.msra.mxu0 0
      %2252 = vmatprep.subr.bf16.mxu0 0
      %2253 = vmatpush1.bf16.msra.mxu0 0
      %2254 = vmatprep.subr.bf16.mxu0 0
      %2255 = vmatpush1.bf16.msra.mxu0 0
      %2256 = vmatprep.subr.bf16.mxu0 0
      %2257 = vmatpush1.bf16.msra.mxu0 0
      %2258 = vmatprep.subr.bf16.mxu0 0
      %2259 = vmatpush1.bf16.msra.mxu0 0
      %2260 = vmatprep.subr.bf16.mxu0 0
      %2261 = vmatpush1.bf16.msra.mxu0 0
      %2262 = vmatprep.subr.bf16.mxu0 0
      %2263 = vmatpush1.bf16.msra.mxu0 0
      %2264 = vmatprep.subr.bf16.mxu0 0
      %2265 = vmatpush1.bf16.msra.mxu0 0
      %2266 = vmatprep.subr.bf16.mxu0 0
      %2267 = vmatpush1.bf16.msra.mxu0 0
      %2268 = vmatprep.subr.bf16.mxu0 0
      %2269 = vmatpush1.bf16.msra.mxu0 0
      %2270 = vmatprep.subr.bf16.mxu0 0
      %2271 = vmatpush1.bf16.msra.mxu0 0
      %2272 = vmatprep.subr.bf16.mxu0 0
      %2273 = vmatpush1.bf16.msra.mxu0 0
      %2274 = vmatprep.subr.bf16.mxu0 0
      %2275 = vmatpush1.bf16.msra.mxu0 0
      %2276 = vmatprep.mubr.bf16.mxu0 0
      %2277 = vmatmul.mubr.bf16.gmra.mrb[0].mxu0 %v2178
      %v2278 = vpop.f32.mrb[0].mxu0
      %v2279 = vadd.f32 %v2230, %v2278
      %v2280 = vpop.f32.mrb[0].mxu0
      %v2281 = vpop.f32.mrb[0].mxu0
      %v2282 = vadd.f32 %v2230, %v2281
      %v2283 = vpop.f32.mrb[0].mxu0
      %2284 = vdwg.mxu0
      %v2285 = vld [vmem:[%s848] sm:$0xf]
      %v2286 = vld [vmem:[%s848 + $0x4] sm:$0xf]
      %v2287 = vld [vmem:[%s848 + $0x8] sm:$0xf]
      %v2288 = vld [vmem:[%s848 + $0xc] sm:$0xf]
      %v2289 = vld [vmem:[%s851] sm:$0x1]
      %v2291 = vlaneseq
      %v2292 = vshrl.u32 %v2291, 7
      %v2293 = vsub.s32 0, %v2292
      %v2294 = vrot.slane %v2289, %v2293
      %v2300 = vunpack.c.l.b16 %v2285
      %v2301 = vunpack.c.l.b16 %v2286
      %v2302 = vunpack.c.l.b16 %v2287
      %v2303 = vunpack.c.l.b16 %v2288
      %v2304 = vpack.c.b16 %v2301, %v2300
      %v2305 = vpack.c.b16 %v2303, %v2302
      %2308 = vmatprep.subr.bf16.mxu0 0
      %2309 = vmatpush1.bf16.msra.mxu0 %v2304
      %2310 = vmatprep.subr.bf16.mxu0 0
      %2311 = vmatpush1.bf16.msra.mxu0 %v2305
      %2312 = vmatprep.subr.bf16.mxu0 0
      %2313 = vmatpush1.bf16.msra.mxu0 0
      %2314 = vmatprep.subr.bf16.mxu0 0
      %2315 = vmatpush1.bf16.msra.mxu0 0
      %2316 = vmatprep.subr.bf16.mxu0 0
      %2317 = vmatpush1.bf16.msra.mxu0 0
      %2318 = vmatprep.subr.bf16.mxu0 0
      %2319 = vmatpush1.bf16.msra.mxu0 0
      %2320 = vmatprep.subr.bf16.mxu0 0
      %2321 = vmatpush1.bf16.msra.mxu0 0
      %2322 = vmatprep.subr.bf16.mxu0 0
      %2323 = vmatpush1.bf16.msra.mxu0 0
      %2324 = vmatprep.subr.bf16.mxu0 0
      %2325 = vmatpush1.bf16.msra.mxu0 0
      %2326 = vmatprep.subr.bf16.mxu0 0
      %2327 = vmatpush1.bf16.msra.mxu0 0
      %2328 = vmatprep.subr.bf16.mxu0 0
      %2329 = vmatpush1.bf16.msra.mxu0 0
      %2330 = vmatprep.subr.bf16.mxu0 0
      %2331 = vmatpush1.bf16.msra.mxu0 0
      %2332 = vmatprep.subr.bf16.mxu0 0
      %2333 = vmatpush1.bf16.msra.mxu0 0
      %2334 = vmatprep.subr.bf16.mxu0 0
      %2335 = vmatpush1.bf16.msra.mxu0 0
      %2336 = vmatprep.subr.bf16.mxu0 0
      %2337 = vmatpush1.bf16.msra.mxu0 0
      %2338 = vmatprep.subr.bf16.mxu0 0
      %2339 = vmatpush1.bf16.msra.mxu0 0
      %2340 = vmatprep.mubr.bf16.mxu0 0
      %2341 = vmatmul.mubr.bf16.gmra.mrb[0].mxu0 %v2178
      %v2342 = vpop.f32.mrb[0].mxu0
      %v2343 = vadd.f32 %v2294, %v2342
      %v2344 = vpop.f32.mrb[0].mxu0
      %v2345 = vpop.f32.mrb[0].mxu0
      %v2346 = vadd.f32 %v2294, %v2345
      %v2347 = vpop.f32.mrb[0].mxu0
      %2348 = vdwg.mxu0
      %v2349 = vmul.f32 %v2215, 0.35355338
      %v2350 = vmul.f32 %v2218, 0.35355338
      %v2351 = vpack.c.bf16 %v2350, %v2349
      %v2352 = vpack.c.bf16 %v2282, %v2279
      %v2353 = vpack.c.bf16 %v2346, %v2343
      %v2355 = vsel %vm1147, %v2351, 0
      %v2358 = vsel %vm1147, %v2352, 0
      %2360 = vmatprep.subr.bf16.mxu0 0
      %2361 = vmatpush1.bf16.xpose.msra.mxu0 %v2358
      %2362 = vmatprep.subr.bf16.mxu0 0
      %2363 = vmatpush1.bf16.xpose.msra.mxu0 0
      %2364 = vmatprep.subr.bf16.mxu0 0
      %2365 = vmatpush1.bf16.xpose.msra.mxu0 0
      %2366 = vmatprep.subr.bf16.mxu0 0
      %2367 = vmatpush1.bf16.xpose.msra.mxu0 0
      %2368 = vmatprep.subr.bf16.mxu0 0
      %2369 = vmatpush1.bf16.xpose.msra.mxu0 0
      %2370 = vmatprep.subr.bf16.mxu0 0
      %2371 = vmatpush1.bf16.xpose.msra.mxu0 0
      %2372 = vmatprep.subr.bf16.mxu0 0
      %2373 = vmatpush1.bf16.xpose.msra.mxu0 0
      %2374 = vmatprep.subr.bf16.mxu0 0
      %2375 = vmatpush1.bf16.xpose.msra.mxu0 0
      %2376 = vmatprep.subr.bf16.mxu0 0
      %2377 = vmatpush1.bf16.xpose.msra.mxu0 0
      %2378 = vmatprep.subr.bf16.mxu0 0
      %2379 = vmatpush1.bf16.xpose.msra.mxu0 0
      %2380 = vmatprep.subr.bf16.mxu0 0
      %2381 = vmatpush1.bf16.xpose.msra.mxu0 0
      %2382 = vmatprep.subr.bf16.mxu0 0
      %2383 = vmatpush1.bf16.xpose.msra.mxu0 0
      %2384 = vmatprep.subr.bf16.mxu0 0
      %2385 = vmatpush1.bf16.xpose.msra.mxu0 0
      %2386 = vmatprep.subr.bf16.mxu0 0
      %2387 = vmatpush1.bf16.xpose.msra.mxu0 0
      %2388 = vmatprep.subr.bf16.mxu0 0
      %2389 = vmatpush1.bf16.xpose.msra.mxu0 0
      %2390 = vmatprep.subr.bf16.mxu0 0
      %2391 = vmatpush1.bf16.xpose.msra.mxu0 0
      %2392 = vmatprep.mubr.bf16.mxu0 0
      %2393 = vmatmul.mubr.bf16.gmra.mrb[0].mxu0 %v2355
      %v2394 = vpop.f32.mrb[0].mxu0
      %v2395 = vadd.f32 0.0, %v2394
      %v2396 = vpop.f32.mrb[0].mxu0
      %v2397 = vpop.f32.mrb[0].mxu0
      %v2398 = vadd.f32 0.0, %v2397
      %v2399 = vpop.f32.mrb[0].mxu0
      %2400 = vdwg.mxu0
      %v2401 = vsel %vm1195, %v2395, -inf
      %2402 = vmax.xlane.f32.xlu0 %v2401
      %v2403 = vpop.xlane.xlu0 %2402
      %v2404 = vsel %vm1199, %v2398, -inf
      %2405 = vmax.xlane.f32.xlu0 %v2404
      %v2406 = vpop.xlane.xlu0 %2405
      %v2407 = vsub.f32 %v2395, %v2403
      %v2408 = vsub.f32 %v2398, %v2406
      %v2409 = vmul.f32 %v2407, 1.442695
      %v2410 = vpow.pop %v2409
      %v2411 = vmul.f32 %v2408, 1.442695
      %v2412 = vpow.pop %v2411
      %v2413 = vsel %vm1195, %v2410, 0.0
      %2414 = vadd.xlane.f32.xlu0 %v2413
      %v2415 = vpop.xlane.xlu0 %2414
      %v2416 = vsel %vm1199, %v2412, 0.0
      %2417 = vadd.xlane.f32.xlu0 %v2416
      %v2418 = vpop.xlane.xlu0 %2417
      %v2419 = vrcp.pop %v2415
      %v2420 = vmul.f32 %v2410, %v2419
      %v2421 = vrcp.pop %v2418
      %v2422 = vmul.f32 %v2412, %v2421
      %v2423 = vpack.c.bf16 %v2422, %v2420
      %v2425 = vsel %vm1195, %v2423, 0
      %v2428 = vand.u32 %v2353, %v1226
      %2430 = vmatprep.subr.bf16.mxu0 0
      %2431 = vmatpush1.bf16.msra.mxu0 %v2428
      %2432 = vmatprep.subr.bf16.mxu0 0
      %2433 = vmatpush1.bf16.msra.mxu0 0
      %2434 = vmatprep.subr.bf16.mxu0 0
      %2435 = vmatpush1.bf16.msra.mxu0 0
      %2436 = vmatprep.subr.bf16.mxu0 0
      %2437 = vmatpush1.bf16.msra.mxu0 0
      %2438 = vmatprep.subr.bf16.mxu0 0
      %2439 = vmatpush1.bf16.msra.mxu0 0
      %2440 = vmatprep.subr.bf16.mxu0 0
      %2441 = vmatpush1.bf16.msra.mxu0 0
      %2442 = vmatprep.subr.bf16.mxu0 0
      %2443 = vmatpush1.bf16.msra.mxu0 0
      %2444 = vmatprep.subr.bf16.mxu0 0
      %2445 = vmatpush1.bf16.msra.mxu0 0
      %2446 = vmatprep.subr.bf16.mxu0 0
      %2447 = vmatpush1.bf16.msra.mxu0 0
      %2448 = vmatprep.subr.bf16.mxu0 0
      %2449 = vmatpush1.bf16.msra.mxu0 0
      %2450 = vmatprep.subr.bf16.mxu0 0
      %2451 = vmatpush1.bf16.msra.mxu0 0
      %2452 = vmatprep.subr.bf16.mxu0 0
      %2453 = vmatpush1.bf16.msra.mxu0 0
      %2454 = vmatprep.subr.bf16.mxu0 0
      %2455 = vmatpush1.bf16.msra.mxu0 0
      %2456 = vmatprep.subr.bf16.mxu0 0
      %2457 = vmatpush1.bf16.msra.mxu0 0
      %2458 = vmatprep.subr.bf16.mxu0 0
      %2459 = vmatpush1.bf16.msra.mxu0 0
      %2460 = vmatprep.subr.bf16.mxu0 0
      %2461 = vmatpush1.bf16.msra.mxu0 0
      %2462 = vmatprep.mubr.bf16.mxu0 0
      %2463 = vmatmul.mubr.bf16.gmra.mrb[0].mxu0 %v2425
      %v2464 = vpop.f32.mrb[0].mxu0
      %v2465 = vadd.f32 0.0, %v2464
      %v2466 = vpop.f32.mrb[0].mxu0
      %v2467 = vpop.f32.mrb[0].mxu0
      %v2468 = vadd.f32 0.0, %v2467
      %v2469 = vpop.f32.mrb[0].mxu0
      %2470 = vdwg.mxu0
      %v2471 = vpack.c.bf16 %v2468, %v2465
      %v2472 = vld [vmem:[%s856] sm:$0xf]
      %v2473 = vld [vmem:[%s856 + $0x4] sm:$0xf]
      %v2474 = vld [vmem:[%s856 + $0x8] sm:$0xf]
      %v2475 = vld [vmem:[%s856 + $0xc] sm:$0xf]
      %v2477 = vsel %vm1147, %v2471, 0
      %v2480 = vsel %vm1279, %v2472, 0
      %2482 = vmatprep.subr.bf16.mxu0 0
      %2483 = vmatpush1.bf16.msra.mxu0 %v2480
      %2484 = vmatprep.subr.bf16.mxu0 0
      %2485 = vmatpush1.bf16.msra.mxu0 0
      %2486 = vmatprep.subr.bf16.mxu0 0
      %2487 = vmatpush1.bf16.msra.mxu0 0
      %2488 = vmatprep.subr.bf16.mxu0 0
      %2489 = vmatpush1.bf16.msra.mxu0 0
      %2490 = vmatprep.subr.bf16.mxu0 0
      %2491 = vmatpush1.bf16.msra.mxu0 0
      %2492 = vmatprep.subr.bf16.mxu0 0
      %2493 = vmatpush1.bf16.msra.mxu0 0
      %2494 = vmatprep.subr.bf16.mxu0 0
      %2495 = vmatpush1.bf16.msra.mxu0 0
      %2496 = vmatprep.subr.bf16.mxu0 0
      %2497 = vmatpush1.bf16.msra.mxu0 0
      %2498 = vmatprep.subr.bf16.mxu0 0
      %2499 = vmatpush1.bf16.msra.mxu0 0
      %2500 = vmatprep.subr.bf16.mxu0 0
      %2501 = vmatpush1.bf16.msra.mxu0 0
      %2502 = vmatprep.subr.bf16.mxu0 0
      %2503 = vmatpush1.bf16.msra.mxu0 0
      %2504 = vmatprep.subr.bf16.mxu0 0
      %2505 = vmatpush1.bf16.msra.mxu0 0
      %2506 = vmatprep.subr.bf16.mxu0 0
      %2507 = vmatpush1.bf16.msra.mxu0 0
      %2508 = vmatprep.subr.bf16.mxu0 0
      %2509 = vmatpush1.bf16.msra.mxu0 0
      %2510 = vmatprep.subr.bf16.mxu0 0
      %2511 = vmatpush1.bf16.msra.mxu0 0
      %2512 = vmatprep.subr.bf16.mxu0 0
      %2513 = vmatpush1.bf16.msra.mxu0 0
      %2514 = vmatprep.mubr.bf16.mxu0 0
      %2515 = vmatmul.mubr.bf16.gmra.mrb[0].mxu0 %v2477
      %v2516 = vpop.f32.mrb[0].mxu0
      %v2517 = vadd.f32 0.0, %v2516
      %v2518 = vpop.f32.mrb[0].mxu0
      %v2519 = vpop.f32.mrb[0].mxu0
      %v2520 = vadd.f32 0.0, %v2519
      %v2521 = vpop.f32.mrb[0].mxu0
      %2522 = vdwg.mxu0
      %v2523 = vadd.f32 %v2107, %v2517
      %v2524 = vadd.f32 %v2108, %v2520
      %2526 = vrot.lane.b32.xlu0 %v2351, 120
      %v2527 = vpop.permute.xlu0 %2526
      %2529 = vrot.lane.b32.xlu0 %v2352, 120
      %v2530 = vpop.permute.xlu0 %2529
      %v2532 = vsel %vm1147, %v2527, 0
      %v2535 = vsel %vm1147, %v2530, 0
      %2537 = vmatprep.subr.bf16.mxu0 0
      %2538 = vmatpush1.bf16.xpose.msra.mxu0 %v2535
      %2539 = vmatprep.subr.bf16.mxu0 0
      %2540 = vmatpush1.bf16.xpose.msra.mxu0 0
      %2541 = vmatprep.subr.bf16.mxu0 0
      %2542 = vmatpush1.bf16.xpose.msra.mxu0 0
      %2543 = vmatprep.subr.bf16.mxu0 0
      %2544 = vmatpush1.bf16.xpose.msra.mxu0 0
      %2545 = vmatprep.subr.bf16.mxu0 0
      %2546 = vmatpush1.bf16.xpose.msra.mxu0 0
      %2547 = vmatprep.subr.bf16.mxu0 0
      %2548 = vmatpush1.bf16.xpose.msra.mxu0 0
      %2549 = vmatprep.subr.bf16.mxu0 0
      %2550 = vmatpush1.bf16.xpose.msra.mxu0 0
      %2551 = vmatprep.subr.bf16.mxu0 0
      %2552 = vmatpush1.bf16.xpose.msra.mxu0 0
      %2553 = vmatprep.subr.bf16.mxu0 0
      %2554 = vmatpush1.bf16.xpose.msra.mxu0 0
      %2555 = vmatprep.subr.bf16.mxu0 0
      %2556 = vmatpush1.bf16.xpose.msra.mxu0 0
      %2557 = vmatprep.subr.bf16.mxu0 0
      %2558 = vmatpush1.bf16.xpose.msra.mxu0 0
      %2559 = vmatprep.subr.bf16.mxu0 0
      %2560 = vmatpush1.bf16.xpose.msra.mxu0 0
      %2561 = vmatprep.subr.bf16.mxu0 0
      %2562 = vmatpush1.bf16.xpose.msra.mxu0 0
      %2563 = vmatprep.subr.bf16.mxu0 0
      %2564 = vmatpush1.bf16.xpose.msra.mxu0 0
      %2565 = vmatprep.subr.bf16.mxu0 0
      %2566 = vmatpush1.bf16.xpose.msra.mxu0 0
      %2567 = vmatprep.subr.bf16.mxu0 0
      %2568 = vmatpush1.bf16.xpose.msra.mxu0 0
      %2569 = vmatprep.mubr.bf16.mxu0 0
      %2570 = vmatmul.mubr.bf16.gmra.mrb[0].mxu0 %v2532
      %v2571 = vpop.f32.mrb[0].mxu0
      %v2572 = vadd.f32 0.0, %v2571
      %v2573 = vpop.f32.mrb[0].mxu0
      %v2574 = vpop.f32.mrb[0].mxu0
      %v2575 = vadd.f32 0.0, %v2574
      %v2576 = vpop.f32.mrb[0].mxu0
      %2577 = vdwg.mxu0
      %v2578 = vsel %vm1195, %v2572, -inf
      %2579 = vmax.xlane.f32.xlu0 %v2578
      %v2580 = vpop.xlane.xlu0 %2579
      %v2581 = vsel %vm1199, %v2575, -inf
      %2582 = vmax.xlane.f32.xlu0 %v2581
      %v2583 = vpop.xlane.xlu0 %2582
      %v2584 = vsub.f32 %v2572, %v2580
      %v2585 = vsub.f32 %v2575, %v2583
      %v2586 = vmul.f32 %v2584, 1.442695
      %v2587 = vpow.pop %v2586
      %v2588 = vmul.f32 %v2585, 1.442695
      %v2589 = vpow.pop %v2588
      %v2590 = vsel %vm1195, %v2587, 0.0
      %2591 = vadd.xlane.f32.xlu0 %v2590
      %v2592 = vpop.xlane.xlu0 %2591
      %v2593 = vsel %vm1199, %v2589, 0.0
      %2594 = vadd.xlane.f32.xlu0 %v2593
      %v2595 = vpop.xlane.xlu0 %2594
      %v2596 = vrcp.pop %v2592
      %v2597 = vmul.f32 %v2587, %v2596
      %v2598 = vrcp.pop %v2595
      %v2599 = vmul.f32 %v2589, %v2598
      %v2600 = vpack.c.bf16 %v2599, %v2597
      %2602 = vrot.lane.b32.xlu0 %v2353, 120
      %v2603 = vpop.permute.xlu0 %2602
      %v2605 = vsel %vm1195, %v2600, 0
      %v2608 = vand.u32 %v2603, %v1226
      %2610 = vmatprep.subr.bf16.mxu0 0
      %2611 = vmatpush1.bf16.msra.mxu0 %v2608
      %2612 = vmatprep.subr.bf16.mxu0 0
      %2613 = vmatpush1.bf16.msra.mxu0 0
      %2614 = vmatprep.subr.bf16.mxu0 0
      %2615 = vmatpush1.bf16.msra.mxu0 0
      %2616 = vmatprep.subr.bf16.mxu0 0
      %2617 = vmatpush1.bf16.msra.mxu0 0
      %2618 = vmatprep.subr.bf16.mxu0 0
      %2619 = vmatpush1.bf16.msra.mxu0 0
      %2620 = vmatprep.subr.bf16.mxu0 0
      %2621 = vmatpush1.bf16.msra.mxu0 0
      %2622 = vmatprep.subr.bf16.mxu0 0
      %2623 = vmatpush1.bf16.msra.mxu0 0
      %2624 = vmatprep.subr.bf16.mxu0 0
      %2625 = vmatpush1.bf16.msra.mxu0 0
      %2626 = vmatprep.subr.bf16.mxu0 0
      %2627 = vmatpush1.bf16.msra.mxu0 0
      %2628 = vmatprep.subr.bf16.mxu0 0
      %2629 = vmatpush1.bf16.msra.mxu0 0
      %2630 = vmatprep.subr.bf16.mxu0 0
      %2631 = vmatpush1.bf16.msra.mxu0 0
      %2632 = vmatprep.subr.bf16.mxu0 0
      %2633 = vmatpush1.bf16.msra.mxu0 0
      %2634 = vmatprep.subr.bf16.mxu0 0
      %2635 = vmatpush1.bf16.msra.mxu0 0
      %2636 = vmatprep.subr.bf16.mxu0 0
      %2637 = vmatpush1.bf16.msra.mxu0 0
      %2638 = vmatprep.subr.bf16.mxu0 0
      %2639 = vmatpush1.bf16.msra.mxu0 0
      %2640 = vmatprep.subr.bf16.mxu0 0
      %2641 = vmatpush1.bf16.msra.mxu0 0
      %2642 = vmatprep.mubr.bf16.mxu0 0
      %2643 = vmatmul.mubr.bf16.gmra.mrb[0].mxu0 %v2605
      %v2644 = vpop.f32.mrb[0].mxu0
      %v2645 = vadd.f32 0.0, %v2644
      %v2646 = vpop.f32.mrb[0].mxu0
      %v2647 = vpop.f32.mrb[0].mxu0
      %v2648 = vadd.f32 0.0, %v2647
      %v2649 = vpop.f32.mrb[0].mxu0
      %2650 = vdwg.mxu0
      %v2651 = vpack.c.bf16 %v2648, %v2645
      %v2653 = vsel %vm1147, %v2651, 0
      %v2656 = vsel %vm1279, %v2473, 0
      %2658 = vmatprep.subr.bf16.mxu0 0
      %2659 = vmatpush1.bf16.msra.mxu0 %v2656
      %2660 = vmatprep.subr.bf16.mxu0 0
      %2661 = vmatpush1.bf16.msra.mxu0 0
      %2662 = vmatprep.subr.bf16.mxu0 0
      %2663 = vmatpush1.bf16.msra.mxu0 0
      %2664 = vmatprep.subr.bf16.mxu0 0
      %2665 = vmatpush1.bf16.msra.mxu0 0
      %2666 = vmatprep.subr.bf16.mxu0 0
      %2667 = vmatpush1.bf16.msra.mxu0 0
      %2668 = vmatprep.subr.bf16.mxu0 0
      %2669 = vmatpush1.bf16.msra.mxu0 0
      %2670 = vmatprep.subr.bf16.mxu0 0
      %2671 = vmatpush1.bf16.msra.mxu0 0
      %2672 = vmatprep.subr.bf16.mxu0 0
      %2673 = vmatpush1.bf16.msra.mxu0 0
      %2674 = vmatprep.subr.bf16.mxu0 0
      %2675 = vmatpush1.bf16.msra.mxu0 0
      %2676 = vmatprep.subr.bf16.mxu0 0
      %2677 = vmatpush1.bf16.msra.mxu0 0
      %2678 = vmatprep.subr.bf16.mxu0 0
      %2679 = vmatpush1.bf16.msra.mxu0 0
      %2680 = vmatprep.subr.bf16.mxu0 0
      %2681 = vmatpush1.bf16.msra.mxu0 0
      %2682 = vmatprep.subr.bf16.mxu0 0
      %2683 = vmatpush1.bf16.msra.mxu0 0
      %2684 = vmatprep.subr.bf16.mxu0 0
      %2685 = vmatpush1.bf16.msra.mxu0 0
      %2686 = vmatprep.subr.bf16.mxu0 0
      %2687 = vmatpush1.bf16.msra.mxu0 0
      %2688 = vmatprep.subr.bf16.mxu0 0
      %2689 = vmatpush1.bf16.msra.mxu0 0
      %2690 = vmatprep.mubr.bf16.mxu0 0
      %2691 = vmatmul.mubr.bf16.gmra.mrb[0].mxu0 %v2653
      %v2692 = vpop.f32.mrb[0].mxu0
      %v2693 = vadd.f32 0.0, %v2692
      %v2694 = vpop.f32.mrb[0].mxu0
      %v2695 = vpop.f32.mrb[0].mxu0
      %v2696 = vadd.f32 0.0, %v2695
      %v2697 = vpop.f32.mrb[0].mxu0
      %2698 = vdwg.mxu0
      %v2699 = vadd.f32 %v2523, %v2693
      %v2700 = vadd.f32 %v2524, %v2696
      %2701 = vrot.lane.b32.xlu0 %v2351, 112
      %v2702 = vpop.permute.xlu0 %2701
      %2703 = vrot.lane.b32.xlu0 %v2352, 112
      %v2704 = vpop.permute.xlu0 %2703
      %v2706 = vsel %vm1147, %v2702, 0
      %v2709 = vsel %vm1147, %v2704, 0
      %2711 = vmatprep.subr.bf16.mxu0 0
      %2712 = vmatpush1.bf16.xpose.msra.mxu0 %v2709
      %2713 = vmatprep.subr.bf16.mxu0 0
      %2714 = vmatpush1.bf16.xpose.msra.mxu0 0
      %2715 = vmatprep.subr.bf16.mxu0 0
      %2716 = vmatpush1.bf16.xpose.msra.mxu0 0
      %2717 = vmatprep.subr.bf16.mxu0 0
      %2718 = vmatpush1.bf16.xpose.msra.mxu0 0
      %2719 = vmatprep.subr.bf16.mxu0 0
      %2720 = vmatpush1.bf16.xpose.msra.mxu0 0
      %2721 = vmatprep.subr.bf16.mxu0 0
      %2722 = vmatpush1.bf16.xpose.msra.mxu0 0
      %2723 = vmatprep.subr.bf16.mxu0 0
      %2724 = vmatpush1.bf16.xpose.msra.mxu0 0
      %2725 = vmatprep.subr.bf16.mxu0 0
      %2726 = vmatpush1.bf16.xpose.msra.mxu0 0
      %2727 = vmatprep.subr.bf16.mxu0 0
      %2728 = vmatpush1.bf16.xpose.msra.mxu0 0
      %2729 = vmatprep.subr.bf16.mxu0 0
      %2730 = vmatpush1.bf16.xpose.msra.mxu0 0
      %2731 = vmatprep.subr.bf16.mxu0 0
      %2732 = vmatpush1.bf16.xpose.msra.mxu0 0
      %2733 = vmatprep.subr.bf16.mxu0 0
      %2734 = vmatpush1.bf16.xpose.msra.mxu0 0
      %2735 = vmatprep.subr.bf16.mxu0 0
      %2736 = vmatpush1.bf16.xpose.msra.mxu0 0
      %2737 = vmatprep.subr.bf16.mxu0 0
      %2738 = vmatpush1.bf16.xpose.msra.mxu0 0
      %2739 = vmatprep.subr.bf16.mxu0 0
      %2740 = vmatpush1.bf16.xpose.msra.mxu0 0
      %2741 = vmatprep.subr.bf16.mxu0 0
      %2742 = vmatpush1.bf16.xpose.msra.mxu0 0
      %2743 = vmatprep.mubr.bf16.mxu0 0
      %2744 = vmatmul.mubr.bf16.gmra.mrb[0].mxu0 %v2706
      %v2745 = vpop.f32.mrb[0].mxu0
      %v2746 = vadd.f32 0.0, %v2745
      %v2747 = vpop.f32.mrb[0].mxu0
      %v2748 = vpop.f32.mrb[0].mxu0
      %v2749 = vadd.f32 0.0, %v2748
      %v2750 = vpop.f32.mrb[0].mxu0
      %2751 = vdwg.mxu0
      %v2752 = vsel %vm1195, %v2746, -inf
      %2753 = vmax.xlane.f32.xlu0 %v2752
      %v2754 = vpop.xlane.xlu0 %2753
      %v2755 = vsel %vm1199, %v2749, -inf
      %2756 = vmax.xlane.f32.xlu0 %v2755
      %v2757 = vpop.xlane.xlu0 %2756
      %v2758 = vsub.f32 %v2746, %v2754
      %v2759 = vsub.f32 %v2749, %v2757
      %v2760 = vmul.f32 %v2758, 1.442695
      %v2761 = vpow.pop %v2760
      %v2762 = vmul.f32 %v2759, 1.442695
      %v2763 = vpow.pop %v2762
      %v2764 = vsel %vm1195, %v2761, 0.0
      %2765 = vadd.xlane.f32.xlu0 %v2764
      %v2766 = vpop.xlane.xlu0 %2765
      %v2767 = vsel %vm1199, %v2763, 0.0
      %2768 = vadd.xlane.f32.xlu0 %v2767
      %v2769 = vpop.xlane.xlu0 %2768
      %v2770 = vrcp.pop %v2766
      %v2771 = vmul.f32 %v2761, %v2770
      %v2772 = vrcp.pop %v2769
      %v2773 = vmul.f32 %v2763, %v2772
      %v2774 = vpack.c.bf16 %v2773, %v2771
      %2775 = vrot.lane.b32.xlu0 %v2353, 112
      %v2776 = vpop.permute.xlu0 %2775
      %v2778 = vsel %vm1195, %v2774, 0
      %v2781 = vand.u32 %v2776, %v1226
      %2783 = vmatprep.subr.bf16.mxu0 0
      %2784 = vmatpush1.bf16.msra.mxu0 %v2781
      %2785 = vmatprep.subr.bf16.mxu0 0
      %2786 = vmatpush1.bf16.msra.mxu0 0
      %2787 = vmatprep.subr.bf16.mxu0 0
      %2788 = vmatpush1.bf16.msra.mxu0 0
      %2789 = vmatprep.subr.bf16.mxu0 0
      %2790 = vmatpush1.bf16.msra.mxu0 0
      %2791 = vmatprep.subr.bf16.mxu0 0
      %2792 = vmatpush1.bf16.msra.mxu0 0
      %2793 = vmatprep.subr.bf16.mxu0 0
      %2794 = vmatpush1.bf16.msra.mxu0 0
      %2795 = vmatprep.subr.bf16.mxu0 0
      %2796 = vmatpush1.bf16.msra.mxu0 0
      %2797 = vmatprep.subr.bf16.mxu0 0
      %2798 = vmatpush1.bf16.msra.mxu0 0
      %2799 = vmatprep.subr.bf16.mxu0 0
      %2800 = vmatpush1.bf16.msra.mxu0 0
      %2801 = vmatprep.subr.bf16.mxu0 0
      %2802 = vmatpush1.bf16.msra.mxu0 0
      %2803 = vmatprep.subr.bf16.mxu0 0
      %2804 = vmatpush1.bf16.msra.mxu0 0
      %2805 = vmatprep.subr.bf16.mxu0 0
      %2806 = vmatpush1.bf16.msra.mxu0 0
      %2807 = vmatprep.subr.bf16.mxu0 0
      %2808 = vmatpush1.bf16.msra.mxu0 0
      %2809 = vmatprep.subr.bf16.mxu0 0
      %2810 = vmatpush1.bf16.msra.mxu0 0
      %2811 = vmatprep.subr.bf16.mxu0 0
      %2812 = vmatpush1.bf16.msra.mxu0 0
      %2813 = vmatprep.subr.bf16.mxu0 0
      %2814 = vmatpush1.bf16.msra.mxu0 0
      %2815 = vmatprep.mubr.bf16.mxu0 0
      %2816 = vmatmul.mubr.bf16.gmra.mrb[0].mxu0 %v2778
      %v2817 = vpop.f32.mrb[0].mxu0
      %v2818 = vadd.f32 0.0, %v2817
      %v2819 = vpop.f32.mrb[0].mxu0
      %v2820 = vpop.f32.mrb[0].mxu0
      %v2821 = vadd.f32 0.0, %v2820
      %v2822 = vpop.f32.mrb[0].mxu0
      %2823 = vdwg.mxu0
      %v2824 = vpack.c.bf16 %v2821, %v2818
      %v2826 = vsel %vm1147, %v2824, 0
      %v2829 = vsel %vm1279, %v2474, 0
      %2831 = vmatprep.subr.bf16.mxu0 0
      %2832 = vmatpush1.bf16.msra.mxu0 %v2829
      %2833 = vmatprep.subr.bf16.mxu0 0
      %2834 = vmatpush1.bf16.msra.mxu0 0
      %2835 = vmatprep.subr.bf16.mxu0 0
      %2836 = vmatpush1.bf16.msra.mxu0 0
      %2837 = vmatprep.subr.bf16.mxu0 0
      %2838 = vmatpush1.bf16.msra.mxu0 0
      %2839 = vmatprep.subr.bf16.mxu0 0
      %2840 = vmatpush1.bf16.msra.mxu0 0
      %2841 = vmatprep.subr.bf16.mxu0 0
      %2842 = vmatpush1.bf16.msra.mxu0 0
      %2843 = vmatprep.subr.bf16.mxu0 0
      %2844 = vmatpush1.bf16.msra.mxu0 0
      %2845 = vmatprep.subr.bf16.mxu0 0
      %2846 = vmatpush1.bf16.msra.mxu0 0
      %2847 = vmatprep.subr.bf16.mxu0 0
      %2848 = vmatpush1.bf16.msra.mxu0 0
      %2849 = vmatprep.subr.bf16.mxu0 0
      %2850 = vmatpush1.bf16.msra.mxu0 0
      %2851 = vmatprep.subr.bf16.mxu0 0
      %2852 = vmatpush1.bf16.msra.mxu0 0
      %2853 = vmatprep.subr.bf16.mxu0 0
      %2854 = vmatpush1.bf16.msra.mxu0 0
      %2855 = vmatprep.subr.bf16.mxu0 0
      %2856 = vmatpush1.bf16.msra.mxu0 0
      %2857 = vmatprep.subr.bf16.mxu0 0
      %2858 = vmatpush1.bf16.msra.mxu0 0
      %2859 = vmatprep.subr.bf16.mxu0 0
      %2860 = vmatpush1.bf16.msra.mxu0 0
      %2861 = vmatprep.subr.bf16.mxu0 0
      %2862 = vmatpush1.bf16.msra.mxu0 0
      %2863 = vmatprep.mubr.bf16.mxu0 0
      %2864 = vmatmul.mubr.bf16.gmra.mrb[0].mxu0 %v2826
      %v2865 = vpop.f32.mrb[0].mxu0
      %v2866 = vadd.f32 0.0, %v2865
      %v2867 = vpop.f32.mrb[0].mxu0
      %v2868 = vpop.f32.mrb[0].mxu0
      %v2869 = vadd.f32 0.0, %v2868
      %v2870 = vpop.f32.mrb[0].mxu0
      %2871 = vdwg.mxu0
      %v2872 = vadd.f32 %v2699, %v2866
      %v2873 = vadd.f32 %v2700, %v2869
      %2874 = vrot.lane.b32.xlu0 %v2351, 104
      %v2875 = vpop.permute.xlu0 %2874
      %2876 = vrot.lane.b32.xlu0 %v2352, 104
      %v2877 = vpop.permute.xlu0 %2876
      %v2879 = vsel %vm1147, %v2875, 0
      %v2882 = vsel %vm1147, %v2877, 0
      %2884 = vmatprep.subr.bf16.mxu0 0
      %2885 = vmatpush1.bf16.xpose.msra.mxu0 %v2882
      %2886 = vmatprep.subr.bf16.mxu0 0
      %2887 = vmatpush1.bf16.xpose.msra.mxu0 0
      %2888 = vmatprep.subr.bf16.mxu0 0
      %2889 = vmatpush1.bf16.xpose.msra.mxu0 0
      %2890 = vmatprep.subr.bf16.mxu0 0
      %2891 = vmatpush1.bf16.xpose.msra.mxu0 0
      %2892 = vmatprep.subr.bf16.mxu0 0
      %2893 = vmatpush1.bf16.xpose.msra.mxu0 0
      %2894 = vmatprep.subr.bf16.mxu0 0
      %2895 = vmatpush1.bf16.xpose.msra.mxu0 0
      %2896 = vmatprep.subr.bf16.mxu0 0
      %2897 = vmatpush1.bf16.xpose.msra.mxu0 0
      %2898 = vmatprep.subr.bf16.mxu0 0
      %2899 = vmatpush1.bf16.xpose.msra.mxu0 0
      %2900 = vmatprep.subr.bf16.mxu0 0
      %2901 = vmatpush1.bf16.xpose.msra.mxu0 0
      %2902 = vmatprep.subr.bf16.mxu0 0
      %2903 = vmatpush1.bf16.xpose.msra.mxu0 0
      %2904 = vmatprep.subr.bf16.mxu0 0
      %2905 = vmatpush1.bf16.xpose.msra.mxu0 0
      %2906 = vmatprep.subr.bf16.mxu0 0
      %2907 = vmatpush1.bf16.xpose.msra.mxu0 0
      %2908 = vmatprep.subr.bf16.mxu0 0
      %2909 = vmatpush1.bf16.xpose.msra.mxu0 0
      %2910 = vmatprep.subr.bf16.mxu0 0
      %2911 = vmatpush1.bf16.xpose.msra.mxu0 0
      %2912 = vmatprep.subr.bf16.mxu0 0
      %2913 = vmatpush1.bf16.xpose.msra.mxu0 0
      %2914 = vmatprep.subr.bf16.mxu0 0
      %2915 = vmatpush1.bf16.xpose.msra.mxu0 0
      %2916 = vmatprep.mubr.bf16.mxu0 0
      %2917 = vmatmul.mubr.bf16.gmra.mrb[0].mxu0 %v2879
      %v2918 = vpop.f32.mrb[0].mxu0
      %v2919 = vadd.f32 0.0, %v2918
      %v2920 = vpop.f32.mrb[0].mxu0
      %v2921 = vpop.f32.mrb[0].mxu0
      %v2922 = vadd.f32 0.0, %v2921
      %v2923 = vpop.f32.mrb[0].mxu0
      %2924 = vdwg.mxu0
      %v2925 = vsel %vm1195, %v2919, -inf
      %2926 = vmax.xlane.f32.xlu0 %v2925
      %v2927 = vpop.xlane.xlu0 %2926
      %v2928 = vsel %vm1199, %v2922, -inf
      %2929 = vmax.xlane.f32.xlu0 %v2928
      %v2930 = vpop.xlane.xlu0 %2929
      %v2931 = vsub.f32 %v2919, %v2927
      %v2932 = vsub.f32 %v2922, %v2930
      %v2933 = vmul.f32 %v2931, 1.442695
      %v2934 = vpow.pop %v2933
      %v2935 = vmul.f32 %v2932, 1.442695
      %v2936 = vpow.pop %v2935
      %v2937 = vsel %vm1195, %v2934, 0.0
      %2938 = vadd.xlane.f32.xlu0 %v2937
      %v2939 = vpop.xlane.xlu0 %2938
      %v2940 = vsel %vm1199, %v2936, 0.0
      %2941 = vadd.xlane.f32.xlu0 %v2940
      %v2942 = vpop.xlane.xlu0 %2941
      %v2943 = vrcp.pop %v2939
      %v2944 = vmul.f32 %v2934, %v2943
      %v2945 = vrcp.pop %v2942
      %v2946 = vmul.f32 %v2936, %v2945
      %v2947 = vpack.c.bf16 %v2946, %v2944
      %2948 = vrot.lane.b32.xlu0 %v2353, 104
      %v2949 = vpop.permute.xlu0 %2948
      %v2951 = vsel %vm1195, %v2947, 0
      %v2954 = vand.u32 %v2949, %v1226
      %2956 = vmatprep.subr.bf16.mxu0 0
      %2957 = vmatpush1.bf16.msra.mxu0 %v2954
      %2958 = vmatprep.subr.bf16.mxu0 0
      %2959 = vmatpush1.bf16.msra.mxu0 0
      %2960 = vmatprep.subr.bf16.mxu0 0
      %2961 = vmatpush1.bf16.msra.mxu0 0
      %2962 = vmatprep.subr.bf16.mxu0 0
      %2963 = vmatpush1.bf16.msra.mxu0 0
      %2964 = vmatprep.subr.bf16.mxu0 0
      %2965 = vmatpush1.bf16.msra.mxu0 0
      %2966 = vmatprep.subr.bf16.mxu0 0
      %2967 = vmatpush1.bf16.msra.mxu0 0
      %2968 = vmatprep.subr.bf16.mxu0 0
      %2969 = vmatpush1.bf16.msra.mxu0 0
      %2970 = vmatprep.subr.bf16.mxu0 0
      %2971 = vmatpush1.bf16.msra.mxu0 0
      %2972 = vmatprep.subr.bf16.mxu0 0
      %2973 = vmatpush1.bf16.msra.mxu0 0
      %2974 = vmatprep.subr.bf16.mxu0 0
      %2975 = vmatpush1.bf16.msra.mxu0 0
      %2976 = vmatprep.subr.bf16.mxu0 0
      %2977 = vmatpush1.bf16.msra.mxu0 0
      %2978 = vmatprep.subr.bf16.mxu0 0
      %2979 = vmatpush1.bf16.msra.mxu0 0
      %2980 = vmatprep.subr.bf16.mxu0 0
      %2981 = vmatpush1.bf16.msra.mxu0 0
      %2982 = vmatprep.subr.bf16.mxu0 0
      %2983 = vmatpush1.bf16.msra.mxu0 0
      %2984 = vmatprep.subr.bf16.mxu0 0
      %2985 = vmatpush1.bf16.msra.mxu0 0
      %2986 = vmatprep.subr.bf16.mxu0 0
      %2987 = vmatpush1.bf16.msra.mxu0 0
      %2988 = vmatprep.mubr.bf16.mxu0 0
      %2989 = vmatmul.mubr.bf16.gmra.mrb[0].mxu0 %v2951
      %v2990 = vpop.f32.mrb[0].mxu0
      %v2991 = vadd.f32 0.0, %v2990
      %v2992 = vpop.f32.mrb[0].mxu0
      %v2993 = vpop.f32.mrb[0].mxu0
      %v2994 = vadd.f32 0.0, %v2993
      %v2995 = vpop.f32.mrb[0].mxu0
      %2996 = vdwg.mxu0
      %v2997 = vpack.c.bf16 %v2994, %v2991
      %v2999 = vsel %vm1147, %v2997, 0
      %v3002 = vsel %vm1279, %v2475, 0
      %3004 = vmatprep.subr.bf16.mxu0 0
      %3005 = vmatpush1.bf16.msra.mxu0 %v3002
      %3006 = vmatprep.subr.bf16.mxu0 0
      %3007 = vmatpush1.bf16.msra.mxu0 0
      %3008 = vmatprep.subr.bf16.mxu0 0
      %3009 = vmatpush1.bf16.msra.mxu0 0
      %3010 = vmatprep.subr.bf16.mxu0 0
      %3011 = vmatpush1.bf16.msra.mxu0 0
      %3012 = vmatprep.subr.bf16.mxu0 0
      %3013 = vmatpush1.bf16.msra.mxu0 0
      %3014 = vmatprep.subr.bf16.mxu0 0
      %3015 = vmatpush1.bf16.msra.mxu0 0
      %3016 = vmatprep.subr.bf16.mxu0 0
      %3017 = vmatpush1.bf16.msra.mxu0 0
      %3018 = vmatprep.subr.bf16.mxu0 0
      %3019 = vmatpush1.bf16.msra.mxu0 0
      %3020 = vmatprep.subr.bf16.mxu0 0
      %3021 = vmatpush1.bf16.msra.mxu0 0
      %3022 = vmatprep.subr.bf16.mxu0 0
      %3023 = vmatpush1.bf16.msra.mxu0 0
      %3024 = vmatprep.subr.bf16.mxu0 0
      %3025 = vmatpush1.bf16.msra.mxu0 0
      %3026 = vmatprep.subr.bf16.mxu0 0
      %3027 = vmatpush1.bf16.msra.mxu0 0
      %3028 = vmatprep.subr.bf16.mxu0 0
      %3029 = vmatpush1.bf16.msra.mxu0 0
      %3030 = vmatprep.subr.bf16.mxu0 0
      %3031 = vmatpush1.bf16.msra.mxu0 0
      %3032 = vmatprep.subr.bf16.mxu0 0
      %3033 = vmatpush1.bf16.msra.mxu0 0
      %3034 = vmatprep.subr.bf16.mxu0 0
      %3035 = vmatpush1.bf16.msra.mxu0 0
      %3036 = vmatprep.mubr.bf16.mxu0 0
      %3037 = vmatmul.mubr.bf16.gmra.mrb[0].mxu0 %v2999
      %v3038 = vpop.f32.mrb[0].mxu0
      %v3039 = vadd.f32 0.0, %v3038
      %v3040 = vpop.f32.mrb[0].mxu0
      %v3041 = vpop.f32.mrb[0].mxu0
      %v3042 = vadd.f32 0.0, %v3041
      %v3043 = vpop.f32.mrb[0].mxu0
      %3044 = vdwg.mxu0
      %v3045 = vadd.f32 %v2872, %v3039
      %v3046 = vadd.f32 %v2873, %v3042
      %v3047 = vld [vmem:[%s859] sm:$0x1]
      %v3049 = vlaneseq
      %v3050 = vshrl.u32 %v3049, 7
      %v3051 = vsub.s32 0, %v3050
      %v3052 = vrot.slane %v3047, %v3051
      %v3054 = vadd.f32 %v3045, %v3052
      %v3055 = vadd.f32 %v3046, %v3052
      %v3056 = vld [vmem:[%s862] sm:$0x1]
      %v3057 = vld [vmem:[%s865] sm:$0x1]
      %v3058 = vsel %vm901, %v3054, 0.0
      %3059 = vadd.xlane.f32.xlu0 %v3058
      %v3060 = vpop.xlane.xlu0 %3059
      %v3061 = vsel %vm905, %v3055, 0.0
      %3062 = vadd.xlane.f32.xlu0 %v3061
      %v3063 = vpop.xlane.xlu0 %3062
      %v3064 = vmul.f32 %v3060, %v909
      %v3065 = vmul.f32 %v3063, %v909
      %v3066 = vsub.f32 %v3054, %v3064
      %v3067 = vsub.f32 %v3055, %v3065
      %v3068 = vmul.f32 %v3066, %v3066
      %v3069 = vmul.f32 %v3067, %v3067
      %v3070 = vsel %vm901, %v3068, 0.0
      %3071 = vadd.xlane.f32.xlu0 %v3070
      %v3072 = vpop.xlane.xlu0 %3071
      %v3073 = vsel %vm905, %v3069, 0.0
      %3074 = vadd.xlane.f32.xlu0 %v3073
      %v3075 = vpop.xlane.xlu0 %3074
      %v3076 = vmul.f32 %v3072, %v909
      %v3077 = vmul.f32 %v3075, %v909
      %v3078 = vadd.f32 %v3076, 1e-05
      %v3079 = vadd.f32 %v3077, 1e-05
      %v3080 = vrsqrt.pop %v3078
      %v3081 = vrsqrt.pop %v3079
      %v3082 = vmul.f32 %v3066, %v3080
      %v3083 = vmul.f32 %v3067, %v3081
      %v3085 = vlaneseq
      %v3086 = vshrl.u32 %v3085, 7
      %v3087 = vsub.s32 0, %v3086
      %v3088 = vrot.slane %v3056, %v3087
      %v3090 = vmul.f32 %v3082, %v3088
      %v3091 = vmul.f32 %v3083, %v3088
      %v3093 = vlaneseq
      %v3094 = vshrl.u32 %v3093, 7
      %v3095 = vsub.s32 0, %v3094
      %v3096 = vrot.slane %v3057, %v3095
      %v3098 = vadd.f32 %v3090, %v3096
      %v3099 = vadd.f32 %v3091, %v3096
      %v3100 = vpack.c.bf16 %v3099, %v3098
      %v3101 = vld [vmem:[%s870] sm:$0xf]
      %v3102 = vld [vmem:[%s870 + $0x4] sm:$0xf]
      %v3103 = vld [vmem:[%s870 + $0x8] sm:$0xf]
      %v3104 = vld [vmem:[%s870 + $0xc] sm:$0xf]
      %v3105 = vld [vmem:[%s873] sm:$0x1]
      %v3107 = vlaneseq
      %v3108 = vshrl.u32 %v3107, 7
      %v3109 = vsub.s32 0, %v3108
      %v3110 = vrot.slane %v3105, %v3109
      %v3116 = vunpack.c.l.b16 %v3101
      %v3117 = vunpack.c.l.b16 %v3102
      %v3118 = vunpack.c.l.b16 %v3103
      %v3119 = vunpack.c.l.b16 %v3104
      %v3120 = vpack.c.b16 %v3117, %v3116
      %v3121 = vpack.c.b16 %v3119, %v3118
      %v3125 = vsel %vm901, %v3100, 0
      %3127 = vmatprep.subr.bf16.mxu0 0
      %3128 = vmatpush1.bf16.msra.mxu0 %v3120
      %3129 = vmatprep.subr.bf16.mxu0 0
      %3130 = vmatpush1.bf16.msra.mxu0 %v3121
      %3131 = vmatprep.subr.bf16.mxu0 0
      %3132 = vmatpush1.bf16.msra.mxu0 0
      %3133 = vmatprep.subr.bf16.mxu0 0
      %3134 = vmatpush1.bf16.msra.mxu0 0
      %3135 = vmatprep.subr.bf16.mxu0 0
      %3136 = vmatpush1.bf16.msra.mxu0 0
      %3137 = vmatprep.subr.bf16.mxu0 0
      %3138 = vmatpush1.bf16.msra.mxu0 0
      %3139 = vmatprep.subr.bf16.mxu0 0
      %3140 = vmatpush1.bf16.msra.mxu0 0
      %3141 = vmatprep.subr.bf16.mxu0 0
      %3142 = vmatpush1.bf16.msra.mxu0 0
      %3143 = vmatprep.subr.bf16.mxu0 0
      %3144 = vmatpush1.bf16.msra.mxu0 0
      %3145 = vmatprep.subr.bf16.mxu0 0
      %3146 = vmatpush1.bf16.msra.mxu0 0
      %3147 = vmatprep.subr.bf16.mxu0 0
      %3148 = vmatpush1.bf16.msra.mxu0 0
      %3149 = vmatprep.subr.bf16.mxu0 0
      %3150 = vmatpush1.bf16.msra.mxu0 0
      %3151 = vmatprep.subr.bf16.mxu0 0
      %3152 = vmatpush1.bf16.msra.mxu0 0
      %3153 = vmatprep.subr.bf16.mxu0 0
      %3154 = vmatpush1.bf16.msra.mxu0 0
      %3155 = vmatprep.subr.bf16.mxu0 0
      %3156 = vmatpush1.bf16.msra.mxu0 0
      %3157 = vmatprep.subr.bf16.mxu0 0
      %3158 = vmatpush1.bf16.msra.mxu0 0
      %3159 = vmatprep.mubr.bf16.mxu0 0
      %3160 = vmatmul.mubr.bf16.gmra.mrb[0].mxu0 %v3125
      %v3161 = vpop.f32.mrb[0].mxu0
      %v3162 = vadd.f32 %v3110, %v3161
      %v3163 = vpop.f32.mrb[0].mxu0
      %v3164 = vpop.f32.mrb[0].mxu0
      %v3165 = vadd.f32 %v3110, %v3164
      %v3166 = vpop.f32.mrb[0].mxu0
      %3167 = vdwg.mxu0
      %v3168 = vmul.f32 %v3162, %v3162
      %v3169 = vmul.f32 %v3165, %v3165
      %v3170 = vmul.f32 %v3162, %v3168
      %v3171 = vmul.f32 %v3165, %v3169
      %v3172 = vmul.f32 %v3170, 0.044715
      %v3173 = vmul.f32 %v3171, 0.044715
      %v3174 = vadd.f32 %v3162, %v3172
      %v3175 = vadd.f32 %v3165, %v3173
      %v3176 = vmul.f32 %v3174, 0.7978846
      %v3177 = vmul.f32 %v3175, 0.7978846
      %v3178 = vtanh.pop %v3176
      %v3179 = vtanh.pop %v3177
      %v3180 = vadd.f32 %v3178, 1.0
      %v3181 = vadd.f32 %v3179, 1.0
      %v3182 = vmul.f32 %v3180, 0.5
      %v3183 = vmul.f32 %v3181, 0.5
      %v3184 = vmul.f32 %v3162, %v3182
      %v3185 = vmul.f32 %v3165, %v3183
      %v3186 = vpack.c.bf16 %v3185, %v3184
      %v3187 = vld [vmem:[%s878] sm:$0xf]
      %v3188 = vld [vmem:[%s878 + $0x4] sm:$0xf]
      %v3189 = vld [vmem:[%s878 + $0x8] sm:$0xf]
      %v3190 = vld [vmem:[%s878 + $0xc] sm:$0xf]
      %v3191 = vld [vmem:[%s878 + $0x10] sm:$0xf]
      %v3192 = vld [vmem:[%s878 + $0x14] sm:$0xf]
      %v3193 = vld [vmem:[%s878 + $0x18] sm:$0xf]
      %v3194 = vld [vmem:[%s878 + $0x1c] sm:$0xf]
      %v3195 = vld [vmem:[%s878 + $0x20] sm:$0xf]
      %v3196 = vld [vmem:[%s878 + $0x24] sm:$0xf]
      %v3197 = vld [vmem:[%s878 + $0x28] sm:$0xf]
      %v3198 = vld [vmem:[%s878 + $0x2c] sm:$0xf]
      %v3199 = vld [vmem:[%s878 + $0x30] sm:$0xf]
      %v3200 = vld [vmem:[%s878 + $0x34] sm:$0xf]
      %v3201 = vld [vmem:[%s878 + $0x38] sm:$0xf]
      %v3202 = vld [vmem:[%s878 + $0x3c] sm:$0xf]
      %v3219 = vunpack.c.l.b16 %v3187
      %v3220 = vunpack.c.l.b16 %v3188
      %v3221 = vunpack.c.l.b16 %v3189
      %v3222 = vunpack.c.l.b16 %v3190
      %v3223 = vunpack.c.l.b16 %v3191
      %v3224 = vunpack.c.l.b16 %v3192
      %v3225 = vunpack.c.l.b16 %v3193
      %v3226 = vunpack.c.l.b16 %v3194
      %v3227 = vunpack.c.l.b16 %v3195
      %v3228 = vunpack.c.l.b16 %v3196
      %v3229 = vunpack.c.l.b16 %v3197
      %v3230 = vunpack.c.l.b16 %v3198
      %v3231 = vunpack.c.l.b16 %v3199
      %v3232 = vunpack.c.l.b16 %v3200
      %v3233 = vunpack.c.l.b16 %v3201
      %v3234 = vunpack.c.l.b16 %v3202
      %v3235 = vpack.c.b16 %v3220, %v3219
      %v3236 = vpack.c.b16 %v3222, %v3221
      %v3237 = vpack.c.b16 %v3224, %v3223
      %v3238 = vpack.c.b16 %v3226, %v3225
      %v3239 = vpack.c.b16 %v3228, %v3227
      %v3240 = vpack.c.b16 %v3230, %v3229
      %v3241 = vpack.c.b16 %v3232, %v3231
      %v3242 = vpack.c.b16 %v3234, %v3233
      %3251 = vmatprep.subr.bf16.mxu0 0
      %3252 = vmatpush1.bf16.msra.mxu0 %v3235
      %3253 = vmatprep.subr.bf16.mxu0 0
      %3254 = vmatpush1.bf16.msra.mxu0 %v3236
      %3255 = vmatprep.subr.bf16.mxu0 0
      %3256 = vmatpush1.bf16.msra.mxu0 %v3237
      %3257 = vmatprep.subr.bf16.mxu0 0
      %3258 = vmatpush1.bf16.msra.mxu0 %v3238
      %3259 = vmatprep.subr.bf16.mxu0 0
      %3260 = vmatpush1.bf16.msra.mxu0 %v3239
      %3261 = vmatprep.subr.bf16.mxu0 0
      %3262 = vmatpush1.bf16.msra.mxu0 %v3240
      %3263 = vmatprep.subr.bf16.mxu0 0
      %3264 = vmatpush1.bf16.msra.mxu0 %v3241
      %3265 = vmatprep.subr.bf16.mxu0 0
      %3266 = vmatpush1.bf16.msra.mxu0 %v3242
      %3267 = vmatprep.subr.bf16.mxu0 0
      %3268 = vmatpush1.bf16.msra.mxu0 0
      %3269 = vmatprep.subr.bf16.mxu0 0
      %3270 = vmatpush1.bf16.msra.mxu0 0
      %3271 = vmatprep.subr.bf16.mxu0 0
      %3272 = vmatpush1.bf16.msra.mxu0 0
      %3273 = vmatprep.subr.bf16.mxu0 0
      %3274 = vmatpush1.bf16.msra.mxu0 0
      %3275 = vmatprep.subr.bf16.mxu0 0
      %3276 = vmatpush1.bf16.msra.mxu0 0
      %3277 = vmatprep.subr.bf16.mxu0 0
      %3278 = vmatpush1.bf16.msra.mxu0 0
      %3279 = vmatprep.subr.bf16.mxu0 0
      %3280 = vmatpush1.bf16.msra.mxu0 0
      %3281 = vmatprep.subr.bf16.mxu0 0
      %3282 = vmatpush1.bf16.msra.mxu0 0
      %3283 = vmatprep.mubr.bf16.mxu0 0
      %3284 = vmatmul.mubr.bf16.gmra.mrb[0].mxu0 %v3186
      %v3285 = vpop.f32.mrb[0].mxu0
      %v3286 = vadd.f32 0.0, %v3285
      %v3287 = vpop.f32.mrb[0].mxu0
      %v3288 = vpop.f32.mrb[0].mxu0
      %v3289 = vadd.f32 0.0, %v3288
      %v3290 = vpop.f32.mrb[0].mxu0
      %3291 = vdwg.mxu0
      %v3292 = vadd.f32 %v3054, %v3286
      %v3293 = vadd.f32 %v3055, %v3289
      %v3294 = vld [vmem:[%s881] sm:$0x1]
      %v3296 = vlaneseq
      %v3297 = vshrl.u32 %v3296, 7
      %v3298 = vsub.s32 0, %v3297
      %v3299 = vrot.slane %v3294, %v3298
      %v3301 = vadd.f32 %v3292, %v3299
      %v3302 = vadd.f32 %v3293, %v3299
      %3303 = vst.msk [vmem:[%s2106] sm:$0xff] %vm901, %v3301
      %3304 = vst.msk [vmem:[%s2106 + $0x8] sm:$0x1f] %vm905, %v3302
      %p3305 = scmp.eq.s32.totalorder %s32, 1
      // Predicated region
      $region109: #{_lambda_.4} parent=103 // pred_check
        %p3306 = pneg %p3305
      $region110: #{_lambda_.4} parent=103 // pred_check_branch
        %3308 = sbr.rel (%p3306) target = $region112
      $region111: #{_lambda_.4} parent=103 // pred_region
        %v3309 = vld [vmem:[#allocation2] sm:$0xff]
        %v3310 = vld [vmem:[#allocation2 + $0x8] sm:$0x1f]
        %v3311 = vld [vmem:[%s17] sm:$0x1]
        %v3312 = vld [vmem:[%s18] sm:$0x1]
        %v3313 = vsel %vm901, %v3309, 0.0
        %3314 = vadd.xlane.f32.xlu0 %v3313
        %v3315 = vpop.xlane.xlu0 %3314
        %v3316 = vsel %vm905, %v3310, 0.0
        %3317 = vadd.xlane.f32.xlu0 %v3316
        %v3318 = vpop.xlane.xlu0 %3317
        %v3319 = vmul.f32 %v3315, %v909
        %v3320 = vmul.f32 %v3318, %v909
        %v3321 = vsub.f32 %v3309, %v3319
        %v3322 = vsub.f32 %v3310, %v3320
        %v3323 = vmul.f32 %v3321, %v3321
        %v3324 = vmul.f32 %v3322, %v3322
        %v3325 = vsel %vm901, %v3323, 0.0
        %3326 = vadd.xlane.f32.xlu0 %v3325
        %v3327 = vpop.xlane.xlu0 %3326
        %v3328 = vsel %vm905, %v3324, 0.0
        %3329 = vadd.xlane.f32.xlu0 %v3328
        %v3330 = vpop.xlane.xlu0 %3329
        %v3331 = vmul.f32 %v3327, %v909
        %v3332 = vmul.f32 %v3330, %v909
        %v3333 = vadd.f32 %v3331, 1e-05
        %v3334 = vadd.f32 %v3332, 1e-05
        %v3335 = vrsqrt.pop %v3333
        %v3336 = vrsqrt.pop %v3334
        %v3337 = vmul.f32 %v3321, %v3335
        %v3338 = vmul.f32 %v3322, %v3336
        %v3340 = vlaneseq
        %v3341 = vshrl.u32 %v3340, 7
        %v3342 = vsub.s32 0, %v3341
        %v3343 = vrot.slane %v3311, %v3342
        %v3345 = vmul.f32 %v3337, %v3343
        %v3346 = vmul.f32 %v3338, %v3343
        %v3348 = vlaneseq
        %v3349 = vshrl.u32 %v3348, 7
        %v3350 = vsub.s32 0, %v3349
        %v3351 = vrot.slane %v3312, %v3350
        %v3353 = vadd.f32 %v3345, %v3351
        %v3354 = vadd.f32 %v3346, %v3351
        %v3355 = vpack.c.bf16 %v3354, %v3353
        %v3356 = vld [vmem:[%s19] sm:$0xf]
        %v3357 = vld [vmem:[%s19 + $0x4] sm:$0xf]
        %v3358 = vld [vmem:[%s19 + $0x8] sm:$0xf]
        %v3359 = vld [vmem:[%s19 + $0xc] sm:$0xf]
        %v3360 = vld [vmem:[%s20] sm:$0x1]
        %v3362 = vlaneseq
        %v3363 = vshrl.u32 %v3362, 7
        %v3364 = vsub.s32 0, %v3363
        %v3365 = vrot.slane %v3360, %v3364
        %v3371 = vunpack.c.l.b16 %v3356
        %v3372 = vunpack.c.l.b16 %v3357
        %v3373 = vunpack.c.l.b16 %v3358
        %v3374 = vunpack.c.l.b16 %v3359
        %v3375 = vpack.c.b16 %v3372, %v3371
        %v3376 = vpack.c.b16 %v3374, %v3373
        %v3380 = vsel %vm901, %v3355, 0
        %3382 = vmatprep.subr.bf16.mxu0 0
        %3383 = vmatpush1.bf16.msra.mxu0 %v3375
        %3384 = vmatprep.subr.bf16.mxu0 0
        %3385 = vmatpush1.bf16.msra.mxu0 %v3376
        %3386 = vmatprep.subr.bf16.mxu0 0
        %3387 = vmatpush1.bf16.msra.mxu0 0
        %3388 = vmatprep.subr.bf16.mxu0 0
        %3389 = vmatpush1.bf16.msra.mxu0 0
        %3390 = vmatprep.subr.bf16.mxu0 0
        %3391 = vmatpush1.bf16.msra.mxu0 0
        %3392 = vmatprep.subr.bf16.mxu0 0
        %3393 = vmatpush1.bf16.msra.mxu0 0
        %3394 = vmatprep.subr.bf16.mxu0 0
        %3395 = vmatpush1.bf16.msra.mxu0 0
        %3396 = vmatprep.subr.bf16.mxu0 0
        %3397 = vmatpush1.bf16.msra.mxu0 0
        %3398 = vmatprep.subr.bf16.mxu0 0
        %3399 = vmatpush1.bf16.msra.mxu0 0
        %3400 = vmatprep.subr.bf16.mxu0 0
        %3401 = vmatpush1.bf16.msra.mxu0 0
        %3402 = vmatprep.subr.bf16.mxu0 0
        %3403 = vmatpush1.bf16.msra.mxu0 0
        %3404 = vmatprep.subr.bf16.mxu0 0
        %3405 = vmatpush1.bf16.msra.mxu0 0
        %3406 = vmatprep.subr.bf16.mxu0 0
        %3407 = vmatpush1.bf16.msra.mxu0 0
        %3408 = vmatprep.subr.bf16.mxu0 0
        %3409 = vmatpush1.bf16.msra.mxu0 0
        %3410 = vmatprep.subr.bf16.mxu0 0
        %3411 = vmatpush1.bf16.msra.mxu0 0
        %3412 = vmatprep.subr.bf16.mxu0 0
        %3413 = vmatpush1.bf16.msra.mxu0 0
        %3414 = vmatprep.mubr.bf16.mxu0 0
        %3415 = vmatmul.mubr.bf16.gmra.mrb[0].mxu0 %v3380
        %v3416 = vpop.f32.mrb[0].mxu0
        %v3417 = vadd.f32 %v3365, %v3416
        %v3418 = vpop.f32.mrb[0].mxu0
        %v3419 = vpop.f32.mrb[0].mxu0
        %v3420 = vadd.f32 %v3365, %v3419
        %v3421 = vpop.f32.mrb[0].mxu0
        %3422 = vdwg.mxu0
        %v3423 = vpack.c.bf16 %v3420, %v3417
        %v3425 = vunpack.c.l.b16 %v3423
        %v3426 = vunpack.c.h.b16 %v3423
        %v3427 = vpack.c.b16 %v3425, %v3425
        %v3428 = vpack.c.b16 %v3426, %v3426
        %vm3431 = vcmask 257024
        %3432 = vst.msk [vmem:[%s21] sm:$0xf] %vm3431, %v3427
        %vm3433 = vcmask 256000
        %vm3434 = vsmask.f32 2304
        %vm3435 = vmand %vm3433, %vm3434
        %v3436 = vld [vmem:[%s21 + $0x4] sm:$0x7]
        %v3437 = vsel %vm3435, %v3428, %v3436
        %3438 = vst [vmem:[%s21 + $0x4] sm:$0x7] %v3437
        %v3439 = vld [vmem:[%s2106] sm:$0xff]
        %v3440 = vld [vmem:[%s2106 + $0x8] sm:$0x1f]
        %v3441 = vld [vmem:[%s17] sm:$0x1]
        %v3442 = vld [vmem:[%s18] sm:$0x1]
        %v3443 = vsel %vm901, %v3439, 0.0
        %3444 = vadd.xlane.f32.xlu0 %v3443
        %v3445 = vpop.xlane.xlu0 %3444
        %v3446 = vsel %vm905, %v3440, 0.0
        %3447 = vadd.xlane.f32.xlu0 %v3446
        %v3448 = vpop.xlane.xlu0 %3447
        %v3449 = vmul.f32 %v3445, %v909
        %v3450 = vmul.f32 %v3448, %v909
        %v3451 = vsub.f32 %v3439, %v3449
        %v3452 = vsub.f32 %v3440, %v3450
        %v3453 = vmul.f32 %v3451, %v3451
        %v3454 = vmul.f32 %v3452, %v3452
        %v3455 = vsel %vm901, %v3453, 0.0
        %3456 = vadd.xlane.f32.xlu0 %v3455
        %v3457 = vpop.xlane.xlu0 %3456
        %v3458 = vsel %vm905, %v3454, 0.0
        %3459 = vadd.xlane.f32.xlu0 %v3458
        %v3460 = vpop.xlane.xlu0 %3459
        %v3461 = vmul.f32 %v3457, %v909
        %v3462 = vmul.f32 %v3460, %v909
        %v3463 = vadd.f32 %v3461, 1e-05
        %v3464 = vadd.f32 %v3462, 1e-05
        %v3465 = vrsqrt.pop %v3463
        %v3466 = vrsqrt.pop %v3464
        %v3467 = vmul.f32 %v3451, %v3465
        %v3468 = vmul.f32 %v3452, %v3466
        %v3470 = vlaneseq
        %v3471 = vshrl.u32 %v3470, 7
        %v3472 = vsub.s32 0, %v3471
        %v3473 = vrot.slane %v3441, %v3472
        %v3475 = vmul.f32 %v3467, %v3473
        %v3476 = vmul.f32 %v3468, %v3473
        %v3478 = vlaneseq
        %v3479 = vshrl.u32 %v3478, 7
        %v3480 = vsub.s32 0, %v3479
        %v3481 = vrot.slane %v3442, %v3480
        %v3483 = vadd.f32 %v3475, %v3481
        %v3484 = vadd.f32 %v3476, %v3481
        %v3485 = vpack.c.bf16 %v3484, %v3483
        %v3486 = vld [vmem:[%s19] sm:$0xf]
        %v3487 = vld [vmem:[%s19 + $0x4] sm:$0xf]
        %v3488 = vld [vmem:[%s19 + $0x8] sm:$0xf]
        %v3489 = vld [vmem:[%s19 + $0xc] sm:$0xf]
        %v3490 = vld [vmem:[%s20] sm:$0x1]
        %v3492 = vlaneseq
        %v3493 = vshrl.u32 %v3492, 7
        %v3494 = vsub.s32 0, %v3493
        %v3495 = vrot.slane %v3490, %v3494
        %v3501 = vunpack.c.l.b16 %v3486
        %v3502 = vunpack.c.l.b16 %v3487
        %v3503 = vunpack.c.l.b16 %v3488
        %v3504 = vunpack.c.l.b16 %v3489
        %v3505 = vpack.c.b16 %v3502, %v3501
        %v3506 = vpack.c.b16 %v3504, %v3503
        %v3510 = vsel %vm901, %v3485, 0
        %3512 = vmatprep.subr.bf16.mxu0 0
        %3513 = vmatpush1.bf16.msra.mxu0 %v3505
        %3514 = vmatprep.subr.bf16.mxu0 0
        %3515 = vmatpush1.bf16.msra.mxu0 %v3506
        %3516 = vmatprep.subr.bf16.mxu0 0
        %3517 = vmatpush1.bf16.msra.mxu0 0
        %3518 = vmatprep.subr.bf16.mxu0 0
        %3519 = vmatpush1.bf16.msra.mxu0 0
        %3520 = vmatprep.subr.bf16.mxu0 0
        %3521 = vmatpush1.bf16.msra.mxu0 0
        %3522 = vmatprep.subr.bf16.mxu0 0
        %3523 = vmatpush1.bf16.msra.mxu0 0
        %3524 = vmatprep.subr.bf16.mxu0 0
        %3525 = vmatpush1.bf16.msra.mxu0 0
        %3526 = vmatprep.subr.bf16.mxu0 0
        %3527 = vmatpush1.bf16.msra.mxu0 0
        %3528 = vmatprep.subr.bf16.mxu0 0
        %3529 = vmatpush1.bf16.msra.mxu0 0
        %3530 = vmatprep.subr.bf16.mxu0 0
        %3531 = vmatpush1.bf16.msra.mxu0 0
        %3532 = vmatprep.subr.bf16.mxu0 0
        %3533 = vmatpush1.bf16.msra.mxu0 0
        %3534 = vmatprep.subr.bf16.mxu0 0
        %3535 = vmatpush1.bf16.msra.mxu0 0
        %3536 = vmatprep.subr.bf16.mxu0 0
        %3537 = vmatpush1.bf16.msra.mxu0 0
        %3538 = vmatprep.subr.bf16.mxu0 0
        %3539 = vmatpush1.bf16.msra.mxu0 0
        %3540 = vmatprep.subr.bf16.mxu0 0
        %3541 = vmatpush1.bf16.msra.mxu0 0
        %3542 = vmatprep.subr.bf16.mxu0 0
        %3543 = vmatpush1.bf16.msra.mxu0 0
        %3544 = vmatprep.mubr.bf16.mxu0 0
        %3545 = vmatmul.mubr.bf16.gmra.mrb[0].mxu0 %v3510
        %v3546 = vpop.f32.mrb[0].mxu0
        %v3547 = vadd.f32 %v3495, %v3546
        %v3548 = vpop.f32.mrb[0].mxu0
        %v3549 = vpop.f32.mrb[0].mxu0
        %v3550 = vadd.f32 %v3495, %v3549
        %v3551 = vpop.f32.mrb[0].mxu0
        %3552 = vdwg.mxu0
        %v3553 = vpack.c.bf16 %v3550, %v3547
        %v3555 = vunpack.c.l.b16 %v3553
        %v3556 = vunpack.c.h.b16 %v3553
        %v3557 = vpack.c.b16 %v3555, %v3555
        %v3558 = vpack.c.b16 %v3556, %v3556
        %s3561 = scalar_lea.vmem %s21, 8
        %3562 = vst.msk [vmem:[%s3561] sm:$0xf] %vm3431, %v3557
        %v3563 = vld [vmem:[%s3561 + $0x4] sm:$0x7]
        %v3564 = vsel %vm3435, %v3558, %v3563
        %3565 = vst [vmem:[%s3561 + $0x4] sm:$0x7] %v3564
      $region112: #{_lambda_.4} parent=103 // pred_fallthru
        _
      // Predicated region
      $region113: #{_lambda_.4} parent=103 // pred_check
        %p3566 = pneg %p566
      $region114: #{_lambda_.4} parent=103 // pred_check_branch
        %3568 = sbr.rel (%p3566) target = $region116
      $region115: #{_lambda_.4} parent=103 // pred_region
        _
      $region116: #{_lambda_.4} parent=103 // pred_fallthru
        _
      // Predicated region
      $region117: #{_lambda_.4} parent=103 // pred_check
        %p3569 = pneg %p566
      $region118: #{_lambda_.4} parent=103 // pred_check_branch
        %3571 = sbr.rel (%p3569) target = $region120
      $region119: #{_lambda_.4} parent=103 // pred_region
        _
      $region120: #{_lambda_.4} parent=103 // pred_fallthru
        _
    $region104: #{_lambda_.4} parent=5 // pred_fallthru
      _
    %p3572 = scmp.le.s32.totalorder 2, %s27
    // Predicated region
    $region121: #{_lambda_.4} parent=5 // pred_check
      %p3573 = pneg %p3572
    $region122: #{_lambda_.4} parent=5 // pred_check_branch
      %3575 = sbr.rel (%p3573) target = $region124
    $region123: #{_lambda_.4} parent=5 // pred_region
      %s3576 = ssub.s32 %s27, 2
    $region124: #{_lambda_.4} parent=5 // pred_fallthru
      _
  $region6: #{_lambda_.4} parent=0 // loop_footer
    %s31 = sadd.s32 1, %s27
  $region7: #{_lambda_.4} parent=0 // loop_footer_branch
    %26 = sbr.rel target = $region3
  $region8: #{_lambda_.4} parent=0 // loop_exit
    _

// kernel: _lambda_.5
$region0: #{_lambda_.5}
  #allocation0 [shape = 'u32[]', space=smem, size = 0x4, offset = 0x4, fixed_abs, tag = 'smem constant byte address 0x4 - core index']
  #allocation1 [shape = 'u32[144,128]{1,0:T(1,128)}', space=vmem, size = 0x12000, scoped, tag = 'internal scratch']
  #allocation2 [shape = 'f32[2,17,32]{2,1,0:T(8,128)}', space=vmem, size = 0x6000, scoped, tag = 'scratch operand']
  %s0 = inlined_call_operand.vmem [shape: bf16[2,17,32], index: 0, kind: input, shape index: {}]
  %s1 = inlined_call_operand.vmem [shape: f32[1,17,32], index: 1, kind: input, shape index: {}]
  %s2 = inlined_call_operand.vmem [shape: f32[2,1,32], index: 2, kind: input, shape index: {}]
  %s3 = inlined_call_operand.vmem [shape: f32[2,1,32], index: 3, kind: input, shape index: {}]
  %s4 = inlined_call_operand.vmem [shape: bf16[2,32,32], index: 4, kind: input, shape index: {}]
  %s5 = inlined_call_operand.vmem [shape: f32[2,1,32], index: 5, kind: input, shape index: {}]
  %s6 = inlined_call_operand.vmem [shape: bf16[2,32,32], index: 6, kind: input, shape index: {}]
  %s7 = inlined_call_operand.vmem [shape: f32[2,1,32], index: 7, kind: input, shape index: {}]
  %s8 = inlined_call_operand.vmem [shape: bf16[2,32,32], index: 8, kind: input, shape index: {}]
  %s9 = inlined_call_operand.vmem [shape: f32[2,1,32], index: 9, kind: input, shape index: {}]
  %s10 = inlined_call_operand.vmem [shape: bf16[2,32,32], index: 10, kind: input, shape index: {}]
  %s11 = inlined_call_operand.vmem [shape: f32[2,1,32], index: 11, kind: input, shape index: {}]
  %s12 = inlined_call_operand.vmem [shape: f32[2,1,32], index: 12, kind: input, shape index: {}]
  %s13 = inlined_call_operand.vmem [shape: f32[2,1,32], index: 13, kind: input, shape index: {}]
  %s14 = inlined_call_operand.vmem [shape: bf16[2,32,128], index: 14, kind: input, shape index: {}]
  %s15 = inlined_call_operand.vmem [shape: f32[2,1,128], index: 15, kind: input, shape index: {}]
  %s16 = inlined_call_operand.vmem [shape: bf16[2,128,32], index: 16, kind: input, shape index: {}]
  %s17 = inlined_call_operand.vmem [shape: f32[2,1,32], index: 17, kind: input, shape index: {}]
  %s18 = inlined_call_operand.vmem [shape: f32[1,32], index: 18, kind: input, shape index: {}]
  %s19 = inlined_call_operand.vmem [shape: f32[1,32], index: 19, kind: input, shape index: {}]
  %s20 = inlined_call_operand.vmem [shape: bf16[32,16], index: 20, kind: input, shape index: {}]
  %s21 = inlined_call_operand.vmem [shape: f32[1,16], index: 21, kind: input, shape index: {}]
  %s22 = inlined_call_operand.vmem [shape: f32[2,17,16], index: 22, kind: output, shape index: {}]
  %s23 = sld [smem:[#allocation0]]
  $region129: #{_lambda_.5} parent=0
    _
  %s25 = ssub.s32 1, %s23
  %s26 = scalar_select 0, %s25, %s23
  loop: start=0, step=1, limit=4
  $region2: #{_lambda_.5} parent=0 // loop_pre_header
    _
  $region3: #{_lambda_.5} parent=0 // loop_header
    %s28 = sphi 0, %s32
    %p29 = scmp.ge.s32.totalorder %s28, 4
    %s36 = sphi 0, %s36
    %s38 = sphi 0, %s36
    %s39 = sphi 0, %s38
    %s53 = sphi 0, %s39
    %s57 = sphi 0, %s57
    %s59 = sphi 0, %s57
    %s60 = sphi 0, %s59
    %s74 = sphi 0, %s60
    %s80 = sphi 0, %s82
    %s83 = sphi 0, %s80
    %s84 = sphi 0, %s83
    %s100 = sphi 0, %s84
    %s106 = sphi 0, %s108
    %s109 = sphi 0, %s106
    %s110 = sphi 0, %s109
    %s126 = sphi 0, %s110
    %s132 = sphi 0, %s134
    %s135 = sphi 0, %s132
    %s136 = sphi 0, %s135
    %s152 = sphi 0, %s136
    %s158 = sphi 0, %s160
    %s161 = sphi 0, %s158
    %s162 = sphi 0, %s161
    %s178 = sphi 0, %s162
    %s184 = sphi 0, %s186
    %s187 = sphi 0, %s184
    %s188 = sphi 0, %s187
    %s204 = sphi 0, %s188
    %s210 = sphi 0, %s212
    %s213 = sphi 0, %s210
    %s214 = sphi 0, %s213
    %s230 = sphi 0, %s214
    %s236 = sphi 0, %s238
    %s239 = sphi 0, %s236
    %s240 = sphi 0, %s239
    %s256 = sphi 0, %s240
    %s262 = sphi 0, %s264
    %s265 = sphi 0, %s262
    %s266 = sphi 0, %s265
    %s282 = sphi 0, %s266
    %s288 = sphi 0, %s290
    %s291 = sphi 0, %s288
    %s292 = sphi 0, %s291
    %s308 = sphi 0, %s292
    %s314 = sphi 0, %s316
    %s317 = sphi 0, %s314
    %s318 = sphi 0, %s317
    %s334 = sphi 0, %s318
    %s340 = sphi 0, %s342
    %s343 = sphi 0, %s340
    %s344 = sphi 0, %s343
    %s360 = sphi 0, %s344
    %s366 = sphi 0, %s368
    %s369 = sphi 0, %s366
    %s370 = sphi 0, %s369
    %s386 = sphi 0, %s370
    %s392 = sphi 0, %s394
    %s395 = sphi 0, %s392
    %s396 = sphi 0, %s395
    %s412 = sphi 0, %s396
    %s418 = sphi 0, %s420
    %s421 = sphi 0, %s418
    %s422 = sphi 0, %s421
    %s438 = sphi 0, %s422
    %s444 = sphi 0, %s446
    %s447 = sphi 0, %s444
    %s448 = sphi 0, %s447
    %s464 = sphi 0, %s448
    %s470 = sphi 0, %s472
    %s473 = sphi 0, %s470
    %s474 = sphi 0, %s473
    %s490 = sphi 0, %s474
    %s494 = sphi 0, %s494
    %s496 = sphi 0, %s494
    %s497 = sphi 0, %s496
    %s511 = sphi 0, %s497
    %s515 = sphi 0, %s515
    %s517 = sphi 0, %s515
    %s518 = sphi 0, %s517
    %s532 = sphi 0, %s518
    %s536 = sphi 0, %s536
    %s538 = sphi 0, %s536
    %s539 = sphi 0, %s538
    %s553 = sphi 0, %s539
    %s557 = sphi 0, %s557
    %s559 = sphi 0, %s557
    %s560 = sphi 0, %s559
    %s574 = sphi 0, %s560
    %s578 = sphi 0, %s578
    %s580 = sphi 0, %s578
    %s581 = sphi 0, %s580
    %s595 = sphi 0, %s581
  $region4: #{_lambda_.5} parent=0 // loop_header_branch
    %31 = sbr.rel (%p29) target = $region8
  $region5: #{_lambda_.5} parent=0 // loop_body
    %s33 = ssub.s32 %s28, 1
    %s34 = ssub.s32 %s28, 2
    %s35 = sadd.s32 %s28, 1
    %s37 = sadd.s32 %s36, 1
    %p40 = scmp.eq.s32.totalorder %s28, 1
    %p41 = scmp.ne.s32.totalorder %s36, %s38
    %p42 = scmp.eq.s32.totalorder %s28, 0
    %p43 = por %p41, %p42
    %p44 = scmp.ne.s32.totalorder %s36, %s38
    %p45 = scmp.eq.s32.totalorder %s33, 1
    %p46 = por %p44, %p45
    %p47 = scmp.ne.s32.totalorder %s38, %s39
    %p48 = scmp.eq.s32.totalorder %s33, 0
    %p49 = por %p47, %p48
    %p50 = scmp.ne.s32.totalorder %s38, %s39
    %p51 = scmp.eq.s32.totalorder %s34, 1
    %p52 = por %p50, %p51
    %p54 = scmp.ne.s32.totalorder %s39, %s53
    %p55 = scmp.eq.s32.totalorder %s34, 0
    %p56 = por %p54, %p55
    %s58 = sadd.s32 %s57, 1
    %p61 = scmp.eq.s32.totalorder %s28, 1
    %p62 = scmp.ne.s32.totalorder %s57, %s59
    %p63 = scmp.eq.s32.totalorder %s28, 0
    %p64 = por %p62, %p63
    %p65 = scmp.ne.s32.totalorder %s57, %s59
    %p66 = scmp.eq.s32.totalorder %s33, 1
    %p67 = por %p65, %p66
    %p68 = scmp.ne.s32.totalorder %s59, %s60
    %p69 = scmp.eq.s32.totalorder %s33, 0
    %p70 = por %p68, %p69
    %p71 = scmp.ne.s32.totalorder %s59, %s60
    %p72 = scmp.eq.s32.totalorder %s34, 1
    %p73 = por %p71, %p72
    %p75 = scmp.ne.s32.totalorder %s60, %s74
    %p76 = scmp.eq.s32.totalorder %s34, 0
    %p77 = por %p75, %p76
    %s78 = ssub.s32 %s28, %s35
    %p79 = scmp.eq.s32.totalorder %s78, 0
    %s81 = sadd.s32 %s80, 1
    %s82 = scalar_select %p79, %s80, %s81
    %p85 = pneg %p79
    %p86 = scmp.eq.s32.totalorder %s28, 1
    %p87 = por %p85, %p86
    %p88 = scmp.ne.s32.totalorder %s80, %s83
    %p89 = scmp.eq.s32.totalorder %s28, 0
    %p90 = por %p88, %p89
    %p91 = scmp.ne.s32.totalorder %s80, %s83
    %p92 = scmp.eq.s32.totalorder %s33, 1
    %p93 = por %p91, %p92
    %p94 = scmp.ne.s32.totalorder %s83, %s84
    %p95 = scmp.eq.s32.totalorder %s33, 0
    %p96 = por %p94, %p95
    %p97 = scmp.ne.s32.totalorder %s83, %s84
    %p98 = scmp.eq.s32.totalorder %s34, 1
    %p99 = por %p97, %p98
    %p101 = scmp.ne.s32.totalorder %s84, %s100
    %p102 = scmp.eq.s32.totalorder %s34, 0
    %p103 = por %p101, %p102
    %s104 = ssub.s32 %s28, %s35
    %p105 = scmp.eq.s32.totalorder %s104, 0
    %s107 = sadd.s32 %s106, 1
    %s108 = scalar_select %p105, %s106, %s107
    %p111 = pneg %p105
    %p112 = scmp.eq.s32.totalorder %s28, 1
    %p113 = por %p111, %p112
    %p114 = scmp.ne.s32.totalorder %s106, %s109
    %p115 = scmp.eq.s32.totalorder %s28, 0
    %p116 = por %p114, %p115
    %p117 = scmp.ne.s32.totalorder %s106, %s109
    %p118 = scmp.eq.s32.totalorder %s33, 1
    %p119 = por %p117, %p118
    %p120 = scmp.ne.s32.totalorder %s109, %s110
    %p121 = scmp.eq.s32.totalorder %s33, 0
    %p122 = por %p120, %p121
    %p123 = scmp.ne.s32.totalorder %s109, %s110
    %p124 = scmp.eq.s32.totalorder %s34, 1
    %p125 = por %p123, %p124
    %p127 = scmp.ne.s32.totalorder %s110, %s126
    %p128 = scmp.eq.s32.totalorder %s34, 0
    %p129 = por %p127, %p128
    %s130 = ssub.s32 %s28, %s35
    %p131 = scmp.eq.s32.totalorder %s130, 0
    %s133 = sadd.s32 %s132, 1
    %s134 = scalar_select %p131, %s132, %s133
    %p137 = pneg %p131
    %p138 = scmp.eq.s32.totalorder %s28, 1
    %p139 = por %p137, %p138
    %p140 = scmp.ne.s32.totalorder %s132, %s135
    %p141 = scmp.eq.s32.totalorder %s28, 0
    %p142 = por %p140, %p141
    %p143 = scmp.ne.s32.totalorder %s132, %s135
    %p144 = scmp.eq.s32.totalorder %s33, 1
    %p145 = por %p143, %p144
    %p146 = scmp.ne.s32.totalorder %s135, %s136
    %p147 = scmp.eq.s32.totalorder %s33, 0
    %p148 = por %p146, %p147
    %p149 = scmp.ne.s32.totalorder %s135, %s136
    %p150 = scmp.eq.s32.totalorder %s34, 1
    %p151 = por %p149, %p150
    %p153 = scmp.ne.s32.totalorder %s136, %s152
    %p154 = scmp.eq.s32.totalorder %s34, 0
    %p155 = por %p153, %p154
    %s156 = ssub.s32 %s28, %s35
    %p157 = scmp.eq.s32.totalorder %s156, 0
    %s159 = sadd.s32 %s158, 1
    %s160 = scalar_select %p157, %s158, %s159
    %p163 = pneg %p157
    %p164 = scmp.eq.s32.totalorder %s28, 1
    %p165 = por %p163, %p164
    %p166 = scmp.ne.s32.totalorder %s158, %s161
    %p167 = scmp.eq.s32.totalorder %s28, 0
    %p168 = por %p166, %p167
    %p169 = scmp.ne.s32.totalorder %s158, %s161
    %p170 = scmp.eq.s32.totalorder %s33, 1
    %p171 = por %p169, %p170
    %p172 = scmp.ne.s32.totalorder %s161, %s162
    %p173 = scmp.eq.s32.totalorder %s33, 0
    %p174 = por %p172, %p173
    %p175 = scmp.ne.s32.totalorder %s161, %s162
    %p176 = scmp.eq.s32.totalorder %s34, 1
    %p177 = por %p175, %p176
    %p179 = scmp.ne.s32.totalorder %s162, %s178
    %p180 = scmp.eq.s32.totalorder %s34, 0
    %p181 = por %p179, %p180
    %s182 = ssub.s32 %s28, %s35
    %p183 = scmp.eq.s32.totalorder %s182, 0
    %s185 = sadd.s32 %s184, 1
    %s186 = scalar_select %p183, %s184, %s185
    %p189 = pneg %p183
    %p190 = scmp.eq.s32.totalorder %s28, 1
    %p191 = por %p189, %p190
    %p192 = scmp.ne.s32.totalorder %s184, %s187
    %p193 = scmp.eq.s32.totalorder %s28, 0
    %p194 = por %p192, %p193
    %p195 = scmp.ne.s32.totalorder %s184, %s187
    %p196 = scmp.eq.s32.totalorder %s33, 1
    %p197 = por %p195, %p196
    %p198 = scmp.ne.s32.totalorder %s187, %s188
    %p199 = scmp.eq.s32.totalorder %s33, 0
    %p200 = por %p198, %p199
    %p201 = scmp.ne.s32.totalorder %s187, %s188
    %p202 = scmp.eq.s32.totalorder %s34, 1
    %p203 = por %p201, %p202
    %p205 = scmp.ne.s32.totalorder %s188, %s204
    %p206 = scmp.eq.s32.totalorder %s34, 0
    %p207 = por %p205, %p206
    %s208 = ssub.s32 %s28, %s35
    %p209 = scmp.eq.s32.totalorder %s208, 0
    %s211 = sadd.s32 %s210, 1
    %s212 = scalar_select %p209, %s210, %s211
    %p215 = pneg %p209
    %p216 = scmp.eq.s32.totalorder %s28, 1
    %p217 = por %p215, %p216
    %p218 = scmp.ne.s32.totalorder %s210, %s213
    %p219 = scmp.eq.s32.totalorder %s28, 0
    %p220 = por %p218, %p219
    %p221 = scmp.ne.s32.totalorder %s210, %s213
    %p222 = scmp.eq.s32.totalorder %s33, 1
    %p223 = por %p221, %p222
    %p224 = scmp.ne.s32.totalorder %s213, %s214
    %p225 = scmp.eq.s32.totalorder %s33, 0
    %p226 = por %p224, %p225
    %p227 = scmp.ne.s32.totalorder %s213, %s214
    %p228 = scmp.eq.s32.totalorder %s34, 1
    %p229 = por %p227, %p228
    %p231 = scmp.ne.s32.totalorder %s214, %s230
    %p232 = scmp.eq.s32.totalorder %s34, 0
    %p233 = por %p231, %p232
    %s234 = ssub.s32 %s28, %s35
    %p235 = scmp.eq.s32.totalorder %s234, 0
    %s237 = sadd.s32 %s236, 1
    %s238 = scalar_select %p235, %s236, %s237
    %p241 = pneg %p235
    %p242 = scmp.eq.s32.totalorder %s28, 1
    %p243 = por %p241, %p242
    %p244 = scmp.ne.s32.totalorder %s236, %s239
    %p245 = scmp.eq.s32.totalorder %s28, 0
    %p246 = por %p244, %p245
    %p247 = scmp.ne.s32.totalorder %s236, %s239
    %p248 = scmp.eq.s32.totalorder %s33, 1
    %p249 = por %p247, %p248
    %p250 = scmp.ne.s32.totalorder %s239, %s240
    %p251 = scmp.eq.s32.totalorder %s33, 0
    %p252 = por %p250, %p251
    %p253 = scmp.ne.s32.totalorder %s239, %s240
    %p254 = scmp.eq.s32.totalorder %s34, 1
    %p255 = por %p253, %p254
    %p257 = scmp.ne.s32.totalorder %s240, %s256
    %p258 = scmp.eq.s32.totalorder %s34, 0
    %p259 = por %p257, %p258
    %s260 = ssub.s32 %s28, %s35
    %p261 = scmp.eq.s32.totalorder %s260, 0
    %s263 = sadd.s32 %s262, 1
    %s264 = scalar_select %p261, %s262, %s263
    %p267 = pneg %p261
    %p268 = scmp.eq.s32.totalorder %s28, 1
    %p269 = por %p267, %p268
    %p270 = scmp.ne.s32.totalorder %s262, %s265
    %p271 = scmp.eq.s32.totalorder %s28, 0
    %p272 = por %p270, %p271
    %p273 = scmp.ne.s32.totalorder %s262, %s265
    %p274 = scmp.eq.s32.totalorder %s33, 1
    %p275 = por %p273, %p274
    %p276 = scmp.ne.s32.totalorder %s265, %s266
    %p277 = scmp.eq.s32.totalorder %s33, 0
    %p278 = por %p276, %p277
    %p279 = scmp.ne.s32.totalorder %s265, %s266
    %p280 = scmp.eq.s32.totalorder %s34, 1
    %p281 = por %p279, %p280
    %p283 = scmp.ne.s32.totalorder %s266, %s282
    %p284 = scmp.eq.s32.totalorder %s34, 0
    %p285 = por %p283, %p284
    %s286 = ssub.s32 %s28, %s35
    %p287 = scmp.eq.s32.totalorder %s286, 0
    %s289 = sadd.s32 %s288, 1
    %s290 = scalar_select %p287, %s288, %s289
    %p293 = pneg %p287
    %p294 = scmp.eq.s32.totalorder %s28, 1
    %p295 = por %p293, %p294
    %p296 = scmp.ne.s32.totalorder %s288, %s291
    %p297 = scmp.eq.s32.totalorder %s28, 0
    %p298 = por %p296, %p297
    %p299 = scmp.ne.s32.totalorder %s288, %s291
    %p300 = scmp.eq.s32.totalorder %s33, 1
    %p301 = por %p299, %p300
    %p302 = scmp.ne.s32.totalorder %s291, %s292
    %p303 = scmp.eq.s32.totalorder %s33, 0
    %p304 = por %p302, %p303
    %p305 = scmp.ne.s32.totalorder %s291, %s292
    %p306 = scmp.eq.s32.totalorder %s34, 1
    %p307 = por %p305, %p306
    %p309 = scmp.ne.s32.totalorder %s292, %s308
    %p310 = scmp.eq.s32.totalorder %s34, 0
    %p311 = por %p309, %p310
    %s312 = ssub.s32 %s28, %s35
    %p313 = scmp.eq.s32.totalorder %s312, 0
    %s315 = sadd.s32 %s314, 1
    %s316 = scalar_select %p313, %s314, %s315
    %p319 = pneg %p313
    %p320 = scmp.eq.s32.totalorder %s28, 1
    %p321 = por %p319, %p320
    %p322 = scmp.ne.s32.totalorder %s314, %s317
    %p323 = scmp.eq.s32.totalorder %s28, 0
    %p324 = por %p322, %p323
    %p325 = scmp.ne.s32.totalorder %s314, %s317
    %p326 = scmp.eq.s32.totalorder %s33, 1
    %p327 = por %p325, %p326
    %p328 = scmp.ne.s32.totalorder %s317, %s318
    %p329 = scmp.eq.s32.totalorder %s33, 0
    %p330 = por %p328, %p329
    %p331 = scmp.ne.s32.totalorder %s317, %s318
    %p332 = scmp.eq.s32.totalorder %s34, 1
    %p333 = por %p331, %p332
    %p335 = scmp.ne.s32.totalorder %s318, %s334
    %p336 = scmp.eq.s32.totalorder %s34, 0
    %p337 = por %p335, %p336
    %s338 = ssub.s32 %s28, %s35
    %p339 = scmp.eq.s32.totalorder %s338, 0
    %s341 = sadd.s32 %s340, 1
    %s342 = scalar_select %p339, %s340, %s341
    %p345 = pneg %p339
    %p346 = scmp.eq.s32.totalorder %s28, 1
    %p347 = por %p345, %p346
    %p348 = scmp.ne.s32.totalorder %s340, %s343
    %p349 = scmp.eq.s32.totalorder %s28, 0
    %p350 = por %p348, %p349
    %p351 = scmp.ne.s32.totalorder %s340, %s343
    %p352 = scmp.eq.s32.totalorder %s33, 1
    %p353 = por %p351, %p352
    %p354 = scmp.ne.s32.totalorder %s343, %s344
    %p355 = scmp.eq.s32.totalorder %s33, 0
    %p356 = por %p354, %p355
    %p357 = scmp.ne.s32.totalorder %s343, %s344
    %p358 = scmp.eq.s32.totalorder %s34, 1
    %p359 = por %p357, %p358
    %p361 = scmp.ne.s32.totalorder %s344, %s360
    %p362 = scmp.eq.s32.totalorder %s34, 0
    %p363 = por %p361, %p362
    %s364 = ssub.s32 %s28, %s35
    %p365 = scmp.eq.s32.totalorder %s364, 0
    %s367 = sadd.s32 %s366, 1
    %s368 = scalar_select %p365, %s366, %s367
    %p371 = pneg %p365
    %p372 = scmp.eq.s32.totalorder %s28, 1
    %p373 = por %p371, %p372
    %p374 = scmp.ne.s32.totalorder %s366, %s369
    %p375 = scmp.eq.s32.totalorder %s28, 0
    %p376 = por %p374, %p375
    %p377 = scmp.ne.s32.totalorder %s366, %s369
    %p378 = scmp.eq.s32.totalorder %s33, 1
    %p379 = por %p377, %p378
    %p380 = scmp.ne.s32.totalorder %s369, %s370
    %p381 = scmp.eq.s32.totalorder %s33, 0
    %p382 = por %p380, %p381
    %p383 = scmp.ne.s32.totalorder %s369, %s370
    %p384 = scmp.eq.s32.totalorder %s34, 1
    %p385 = por %p383, %p384
    %p387 = scmp.ne.s32.totalorder %s370, %s386
    %p388 = scmp.eq.s32.totalorder %s34, 0
    %p389 = por %p387, %p388
    %s390 = ssub.s32 %s28, %s35
    %p391 = scmp.eq.s32.totalorder %s390, 0
    %s393 = sadd.s32 %s392, 1
    %s394 = scalar_select %p391, %s392, %s393
    %p397 = pneg %p391
    %p398 = scmp.eq.s32.totalorder %s28, 1
    %p399 = por %p397, %p398
    %p400 = scmp.ne.s32.totalorder %s392, %s395
    %p401 = scmp.eq.s32.totalorder %s28, 0
    %p402 = por %p400, %p401
    %p403 = scmp.ne.s32.totalorder %s392, %s395
    %p404 = scmp.eq.s32.totalorder %s33, 1
    %p405 = por %p403, %p404
    %p406 = scmp.ne.s32.totalorder %s395, %s396
    %p407 = scmp.eq.s32.totalorder %s33, 0
    %p408 = por %p406, %p407
    %p409 = scmp.ne.s32.totalorder %s395, %s396
    %p410 = scmp.eq.s32.totalorder %s34, 1
    %p411 = por %p409, %p410
    %p413 = scmp.ne.s32.totalorder %s396, %s412
    %p414 = scmp.eq.s32.totalorder %s34, 0
    %p415 = por %p413, %p414
    %s416 = ssub.s32 %s28, %s35
    %p417 = scmp.eq.s32.totalorder %s416, 0
    %s419 = sadd.s32 %s418, 1
    %s420 = scalar_select %p417, %s418, %s419
    %p423 = pneg %p417
    %p424 = scmp.eq.s32.totalorder %s28, 1
    %p425 = por %p423, %p424
    %p426 = scmp.ne.s32.totalorder %s418, %s421
    %p427 = scmp.eq.s32.totalorder %s28, 0
    %p428 = por %p426, %p427
    %p429 = scmp.ne.s32.totalorder %s418, %s421
    %p430 = scmp.eq.s32.totalorder %s33, 1
    %p431 = por %p429, %p430
    %p432 = scmp.ne.s32.totalorder %s421, %s422
    %p433 = scmp.eq.s32.totalorder %s33, 0
    %p434 = por %p432, %p433
    %p435 = scmp.ne.s32.totalorder %s421, %s422
    %p436 = scmp.eq.s32.totalorder %s34, 1
    %p437 = por %p435, %p436
    %p439 = scmp.ne.s32.totalorder %s422, %s438
    %p440 = scmp.eq.s32.totalorder %s34, 0
    %p441 = por %p439, %p440
    %s442 = ssub.s32 %s28, %s35
    %p443 = scmp.eq.s32.totalorder %s442, 0
    %s445 = sadd.s32 %s444, 1
    %s446 = scalar_select %p443, %s444, %s445
    %p449 = pneg %p443
    %p450 = scmp.eq.s32.totalorder %s28, 1
    %p451 = por %p449, %p450
    %p452 = scmp.ne.s32.totalorder %s444, %s447
    %p453 = scmp.eq.s32.totalorder %s28, 0
    %p454 = por %p452, %p453
    %p455 = scmp.ne.s32.totalorder %s444, %s447
    %p456 = scmp.eq.s32.totalorder %s33, 1
    %p457 = por %p455, %p456
    %p458 = scmp.ne.s32.totalorder %s447, %s448
    %p459 = scmp.eq.s32.totalorder %s33, 0
    %p460 = por %p458, %p459
    %p461 = scmp.ne.s32.totalorder %s447, %s448
    %p462 = scmp.eq.s32.totalorder %s34, 1
    %p463 = por %p461, %p462
    %p465 = scmp.ne.s32.totalorder %s448, %s464
    %p466 = scmp.eq.s32.totalorder %s34, 0
    %p467 = por %p465, %p466
    %s468 = ssub.s32 %s28, %s35
    %p469 = scmp.eq.s32.totalorder %s468, 0
    %s471 = sadd.s32 %s470, 1
    %s472 = scalar_select %p469, %s470, %s471
    %p475 = pneg %p469
    %p476 = scmp.eq.s32.totalorder %s28, 1
    %p477 = por %p475, %p476
    %p478 = scmp.ne.s32.totalorder %s470, %s473
    %p479 = scmp.eq.s32.totalorder %s28, 0
    %p480 = por %p478, %p479
    %p481 = scmp.ne.s32.totalorder %s470, %s473
    %p482 = scmp.eq.s32.totalorder %s33, 1
    %p483 = por %p481, %p482
    %p484 = scmp.ne.s32.totalorder %s473, %s474
    %p485 = scmp.eq.s32.totalorder %s33, 0
    %p486 = por %p484, %p485
    %p487 = scmp.ne.s32.totalorder %s473, %s474
    %p488 = scmp.eq.s32.totalorder %s34, 1
    %p489 = por %p487, %p488
    %p491 = scmp.ne.s32.totalorder %s474, %s490
    %p492 = scmp.eq.s32.totalorder %s34, 0
    %p493 = por %p491, %p492
    %s495 = sadd.s32 %s494, 1
    %p498 = scmp.eq.s32.totalorder %s28, 1
    %p499 = scmp.ne.s32.totalorder %s494, %s496
    %p500 = scmp.eq.s32.totalorder %s28, 0
    %p501 = por %p499, %p500
    %p502 = scmp.ne.s32.totalorder %s494, %s496
    %p503 = scmp.eq.s32.totalorder %s33, 1
    %p504 = por %p502, %p503
    %p505 = scmp.ne.s32.totalorder %s496, %s497
    %p506 = scmp.eq.s32.totalorder %s33, 0
    %p507 = por %p505, %p506
    %p508 = scmp.ne.s32.totalorder %s496, %s497
    %p509 = scmp.eq.s32.totalorder %s34, 1
    %p510 = por %p508, %p509
    %p512 = scmp.ne.s32.totalorder %s497, %s511
    %p513 = scmp.eq.s32.totalorder %s34, 0
    %p514 = por %p512, %p513
    %s516 = sadd.s32 %s515, 1
    %p519 = scmp.eq.s32.totalorder %s28, 1
    %p520 = scmp.ne.s32.totalorder %s515, %s517
    %p521 = scmp.eq.s32.totalorder %s28, 0
    %p522 = por %p520, %p521
    %p523 = scmp.ne.s32.totalorder %s515, %s517
    %p524 = scmp.eq.s32.totalorder %s33, 1
    %p525 = por %p523, %p524
    %p526 = scmp.ne.s32.totalorder %s517, %s518
    %p527 = scmp.eq.s32.totalorder %s33, 0
    %p528 = por %p526, %p527
    %p529 = scmp.ne.s32.totalorder %s517, %s518
    %p530 = scmp.eq.s32.totalorder %s34, 1
    %p531 = por %p529, %p530
    %p533 = scmp.ne.s32.totalorder %s518, %s532
    %p534 = scmp.eq.s32.totalorder %s34, 0
    %p535 = por %p533, %p534
    %s537 = sadd.s32 %s536, 1
    %p540 = scmp.eq.s32.totalorder %s28, 1
    %p541 = scmp.ne.s32.totalorder %s536, %s538
    %p542 = scmp.eq.s32.totalorder %s28, 0
    %p543 = por %p541, %p542
    %p544 = scmp.ne.s32.totalorder %s536, %s538
    %p545 = scmp.eq.s32.totalorder %s33, 1
    %p546 = por %p544, %p545
    %p547 = scmp.ne.s32.totalorder %s538, %s539
    %p548 = scmp.eq.s32.totalorder %s33, 0
    %p549 = por %p547, %p548
    %p550 = scmp.ne.s32.totalorder %s538, %s539
    %p551 = scmp.eq.s32.totalorder %s34, 1
    %p552 = por %p550, %p551
    %p554 = scmp.ne.s32.totalorder %s539, %s553
    %p555 = scmp.eq.s32.totalorder %s34, 0
    %p556 = por %p554, %p555
    %s558 = sadd.s32 %s557, 1
    %p561 = scmp.eq.s32.totalorder %s28, 1
    %p562 = scmp.ne.s32.totalorder %s557, %s559
    %p563 = scmp.eq.s32.totalorder %s28, 0
    %p564 = por %p562, %p563
    %p565 = scmp.ne.s32.totalorder %s557, %s559
    %p566 = scmp.eq.s32.totalorder %s33, 1
    %p567 = por %p565, %p566
    %p568 = scmp.ne.s32.totalorder %s559, %s560
    %p569 = scmp.eq.s32.totalorder %s33, 0
    %p570 = por %p568, %p569
    %p571 = scmp.ne.s32.totalorder %s559, %s560
    %p572 = scmp.eq.s32.totalorder %s34, 1
    %p573 = por %p571, %p572
    %p575 = scmp.ne.s32.totalorder %s560, %s574
    %p576 = scmp.eq.s32.totalorder %s34, 0
    %p577 = por %p575, %p576
    %s579 = sadd.s32 %s578, 1
    %p582 = scmp.eq.s32.totalorder %s28, 1
    %p583 = scmp.ne.s32.totalorder %s578, %s580
    %p584 = scmp.eq.s32.totalorder %s28, 0
    %p585 = por %p583, %p584
    %p586 = scmp.ne.s32.totalorder %s578, %s580
    %p587 = scmp.eq.s32.totalorder %s33, 1
    %p588 = por %p586, %p587
    %p589 = scmp.ne.s32.totalorder %s580, %s581
    %p590 = scmp.eq.s32.totalorder %s33, 0
    %p591 = por %p589, %p590
    %p592 = scmp.ne.s32.totalorder %s580, %s581
    %p593 = scmp.eq.s32.totalorder %s34, 1
    %p594 = por %p592, %p593
    %p596 = scmp.ne.s32.totalorder %s581, %s595
    %p597 = scmp.eq.s32.totalorder %s34, 0
    %p598 = por %p596, %p597
    %p599 = scmp.le.s32.totalorder 1, %s28
    %p600 = scmp.lt.s32.totalorder %s28, 3
    %p601 = pnand %p599, %p600
    %p602 = pneg %p601
    // Predicated region
    $region9: #{_lambda_.5} parent=5 // pred_check
      _
    $region10: #{_lambda_.5} parent=5 // pred_check_branch
      %604 = sbr.rel (%p601) target = $region12
    $region11: #{_lambda_.5} parent=5 // pred_region
      %s605 = ssub.s32 %s28, 1
      // Predicated region
      $region13: #{_lambda_.5} parent=11 // pred_check
        %p606 = pneg %p49
      $region14: #{_lambda_.5} parent=11 // pred_check_branch
        %608 = sbr.rel (%p606) target = $region16
      $region15: #{_lambda_.5} parent=11 // pred_region
        _
      $region16: #{_lambda_.5} parent=11 // pred_fallthru
        _
      // Predicated region
      $region17: #{_lambda_.5} parent=11 // pred_check
        %p609 = pneg %p70
      $region18: #{_lambda_.5} parent=11 // pred_check_branch
        %611 = sbr.rel (%p609) target = $region20
      $region19: #{_lambda_.5} parent=11 // pred_region
        _
      $region20: #{_lambda_.5} parent=11 // pred_fallthru
        _
      // Predicated region
      $region21: #{_lambda_.5} parent=11 // pred_check
        %p612 = pneg %p507
      $region22: #{_lambda_.5} parent=11 // pred_check_branch
        %614 = sbr.rel (%p612) target = $region24
      $region23: #{_lambda_.5} parent=11 // pred_region
        _
      $region24: #{_lambda_.5} parent=11 // pred_fallthru
        _
      // Predicated region
      $region25: #{_lambda_.5} parent=11 // pred_check
        %p615 = pneg %p528
      $region26: #{_lambda_.5} parent=11 // pred_check_branch
        %617 = sbr.rel (%p615) target = $region28
      $region27: #{_lambda_.5} parent=11 // pred_region
        _
      $region28: #{_lambda_.5} parent=11 // pred_fallthru
        _
      // Predicated region
      $region29: #{_lambda_.5} parent=11 // pred_check
        %p618 = pneg %p549
      $region30: #{_lambda_.5} parent=11 // pred_check_branch
        %620 = sbr.rel (%p618) target = $region32
      $region31: #{_lambda_.5} parent=11 // pred_region
        _
      $region32: #{_lambda_.5} parent=11 // pred_fallthru
        _
      // Predicated region
      $region33: #{_lambda_.5} parent=11 // pred_check
        %p621 = pneg %p570
      $region34: #{_lambda_.5} parent=11 // pred_check_branch
        %623 = sbr.rel (%p621) target = $region36
      $region35: #{_lambda_.5} parent=11 // pred_region
        _
      $region36: #{_lambda_.5} parent=11 // pred_fallthru
        _
    $region12: #{_lambda_.5} parent=5 // pred_fallthru
      _
    %p624 = scmp.lt.s32.totalorder %s28, 2
    // Predicated region
    $region37: #{_lambda_.5} parent=5 // pred_check
      %p625 = pneg %p624
    $region38: #{_lambda_.5} parent=5 // pred_check_branch
      %627 = sbr.rel (%p625) target = $region40
    $region39: #{_lambda_.5} parent=5 // pred_region
      // Predicated region
      $region41: #{_lambda_.5} parent=39 // pred_check
        %p628 = pneg %p90
      $region42: #{_lambda_.5} parent=39 // pred_check_branch
        %630 = sbr.rel (%p628) target = $region44
      $region43: #{_lambda_.5} parent=39 // pred_region
        %p631 = scmp.lt.s32.totalorder %s28, 1
        %s632 = scalar_select %p631, %s28, 1
        %s633 = scalar_lea.vmem %s2, %s632
      $region44: #{_lambda_.5} parent=39 // pred_fallthru
        _
      // Predicated region
      $region45: #{_lambda_.5} parent=39 // pred_check
        %p634 = pneg %p116
      $region46: #{_lambda_.5} parent=39 // pred_check_branch
        %636 = sbr.rel (%p634) target = $region48
      $region47: #{_lambda_.5} parent=39 // pred_region
        %p637 = scmp.lt.s32.totalorder %s28, 1
        %s638 = scalar_select %p637, %s28, 1
        %s639 = scalar_lea.vmem %s3, %s638
      $region48: #{_lambda_.5} parent=39 // pred_fallthru
        _
      // Predicated region
      $region49: #{_lambda_.5} parent=39 // pred_check
        %p640 = pneg %p142
      $region50: #{_lambda_.5} parent=39 // pred_check_branch
        %642 = sbr.rel (%p640) target = $region52
      $region51: #{_lambda_.5} parent=39 // pred_region
        %p643 = scmp.lt.s32.totalorder %s28, 1
        %s644 = scalar_select %p643, %s28, 1
        %s645 = smul.addr %s644, 4
        %s646 = smul.addr %s645, 4
        %s647 = scalar_lea.vmem %s4, %s646
      $region52: #{_lambda_.5} parent=39 // pred_fallthru
        _
      // Predicated region
      $region53: #{_lambda_.5} parent=39 // pred_check
        %p648 = pneg %p168
      $region54: #{_lambda_.5} parent=39 // pred_check_branch
        %650 = sbr.rel (%p648) target = $region56
      $region55: #{_lambda_.5} parent=39 // pred_region
        %p651 = scmp.lt.s32.totalorder %s28, 1
        %s652 = scalar_select %p651, %s28, 1
        %s653 = scalar_lea.vmem %s5, %s652
      $region56: #{_lambda_.5} parent=39 // pred_fallthru
        _
      // Predicated region
      $region57: #{_lambda_.5} parent=39 // pred_check
        %p654 = pneg %p194
      $region58: #{_lambda_.5} parent=39 // pred_check_branch
        %656 = sbr.rel (%p654) target = $region60
      $region59: #{_lambda_.5} parent=39 // pred_region
        %p657 = scmp.lt.s32.totalorder %s28, 1
        %s658 = scalar_select %p657, %s28, 1
        %s659 = smul.addr %s658, 4
        %s660 = smul.addr %s659, 4
        %s661 = scalar_lea.vmem %s6, %s660
      $region60: #{_lambda_.5} parent=39 // pred_fallthru
        _
      // Predicated region
      $region61: #{_lambda_.5} parent=39 // pred_check
        %p662 = pneg %p220
      $region62: #{_lambda_.5} parent=39 // pred_check_branch
        %664 = sbr.rel (%p662) target = $region64
      $region63: #{_lambda_.5} parent=39 // pred_region
        %p665 = scmp.lt.s32.totalorder %s28, 1
        %s666 = scalar_select %p665, %s28, 1
        %s667 = scalar_lea.vmem %s7, %s666
      $region64: #{_lambda_.5} parent=39 // pred_fallthru
        _
      // Predicated region
      $region65: #{_lambda_.5} parent=39 // pred_check
        %p668 = pneg %p246
      $region66: #{_lambda_.5} parent=39 // pred_check_branch
        %670 = sbr.rel (%p668) target = $region68
      $region67: #{_lambda_.5} parent=39 // pred_region
        %p671 = scmp.lt.s32.totalorder %s28, 1
        %s672 = scalar_select %p671, %s28, 1
        %s673 = smul.addr %s672, 4
        %s674 = smul.addr %s673, 4
        %s675 = scalar_lea.vmem %s8, %s674
      $region68: #{_lambda_.5} parent=39 // pred_fallthru
        _
      // Predicated region
      $region69: #{_lambda_.5} parent=39 // pred_check
        %p676 = pneg %p272
      $region70: #{_lambda_.5} parent=39 // pred_check_branch
        %678 = sbr.rel (%p676) target = $region72
      $region71: #{_lambda_.5} parent=39 // pred_region
        %p679 = scmp.lt.s32.totalorder %s28, 1
        %s680 = scalar_select %p679, %s28, 1
        %s681 = scalar_lea.vmem %s9, %s680
      $region72: #{_lambda_.5} parent=39 // pred_fallthru
        _
      // Predicated region
      $region73: #{_lambda_.5} parent=39 // pred_check
        %p682 = pneg %p298
      $region74: #{_lambda_.5} parent=39 // pred_check_branch
        %684 = sbr.rel (%p682) target = $region76
      $region75: #{_lambda_.5} parent=39 // pred_region
        %p685 = scmp.lt.s32.totalorder %s28, 1
        %s686 = scalar_select %p685, %s28, 1
        %s687 = smul.addr %s686, 4
        %s688 = smul.addr %s687, 4
        %s689 = scalar_lea.vmem %s10, %s688
      $region76: #{_lambda_.5} parent=39 // pred_fallthru
        _
      // Predicated region
      $region77: #{_lambda_.5} parent=39 // pred_check
        %p690 = pneg %p324
      $region78: #{_lambda_.5} parent=39 // pred_check_branch
        %692 = sbr.rel (%p690) target = $region80
      $region79: #{_lambda_.5} parent=39 // pred_region
        %p693 = scmp.lt.s32.totalorder %s28, 1
        %s694 = scalar_select %p693, %s28, 1
        %s695 = scalar_lea.vmem %s11, %s694
      $region80: #{_lambda_.5} parent=39 // pred_fallthru
        _
      // Predicated region
      $region81: #{_lambda_.5} parent=39 // pred_check
        %p696 = pneg %p350
      $region82: #{_lambda_.5} parent=39 // pred_check_branch
        %698 = sbr.rel (%p696) target = $region84
      $region83: #{_lambda_.5} parent=39 // pred_region
        %p699 = scmp.lt.s32.totalorder %s28, 1
        %s700 = scalar_select %p699, %s28, 1
        %s701 = scalar_lea.vmem %s12, %s700
      $region84: #{_lambda_.5} parent=39 // pred_fallthru
        _
      // Predicated region
      $region85: #{_lambda_.5} parent=39 // pred_check
        %p702 = pneg %p376
      $region86: #{_lambda_.5} parent=39 // pred_check_branch
        %704 = sbr.rel (%p702) target = $region88
      $region87: #{_lambda_.5} parent=39 // pred_region
        %p705 = scmp.lt.s32.totalorder %s28, 1
        %s706 = scalar_select %p705, %s28, 1
        %s707 = scalar_lea.vmem %s13, %s706
      $region88: #{_lambda_.5} parent=39 // pred_fallthru
        _
      // Predicated region
      $region89: #{_lambda_.5} parent=39 // pred_check
        %p708 = pneg %p402
      $region90: #{_lambda_.5} parent=39 // pred_check_branch
        %710 = sbr.rel (%p708) target = $region92
      $region91: #{_lambda_.5} parent=39 // pred_region
        %p711 = scmp.lt.s32.totalorder %s28, 1
        %s712 = scalar_select %p711, %s28, 1
        %s713 = smul.addr %s712, 4
        %s714 = smul.addr %s713, 4
        %s715 = scalar_lea.vmem %s14, %s714
      $region92: #{_lambda_.5} parent=39 // pred_fallthru
        _
      // Predicated region
      $region93: #{_lambda_.5} parent=39 // pred_check
        %p716 = pneg %p428
      $region94: #{_lambda_.5} parent=39 // pred_check_branch
        %718 = sbr.rel (%p716) target = $region96
      $region95: #{_lambda_.5} parent=39 // pred_region
        %p719 = scmp.lt.s32.totalorder %s28, 1
        %s720 = scalar_select %p719, %s28, 1
        %s721 = scalar_lea.vmem %s15, %s720
      $region96: #{_lambda_.5} parent=39 // pred_fallthru
        _
      // Predicated region
      $region97: #{_lambda_.5} parent=39 // pred_check
        %p722 = pneg %p454
      $region98: #{_lambda_.5} parent=39 // pred_check_branch
        %724 = sbr.rel (%p722) target = $region100
      $region99: #{_lambda_.5} parent=39 // pred_region
        %p725 = scmp.lt.s32.totalorder %s28, 1
        %s726 = scalar_select %p725, %s28, 1
        %s727 = smul.addr %s726, 16
        %s728 = smul.addr %s727, 4
        %s729 = scalar_lea.vmem %s16, %s728
      $region100: #{_lambda_.5} parent=39 // pred_fallthru
        _
      // Predicated region
      $region101: #{_lambda_.5} parent=39 // pred_check
        %p730 = pneg %p480
      $region102: #{_lambda_.5} parent=39 // pred_check_branch
        %732 = sbr.rel (%p730) target = $region104
      $region103: #{_lambda_.5} parent=39 // pred_region
        %p733 = scmp.lt.s32.totalorder %s28, 1
        %s734 = scalar_select %p733, %s28, 1
        %s735 = scalar_lea.vmem %s17, %s734
      $region104: #{_lambda_.5} parent=39 // pred_fallthru
        _
    $region40: #{_lambda_.5} parent=5 // pred_fallthru
      _
    %p736 = scmp.le.s32.totalorder 1, %s28
    %p737 = scmp.lt.s32.totalorder %s28, 3
    %p738 = pnand %p736, %p737
    %p739 = pneg %p738
    // Predicated region
    $region105: #{_lambda_.5} parent=5 // pred_check
      _
    $region106: #{_lambda_.5} parent=5 // pred_check_branch
      %741 = sbr.rel (%p738) target = $region108
    $region107: #{_lambda_.5} parent=5 // pred_region
      %s742 = ssub.s32 %s28, 1
      %p743 = pneg %p49
      %p744 = pneg %p46
      %p745 = pneg %p70
      %p746 = pneg %p67
      %p747 = scmp.lt.s32.totalorder %s33, 1
      %s748 = scalar_select %p747, %s33, 1
      %s749 = scalar_lea.vmem %s2, %s748
      %p750 = pneg %p96
      %p751 = pneg %p93
      %p752 = scmp.lt.s32.totalorder %s33, 1
      %s753 = scalar_select %p752, %s33, 1
      %s754 = scalar_lea.vmem %s3, %s753
      %p755 = pneg %p122
      %p756 = pneg %p119
      %p757 = scmp.lt.s32.totalorder %s33, 1
      %s758 = scalar_select %p757, %s33, 1
      %s759 = smul.addr %s758, 4
      %s760 = smul.addr %s759, 4
      %s761 = scalar_lea.vmem %s4, %s760
      %p762 = pneg %p148
      %p763 = pneg %p145
      %p764 = scmp.lt.s32.totalorder %s33, 1
      %s765 = scalar_select %p764, %s33, 1
      %s766 = scalar_lea.vmem %s5, %s765
      %p767 = pneg %p174
      %p768 = pneg %p171
      %p769 = scmp.lt.s32.totalorder %s33, 1
      %s770 = scalar_select %p769, %s33, 1
      %s771 = smul.addr %s770, 4
      %s772 = smul.addr %s771, 4
      %s773 = scalar_lea.vmem %s6, %s772
      %p774 = pneg %p200
      %p775 = pneg %p197
      %p776 = scmp.lt.s32.totalorder %s33, 1
      %s777 = scalar_select %p776, %s33, 1
      %s778 = scalar_lea.vmem %s7, %s777
      %p779 = pneg %p226
      %p780 = pneg %p223
      %p781 = scmp.lt.s32.totalorder %s33, 1
      %s782 = scalar_select %p781, %s33, 1
      %s783 = smul.addr %s782, 4
      %s784 = smul.addr %s783, 4
      %s785 = scalar_lea.vmem %s8, %s784
      %p786 = pneg %p252
      %p787 = pneg %p249
      %p788 = scmp.lt.s32.totalorder %s33, 1
      %s789 = scalar_select %p788, %s33, 1
      %s790 = scalar_lea.vmem %s9, %s789
      %p791 = pneg %p278
      %p792 = pneg %p275
      %p793 = scmp.lt.s32.totalorder %s33, 1
      %s794 = scalar_select %p793, %s33, 1
      %s795 = smul.addr %s794, 4
      %s796 = smul.addr %s795, 4
      %s797 = scalar_lea.vmem %s10, %s796
      %p798 = pneg %p304
      %p799 = pneg %p301
      %p800 = scmp.lt.s32.totalorder %s33, 1
      %s801 = scalar_select %p800, %s33, 1
      %s802 = scalar_lea.vmem %s11, %s801
      %p803 = pneg %p330
      %p804 = pneg %p327
      %p805 = scmp.lt.s32.totalorder %s33, 1
      %s806 = scalar_select %p805, %s33, 1
      %s807 = scalar_lea.vmem %s12, %s806
      %p808 = pneg %p356
      %p809 = pneg %p353
      %p810 = scmp.lt.s32.totalorder %s33, 1
      %s811 = scalar_select %p810, %s33, 1
      %s812 = scalar_lea.vmem %s13, %s811
      %p813 = pneg %p382
      %p814 = pneg %p379
      %p815 = scmp.lt.s32.totalorder %s33, 1
      %s816 = scalar_select %p815, %s33, 1
      %s817 = smul.addr %s816, 4
      %s818 = smul.addr %s817, 4
      %s819 = scalar_lea.vmem %s14, %s818
      %p820 = pneg %p408
      %p821 = pneg %p405
      %p822 = scmp.lt.s32.totalorder %s33, 1
      %s823 = scalar_select %p822, %s33, 1
      %s824 = scalar_lea.vmem %s15, %s823
      %p825 = pneg %p434
      %p826 = pneg %p431
      %p827 = scmp.lt.s32.totalorder %s33, 1
      %s828 = scalar_select %p827, %s33, 1
      %s829 = smul.addr %s828, 16
      %s830 = smul.addr %s829, 4
      %s831 = scalar_lea.vmem %s16, %s830
      %p832 = pneg %p460
      %p833 = pneg %p457
      %p834 = scmp.lt.s32.totalorder %s33, 1
      %s835 = scalar_select %p834, %s33, 1
      %s836 = scalar_lea.vmem %s17, %s835
      %p837 = pneg %p486
      %p838 = pneg %p483
      %p839 = pneg %p507
      %p840 = pneg %p504
      %p841 = pneg %p528
      %p842 = pneg %p525
      %p843 = pneg %p549
      %p844 = pneg %p546
      %p845 = pneg %p570
      %p846 = pneg %p567
      %p847 = pneg %p591
      %p848 = pneg %p588
      %p849 = scmp.lt.s32.totalorder %s33, 1
      %s850 = scalar_select %p849, %s33, 1
      %s851 = scalar_lea.vmem %s2, %s850
      %p852 = scmp.lt.s32.totalorder %s33, 1
      %s853 = scalar_select %p852, %s33, 1
      %s854 = scalar_lea.vmem %s3, %s853
      %p855 = scmp.lt.s32.totalorder %s33, 1
      %s856 = scalar_select %p855, %s33, 1
      %s857 = smul.addr %s856, 4
      %s858 = smul.addr %s857, 4
      %s859 = scalar_lea.vmem %s4, %s858
      %p860 = scmp.lt.s32.totalorder %s33, 1
      %s861 = scalar_select %p860, %s33, 1
      %s862 = scalar_lea.vmem %s5, %s861
      %p863 = scmp.lt.s32.totalorder %s33, 1
      %s864 = scalar_select %p863, %s33, 1
      %s865 = smul.addr %s864, 4
      %s866 = smul.addr %s865, 4
      %s867 = scalar_lea.vmem %s6, %s866
      %p868 = scmp.lt.s32.totalorder %s33, 1
      %s869 = scalar_select %p868, %s33, 1
      %s870 = scalar_lea.vmem %s7, %s869
      %p871 = scmp.lt.s32.totalorder %s33, 1
      %s872 = scalar_select %p871, %s33, 1
      %s873 = smul.addr %s872, 4
      %s874 = smul.addr %s873, 4
      %s875 = scalar_lea.vmem %s8, %s874
      %p876 = scmp.lt.s32.totalorder %s33, 1
      %s877 = scalar_select %p876, %s33, 1
      %s878 = scalar_lea.vmem %s9, %s877
      %p879 = scmp.lt.s32.totalorder %s33, 1
      %s880 = scalar_select %p879, %s33, 1
      %s881 = smul.addr %s880, 4
      %s882 = smul.addr %s881, 4
      %s883 = scalar_lea.vmem %s10, %s882
      %p884 = scmp.lt.s32.totalorder %s33, 1
      %s885 = scalar_select %p884, %s33, 1
      %s886 = scalar_lea.vmem %s11, %s885
      %p887 = scmp.lt.s32.totalorder %s33, 1
      %s888 = scalar_select %p887, %s33, 1
      %s889 = scalar_lea.vmem %s12, %s888
      %p890 = scmp.lt.s32.totalorder %s33, 1
      %s891 = scalar_select %p890, %s33, 1
      %s892 = scalar_lea.vmem %s13, %s891
      %p893 = scmp.lt.s32.totalorder %s33, 1
      %s894 = scalar_select %p893, %s33, 1
      %s895 = smul.addr %s894, 4
      %s896 = smul.addr %s895, 4
      %s897 = scalar_lea.vmem %s14, %s896
      %p898 = scmp.lt.s32.totalorder %s33, 1
      %s899 = scalar_select %p898, %s33, 1
      %s900 = scalar_lea.vmem %s15, %s899
      %p901 = scmp.lt.s32.totalorder %s33, 1
      %s902 = scalar_select %p901, %s33, 1
      %s903 = smul.addr %s902, 16
      %s904 = smul.addr %s903, 4
      %s905 = scalar_lea.vmem %s16, %s904
      %p906 = scmp.lt.s32.totalorder %s33, 1
      %s907 = scalar_select %p906, %s33, 1
      %s908 = scalar_lea.vmem %s17, %s907
      %p910 = scmp.eq.s32.totalorder %s33, 0
      // Predicated region
      $region109: #{_lambda_.5} parent=107 // pred_check
        %p911 = pneg %p910
      $region110: #{_lambda_.5} parent=107 // pred_check_branch
        %913 = sbr.rel (%p911) target = $region112
      $region111: #{_lambda_.5} parent=107 // pred_region
        %v914 = vld [vmem:[%s0] sm:$0xf]
        %v915 = vld [vmem:[%s0 + $0x4] sm:$0xf]
        %v916 = vld [vmem:[%s0 + $0x8] sm:$0x1]
        %v917 = vld [vmem:[%s0 + $0xc] sm:$0xf]
        %v918 = vld [vmem:[%s0 + $0x10] sm:$0xf]
        %v919 = vld [vmem:[%s0 + $0x14] sm:$0x1]
        %v920 = vunpack.c.l.bf16 %v914
        %v921 = vunpack.c.l.bf16 %v915
        %v922 = vunpack.c.l.bf16 %v916
        %v923 = vunpack.c.l.bf16 %v917
        %v924 = vunpack.c.l.bf16 %v918
        %v925 = vunpack.c.l.bf16 %v919
        %v926 = vld [vmem:[%s1] sm:$0xff]
        %v927 = vld [vmem:[%s1 + $0x8] sm:$0xff]
        %v928 = vld [vmem:[%s1 + $0x10] sm:$0x1]
        %v929 = vadd.f32 %v920, %v926
        %v930 = vadd.f32 %v921, %v927
        %v931 = vadd.f32 %v922, %v928
        %v932 = vadd.f32 %v923, %v926
        %v933 = vadd.f32 %v924, %v927
        %v934 = vadd.f32 %v925, %v928
        %vm935 = vcmask 261120
        %936 = vst.msk [vmem:[#allocation2] sm:$0xff] %vm935, %v929
        %937 = vst.msk [vmem:[#allocation2 + $0x8] sm:$0xff] %vm935, %v930
        %vm938 = vcmask 253952
        %939 = vst.msk [vmem:[#allocation2 + $0x10] sm:$0x1] %vm938, %v931
        %940 = vst.msk [vmem:[#allocation2 + $0x18] sm:$0xff] %vm935, %v932
        %941 = vst.msk [vmem:[#allocation2 + $0x20] sm:$0xff] %vm935, %v933
        %942 = vst.msk [vmem:[#allocation2 + $0x28] sm:$0x1] %vm938, %v934
      $region112: #{_lambda_.5} parent=107 // pred_fallthru
        _
      %v943 = vld [vmem:[#allocation2] sm:$0xff]
      %v944 = vld [vmem:[#allocation2 + $0x8] sm:$0xff]
      %v945 = vld [vmem:[#allocation2 + $0x10] sm:$0x1]
      %v946 = vld [vmem:[%s851] sm:$0x1]
      %v947 = vld [vmem:[%s854] sm:$0x1]
      %vm948 = vcmask 261120
      %v949 = vsel %vm948, %v943, 0.0
      %950 = vadd.xlane.f32.xlu0 %v949
      %v951 = vpop.xlane.xlu0 %950
      %v952 = vsel %vm948, %v944, 0.0
      %953 = vadd.xlane.f32.xlu0 %v952
      %v954 = vpop.xlane.xlu0 %953
      %vm955 = vcmask 253952
      %v956 = vsel %vm955, %v945, 0.0
      %957 = vadd.xlane.f32.xlu0 %v956
      %v958 = vpop.xlane.xlu0 %957
      %v959 = vrcp.pop 32.0
      %v960 = vmul.f32 %v951, %v959
      %v961 = vmul.f32 %v954, %v959
      %v962 = vmul.f32 %v958, %v959
      %v963 = vsub.f32 %v943, %v960
      %v964 = vsub.f32 %v944, %v961
      %v965 = vsub.f32 %v945, %v962
      %v966 = vmul.f32 %v963, %v963
      %v967 = vmul.f32 %v964, %v964
      %v968 = vmul.f32 %v965, %v965
      %v969 = vsel %vm948, %v966, 0.0
      %970 = vadd.xlane.f32.xlu0 %v969
      %v971 = vpop.xlane.xlu0 %970
      %v972 = vsel %vm948, %v967, 0.0
      %973 = vadd.xlane.f32.xlu0 %v972
      %v974 = vpop.xlane.xlu0 %973
      %v975 = vsel %vm955, %v968, 0.0
      %976 = vadd.xlane.f32.xlu0 %v975
      %v977 = vpop.xlane.xlu0 %976
      %v978 = vmul.f32 %v971, %v959
      %v979 = vmul.f32 %v974, %v959
      %v980 = vmul.f32 %v977, %v959
      %v981 = vadd.f32 %v978, 1e-05
      %v982 = vadd.f32 %v979, 1e-05
      %v983 = vadd.f32 %v980, 1e-05
      %v984 = vrsqrt.pop %v981
      %v985 = vrsqrt.pop %v982
      %v986 = vrsqrt.pop %v983
      %v987 = vmul.f32 %v963, %v984
      %v988 = vmul.f32 %v964, %v985
      %v989 = vmul.f32 %v965, %v986
      %v991 = vlaneseq
      %v992 = vshrl.u32 %v991, 7
      %v993 = vsub.s32 0, %v992
      %v994 = vrot.slane %v946, %v993
      %v996 = vmul.f32 %v987, %v994
      %v997 = vmul.f32 %v988, %v994
      %v998 = vmul.f32 %v989, %v994
      %v1000 = vlaneseq
      %v1001 = vshrl.u32 %v1000, 7
      %v1002 = vsub.s32 0, %v1001
      %v1003 = vrot.slane %v947, %v1002
      %v1005 = vadd.f32 %v996, %v1003
      %v1006 = vadd.f32 %v997, %v1003
      %v1007 = vadd.f32 %v998, %v1003
      %v1008 = vpack.c.bf16 %v1006, %v1005
      %v1009 = vpack.c.bf16 %v1007, %v1007
      %v1010 = vld [vmem:[%s859] sm:$0xf]
      %v1011 = vld [vmem:[%s859 + $0x4] sm:$0xf]
      %v1012 = vld [vmem:[%s859 + $0x8] sm:$0xf]
      %v1013 = vld [vmem:[%s859 + $0xc] sm:$0xf]
      %v1014 = vld [vmem:[%s862] sm:$0x1]
      %v1016 = vlaneseq
      %v1017 = vshrl.u32 %v1016, 7
      %v1018 = vsub.s32 0, %v1017
      %v1019 = vrot.slane %v1014, %v1018
      %v1025 = vunpack.c.l.b16 %v1010
      %v1026 = vunpack.c.l.b16 %v1011
      %v1027 = vunpack.c.l.b16 %v1012
      %v1028 = vunpack.c.l.b16 %v1013
      %v1029 = vpack.c.b16 %v1026, %v1025
      %v1030 = vpack.c.b16 %v1028, %v1027
      %v1034 = vsel %vm948, %v1008, 0
      %v1037 = vsel %vm948, %v1009, 0
      %1039 = vmatprep.subr.bf16.mxu0 0
      %1040 = vmatpush1.bf16.msra.mxu0 %v1029
      %1041 = vmatprep.subr.bf16.mxu0 0
      %1042 = vmatpush1.bf16.msra.mxu0 %v1030
      %1043 = vmatprep.subr.bf16.mxu0 0
      %1044 = vmatpush1.bf16.msra.mxu0 0
      %1045 = vmatprep.subr.bf16.mxu0 0
      %1046 = vmatpush1.bf16.msra.mxu0 0
      %1047 = vmatprep.subr.bf16.mxu0 0
      %1048 = vmatpush1.bf16.msra.mxu0 0
      %1049 = vmatprep.subr.bf16.mxu0 0
      %1050 = vmatpush1.bf16.msra.mxu0 0
      %1051 = vmatprep.subr.bf16.mxu0 0
      %1052 = vmatpush1.bf16.msra.mxu0 0
      %1053 = vmatprep.subr.bf16.mxu0 0
      %1054 = vmatpush1.bf16.msra.mxu0 0
      %1055 = vmatprep.subr.bf16.mxu0 0
      %1056 = vmatpush1.bf16.msra.mxu0 0
      %1057 = vmatprep.subr.bf16.mxu0 0
      %1058 = vmatpush1.bf16.msra.mxu0 0
      %1059 = vmatprep.subr.bf16.mxu0 0
      %1060 = vmatpush1.bf16.msra.mxu0 0
      %1061 = vmatprep.subr.bf16.mxu0 0
      %1062 = vmatpush1.bf16.msra.mxu0 0
      %1063 = vmatprep.subr.bf16.mxu0 0
      %1064 = vmatpush1.bf16.msra.mxu0 0
      %1065 = vmatprep.subr.bf16.mxu0 0
      %1066 = vmatpush1.bf16.msra.mxu0 0
      %1067 = vmatprep.subr.bf16.mxu0 0
      %1068 = vmatpush1.bf16.msra.mxu0 0
      %1069 = vmatprep.subr.bf16.mxu0 0
      %1070 = vmatpush1.bf16.msra.mxu0 0
      %1071 = vmatprep.mubr.bf16.mxu0 0
      %1072 = vmatmul.mubr.bf16.gmra.mrb[0].mxu0 %v1034
      %v1073 = vpop.f32.mrb[0].mxu0
      %v1074 = vadd.f32 %v1019, %v1073
      %v1075 = vpop.f32.mrb[0].mxu0
      %v1076 = vpop.f32.mrb[0].mxu0
      %v1077 = vadd.f32 %v1019, %v1076
      %v1078 = vpop.f32.mrb[0].mxu0
      %1079 = vmatprep.mubr.bf16.mxu0 0
      %1080 = vmatmul.mubr.bf16.gmra.mrb[0].mxu0 %v1037
      %v1081 = vpop.f32.mrb[0].mxu0
      %v1082 = vadd.f32 %v1019, %v1081
      %v1083 = vpop.f32.mrb[0].mxu0
      %v1084 = vpop.f32.mrb[0].mxu0
      %v1085 = vpop.f32.mrb[0].mxu0
      %1086 = vdwg.mxu0
      %v1087 = vld [vmem:[%s867] sm:$0xf]
      %v1088 = vld [vmem:[%s867 + $0x4] sm:$0xf]
      %v1089 = vld [vmem:[%s867 + $0x8] sm:$0xf]
      %v1090 = vld [vmem:[%s867 + $0xc] sm:$0xf]
      %v1091 = vld [vmem:[%s870] sm:$0x1]
      %v1093 = vlaneseq
      %v1094 = vshrl.u32 %v1093, 7
      %v1095 = vsub.s32 0, %v1094
      %v1096 = vrot.slane %v1091, %v1095
      %v1102 = vunpack.c.l.b16 %v1087
      %v1103 = vunpack.c.l.b16 %v1088
      %v1104 = vunpack.c.l.b16 %v1089
      %v1105 = vunpack.c.l.b16 %v1090
      %v1106 = vpack.c.b16 %v1103, %v1102
      %v1107 = vpack.c.b16 %v1105, %v1104
      %1110 = vmatprep.subr.bf16.mxu0 0
      %1111 = vmatpush1.bf16.msra.mxu0 %v1106
      %1112 = vmatprep.subr.bf16.mxu0 0
      %1113 = vmatpush1.bf16.msra.mxu0 %v1107
      %1114 = vmatprep.subr.bf16.mxu0 0
      %1115 = vmatpush1.bf16.msra.mxu0 0
      %1116 = vmatprep.subr.bf16.mxu0 0
      %1117 = vmatpush1.bf16.msra.mxu0 0
      %1118 = vmatprep.subr.bf16.mxu0 0
      %1119 = vmatpush1.bf16.msra.mxu0 0
      %1120 = vmatprep.subr.bf16.mxu0 0
      %1121 = vmatpush1.bf16.msra.mxu0 0
      %1122 = vmatprep.subr.bf16.mxu0 0
      %1123 = vmatpush1.bf16.msra.mxu0 0
      %1124 = vmatprep.subr.bf16.mxu0 0
      %1125 = vmatpush1.bf16.msra.mxu0 0
      %1126 = vmatprep.subr.bf16.mxu0 0
      %1127 = vmatpush1.bf16.msra.mxu0 0
      %1128 = vmatprep.subr.bf16.mxu0 0
      %1129 = vmatpush1.bf16.msra.mxu0 0
      %1130 = vmatprep.subr.bf16.mxu0 0
      %1131 = vmatpush1.bf16.msra.mxu0 0
      %1132 = vmatprep.subr.bf16.mxu0 0
      %1133 = vmatpush1.bf16.msra.mxu0 0
      %1134 = vmatprep.subr.bf16.mxu0 0
      %1135 = vmatpush1.bf16.msra.mxu0 0
      %1136 = vmatprep.subr.bf16.mxu0 0
      %1137 = vmatpush1.bf16.msra.mxu0 0
      %1138 = vmatprep.subr.bf16.mxu0 0
      %1139 = vmatpush1.bf16.msra.mxu0 0
      %1140 = vmatprep.subr.bf16.mxu0 0
      %1141 = vmatpush1.bf16.msra.mxu0 0
      %1142 = vmatprep.mubr.bf16.mxu0 0
      %1143 = vmatmul.mubr.bf16.gmra.mrb[0].mxu0 %v1034
      %v1144 = vpop.f32.mrb[0].mxu0
      %v1145 = vadd.f32 %v1096, %v1144
      %v1146 = vpop.f32.mrb[0].mxu0
      %v1147 = vpop.f32.mrb[0].mxu0
      %v1148 = vadd.f32 %v1096, %v1147
      %v1149 = vpop.f32.mrb[0].mxu0
      %1150 = vmatprep.mubr.bf16.mxu0 0
      %1151 = vmatmul.mubr.bf16.gmra.mrb[0].mxu0 %v1037
      %v1152 = vpop.f32.mrb[0].mxu0
      %v1153 = vadd.f32 %v1096, %v1152
      %v1154 = vpop.f32.mrb[0].mxu0
      %v1155 = vpop.f32.mrb[0].mxu0
      %v1156 = vpop.f32.mrb[0].mxu0
      %1157 = vdwg.mxu0
      %v1158 = vld [vmem:[%s875] sm:$0xf]
      %v1159 = vld [vmem:[%s875 + $0x4] sm:$0xf]
      %v1160 = vld [vmem:[%s875 + $0x8] sm:$0xf]
      %v1161 = vld [vmem:[%s875 + $0xc] sm:$0xf]
      %v1162 = vld [vmem:[%s878] sm:$0x1]
      %v1164 = vlaneseq
      %v1165 = vshrl.u32 %v1164, 7
      %v1166 = vsub.s32 0, %v1165
      %v1167 = vrot.slane %v1162, %v1166
      %v1173 = vunpack.c.l.b16 %v1158
      %v1174 = vunpack.c.l.b16 %v1159
      %v1175 = vunpack.c.l.b16 %v1160
      %v1176 = vunpack.c.l.b16 %v1161
      %v1177 = vpack.c.b16 %v1174, %v1173
      %v1178 = vpack.c.b16 %v1176, %v1175
      %1181 = vmatprep.subr.bf16.mxu0 0
      %1182 = vmatpush1.bf16.msra.mxu0 %v1177
      %1183 = vmatprep.subr.bf16.mxu0 0
      %1184 = vmatpush1.bf16.msra.mxu0 %v1178
      %1185 = vmatprep.subr.bf16.mxu0 0
      %1186 = vmatpush1.bf16.msra.mxu0 0
      %1187 = vmatprep.subr.bf16.mxu0 0
      %1188 = vmatpush1.bf16.msra.mxu0 0
      %1189 = vmatprep.subr.bf16.mxu0 0
      %1190 = vmatpush1.bf16.msra.mxu0 0
      %1191 = vmatprep.subr.bf16.mxu0 0
      %1192 = vmatpush1.bf16.msra.mxu0 0
      %1193 = vmatprep.subr.bf16.mxu0 0
      %1194 = vmatpush1.bf16.msra.mxu0 0
      %1195 = vmatprep.subr.bf16.mxu0 0
      %1196 = vmatpush1.bf16.msra.mxu0 0
      %1197 = vmatprep.subr.bf16.mxu0 0
      %1198 = vmatpush1.bf16.msra.mxu0 0
      %1199 = vmatprep.subr.bf16.mxu0 0
      %1200 = vmatpush1.bf16.msra.mxu0 0
      %1201 = vmatprep.subr.bf16.mxu0 0
      %1202 = vmatpush1.bf16.msra.mxu0 0
      %1203 = vmatprep.subr.bf16.mxu0 0
      %1204 = vmatpush1.bf16.msra.mxu0 0
      %1205 = vmatprep.subr.bf16.mxu0 0
      %1206 = vmatpush1.bf16.msra.mxu0 0
      %1207 = vmatprep.subr.bf16.mxu0 0
      %1208 = vmatpush1.bf16.msra.mxu0 0
      %1209 = vmatprep.subr.bf16.mxu0 0
      %1210 = vmatpush1.bf16.msra.mxu0 0
      %1211 = vmatprep.subr.bf16.mxu0 0
      %1212 = vmatpush1.bf16.msra.mxu0 0
      %1213 = vmatprep.mubr.bf16.mxu0 0
      %1214 = vmatmul.mubr.bf16.gmra.mrb[0].mxu0 %v1034
      %v1215 = vpop.f32.mrb[0].mxu0
      %v1216 = vadd.f32 %v1167, %v1215
      %v1217 = vpop.f32.mrb[0].mxu0
      %v1218 = vpop.f32.mrb[0].mxu0
      %v1219 = vadd.f32 %v1167, %v1218
      %v1220 = vpop.f32.mrb[0].mxu0
      %1221 = vmatprep.mubr.bf16.mxu0 0
      %1222 = vmatmul.mubr.bf16.gmra.mrb[0].mxu0 %v1037
      %v1223 = vpop.f32.mrb[0].mxu0
      %v1224 = vadd.f32 %v1167, %v1223
      %v1225 = vpop.f32.mrb[0].mxu0
      %v1226 = vpop.f32.mrb[0].mxu0
      %v1227 = vpop.f32.mrb[0].mxu0
      %1228 = vdwg.mxu0
      %v1229 = vmul.f32 %v1074, 0.35355338
      %v1230 = vmul.f32 %v1077, 0.35355338
      %v1231 = vmul.f32 %v1082, 0.35355338
      %v1232 = vpack.c.bf16 %v1230, %v1229
      %v1233 = vpack.c.bf16 %v1231, %v1231
      %v1234 = vpack.c.bf16 %v1148, %v1145
      %v1235 = vpack.c.bf16 %v1153, %v1153
      %v1236 = vpack.c.bf16 %v1219, %v1216
      %v1237 = vpack.c.bf16 %v1224, %v1224
      %vm1238 = vcmask 64512
      %v1240 = vsel %vm1238, %v1232, 0
      %v1243 = vsel %vm1238, %v1233, 0
      %v1246 = vsel %vm1238, %v1234, 0
      %v1249 = vsel %vm1238, %v1235, 0
      %1251 = vmatprep.subr.bf16.mxu0 0
      %1252 = vmatpush1.bf16.xpose.msra.mxu0 %v1246
      %1253 = vmatprep.subr.bf16.mxu0 0
      %1254 = vmatpush1.bf16.xpose.msra.mxu0 %v1249
      %1255 = vmatprep.subr.bf16.mxu0 0
      %1256 = vmatpush1.bf16.xpose.msra.mxu0 0
      %1257 = vmatprep.subr.bf16.mxu0 0
      %1258 = vmatpush1.bf16.xpose.msra.mxu0 0
      %1259 = vmatprep.subr.bf16.mxu0 0
      %1260 = vmatpush1.bf16.xpose.msra.mxu0 0
      %1261 = vmatprep.subr.bf16.mxu0 0
      %1262 = vmatpush1.bf16.xpose.msra.mxu0 0
      %1263 = vmatprep.subr.bf16.mxu0 0
      %1264 = vmatpush1.bf16.xpose.msra.mxu0 0
      %1265 = vmatprep.subr.bf16.mxu0 0
      %1266 = vmatpush1.bf16.xpose.msra.mxu0 0
      %1267 = vmatprep.subr.bf16.mxu0 0
      %1268 = vmatpush1.bf16.xpose.msra.mxu0 0
      %1269 = vmatprep.subr.bf16.mxu0 0
      %1270 = vmatpush1.bf16.xpose.msra.mxu0 0
      %1271 = vmatprep.subr.bf16.mxu0 0
      %1272 = vmatpush1.bf16.xpose.msra.mxu0 0
      %1273 = vmatprep.subr.bf16.mxu0 0
      %1274 = vmatpush1.bf16.xpose.msra.mxu0 0
      %1275 = vmatprep.subr.bf16.mxu0 0
      %1276 = vmatpush1.bf16.xpose.msra.mxu0 0
      %1277 = vmatprep.subr.bf16.mxu0 0
      %1278 = vmatpush1.bf16.xpose.msra.mxu0 0
      %1279 = vmatprep.subr.bf16.mxu0 0
      %1280 = vmatpush1.bf16.xpose.msra.mxu0 0
      %1281 = vmatprep.subr.bf16.mxu0 0
      %1282 = vmatpush1.bf16.xpose.msra.mxu0 0
      %1283 = vmatprep.mubr.bf16.mxu0 0
      %1284 = vmatmul.mubr.bf16.gmra.mrb[0].mxu0 %v1240
      %v1285 = vpop.f32.mrb[0].mxu0
      %v1286 = vadd.f32 0.0, %v1285
      %v1287 = vpop.f32.mrb[0].mxu0
      %v1288 = vpop.f32.mrb[0].mxu0
      %v1289 = vadd.f32 0.0, %v1288
      %v1290 = vpop.f32.mrb[0].mxu0
      %1291 = vmatprep.mubr.bf16.mxu0 0
      %1292 = vmatmul.mubr.bf16.gmra.mrb[0].mxu0 %v1243
      %v1293 = vpop.f32.mrb[0].mxu0
      %v1294 = vadd.f32 0.0, %v1293
      %v1295 = vpop.f32.mrb[0].mxu0
      %v1296 = vpop.f32.mrb[0].mxu0
      %v1297 = vpop.f32.mrb[0].mxu0
      %1298 = vdwg.mxu0
      %vm1299 = vcmask 138240
      %v1300 = vsel %vm1299, %v1286, -inf
      %1301 = vmax.xlane.f32.xlu0 %v1300
      %v1302 = vpop.xlane.xlu0 %1301
      %v1303 = vsel %vm1299, %v1289, -inf
      %1304 = vmax.xlane.f32.xlu0 %v1303
      %v1305 = vpop.xlane.xlu0 %1304
      %vm1306 = vcmask 131072
      %v1307 = vsel %vm1306, %v1294, -inf
      %1308 = vmax.xlane.f32.xlu0 %v1307
      %v1309 = vpop.xlane.xlu0 %1308
      %v1310 = vsub.f32 %v1286, %v1302
      %v1311 = vsub.f32 %v1289, %v1305
      %v1312 = vsub.f32 %v1294, %v1309
      %v1313 = vmul.f32 %v1310, 1.442695
      %v1314 = vpow.pop %v1313
      %v1315 = vmul.f32 %v1311, 1.442695
      %v1316 = vpow.pop %v1315
      %v1317 = vmul.f32 %v1312, 1.442695
      %v1318 = vpow.pop %v1317
      %v1319 = vsel %vm1299, %v1314, 0.0
      %1320 = vadd.xlane.f32.xlu0 %v1319
      %v1321 = vpop.xlane.xlu0 %1320
      %v1322 = vsel %vm1299, %v1316, 0.0
      %1323 = vadd.xlane.f32.xlu0 %v1322
      %v1324 = vpop.xlane.xlu0 %1323
      %v1325 = vsel %vm1306, %v1318, 0.0
      %1326 = vadd.xlane.f32.xlu0 %v1325
      %v1327 = vpop.xlane.xlu0 %1326
      %v1328 = vrcp.pop %v1321
      %v1329 = vmul.f32 %v1314, %v1328
      %v1330 = vrcp.pop %v1324
      %v1331 = vmul.f32 %v1316, %v1330
      %v1332 = vrcp.pop %v1327
      %v1333 = vmul.f32 %v1318, %v1332
      %v1334 = vpack.c.bf16 %v1331, %v1329
      %v1335 = vpack.c.bf16 %v1333, %v1333
      %v1337 = vsel %vm1299, %v1334, 0
      %v1340 = vsel %vm1299, %v1335, 0
      %vm1342 = vcmask 1040384
      %v1343 = vsel 0, 4294967295, 65535
      %v1344 = vsel %vm1342, %v1343, 0
      %v1346 = vand.u32 %v1237, %v1344
      %1348 = vmatprep.subr.bf16.mxu0 0
      %1349 = vmatpush1.bf16.msra.mxu0 %v1236
      %1350 = vmatprep.subr.bf16.mxu0 0
      %1351 = vmatpush1.bf16.msra.mxu0 %v1346
      %1352 = vmatprep.subr.bf16.mxu0 0
      %1353 = vmatpush1.bf16.msra.mxu0 0
      %1354 = vmatprep.subr.bf16.mxu0 0
      %1355 = vmatpush1.bf16.msra.mxu0 0
      %1356 = vmatprep.subr.bf16.mxu0 0
      %1357 = vmatpush1.bf16.msra.mxu0 0
      %1358 = vmatprep.subr.bf16.mxu0 0
      %1359 = vmatpush1.bf16.msra.mxu0 0
      %1360 = vmatprep.subr.bf16.mxu0 0
      %1361 = vmatpush1.bf16.msra.mxu0 0
      %1362 = vmatprep.subr.bf16.mxu0 0
      %1363 = vmatpush1.bf16.msra.mxu0 0
      %1364 = vmatprep.subr.bf16.mxu0 0
      %1365 = vmatpush1.bf16.msra.mxu0 0
      %1366 = vmatprep.subr.bf16.mxu0 0
      %1367 = vmatpush1.bf16.msra.mxu0 0
      %1368 = vmatprep.subr.bf16.mxu0 0
      %1369 = vmatpush1.bf16.msra.mxu0 0
      %1370 = vmatprep.subr.bf16.mxu0 0
      %1371 = vmatpush1.bf16.msra.mxu0 0
      %1372 = vmatprep.subr.bf16.mxu0 0
      %1373 = vmatpush1.bf16.msra.mxu0 0
      %1374 = vmatprep.subr.bf16.mxu0 0
      %1375 = vmatpush1.bf16.msra.mxu0 0
      %1376 = vmatprep.subr.bf16.mxu0 0
      %1377 = vmatpush1.bf16.msra.mxu0 0
      %1378 = vmatprep.subr.bf16.mxu0 0
      %1379 = vmatpush1.bf16.msra.mxu0 0
      %1380 = vmatprep.mubr.bf16.mxu0 0
      %1381 = vmatmul.mubr.bf16.gmra.mrb[0].mxu0 %v1337
      %v1382 = vpop.f32.mrb[0].mxu0
      %v1383 = vadd.f32 0.0, %v1382
      %v1384 = vpop.f32.mrb[0].mxu0
      %v1385 = vpop.f32.mrb[0].mxu0
      %v1386 = vadd.f32 0.0, %v1385
      %v1387 = vpop.f32.mrb[0].mxu0
      %1388 = vmatprep.mubr.bf16.mxu0 0
      %1389 = vmatmul.mubr.bf16.gmra.mrb[0].mxu0 %v1340
      %v1390 = vpop.f32.mrb[0].mxu0
      %v1391 = vadd.f32 0.0, %v1390
      %v1392 = vpop.f32.mrb[0].mxu0
      %v1393 = vpop.f32.mrb[0].mxu0
      %v1394 = vpop.f32.mrb[0].mxu0
      %1395 = vdwg.mxu0
      %v1396 = vpack.c.bf16 %v1386, %v1383
      %v1397 = vpack.c.bf16 %v1391, %v1391
      %v1398 = vld [vmem:[%s883] sm:$0xf]
      %v1399 = vld [vmem:[%s883 + $0x4] sm:$0xf]
      %v1400 = vld [vmem:[%s883 + $0x8] sm:$0xf]
      %v1401 = vld [vmem:[%s883 + $0xc] sm:$0xf]
      %v1403 = vsel %vm1238, %v1396, 0
      %v1406 = vsel %vm1238, %v1397, 0
      %vm1408 = vcmask 1043456
      %v1410 = vsel %vm1408, %v1398, 0
      %1412 = vmatprep.subr.bf16.mxu0 0
      %1413 = vmatpush1.bf16.msra.mxu0 %v1410
      %1414 = vmatprep.subr.bf16.mxu0 0
      %1415 = vmatpush1.bf16.msra.mxu0 0
      %1416 = vmatprep.subr.bf16.mxu0 0
      %1417 = vmatpush1.bf16.msra.mxu0 0
      %1418 = vmatprep.subr.bf16.mxu0 0
      %1419 = vmatpush1.bf16.msra.mxu0 0
      %1420 = vmatprep.subr.bf16.mxu0 0
      %1421 = vmatpush1.bf16.msra.mxu0 0
      %1422 = vmatprep.subr.bf16.mxu0 0
      %1423 = vmatpush1.bf16.msra.mxu0 0
      %1424 = vmatprep.subr.bf16.mxu0 0
      %1425 = vmatpush1.bf16.msra.mxu0 0
      %1426 = vmatprep.subr.bf16.mxu0 0
      %1427 = vmatpush1.bf16.msra.mxu0 0
      %1428 = vmatprep.subr.bf16.mxu0 0
      %1429 = vmatpush1.bf16.msra.mxu0 0
      %1430 = vmatprep.subr.bf16.mxu0 0
      %1431 = vmatpush1.bf16.msra.mxu0 0
      %1432 = vmatprep.subr.bf16.mxu0 0
      %1433 = vmatpush1.bf16.msra.mxu0 0
      %1434 = vmatprep.subr.bf16.mxu0 0
      %1435 = vmatpush1.bf16.msra.mxu0 0
      %1436 = vmatprep.subr.bf16.mxu0 0
      %1437 = vmatpush1.bf16.msra.mxu0 0
      %1438 = vmatprep.subr.bf16.mxu0 0
      %1439 = vmatpush1.bf16.msra.mxu0 0
      %1440 = vmatprep.subr.bf16.mxu0 0
      %1441 = vmatpush1.bf16.msra.mxu0 0
      %1442 = vmatprep.subr.bf16.mxu0 0
      %1443 = vmatpush1.bf16.msra.mxu0 0
      %1444 = vmatprep.mubr.bf16.mxu0 0
      %1445 = vmatmul.mubr.bf16.gmra.mrb[0].mxu0 %v1403
      %v1446 = vpop.f32.mrb[0].mxu0
      %v1447 = vadd.f32 0.0, %v1446
      %v1448 = vpop.f32.mrb[0].mxu0
      %v1449 = vpop.f32.mrb[0].mxu0
      %v1450 = vadd.f32 0.0, %v1449
      %v1451 = vpop.f32.mrb[0].mxu0
      %1452 = vmatprep.mubr.bf16.mxu0 0
      %1453 = vmatmul.mubr.bf16.gmra.mrb[0].mxu0 %v1406
      %v1454 = vpop.f32.mrb[0].mxu0
      %v1455 = vadd.f32 0.0, %v1454
      %v1456 = vpop.f32.mrb[0].mxu0
      %v1457 = vpop.f32.mrb[0].mxu0
      %v1458 = vpop.f32.mrb[0].mxu0
      %1459 = vdwg.mxu0
      %v1460 = vadd.f32 %v943, %v1447
      %v1461 = vadd.f32 %v944, %v1450
      %v1462 = vadd.f32 %v945, %v1455
      %1465 = vrot.lane.b32.xlu0 %v1232, 120
      %v1466 = vpop.permute.xlu0 %1465
      %1467 = vrot.lane.b32.xlu0 %v1233, 120
      %v1468 = vpop.permute.xlu0 %1467
      %1471 = vrot.lane.b32.xlu0 %v1234, 120
      %v1472 = vpop.permute.xlu0 %1471
      %1473 = vrot.lane.b32.xlu0 %v1235, 120
      %v1474 = vpop.permute.xlu0 %1473
      %v1476 = vsel %vm1238, %v1466, 0
      %v1479 = vsel %vm1238, %v1468, 0
      %v1482 = vsel %vm1238, %v1472, 0
      %v1485 = vsel %vm1238, %v1474, 0
      %1487 = vmatprep.subr.bf16.mxu0 0
      %1488 = vmatpush1.bf16.xpose.msra.mxu0 %v1482
      %1489 = vmatprep.subr.bf16.mxu0 0
      %1490 = vmatpush1.bf16.xpose.msra.mxu0 %v1485
      %1491 = vmatprep.subr.bf16.mxu0 0
      %1492 = vmatpush1.bf16.xpose.msra.mxu0 0
      %1493 = vmatprep.subr.bf16.mxu0 0
      %1494 = vmatpush1.bf16.xpose.msra.mxu0 0
      %1495 = vmatprep.subr.bf16.mxu0 0
      %1496 = vmatpush1.bf16.xpose.msra.mxu0 0
      %1497 = vmatprep.subr.bf16.mxu0 0
      %1498 = vmatpush1.bf16.xpose.msra.mxu0 0
      %1499 = vmatprep.subr.bf16.mxu0 0
      %1500 = vmatpush1.bf16.xpose.msra.mxu0 0
      %1501 = vmatprep.subr.bf16.mxu0 0
      %1502 = vmatpush1.bf16.xpose.msra.mxu0 0
      %1503 = vmatprep.subr.bf16.mxu0 0
      %1504 = vmatpush1.bf16.xpose.msra.mxu0 0
      %1505 = vmatprep.subr.bf16.mxu0 0
      %1506 = vmatpush1.bf16.xpose.msra.mxu0 0
      %1507 = vmatprep.subr.bf16.mxu0 0
      %1508 = vmatpush1.bf16.xpose.msra.mxu0 0
      %1509 = vmatprep.subr.bf16.mxu0 0
      %1510 = vmatpush1.bf16.xpose.msra.mxu0 0
      %1511 = vmatprep.subr.bf16.mxu0 0
      %1512 = vmatpush1.bf16.xpose.msra.mxu0 0
      %1513 = vmatprep.subr.bf16.mxu0 0
      %1514 = vmatpush1.bf16.xpose.msra.mxu0 0
      %1515 = vmatprep.subr.bf16.mxu0 0
      %1516 = vmatpush1.bf16.xpose.msra.mxu0 0
      %1517 = vmatprep.subr.bf16.mxu0 0
      %1518 = vmatpush1.bf16.xpose.msra.mxu0 0
      %1519 = vmatprep.mubr.bf16.mxu0 0
      %1520 = vmatmul.mubr.bf16.gmra.mrb[0].mxu0 %v1476
      %v1521 = vpop.f32.mrb[0].mxu0
      %v1522 = vadd.f32 0.0, %v1521
      %v1523 = vpop.f32.mrb[0].mxu0
      %v1524 = vpop.f32.mrb[0].mxu0
      %v1525 = vadd.f32 0.0, %v1524
      %v1526 = vpop.f32.mrb[0].mxu0
      %1527 = vmatprep.mubr.bf16.mxu0 0
      %1528 = vmatmul.mubr.bf16.gmra.mrb[0].mxu0 %v1479
      %v1529 = vpop.f32.mrb[0].mxu0
      %v1530 = vadd.f32 0.0, %v1529
      %v1531 = vpop.f32.mrb[0].mxu0
      %v1532 = vpop.f32.mrb[0].mxu0
      %v1533 = vpop.f32.mrb[0].mxu0
      %1534 = vdwg.mxu0
      %v1535 = vsel %vm1299, %v1522, -inf
      %1536 = vmax.xlane.f32.xlu0 %v1535
      %v1537 = vpop.xlane.xlu0 %1536
      %v1538 = vsel %vm1299, %v1525, -inf
      %1539 = vmax.xlane.f32.xlu0 %v1538
      %v1540 = vpop.xlane.xlu0 %1539
      %v1541 = vsel %vm1306, %v1530, -inf
      %1542 = vmax.xlane.f32.xlu0 %v1541
      %v1543 = vpop.xlane.xlu0 %1542
      %v1544 = vsub.f32 %v1522, %v1537
      %v1545 = vsub.f32 %v1525, %v1540
      %v1546 = vsub.f32 %v1530, %v1543
      %v1547 = vmul.f32 %v1544, 1.442695
      %v1548 = vpow.pop %v1547
      %v1549 = vmul.f32 %v1545, 1.442695
      %v1550 = vpow.pop %v1549
      %v1551 = vmul.f32 %v1546, 1.442695
      %v1552 = vpow.pop %v1551
      %v1553 = vsel %vm1299, %v1548, 0.0
      %1554 = vadd.xlane.f32.xlu0 %v1553
      %v1555 = vpop.xlane.xlu0 %1554
      %v1556 = vsel %vm1299, %v1550, 0.0
      %1557 = vadd.xlane.f32.xlu0 %v1556
      %v1558 = vpop.xlane.xlu0 %1557
      %v1559 = vsel %vm1306, %v1552, 0.0
      %1560 = vadd.xlane.f32.xlu0 %v1559
      %v1561 = vpop.xlane.xlu0 %1560
      %v1562 = vrcp.pop %v1555
      %v1563 = vmul.f32 %v1548, %v1562
      %v1564 = vrcp.pop %v1558
      %v1565 = vmul.f32 %v1550, %v1564
      %v1566 = vrcp.pop %v1561
      %v1567 = vmul.f32 %v1552, %v1566
      %v1568 = vpack.c.bf16 %v1565, %v1563
      %v1569 = vpack.c.bf16 %v1567, %v1567
      %1572 = vrot.lane.b32.xlu0 %v1236, 120
      %v1573 = vpop.permute.xlu0 %1572
      %1574 = vrot.lane.b32.xlu0 %v1237, 120
      %v1575 = vpop.permute.xlu0 %1574
      %v1578 = vsel %vm1299, %v1568, 0
      %v1581 = vsel %vm1299, %v1569, 0
      %v1584 = vand.u32 %v1575, %v1344
      %1586 = vmatprep.subr.bf16.mxu0 0
      %1587 = vmatpush1.bf16.msra.mxu0 %v1573
      %1588 = vmatprep.subr.bf16.mxu0 0
      %1589 = vmatpush1.bf16.msra.mxu0 %v1584
      %1590 = vmatprep.subr.bf16.mxu0 0
      %1591 = vmatpush1.bf16.msra.mxu0 0
      %1592 = vmatprep.subr.bf16.mxu0 0
      %1593 = vmatpush1.bf16.msra.mxu0 0
      %1594 = vmatprep.subr.bf16.mxu0 0
      %1595 = vmatpush1.bf16.msra.mxu0 0
      %1596 = vmatprep.subr.bf16.mxu0 0
      %1597 = vmatpush1.bf16.msra.mxu0 0
      %1598 = vmatprep.subr.bf16.mxu0 0
      %1599 = vmatpush1.bf16.msra.mxu0 0
      %1600 = vmatprep.subr.bf16.mxu0 0
      %1601 = vmatpush1.bf16.msra.mxu0 0
      %1602 = vmatprep.subr.bf16.mxu0 0
      %1603 = vmatpush1.bf16.msra.mxu0 0
      %1604 = vmatprep.subr.bf16.mxu0 0
      %1605 = vmatpush1.bf16.msra.mxu0 0
      %1606 = vmatprep.subr.bf16.mxu0 0
      %1607 = vmatpush1.bf16.msra.mxu0 0
      %1608 = vmatprep.subr.bf16.mxu0 0
      %1609 = vmatpush1.bf16.msra.mxu0 0
      %1610 = vmatprep.subr.bf16.mxu0 0
      %1611 = vmatpush1.bf16.msra.mxu0 0
      %1612 = vmatprep.subr.bf16.mxu0 0
      %1613 = vmatpush1.bf16.msra.mxu0 0
      %1614 = vmatprep.subr.bf16.mxu0 0
      %1615 = vmatpush1.bf16.msra.mxu0 0
      %1616 = vmatprep.subr.bf16.mxu0 0
      %1617 = vmatpush1.bf16.msra.mxu0 0
      %1618 = vmatprep.mubr.bf16.mxu0 0
      %1619 = vmatmul.mubr.bf16.gmra.mrb[0].mxu0 %v1578
      %v1620 = vpop.f32.mrb[0].mxu0
      %v1621 = vadd.f32 0.0, %v1620
      %v1622 = vpop.f32.mrb[0].mxu0
      %v1623 = vpop.f32.mrb[0].mxu0
      %v1624 = vadd.f32 0.0, %v1623
      %v1625 = vpop.f32.mrb[0].mxu0
      %1626 = vmatprep.mubr.bf16.mxu0 0
      %1627 = vmatmul.mubr.bf16.gmra.mrb[0].mxu0 %v1581
      %v1628 = vpop.f32.mrb[0].mxu0
      %v1629 = vadd.f32 0.0, %v1628
      %v1630 = vpop.f32.mrb[0].mxu0
      %v1631 = vpop.f32.mrb[0].mxu0
      %v1632 = vpop.f32.mrb[0].mxu0
      %1633 = vdwg.mxu0
      %v1634 = vpack.c.bf16 %v1624, %v1621
      %v1635 = vpack.c.bf16 %v1629, %v1629
      %v1637 = vsel %vm1238, %v1634, 0
      %v1640 = vsel %vm1238, %v1635, 0
      %v1643 = vsel %vm1408, %v1399, 0
      %1645 = vmatprep.subr.bf16.mxu0 0
      %1646 = vmatpush1.bf16.msra.mxu0 %v1643
      %1647 = vmatprep.subr.bf16.mxu0 0
      %1648 = vmatpush1.bf16.msra.mxu0 0
      %1649 = vmatprep.subr.bf16.mxu0 0
      %1650 = vmatpush1.bf16.msra.mxu0 0
      %1651 = vmatprep.subr.bf16.mxu0 0
      %1652 = vmatpush1.bf16.msra.mxu0 0
      %1653 = vmatprep.subr.bf16.mxu0 0
      %1654 = vmatpush1.bf16.msra.mxu0 0
      %1655 = vmatprep.subr.bf16.mxu0 0
      %1656 = vmatpush1.bf16.msra.mxu0 0
      %1657 = vmatprep.subr.bf16.mxu0 0
      %1658 = vmatpush1.bf16.msra.mxu0 0
      %1659 = vmatprep.subr.bf16.mxu0 0
      %1660 = vmatpush1.bf16.msra.mxu0 0
      %1661 = vmatprep.subr.bf16.mxu0 0
      %1662 = vmatpush1.bf16.msra.mxu0 0
      %1663 = vmatprep.subr.bf16.mxu0 0
      %1664 = vmatpush1.bf16.msra.mxu0 0
      %1665 = vmatprep.subr.bf16.mxu0 0
      %1666 = vmatpush1.bf16.msra.mxu0 0
      %1667 = vmatprep.subr.bf16.mxu0 0
      %1668 = vmatpush1.bf16.msra.mxu0 0
      %1669 = vmatprep.subr.bf16.mxu0 0
      %1670 = vmatpush1.bf16.msra.mxu0 0
      %1671 = vmatprep.subr.bf16.mxu0 0
      %1672 = vmatpush1.bf16.msra.mxu0 0
      %1673 = vmatprep.subr.bf16.mxu0 0
      %1674 = vmatpush1.bf16.msra.mxu0 0
      %1675 = vmatprep.subr.bf16.mxu0 0
      %1676 = vmatpush1.bf16.msra.mxu0 0
      %1677 = vmatprep.mubr.bf16.mxu0 0
      %1678 = vmatmul.mubr.bf16.gmra.mrb[0].mxu0 %v1637
      %v1679 = vpop.f32.mrb[0].mxu0
      %v1680 = vadd.f32 0.0, %v1679
      %v1681 = vpop.f32.mrb[0].mxu0
      %v1682 = vpop.f32.mrb[0].mxu0
      %v1683 = vadd.f32 0.0, %v1682
      %v1684 = vpop.f32.mrb[0].mxu0
      %1685 = vmatprep.mubr.bf16.mxu0 0
      %1686 = vmatmul.mubr.bf16.gmra.mrb[0].mxu0 %v1640
      %v1687 = vpop.f32.mrb[0].mxu0
      %v1688 = vadd.f32 0.0, %v1687
      %v1689 = vpop.f32.mrb[0].mxu0
      %v1690 = vpop.f32.mrb[0].mxu0
      %v1691 = vpop.f32.mrb[0].mxu0
      %1692 = vdwg.mxu0
      %v1693 = vadd.f32 %v1460, %v1680
      %v1694 = vadd.f32 %v1461, %v1683
      %v1695 = vadd.f32 %v1462, %v1688
      %1696 = vrot.lane.b32.xlu0 %v1232, 112
      %v1697 = vpop.permute.xlu0 %1696
      %1698 = vrot.lane.b32.xlu0 %v1233, 112
      %v1699 = vpop.permute.xlu0 %1698
      %1700 = vrot.lane.b32.xlu0 %v1234, 112
      %v1701 = vpop.permute.xlu0 %1700
      %1702 = vrot.lane.b32.xlu0 %v1235, 112
      %v1703 = vpop.permute.xlu0 %1702
      %v1705 = vsel %vm1238, %v1697, 0
      %v1708 = vsel %vm1238, %v1699, 0
      %v1711 = vsel %vm1238, %v1701, 0
      %v1714 = vsel %vm1238, %v1703, 0
      %1716 = vmatprep.subr.bf16.mxu0 0
      %1717 = vmatpush1.bf16.xpose.msra.mxu0 %v1711
      %1718 = vmatprep.subr.bf16.mxu0 0
      %1719 = vmatpush1.bf16.xpose.msra.mxu0 %v1714
      %1720 = vmatprep.subr.bf16.mxu0 0
      %1721 = vmatpush1.bf16.xpose.msra.mxu0 0
      %1722 = vmatprep.subr.bf16.mxu0 0
      %1723 = vmatpush1.bf16.xpose.msra.mxu0 0
      %1724 = vmatprep.subr.bf16.mxu0 0
      %1725 = vmatpush1.bf16.xpose.msra.mxu0 0
      %1726 = vmatprep.subr.bf16.mxu0 0
      %1727 = vmatpush1.bf16.xpose.msra.mxu0 0
      %1728 = vmatprep.subr.bf16.mxu0 0
      %1729 = vmatpush1.bf16.xpose.msra.mxu0 0
      %1730 = vmatprep.subr.bf16.mxu0 0
      %1731 = vmatpush1.bf16.xpose.msra.mxu0 0
      %1732 = vmatprep.subr.bf16.mxu0 0
      %1733 = vmatpush1.bf16.xpose.msra.mxu0 0
      %1734 = vmatprep.subr.bf16.mxu0 0
      %1735 = vmatpush1.bf16.xpose.msra.mxu0 0
      %1736 = vmatprep.subr.bf16.mxu0 0
      %1737 = vmatpush1.bf16.xpose.msra.mxu0 0
      %1738 = vmatprep.subr.bf16.mxu0 0
      %1739 = vmatpush1.bf16.xpose.msra.mxu0 0
      %1740 = vmatprep.subr.bf16.mxu0 0
      %1741 = vmatpush1.bf16.xpose.msra.mxu0 0
      %1742 = vmatprep.subr.bf16.mxu0 0
      %1743 = vmatpush1.bf16.xpose.msra.mxu0 0
      %1744 = vmatprep.subr.bf16.mxu0 0
      %1745 = vmatpush1.bf16.xpose.msra.mxu0 0
      %1746 = vmatprep.subr.bf16.mxu0 0
      %1747 = vmatpush1.bf16.xpose.msra.mxu0 0
      %1748 = vmatprep.mubr.bf16.mxu0 0
      %1749 = vmatmul.mubr.bf16.gmra.mrb[0].mxu0 %v1705
      %v1750 = vpop.f32.mrb[0].mxu0
      %v1751 = vadd.f32 0.0, %v1750
      %v1752 = vpop.f32.mrb[0].mxu0
      %v1753 = vpop.f32.mrb[0].mxu0
      %v1754 = vadd.f32 0.0, %v1753
      %v1755 = vpop.f32.mrb[0].mxu0
      %1756 = vmatprep.mubr.bf16.mxu0 0
      %1757 = vmatmul.mubr.bf16.gmra.mrb[0].mxu0 %v1708
      %v1758 = vpop.f32.mrb[0].mxu0
      %v1759 = vadd.f32 0.0, %v1758
      %v1760 = vpop.f32.mrb[0].mxu0
      %v1761 = vpop.f32.mrb[0].mxu0
      %v1762 = vpop.f32.mrb[0].mxu0
      %1763 = vdwg.mxu0
      %v1764 = vsel %vm1299, %v1751, -inf
      %1765 = vmax.xlane.f32.xlu0 %v1764
      %v1766 = vpop.xlane.xlu0 %1765
      %v1767 = vsel %vm1299, %v1754, -inf
      %1768 = vmax.xlane.f32.xlu0 %v1767
      %v1769 = vpop.xlane.xlu0 %1768
      %v1770 = vsel %vm1306, %v1759, -inf
      %1771 = vmax.xlane.f32.xlu0 %v1770
      %v1772 = vpop.xlane.xlu0 %1771
      %v1773 = vsub.f32 %v1751, %v1766
      %v1774 = vsub.f32 %v1754, %v1769
      %v1775 = vsub.f32 %v1759, %v1772
      %v1776 = vmul.f32 %v1773, 1.442695
      %v1777 = vpow.pop %v1776
      %v1778 = vmul.f32 %v1774, 1.442695
      %v1779 = vpow.pop %v1778
      %v1780 = vmul.f32 %v1775, 1.442695
      %v1781 = vpow.pop %v1780
      %v1782 = vsel %vm1299, %v1777, 0.0
      %1783 = vadd.xlane.f32.xlu0 %v1782
      %v1784 = vpop.xlane.xlu0 %1783
      %v1785 = vsel %vm1299, %v1779, 0.0
      %1786 = vadd.xlane.f32.xlu0 %v1785
      %v1787 = vpop.xlane.xlu0 %1786
      %v1788 = vsel %vm1306, %v1781, 0.0
      %1789 = vadd.xlane.f32.xlu0 %v1788
      %v1790 = vpop.xlane.xlu0 %1789
      %v1791 = vrcp.pop %v1784
      %v1792 = vmul.f32 %v1777, %v1791
      %v1793 = vrcp.pop %v1787
      %v1794 = vmul.f32 %v1779, %v1793
      %v1795 = vrcp.pop %v1790
      %v1796 = vmul.f32 %v1781, %v1795
      %v1797 = vpack.c.bf16 %v1794, %v1792
      %v1798 = vpack.c.bf16 %v1796, %v1796
      %1799 = vrot.lane.b32.xlu0 %v1236, 112
      %v1800 = vpop.permute.xlu0 %1799
      %1801 = vrot.lane.b32.xlu0 %v1237, 112
      %v1802 = vpop.permute.xlu0 %1801
      %v1805 = vsel %vm1299, %v1797, 0
      %v1808 = vsel %vm1299, %v1798, 0
      %v1811 = vand.u32 %v1802, %v1344
      %1813 = vmatprep.subr.bf16.mxu0 0
      %1814 = vmatpush1.bf16.msra.mxu0 %v1800
      %1815 = vmatprep.subr.bf16.mxu0 0
      %1816 = vmatpush1.bf16.msra.mxu0 %v1811
      %1817 = vmatprep.subr.bf16.mxu0 0
      %1818 = vmatpush1.bf16.msra.mxu0 0
      %1819 = vmatprep.subr.bf16.mxu0 0
      %1820 = vmatpush1.bf16.msra.mxu0 0
      %1821 = vmatprep.subr.bf16.mxu0 0
      %1822 = vmatpush1.bf16.msra.mxu0 0
      %1823 = vmatprep.subr.bf16.mxu0 0
      %1824 = vmatpush1.bf16.msra.mxu0 0
      %1825 = vmatprep.subr.bf16.mxu0 0
      %1826 = vmatpush1.bf16.msra.mxu0 0
      %1827 = vmatprep.subr.bf16.mxu0 0
      %1828 = vmatpush1.bf16.msra.mxu0 0
      %1829 = vmatprep.subr.bf16.mxu0 0
      %1830 = vmatpush1.bf16.msra.mxu0 0
      %1831 = vmatprep.subr.bf16.mxu0 0
      %1832 = vmatpush1.bf16.msra.mxu0 0
      %1833 = vmatprep.subr.bf16.mxu0 0
      %1834 = vmatpush1.bf16.msra.mxu0 0
      %1835 = vmatprep.subr.bf16.mxu0 0
      %1836 = vmatpush1.bf16.msra.mxu0 0
      %1837 = vmatprep.subr.bf16.mxu0 0
      %1838 = vmatpush1.bf16.msra.mxu0 0
      %1839 = vmatprep.subr.bf16.mxu0 0
      %1840 = vmatpush1.bf16.msra.mxu0 0
      %1841 = vmatprep.subr.bf16.mxu0 0
      %1842 = vmatpush1.bf16.msra.mxu0 0
      %1843 = vmatprep.subr.bf16.mxu0 0
      %1844 = vmatpush1.bf16.msra.mxu0 0
      %1845 = vmatprep.mubr.bf16.mxu0 0
      %1846 = vmatmul.mubr.bf16.gmra.mrb[0].mxu0 %v1805
      %v1847 = vpop.f32.mrb[0].mxu0
      %v1848 = vadd.f32 0.0, %v1847
      %v1849 = vpop.f32.mrb[0].mxu0
      %v1850 = vpop.f32.mrb[0].mxu0
      %v1851 = vadd.f32 0.0, %v1850
      %v1852 = vpop.f32.mrb[0].mxu0
      %1853 = vmatprep.mubr.bf16.mxu0 0
      %1854 = vmatmul.mubr.bf16.gmra.mrb[0].mxu0 %v1808
      %v1855 = vpop.f32.mrb[0].mxu0
      %v1856 = vadd.f32 0.0, %v1855
      %v1857 = vpop.f32.mrb[0].mxu0
      %v1858 = vpop.f32.mrb[0].mxu0
      %v1859 = vpop.f32.mrb[0].mxu0
      %1860 = vdwg.mxu0
      %v1861 = vpack.c.bf16 %v1851, %v1848
      %v1862 = vpack.c.bf16 %v1856, %v1856
      %v1864 = vsel %vm1238, %v1861, 0
      %v1867 = vsel %vm1238, %v1862, 0
      %v1870 = vsel %vm1408, %v1400, 0
      %1872 = vmatprep.subr.bf16.mxu0 0
      %1873 = vmatpush1.bf16.msra.mxu0 %v1870
      %1874 = vmatprep.subr.bf16.mxu0 0
      %1875 = vmatpush1.bf16.msra.mxu0 0
      %1876 = vmatprep.subr.bf16.mxu0 0
      %1877 = vmatpush1.bf16.msra.mxu0 0
      %1878 = vmatprep.subr.bf16.mxu0 0
      %1879 = vmatpush1.bf16.msra.mxu0 0
      %1880 = vmatprep.subr.bf16.mxu0 0
      %1881 = vmatpush1.bf16.msra.mxu0 0
      %1882 = vmatprep.subr.bf16.mxu0 0
      %1883 = vmatpush1.bf16.msra.mxu0 0
      %1884 = vmatprep.subr.bf16.mxu0 0
      %1885 = vmatpush1.bf16.msra.mxu0 0
      %1886 = vmatprep.subr.bf16.mxu0 0
      %1887 = vmatpush1.bf16.msra.mxu0 0
      %1888 = vmatprep.subr.bf16.mxu0 0
      %1889 = vmatpush1.bf16.msra.mxu0 0
      %1890 = vmatprep.subr.bf16.mxu0 0
      %1891 = vmatpush1.bf16.msra.mxu0 0
      %1892 = vmatprep.subr.bf16.mxu0 0
      %1893 = vmatpush1.bf16.msra.mxu0 0
      %1894 = vmatprep.subr.bf16.mxu0 0
      %1895 = vmatpush1.bf16.msra.mxu0 0
      %1896 = vmatprep.subr.bf16.mxu0 0
      %1897 = vmatpush1.bf16.msra.mxu0 0
      %1898 = vmatprep.subr.bf16.mxu0 0
      %1899 = vmatpush1.bf16.msra.mxu0 0
      %1900 = vmatprep.subr.bf16.mxu0 0
      %1901 = vmatpush1.bf16.msra.mxu0 0
      %1902 = vmatprep.subr.bf16.mxu0 0
      %1903 = vmatpush1.bf16.msra.mxu0 0
      %1904 = vmatprep.mubr.bf16.mxu0 0
      %1905 = vmatmul.mubr.bf16.gmra.mrb[0].mxu0 %v1864
      %v1906 = vpop.f32.mrb[0].mxu0
      %v1907 = vadd.f32 0.0, %v1906
      %v1908 = vpop.f32.mrb[0].mxu0
      %v1909 = vpop.f32.mrb[0].mxu0
      %v1910 = vadd.f32 0.0, %v1909
      %v1911 = vpop.f32.mrb[0].mxu0
      %1912 = vmatprep.mubr.bf16.mxu0 0
      %1913 = vmatmul.mubr.bf16.gmra.mrb[0].mxu0 %v1867
      %v1914 = vpop.f32.mrb[0].mxu0
      %v1915 = vadd.f32 0.0, %v1914
      %v1916 = vpop.f32.mrb[0].mxu0
      %v1917 = vpop.f32.mrb[0].mxu0
      %v1918 = vpop.f32.mrb[0].mxu0
      %1919 = vdwg.mxu0
      %v1920 = vadd.f32 %v1693, %v1907
      %v1921 = vadd.f32 %v1694, %v1910
      %v1922 = vadd.f32 %v1695, %v1915
      %1923 = vrot.lane.b32.xlu0 %v1232, 104
      %v1924 = vpop.permute.xlu0 %1923
      %1925 = vrot.lane.b32.xlu0 %v1233, 104
      %v1926 = vpop.permute.xlu0 %1925
      %1927 = vrot.lane.b32.xlu0 %v1234, 104
      %v1928 = vpop.permute.xlu0 %1927
      %1929 = vrot.lane.b32.xlu0 %v1235, 104
      %v1930 = vpop.permute.xlu0 %1929
      %v1932 = vsel %vm1238, %v1924, 0
      %v1935 = vsel %vm1238, %v1926, 0
      %v1938 = vsel %vm1238, %v1928, 0
      %v1941 = vsel %vm1238, %v1930, 0
      %1943 = vmatprep.subr.bf16.mxu0 0
      %1944 = vmatpush1.bf16.xpose.msra.mxu0 %v1938
      %1945 = vmatprep.subr.bf16.mxu0 0
      %1946 = vmatpush1.bf16.xpose.msra.mxu0 %v1941
      %1947 = vmatprep.subr.bf16.mxu0 0
      %1948 = vmatpush1.bf16.xpose.msra.mxu0 0
      %1949 = vmatprep.subr.bf16.mxu0 0
      %1950 = vmatpush1.bf16.xpose.msra.mxu0 0
      %1951 = vmatprep.subr.bf16.mxu0 0
      %1952 = vmatpush1.bf16.xpose.msra.mxu0 0
      %1953 = vmatprep.subr.bf16.mxu0 0
      %1954 = vmatpush1.bf16.xpose.msra.mxu0 0
      %1955 = vmatprep.subr.bf16.mxu0 0
      %1956 = vmatpush1.bf16.xpose.msra.mxu0 0
      %1957 = vmatprep.subr.bf16.mxu0 0
      %1958 = vmatpush1.bf16.xpose.msra.mxu0 0
      %1959 = vmatprep.subr.bf16.mxu0 0
      %1960 = vmatpush1.bf16.xpose.msra.mxu0 0
      %1961 = vmatprep.subr.bf16.mxu0 0
      %1962 = vmatpush1.bf16.xpose.msra.mxu0 0
      %1963 = vmatprep.subr.bf16.mxu0 0
      %1964 = vmatpush1.bf16.xpose.msra.mxu0 0
      %1965 = vmatprep.subr.bf16.mxu0 0
      %1966 = vmatpush1.bf16.xpose.msra.mxu0 0
      %1967 = vmatprep.subr.bf16.mxu0 0
      %1968 = vmatpush1.bf16.xpose.msra.mxu0 0
      %1969 = vmatprep.subr.bf16.mxu0 0
      %1970 = vmatpush1.bf16.xpose.msra.mxu0 0
      %1971 = vmatprep.subr.bf16.mxu0 0
      %1972 = vmatpush1.bf16.xpose.msra.mxu0 0
      %1973 = vmatprep.subr.bf16.mxu0 0
      %1974 = vmatpush1.bf16.xpose.msra.mxu0 0
      %1975 = vmatprep.mubr.bf16.mxu0 0
      %1976 = vmatmul.mubr.bf16.gmra.mrb[0].mxu0 %v1932
      %v1977 = vpop.f32.mrb[0].mxu0
      %v1978 = vadd.f32 0.0, %v1977
      %v1979 = vpop.f32.mrb[0].mxu0
      %v1980 = vpop.f32.mrb[0].mxu0
      %v1981 = vadd.f32 0.0, %v1980
      %v1982 = vpop.f32.mrb[0].mxu0
      %1983 = vmatprep.mubr.bf16.mxu0 0
      %1984 = vmatmul.mubr.bf16.gmra.mrb[0].mxu0 %v1935
      %v1985 = vpop.f32.mrb[0].mxu0
      %v1986 = vadd.f32 0.0, %v1985
      %v1987 = vpop.f32.mrb[0].mxu0
      %v1988 = vpop.f32.mrb[0].mxu0
      %v1989 = vpop.f32.mrb[0].mxu0
      %1990 = vdwg.mxu0
      %v1991 = vsel %vm1299, %v1978, -inf
      %1992 = vmax.xlane.f32.xlu0 %v1991
      %v1993 = vpop.xlane.xlu0 %1992
      %v1994 = vsel %vm1299, %v1981, -inf
      %1995 = vmax.xlane.f32.xlu0 %v1994
      %v1996 = vpop.xlane.xlu0 %1995
      %v1997 = vsel %vm1306, %v1986, -inf
      %1998 = vmax.xlane.f32.xlu0 %v1997
      %v1999 = vpop.xlane.xlu0 %1998
      %v2000 = vsub.f32 %v1978, %v1993
      %v2001 = vsub.f32 %v1981, %v1996
      %v2002 = vsub.f32 %v1986, %v1999
      %v2003 = vmul.f32 %v2000, 1.442695
      %v2004 = vpow.pop %v2003
      %v2005 = vmul.f32 %v2001, 1.442695
      %v2006 = vpow.pop %v2005
      %v2007 = vmul.f32 %v2002, 1.442695
      %v2008 = vpow.pop %v2007
      %v2009 = vsel %vm1299, %v2004, 0.0
      %2010 = vadd.xlane.f32.xlu0 %v2009
      %v2011 = vpop.xlane.xlu0 %2010
      %v2012 = vsel %vm1299, %v2006, 0.0
      %2013 = vadd.xlane.f32.xlu0 %v2012
      %v2014 = vpop.xlane.xlu0 %2013
      %v2015 = vsel %vm1306, %v2008, 0.0
      %2016 = vadd.xlane.f32.xlu0 %v2015
      %v2017 = vpop.xlane.xlu0 %2016
      %v2018 = vrcp.pop %v2011
      %v2019 = vmul.f32 %v2004, %v2018
      %v2020 = vrcp.pop %v2014
      %v2021 = vmul.f32 %v2006, %v2020
      %v2022 = vrcp.pop %v2017
      %v2023 = vmul.f32 %v2008, %v2022
      %v2024 = vpack.c.bf16 %v2021, %v2019
      %v2025 = vpack.c.bf16 %v2023, %v2023
      %2026 = vrot.lane.b32.xlu0 %v1236, 104
      %v2027 = vpop.permute.xlu0 %2026
      %2028 = vrot.lane.b32.xlu0 %v1237, 104
      %v2029 = vpop.permute.xlu0 %2028
      %v2032 = vsel %vm1299, %v2024, 0
      %v2035 = vsel %vm1299, %v2025, 0
      %v2038 = vand.u32 %v2029, %v1344
      %2040 = vmatprep.subr.bf16.mxu0 0
      %2041 = vmatpush1.bf16.msra.mxu0 %v2027
      %2042 = vmatprep.subr.bf16.mxu0 0
      %2043 = vmatpush1.bf16.msra.mxu0 %v2038
      %2044 = vmatprep.subr.bf16.mxu0 0
      %2045 = vmatpush1.bf16.msra.mxu0 0
      %2046 = vmatprep.subr.bf16.mxu0 0
      %2047 = vmatpush1.bf16.msra.mxu0 0
      %2048 = vmatprep.subr.bf16.mxu0 0
      %2049 = vmatpush1.bf16.msra.mxu0 0
      %2050 = vmatprep.subr.bf16.mxu0 0
      %2051 = vmatpush1.bf16.msra.mxu0 0
      %2052 = vmatprep.subr.bf16.mxu0 0
      %2053 = vmatpush1.bf16.msra.mxu0 0
      %2054 = vmatprep.subr.bf16.mxu0 0
      %2055 = vmatpush1.bf16.msra.mxu0 0
      %2056 = vmatprep.subr.bf16.mxu0 0
      %2057 = vmatpush1.bf16.msra.mxu0 0
      %2058 = vmatprep.subr.bf16.mxu0 0
      %2059 = vmatpush1.bf16.msra.mxu0 0
      %2060 = vmatprep.subr.bf16.mxu0 0
      %2061 = vmatpush1.bf16.msra.mxu0 0
      %2062 = vmatprep.subr.bf16.mxu0 0
      %2063 = vmatpush1.bf16.msra.mxu0 0
      %2064 = vmatprep.subr.bf16.mxu0 0
      %2065 = vmatpush1.bf16.msra.mxu0 0
      %2066 = vmatprep.subr.bf16.mxu0 0
      %2067 = vmatpush1.bf16.msra.mxu0 0
      %2068 = vmatprep.subr.bf16.mxu0 0
      %2069 = vmatpush1.bf16.msra.mxu0 0
      %2070 = vmatprep.subr.bf16.mxu0 0
      %2071 = vmatpush1.bf16.msra.mxu0 0
      %2072 = vmatprep.mubr.bf16.mxu0 0
      %2073 = vmatmul.mubr.bf16.gmra.mrb[0].mxu0 %v2032
      %v2074 = vpop.f32.mrb[0].mxu0
      %v2075 = vadd.f32 0.0, %v2074
      %v2076 = vpop.f32.mrb[0].mxu0
      %v2077 = vpop.f32.mrb[0].mxu0
      %v2078 = vadd.f32 0.0, %v2077
      %v2079 = vpop.f32.mrb[0].mxu0
      %2080 = vmatprep.mubr.bf16.mxu0 0
      %2081 = vmatmul.mubr.bf16.gmra.mrb[0].mxu0 %v2035
      %v2082 = vpop.f32.mrb[0].mxu0
      %v2083 = vadd.f32 0.0, %v2082
      %v2084 = vpop.f32.mrb[0].mxu0
      %v2085 = vpop.f32.mrb[0].mxu0
      %v2086 = vpop.f32.mrb[0].mxu0
      %2087 = vdwg.mxu0
      %v2088 = vpack.c.bf16 %v2078, %v2075
      %v2089 = vpack.c.bf16 %v2083, %v2083
      %v2091 = vsel %vm1238, %v2088, 0
      %v2094 = vsel %vm1238, %v2089, 0
      %v2097 = vsel %vm1408, %v1401, 0
      %2099 = vmatprep.subr.bf16.mxu0 0
      %2100 = vmatpush1.bf16.msra.mxu0 %v2097
      %2101 = vmatprep.subr.bf16.mxu0 0
      %2102 = vmatpush1.bf16.msra.mxu0 0
      %2103 = vmatprep.subr.bf16.mxu0 0
      %2104 = vmatpush1.bf16.msra.mxu0 0
      %2105 = vmatprep.subr.bf16.mxu0 0
      %2106 = vmatpush1.bf16.msra.mxu0 0
      %2107 = vmatprep.subr.bf16.mxu0 0
      %2108 = vmatpush1.bf16.msra.mxu0 0
      %2109 = vmatprep.subr.bf16.mxu0 0
      %2110 = vmatpush1.bf16.msra.mxu0 0
      %2111 = vmatprep.subr.bf16.mxu0 0
      %2112 = vmatpush1.bf16.msra.mxu0 0
      %2113 = vmatprep.subr.bf16.mxu0 0
      %2114 = vmatpush1.bf16.msra.mxu0 0
      %2115 = vmatprep.subr.bf16.mxu0 0
      %2116 = vmatpush1.bf16.msra.mxu0 0
      %2117 = vmatprep.subr.bf16.mxu0 0
      %2118 = vmatpush1.bf16.msra.mxu0 0
      %2119 = vmatprep.subr.bf16.mxu0 0
      %2120 = vmatpush1.bf16.msra.mxu0 0
      %2121 = vmatprep.subr.bf16.mxu0 0
      %2122 = vmatpush1.bf16.msra.mxu0 0
      %2123 = vmatprep.subr.bf16.mxu0 0
      %2124 = vmatpush1.bf16.msra.mxu0 0
      %2125 = vmatprep.subr.bf16.mxu0 0
      %2126 = vmatpush1.bf16.msra.mxu0 0
      %2127 = vmatprep.subr.bf16.mxu0 0
      %2128 = vmatpush1.bf16.msra.mxu0 0
      %2129 = vmatprep.subr.bf16.mxu0 0
      %2130 = vmatpush1.bf16.msra.mxu0 0
      %2131 = vmatprep.mubr.bf16.mxu0 0
      %2132 = vmatmul.mubr.bf16.gmra.mrb[0].mxu0 %v2091
      %v2133 = vpop.f32.mrb[0].mxu0
      %v2134 = vadd.f32 0.0, %v2133
      %v2135 = vpop.f32.mrb[0].mxu0
      %v2136 = vpop.f32.mrb[0].mxu0
      %v2137 = vadd.f32 0.0, %v2136
      %v2138 = vpop.f32.mrb[0].mxu0
      %2139 = vmatprep.mubr.bf16.mxu0 0
      %2140 = vmatmul.mubr.bf16.gmra.mrb[0].mxu0 %v2094
      %v2141 = vpop.f32.mrb[0].mxu0
      %v2142 = vadd.f32 0.0, %v2141
      %v2143 = vpop.f32.mrb[0].mxu0
      %v2144 = vpop.f32.mrb[0].mxu0
      %v2145 = vpop.f32.mrb[0].mxu0
      %2146 = vdwg.mxu0
      %v2147 = vadd.f32 %v1920, %v2134
      %v2148 = vadd.f32 %v1921, %v2137
      %v2149 = vadd.f32 %v1922, %v2142
      %v2150 = vld [vmem:[%s886] sm:$0x1]
      %v2152 = vlaneseq
      %v2153 = vshrl.u32 %v2152, 7
      %v2154 = vsub.s32 0, %v2153
      %v2155 = vrot.slane %v2150, %v2154
      %v2157 = vadd.f32 %v2147, %v2155
      %v2158 = vadd.f32 %v2148, %v2155
      %v2159 = vadd.f32 %v2149, %v2155
      %v2160 = vld [vmem:[%s889] sm:$0x1]
      %v2161 = vld [vmem:[%s892] sm:$0x1]
      %v2162 = vsel %vm948, %v2157, 0.0
      %2163 = vadd.xlane.f32.xlu0 %v2162
      %v2164 = vpop.xlane.xlu0 %2163
      %v2165 = vsel %vm948, %v2158, 0.0
      %2166 = vadd.xlane.f32.xlu0 %v2165
      %v2167 = vpop.xlane.xlu0 %2166
      %v2168 = vsel %vm955, %v2159, 0.0
      %2169 = vadd.xlane.f32.xlu0 %v2168
      %v2170 = vpop.xlane.xlu0 %2169
      %v2171 = vmul.f32 %v2164, %v959
      %v2172 = vmul.f32 %v2167, %v959
      %v2173 = vmul.f32 %v2170, %v959
      %v2174 = vsub.f32 %v2157, %v2171
      %v2175 = vsub.f32 %v2158, %v2172
      %v2176 = vsub.f32 %v2159, %v2173
      %v2177 = vmul.f32 %v2174, %v2174
      %v2178 = vmul.f32 %v2175, %v2175
      %v2179 = vmul.f32 %v2176, %v2176
      %v2180 = vsel %vm948, %v2177, 0.0
      %2181 = vadd.xlane.f32.xlu0 %v2180
      %v2182 = vpop.xlane.xlu0 %2181
      %v2183 = vsel %vm948, %v2178, 0.0
      %2184 = vadd.xlane.f32.xlu0 %v2183
      %v2185 = vpop.xlane.xlu0 %2184
      %v2186 = vsel %vm955, %v2179, 0.0
      %2187 = vadd.xlane.f32.xlu0 %v2186
      %v2188 = vpop.xlane.xlu0 %2187
      %v2189 = vmul.f32 %v2182, %v959
      %v2190 = vmul.f32 %v2185, %v959
      %v2191 = vmul.f32 %v2188, %v959
      %v2192 = vadd.f32 %v2189, 1e-05
      %v2193 = vadd.f32 %v2190, 1e-05
      %v2194 = vadd.f32 %v2191, 1e-05
      %v2195 = vrsqrt.pop %v2192
      %v2196 = vrsqrt.pop %v2193
      %v2197 = vrsqrt.pop %v2194
      %v2198 = vmul.f32 %v2174, %v2195
      %v2199 = vmul.f32 %v2175, %v2196
      %v2200 = vmul.f32 %v2176, %v2197
      %v2202 = vlaneseq
      %v2203 = vshrl.u32 %v2202, 7
      %v2204 = vsub.s32 0, %v2203
      %v2205 = vrot.slane %v2160, %v2204
      %v2207 = vmul.f32 %v2198, %v2205
      %v2208 = vmul.f32 %v2199, %v2205
      %v2209 = vmul.f32 %v2200, %v2205
      %v2211 = vlaneseq
      %v2212 = vshrl.u32 %v2211, 7
      %v2213 = vsub.s32 0, %v2212
      %v2214 = vrot.slane %v2161, %v2213
      %v2216 = vadd.f32 %v2207, %v2214
      %v2217 = vadd.f32 %v2208, %v2214
      %v2218 = vadd.f32 %v2209, %v2214
      %v2219 = vpack.c.bf16 %v2217, %v2216
      %v2220 = vpack.c.bf16 %v2218, %v2218
      %v2221 = vld [vmem:[%s897] sm:$0xf]
      %v2222 = vld [vmem:[%s897 + $0x4] sm:$0xf]
      %v2223 = vld [vmem:[%s897 + $0x8] sm:$0xf]
      %v2224 = vld [vmem:[%s897 + $0xc] sm:$0xf]
      %v2225 = vld [vmem:[%s900] sm:$0x1]
      %v2227 = vlaneseq
      %v2228 = vshrl.u32 %v2227, 7
      %v2229 = vsub.s32 0, %v2228
      %v2230 = vrot.slane %v2225, %v2229
      %v2236 = vunpack.c.l.b16 %v2221
      %v2237 = vunpack.c.l.b16 %v2222
      %v2238 = vunpack.c.l.b16 %v2223
      %v2239 = vunpack.c.l.b16 %v2224
      %v2240 = vpack.c.b16 %v2237, %v2236
      %v2241 = vpack.c.b16 %v2239, %v2238
      %v2245 = vsel %vm948, %v2219, 0
      %v2248 = vsel %vm948, %v2220, 0
      %2250 = vmatprep.subr.bf16.mxu0 0
      %2251 = vmatpush1.bf16.msra.mxu0 %v2240
      %2252 = vmatprep.subr.bf16.mxu0 0
      %2253 = vmatpush1.bf16.msra.mxu0 %v2241
      %2254 = vmatprep.subr.bf16.mxu0 0
      %2255 = vmatpush1.bf16.msra.mxu0 0
      %2256 = vmatprep.subr.bf16.mxu0 0
      %2257 = vmatpush1.bf16.msra.mxu0 0
      %2258 = vmatprep.subr.bf16.mxu0 0
      %2259 = vmatpush1.bf16.msra.mxu0 0
      %2260 = vmatprep.subr.bf16.mxu0 0
      %2261 = vmatpush1.bf16.msra.mxu0 0
      %2262 = vmatprep.subr.bf16.mxu0 0
      %2263 = vmatpush1.bf16.msra.mxu0 0
      %2264 = vmatprep.subr.bf16.mxu0 0
      %2265 = vmatpush1.bf16.msra.mxu0 0
      %2266 = vmatprep.subr.bf16.mxu0 0
      %2267 = vmatpush1.bf16.msra.mxu0 0
      %2268 = vmatprep.subr.bf16.mxu0 0
      %2269 = vmatpush1.bf16.msra.mxu0 0
      %2270 = vmatprep.subr.bf16.mxu0 0
      %2271 = vmatpush1.bf16.msra.mxu0 0
      %2272 = vmatprep.subr.bf16.mxu0 0
      %2273 = vmatpush1.bf16.msra.mxu0 0
      %2274 = vmatprep.subr.bf16.mxu0 0
      %2275 = vmatpush1.bf16.msra.mxu0 0
      %2276 = vmatprep.subr.bf16.mxu0 0
      %2277 = vmatpush1.bf16.msra.mxu0 0
      %2278 = vmatprep.subr.bf16.mxu0 0
      %2279 = vmatpush1.bf16.msra.mxu0 0
      %2280 = vmatprep.subr.bf16.mxu0 0
      %2281 = vmatpush1.bf16.msra.mxu0 0
      %2282 = vmatprep.mubr.bf16.mxu0 0
      %2283 = vmatmul.mubr.bf16.gmra.mrb[0].mxu0 %v2245
      %v2284 = vpop.f32.mrb[0].mxu0
      %v2285 = vadd.f32 %v2230, %v2284
      %v2286 = vpop.f32.mrb[0].mxu0
      %v2287 = vpop.f32.mrb[0].mxu0
      %v2288 = vadd.f32 %v2230, %v2287
      %v2289 = vpop.f32.mrb[0].mxu0
      %2290 = vmatprep.mubr.bf16.mxu0 0
      %2291 = vmatmul.mubr.bf16.gmra.mrb[0].mxu0 %v2248
      %v2292 = vpop.f32.mrb[0].mxu0
      %v2293 = vadd.f32 %v2230, %v2292
      %v2294 = vpop.f32.mrb[0].mxu0
      %v2295 = vpop.f32.mrb[0].mxu0
      %v2296 = vpop.f32.mrb[0].mxu0
      %2297 = vdwg.mxu0
      %v2298 = vmul.f32 %v2285, %v2285
      %v2299 = vmul.f32 %v2288, %v2288
      %v2300 = vmul.f32 %v2293, %v2293
      %v2301 = vmul.f32 %v2285, %v2298
      %v2302 = vmul.f32 %v2288, %v2299
      %v2303 = vmul.f32 %v2293, %v2300
      %v2304 = vmul.f32 %v2301, 0.044715
      %v2305 = vmul.f32 %v2302, 0.044715
      %v2306 = vmul.f32 %v2303, 0.044715
      %v2307 = vadd.f32 %v2285, %v2304
      %v2308 = vadd.f32 %v2288, %v2305
      %v2309 = vadd.f32 %v2293, %v2306
      %v2310 = vmul.f32 %v2307, 0.7978846
      %v2311 = vmul.f32 %v2308, 0.7978846
      %v2312 = vmul.f32 %v2309, 0.7978846
      %v2313 = vtanh.pop %v2310
      %v2314 = vtanh.pop %v2311
      %v2315 = vtanh.pop %v2312
      %v2316 = vadd.f32 %v2313, 1.0
      %v2317 = vadd.f32 %v2314, 1.0
      %v2318 = vadd.f32 %v2315, 1.0
      %v2319 = vmul.f32 %v2316, 0.5
      %v2320 = vmul.f32 %v2317, 0.5
      %v2321 = vmul.f32 %v2318, 0.5
      %v2322 = vmul.f32 %v2285, %v2319
      %v2323 = vmul.f32 %v2288, %v2320
      %v2324 = vmul.f32 %v2293, %v2321
      %v2325 = vpack.c.bf16 %v2323, %v2322
      %v2326 = vpack.c.bf16 %v2324, %v2324
      %v2327 = vld [vmem:[%s905] sm:$0xf]
      %v2328 = vld [vmem:[%s905 + $0x4] sm:$0xf]
      %v2329 = vld [vmem:[%s905 + $0x8] sm:$0xf]
      %v2330 = vld [vmem:[%s905 + $0xc] sm:$0xf]
      %v2331 = vld [vmem:[%s905 + $0x10] sm:$0xf]
      %v2332 = vld [vmem:[%s905 + $0x14] sm:$0xf]
      %v2333 = vld [vmem:[%s905 + $0x18] sm:$0xf]
      %v2334 = vld [vmem:[%s905 + $0x1c] sm:$0xf]
      %v2335 = vld [vmem:[%s905 + $0x20] sm:$0xf]
      %v2336 = vld [vmem:[%s905 + $0x24] sm:$0xf]
      %v2337 = vld [vmem:[%s905 + $0x28] sm:$0xf]
      %v2338 = vld [vmem:[%s905 + $0x2c] sm:$0xf]
      %v2339 = vld [vmem:[%s905 + $0x30] sm:$0xf]
      %v2340 = vld [vmem:[%s905 + $0x34] sm:$0xf]
      %v2341 = vld [vmem:[%s905 + $0x38] sm:$0xf]
      %v2342 = vld [vmem:[%s905 + $0x3c] sm:$0xf]
      %v2359 = vunpack.c.l.b16 %v2327
      %v2360 = vunpack.c.l.b16 %v2328
      %v2361 = vunpack.c.l.b16 %v2329
      %v2362 = vunpack.c.l.b16 %v2330
      %v2363 = vunpack.c.l.b16 %v2331
      %v2364 = vunpack.c.l.b16 %v2332
      %v2365 = vunpack.c.l.b16 %v2333
      %v2366 = vunpack.c.l.b16 %v2334
      %v2367 = vunpack.c.l.b16 %v2335
      %v2368 = vunpack.c.l.b16 %v2336
      %v2369 = vunpack.c.l.b16 %v2337
      %v2370 = vunpack.c.l.b16 %v2338
      %v2371 = vunpack.c.l.b16 %v2339
      %v2372 = vunpack.c.l.b16 %v2340
      %v2373 = vunpack.c.l.b16 %v2341
      %v2374 = vunpack.c.l.b16 %v2342
      %v2375 = vpack.c.b16 %v2360, %v2359
      %v2376 = vpack.c.b16 %v2362, %v2361
      %v2377 = vpack.c.b16 %v2364, %v2363
      %v2378 = vpack.c.b16 %v2366, %v2365
      %v2379 = vpack.c.b16 %v2368, %v2367
      %v2380 = vpack.c.b16 %v2370, %v2369
      %v2381 = vpack.c.b16 %v2372, %v2371
      %v2382 = vpack.c.b16 %v2374, %v2373
      %2391 = vmatprep.subr.bf16.mxu0 0
      %2392 = vmatpush1.bf16.msra.mxu0 %v2375
      %2393 = vmatprep.subr.bf16.mxu0 0
      %2394 = vmatpush1.bf16.msra.mxu0 %v2376
      %2395 = vmatprep.subr.bf16.mxu0 0
      %2396 = vmatpush1.bf16.msra.mxu0 %v2377
      %2397 = vmatprep.subr.bf16.mxu0 0
      %2398 = vmatpush1.bf16.msra.mxu0 %v2378
      %2399 = vmatprep.subr.bf16.mxu0 0
      %2400 = vmatpush1.bf16.msra.mxu0 %v2379
      %2401 = vmatprep.subr.bf16.mxu0 0
      %2402 = vmatpush1.bf16.msra.mxu0 %v2380
      %2403 = vmatprep.subr.bf16.mxu0 0
      %2404 = vmatpush1.bf16.msra.mxu0 %v2381
      %2405 = vmatprep.subr.bf16.mxu0 0
      %2406 = vmatpush1.bf16.msra.mxu0 %v2382
      %2407 = vmatprep.subr.bf16.mxu0 0
      %2408 = vmatpush1.bf16.msra.mxu0 0
      %2409 = vmatprep.subr.bf16.mxu0 0
      %2410 = vmatpush1.bf16.msra.mxu0 0
      %2411 = vmatprep.subr.bf16.mxu0 0
      %2412 = vmatpush1.bf16.msra.mxu0 0
      %2413 = vmatprep.subr.bf16.mxu0 0
      %2414 = vmatpush1.bf16.msra.mxu0 0
      %2415 = vmatprep.subr.bf16.mxu0 0
      %2416 = vmatpush1.bf16.msra.mxu0 0
      %2417 = vmatprep.subr.bf16.mxu0 0
      %2418 = vmatpush1.bf16.msra.mxu0 0
      %2419 = vmatprep.subr.bf16.mxu0 0
      %2420 = vmatpush1.bf16.msra.mxu0 0
      %2421 = vmatprep.subr.bf16.mxu0 0
      %2422 = vmatpush1.bf16.msra.mxu0 0
      %2423 = vmatprep.mubr.bf16.mxu0 0
      %2424 = vmatmul.mubr.bf16.gmra.mrb[0].mxu0 %v2325
      %v2425 = vpop.f32.mrb[0].mxu0
      %v2426 = vadd.f32 0.0, %v2425
      %v2427 = vpop.f32.mrb[0].mxu0
      %v2428 = vpop.f32.mrb[0].mxu0
      %v2429 = vadd.f32 0.0, %v2428
      %v2430 = vpop.f32.mrb[0].mxu0
      %2431 = vmatprep.mubr.bf16.mxu0 0
      %2432 = vmatmul.mubr.bf16.gmra.mrb[0].mxu0 %v2326
      %v2433 = vpop.f32.mrb[0].mxu0
      %v2434 = vadd.f32 0.0, %v2433
      %v2435 = vpop.f32.mrb[0].mxu0
      %v2436 = vpop.f32.mrb[0].mxu0
      %v2437 = vpop.f32.mrb[0].mxu0
      %2438 = vdwg.mxu0
      %v2439 = vadd.f32 %v2157, %v2426
      %v2440 = vadd.f32 %v2158, %v2429
      %v2441 = vadd.f32 %v2159, %v2434
      %v2442 = vld [vmem:[%s908] sm:$0x1]
      %v2444 = vlaneseq
      %v2445 = vshrl.u32 %v2444, 7
      %v2446 = vsub.s32 0, %v2445
      %v2447 = vrot.slane %v2442, %v2446
      %v2449 = vadd.f32 %v2439, %v2447
      %v2450 = vadd.f32 %v2440, %v2447
      %v2451 = vadd.f32 %v2441, %v2447
      %2452 = vst.msk [vmem:[#allocation2] sm:$0xff] %vm948, %v2449
      %2453 = vst.msk [vmem:[#allocation2 + $0x8] sm:$0xff] %vm948, %v2450
      %2454 = vst.msk [vmem:[#allocation2 + $0x10] sm:$0x1] %vm955, %v2451
      %s2455 = scalar_lea.vmem [#allocation2], 24
      %v2456 = vld [vmem:[%s2455] sm:$0xff]
      %v2457 = vld [vmem:[%s2455 + $0x8] sm:$0xff]
      %v2458 = vld [vmem:[%s2455 + $0x10] sm:$0x1]
      %v2459 = vld [vmem:[%s851] sm:$0x1]
      %v2460 = vld [vmem:[%s854] sm:$0x1]
      %v2461 = vsel %vm948, %v2456, 0.0
      %2462 = vadd.xlane.f32.xlu0 %v2461
      %v2463 = vpop.xlane.xlu0 %2462
      %v2464 = vsel %vm948, %v2457, 0.0
      %2465 = vadd.xlane.f32.xlu0 %v2464
      %v2466 = vpop.xlane.xlu0 %2465
      %v2467 = vsel %vm955, %v2458, 0.0
      %2468 = vadd.xlane.f32.xlu0 %v2467
      %v2469 = vpop.xlane.xlu0 %2468
      %v2470 = vmul.f32 %v2463, %v959
      %v2471 = vmul.f32 %v2466, %v959
      %v2472 = vmul.f32 %v2469, %v959
      %v2473 = vsub.f32 %v2456, %v2470
      %v2474 = vsub.f32 %v2457, %v2471
      %v2475 = vsub.f32 %v2458, %v2472
      %v2476 = vmul.f32 %v2473, %v2473
      %v2477 = vmul.f32 %v2474, %v2474
      %v2478 = vmul.f32 %v2475, %v2475
      %v2479 = vsel %vm948, %v2476, 0.0
      %2480 = vadd.xlane.f32.xlu0 %v2479
      %v2481 = vpop.xlane.xlu0 %2480
      %v2482 = vsel %vm948, %v2477, 0.0
      %2483 = vadd.xlane.f32.xlu0 %v2482
      %v2484 = vpop.xlane.xlu0 %2483
      %v2485 = vsel %vm955, %v2478, 0.0
      %2486 = vadd.xlane.f32.xlu0 %v2485
      %v2487 = vpop.xlane.xlu0 %2486
      %v2488 = vmul.f32 %v2481, %v959
      %v2489 = vmul.f32 %v2484, %v959
      %v2490 = vmul.f32 %v2487, %v959
      %v2491 = vadd.f32 %v2488, 1e-05
      %v2492 = vadd.f32 %v2489, 1e-05
      %v2493 = vadd.f32 %v2490, 1e-05
      %v2494 = vrsqrt.pop %v2491
      %v2495 = vrsqrt.pop %v2492
      %v2496 = vrsqrt.pop %v2493
      %v2497 = vmul.f32 %v2473, %v2494
      %v2498 = vmul.f32 %v2474, %v2495
      %v2499 = vmul.f32 %v2475, %v2496
      %v2501 = vlaneseq
      %v2502 = vshrl.u32 %v2501, 7
      %v2503 = vsub.s32 0, %v2502
      %v2504 = vrot.slane %v2459, %v2503
      %v2506 = vmul.f32 %v2497, %v2504
      %v2507 = vmul.f32 %v2498, %v2504
      %v2508 = vmul.f32 %v2499, %v2504
      %v2510 = vlaneseq
      %v2511 = vshrl.u32 %v2510, 7
      %v2512 = vsub.s32 0, %v2511
      %v2513 = vrot.slane %v2460, %v2512
      %v2515 = vadd.f32 %v2506, %v2513
      %v2516 = vadd.f32 %v2507, %v2513
      %v2517 = vadd.f32 %v2508, %v2513
      %v2518 = vpack.c.bf16 %v2516, %v2515
      %v2519 = vpack.c.bf16 %v2517, %v2517
      %v2520 = vld [vmem:[%s859] sm:$0xf]
      %v2521 = vld [vmem:[%s859 + $0x4] sm:$0xf]
      %v2522 = vld [vmem:[%s859 + $0x8] sm:$0xf]
      %v2523 = vld [vmem:[%s859 + $0xc] sm:$0xf]
      %v2524 = vld [vmem:[%s862] sm:$0x1]
      %v2526 = vlaneseq
      %v2527 = vshrl.u32 %v2526, 7
      %v2528 = vsub.s32 0, %v2527
      %v2529 = vrot.slane %v2524, %v2528
      %v2535 = vunpack.c.l.b16 %v2520
      %v2536 = vunpack.c.l.b16 %v2521
      %v2537 = vunpack.c.l.b16 %v2522
      %v2538 = vunpack.c.l.b16 %v2523
      %v2539 = vpack.c.b16 %v2536, %v2535
      %v2540 = vpack.c.b16 %v2538, %v2537
      %v2544 = vsel %vm948, %v2518, 0
      %v2547 = vsel %vm948, %v2519, 0
      %2549 = vmatprep.subr.bf16.mxu0 0
      %2550 = vmatpush1.bf16.msra.mxu0 %v2539
      %2551 = vmatprep.subr.bf16.mxu0 0
      %2552 = vmatpush1.bf16.msra.mxu0 %v2540
      %2553 = vmatprep.subr.bf16.mxu0 0
      %2554 = vmatpush1.bf16.msra.mxu0 0
      %2555 = vmatprep.subr.bf16.mxu0 0
      %2556 = vmatpush1.bf16.msra.mxu0 0
      %2557 = vmatprep.subr.bf16.mxu0 0
      %2558 = vmatpush1.bf16.msra.mxu0 0
      %2559 = vmatprep.subr.bf16.mxu0 0
      %2560 = vmatpush1.bf16.msra.mxu0 0
      %2561 = vmatprep.subr.bf16.mxu0 0
      %2562 = vmatpush1.bf16.msra.mxu0 0
      %2563 = vmatprep.subr.bf16.mxu0 0
      %2564 = vmatpush1.bf16.msra.mxu0 0
      %2565 = vmatprep.subr.bf16.mxu0 0
      %2566 = vmatpush1.bf16.msra.mxu0 0
      %2567 = vmatprep.subr.bf16.mxu0 0
      %2568 = vmatpush1.bf16.msra.mxu0 0
      %2569 = vmatprep.subr.bf16.mxu0 0
      %2570 = vmatpush1.bf16.msra.mxu0 0
      %2571 = vmatprep.subr.bf16.mxu0 0
      %2572 = vmatpush1.bf16.msra.mxu0 0
      %2573 = vmatprep.subr.bf16.mxu0 0
      %2574 = vmatpush1.bf16.msra.mxu0 0
      %2575 = vmatprep.subr.bf16.mxu0 0
      %2576 = vmatpush1.bf16.msra.mxu0 0
      %2577 = vmatprep.subr.bf16.mxu0 0
      %2578 = vmatpush1.bf16.msra.mxu0 0
      %2579 = vmatprep.subr.bf16.mxu0 0
      %2580 = vmatpush1.bf16.msra.mxu0 0
      %2581 = vmatprep.mubr.bf16.mxu0 0
      %2582 = vmatmul.mubr.bf16.gmra.mrb[0].mxu0 %v2544
      %v2583 = vpop.f32.mrb[0].mxu0
      %v2584 = vadd.f32 %v2529, %v2583
      %v2585 = vpop.f32.mrb[0].mxu0
      %v2586 = vpop.f32.mrb[0].mxu0
      %v2587 = vadd.f32 %v2529, %v2586
      %v2588 = vpop.f32.mrb[0].mxu0
      %2589 = vmatprep.mubr.bf16.mxu0 0
      %2590 = vmatmul.mubr.bf16.gmra.mrb[0].mxu0 %v2547
      %v2591 = vpop.f32.mrb[0].mxu0
      %v2592 = vadd.f32 %v2529, %v2591
      %v2593 = vpop.f32.mrb[0].mxu0
      %v2594 = vpop.f32.mrb[0].mxu0
      %v2595 = vpop.f32.mrb[0].mxu0
      %2596 = vdwg.mxu0
      %v2597 = vld [vmem:[%s867] sm:$0xf]
      %v2598 = vld [vmem:[%s867 + $0x4] sm:$0xf]
      %v2599 = vld [vmem:[%s867 + $0x8] sm:$0xf]
      %v2600 = vld [vmem:[%s867 + $0xc] sm:$0xf]
      %v2601 = vld [vmem:[%s870] sm:$0x1]
      %v2603 = vlaneseq
      %v2604 = vshrl.u32 %v2603, 7
      %v2605 = vsub.s32 0, %v2604
      %v2606 = vrot.slane %v2601, %v2605
      %v2612 = vunpack.c.l.b16 %v2597
      %v2613 = vunpack.c.l.b16 %v2598
      %v2614 = vunpack.c.l.b16 %v2599
      %v2615 = vunpack.c.l.b16 %v2600
      %v2616 = vpack.c.b16 %v2613, %v2612
      %v2617 = vpack.c.b16 %v2615, %v2614
      %2620 = vmatprep.subr.bf16.mxu0 0
      %2621 = vmatpush1.bf16.msra.mxu0 %v2616
      %2622 = vmatprep.subr.bf16.mxu0 0
      %2623 = vmatpush1.bf16.msra.mxu0 %v2617
      %2624 = vmatprep.subr.bf16.mxu0 0
      %2625 = vmatpush1.bf16.msra.mxu0 0
      %2626 = vmatprep.subr.bf16.mxu0 0
      %2627 = vmatpush1.bf16.msra.mxu0 0
      %2628 = vmatprep.subr.bf16.mxu0 0
      %2629 = vmatpush1.bf16.msra.mxu0 0
      %2630 = vmatprep.subr.bf16.mxu0 0
      %2631 = vmatpush1.bf16.msra.mxu0 0
      %2632 = vmatprep.subr.bf16.mxu0 0
      %2633 = vmatpush1.bf16.msra.mxu0 0
      %2634 = vmatprep.subr.bf16.mxu0 0
      %2635 = vmatpush1.bf16.msra.mxu0 0
      %2636 = vmatprep.subr.bf16.mxu0 0
      %2637 = vmatpush1.bf16.msra.mxu0 0
      %2638 = vmatprep.subr.bf16.mxu0 0
      %2639 = vmatpush1.bf16.msra.mxu0 0
      %2640 = vmatprep.subr.bf16.mxu0 0
      %2641 = vmatpush1.bf16.msra.mxu0 0
      %2642 = vmatprep.subr.bf16.mxu0 0
      %2643 = vmatpush1.bf16.msra.mxu0 0
      %2644 = vmatprep.subr.bf16.mxu0 0
      %2645 = vmatpush1.bf16.msra.mxu0 0
      %2646 = vmatprep.subr.bf16.mxu0 0
      %2647 = vmatpush1.bf16.msra.mxu0 0
      %2648 = vmatprep.subr.bf16.mxu0 0
      %2649 = vmatpush1.bf16.msra.mxu0 0
      %2650 = vmatprep.subr.bf16.mxu0 0
      %2651 = vmatpush1.bf16.msra.mxu0 0
      %2652 = vmatprep.mubr.bf16.mxu0 0
      %2653 = vmatmul.mubr.bf16.gmra.mrb[0].mxu0 %v2544
      %v2654 = vpop.f32.mrb[0].mxu0
      %v2655 = vadd.f32 %v2606, %v2654
      %v2656 = vpop.f32.mrb[0].mxu0
      %v2657 = vpop.f32.mrb[0].mxu0
      %v2658 = vadd.f32 %v2606, %v2657
      %v2659 = vpop.f32.mrb[0].mxu0
      %2660 = vmatprep.mubr.bf16.mxu0 0
      %2661 = vmatmul.mubr.bf16.gmra.mrb[0].mxu0 %v2547
      %v2662 = vpop.f32.mrb[0].mxu0
      %v2663 = vadd.f32 %v2606, %v2662
      %v2664 = vpop.f32.mrb[0].mxu0
      %v2665 = vpop.f32.mrb[0].mxu0
      %v2666 = vpop.f32.mrb[0].mxu0
      %2667 = vdwg.mxu0
      %v2668 = vld [vmem:[%s875] sm:$0xf]
      %v2669 = vld [vmem:[%s875 + $0x4] sm:$0xf]
      %v2670 = vld [vmem:[%s875 + $0x8] sm:$0xf]
      %v2671 = vld [vmem:[%s875 + $0xc] sm:$0xf]
      %v2672 = vld [vmem:[%s878] sm:$0x1]
      %v2674 = vlaneseq
      %v2675 = vshrl.u32 %v2674, 7
      %v2676 = vsub.s32 0, %v2675
      %v2677 = vrot.slane %v2672, %v2676
      %v2683 = vunpack.c.l.b16 %v2668
      %v2684 = vunpack.c.l.b16 %v2669
      %v2685 = vunpack.c.l.b16 %v2670
      %v2686 = vunpack.c.l.b16 %v2671
      %v2687 = vpack.c.b16 %v2684, %v2683
      %v2688 = vpack.c.b16 %v2686, %v2685
      %2691 = vmatprep.subr.bf16.mxu0 0
      %2692 = vmatpush1.bf16.msra.mxu0 %v2687
      %2693 = vmatprep.subr.bf16.mxu0 0
      %2694 = vmatpush1.bf16.msra.mxu0 %v2688
      %2695 = vmatprep.subr.bf16.mxu0 0
      %2696 = vmatpush1.bf16.msra.mxu0 0
      %2697 = vmatprep.subr.bf16.mxu0 0
      %2698 = vmatpush1.bf16.msra.mxu0 0
      %2699 = vmatprep.subr.bf16.mxu0 0
      %2700 = vmatpush1.bf16.msra.mxu0 0
      %2701 = vmatprep.subr.bf16.mxu0 0
      %2702 = vmatpush1.bf16.msra.mxu0 0
      %2703 = vmatprep.subr.bf16.mxu0 0
      %2704 = vmatpush1.bf16.msra.mxu0 0
      %2705 = vmatprep.subr.bf16.mxu0 0
      %2706 = vmatpush1.bf16.msra.mxu0 0
      %2707 = vmatprep.subr.bf16.mxu0 0
      %2708 = vmatpush1.bf16.msra.mxu0 0
      %2709 = vmatprep.subr.bf16.mxu0 0
      %2710 = vmatpush1.bf16.msra.mxu0 0
      %2711 = vmatprep.subr.bf16.mxu0 0
      %2712 = vmatpush1.bf16.msra.mxu0 0
      %2713 = vmatprep.subr.bf16.mxu0 0
      %2714 = vmatpush1.bf16.msra.mxu0 0
      %2715 = vmatprep.subr.bf16.mxu0 0
      %2716 = vmatpush1.bf16.msra.mxu0 0
      %2717 = vmatprep.subr.bf16.mxu0 0
      %2718 = vmatpush1.bf16.msra.mxu0 0
      %2719 = vmatprep.subr.bf16.mxu0 0
      %2720 = vmatpush1.bf16.msra.mxu0 0
      %2721 = vmatprep.subr.bf16.mxu0 0
      %2722 = vmatpush1.bf16.msra.mxu0 0
      %2723 = vmatprep.mubr.bf16.mxu0 0
      %2724 = vmatmul.mubr.bf16.gmra.mrb[0].mxu0 %v2544
      %v2725 = vpop.f32.mrb[0].mxu0
      %v2726 = vadd.f32 %v2677, %v2725
      %v2727 = vpop.f32.mrb[0].mxu0
      %v2728 = vpop.f32.mrb[0].mxu0
      %v2729 = vadd.f32 %v2677, %v2728
      %v2730 = vpop.f32.mrb[0].mxu0
      %2731 = vmatprep.mubr.bf16.mxu0 0
      %2732 = vmatmul.mubr.bf16.gmra.mrb[0].mxu0 %v2547
      %v2733 = vpop.f32.mrb[0].mxu0
      %v2734 = vadd.f32 %v2677, %v2733
      %v2735 = vpop.f32.mrb[0].mxu0
      %v2736 = vpop.f32.mrb[0].mxu0
      %v2737 = vpop.f32.mrb[0].mxu0
      %2738 = vdwg.mxu0
      %v2739 = vmul.f32 %v2584, 0.35355338
      %v2740 = vmul.f32 %v2587, 0.35355338
      %v2741 = vmul.f32 %v2592, 0.35355338
      %v2742 = vpack.c.bf16 %v2740, %v2739
      %v2743 = vpack.c.bf16 %v2741, %v2741
      %v2744 = vpack.c.bf16 %v2658, %v2655
      %v2745 = vpack.c.bf16 %v2663, %v2663
      %v2746 = vpack.c.bf16 %v2729, %v2726
      %v2747 = vpack.c.bf16 %v2734, %v2734
      %v2749 = vsel %vm1238, %v2742, 0
      %v2752 = vsel %vm1238, %v2743, 0
      %v2755 = vsel %vm1238, %v2744, 0
      %v2758 = vsel %vm1238, %v2745, 0
      %2760 = vmatprep.subr.bf16.mxu0 0
      %2761 = vmatpush1.bf16.xpose.msra.mxu0 %v2755
      %2762 = vmatprep.subr.bf16.mxu0 0
      %2763 = vmatpush1.bf16.xpose.msra.mxu0 %v2758
      %2764 = vmatprep.subr.bf16.mxu0 0
      %2765 = vmatpush1.bf16.xpose.msra.mxu0 0
      %2766 = vmatprep.subr.bf16.mxu0 0
      %2767 = vmatpush1.bf16.xpose.msra.mxu0 0
      %2768 = vmatprep.subr.bf16.mxu0 0
      %2769 = vmatpush1.bf16.xpose.msra.mxu0 0
      %2770 = vmatprep.subr.bf16.mxu0 0
      %2771 = vmatpush1.bf16.xpose.msra.mxu0 0
      %2772 = vmatprep.subr.bf16.mxu0 0
      %2773 = vmatpush1.bf16.xpose.msra.mxu0 0
      %2774 = vmatprep.subr.bf16.mxu0 0
      %2775 = vmatpush1.bf16.xpose.msra.mxu0 0
      %2776 = vmatprep.subr.bf16.mxu0 0
      %2777 = vmatpush1.bf16.xpose.msra.mxu0 0
      %2778 = vmatprep.subr.bf16.mxu0 0
      %2779 = vmatpush1.bf16.xpose.msra.mxu0 0
      %2780 = vmatprep.subr.bf16.mxu0 0
      %2781 = vmatpush1.bf16.xpose.msra.mxu0 0
      %2782 = vmatprep.subr.bf16.mxu0 0
      %2783 = vmatpush1.bf16.xpose.msra.mxu0 0
      %2784 = vmatprep.subr.bf16.mxu0 0
      %2785 = vmatpush1.bf16.xpose.msra.mxu0 0
      %2786 = vmatprep.subr.bf16.mxu0 0
      %2787 = vmatpush1.bf16.xpose.msra.mxu0 0
      %2788 = vmatprep.subr.bf16.mxu0 0
      %2789 = vmatpush1.bf16.xpose.msra.mxu0 0
      %2790 = vmatprep.subr.bf16.mxu0 0
      %2791 = vmatpush1.bf16.xpose.msra.mxu0 0
      %2792 = vmatprep.mubr.bf16.mxu0 0
      %2793 = vmatmul.mubr.bf16.gmra.mrb[0].mxu0 %v2749
      %v2794 = vpop.f32.mrb[0].mxu0
      %v2795 = vadd.f32 0.0, %v2794
      %v2796 = vpop.f32.mrb[0].mxu0
      %v2797 = vpop.f32.mrb[0].mxu0
      %v2798 = vadd.f32 0.0, %v2797
      %v2799 = vpop.f32.mrb[0].mxu0
      %2800 = vmatprep.mubr.bf16.mxu0 0
      %2801 = vmatmul.mubr.bf16.gmra.mrb[0].mxu0 %v2752
      %v2802 = vpop.f32.mrb[0].mxu0
      %v2803 = vadd.f32 0.0, %v2802
      %v2804 = vpop.f32.mrb[0].mxu0
      %v2805 = vpop.f32.mrb[0].mxu0
      %v2806 = vpop.f32.mrb[0].mxu0
      %2807 = vdwg.mxu0
      %v2808 = vsel %vm1299, %v2795, -inf
      %2809 = vmax.xlane.f32.xlu0 %v2808
      %v2810 = vpop.xlane.xlu0 %2809
      %v2811 = vsel %vm1299, %v2798, -inf
      %2812 = vmax.xlane.f32.xlu0 %v2811
      %v2813 = vpop.xlane.xlu0 %2812
      %v2814 = vsel %vm1306, %v2803, -inf
      %2815 = vmax.xlane.f32.xlu0 %v2814
      %v2816 = vpop.xlane.xlu0 %2815
      %v2817 = vsub.f32 %v2795, %v2810
      %v2818 = vsub.f32 %v2798, %v2813
      %v2819 = vsub.f32 %v2803, %v2816
      %v2820 = vmul.f32 %v2817, 1.442695
      %v2821 = vpow.pop %v2820
      %v2822 = vmul.f32 %v2818, 1.442695
      %v2823 = vpow.pop %v2822
      %v2824 = vmul.f32 %v2819, 1.442695
      %v2825 = vpow.pop %v2824
      %v2826 = vsel %vm1299, %v2821, 0.0
      %2827 = vadd.xlane.f32.xlu0 %v2826
      %v2828 = vpop.xlane.xlu0 %2827
      %v2829 = vsel %vm1299, %v2823, 0.0
      %2830 = vadd.xlane.f32.xlu0 %v2829
      %v2831 = vpop.xlane.xlu0 %2830
      %v2832 = vsel %vm1306, %v2825, 0.0
      %2833 = vadd.xlane.f32.xlu0 %v2832
      %v2834 = vpop.xlane.xlu0 %2833
      %v2835 = vrcp.pop %v2828
      %v2836 = vmul.f32 %v2821, %v2835
      %v2837 = vrcp.pop %v2831
      %v2838 = vmul.f32 %v2823, %v2837
      %v2839 = vrcp.pop %v2834
      %v2840 = vmul.f32 %v2825, %v2839
      %v2841 = vpack.c.bf16 %v2838, %v2836
      %v2842 = vpack.c.bf16 %v2840, %v2840
      %v2844 = vsel %vm1299, %v2841, 0
      %v2847 = vsel %vm1299, %v2842, 0
      %v2850 = vand.u32 %v2747, %v1344
      %2852 = vmatprep.subr.bf16.mxu0 0
      %2853 = vmatpush1.bf16.msra.mxu0 %v2746
      %2854 = vmatprep.subr.bf16.mxu0 0
      %2855 = vmatpush1.bf16.msra.mxu0 %v2850
      %2856 = vmatprep.subr.bf16.mxu0 0
      %2857 = vmatpush1.bf16.msra.mxu0 0
      %2858 = vmatprep.subr.bf16.mxu0 0
      %2859 = vmatpush1.bf16.msra.mxu0 0
      %2860 = vmatprep.subr.bf16.mxu0 0
      %2861 = vmatpush1.bf16.msra.mxu0 0
      %2862 = vmatprep.subr.bf16.mxu0 0
      %2863 = vmatpush1.bf16.msra.mxu0 0
      %2864 = vmatprep.subr.bf16.mxu0 0
      %2865 = vmatpush1.bf16.msra.mxu0 0
      %2866 = vmatprep.subr.bf16.mxu0 0
      %2867 = vmatpush1.bf16.msra.mxu0 0
      %2868 = vmatprep.subr.bf16.mxu0 0
      %2869 = vmatpush1.bf16.msra.mxu0 0
      %2870 = vmatprep.subr.bf16.mxu0 0
      %2871 = vmatpush1.bf16.msra.mxu0 0
      %2872 = vmatprep.subr.bf16.mxu0 0
      %2873 = vmatpush1.bf16.msra.mxu0 0
      %2874 = vmatprep.subr.bf16.mxu0 0
      %2875 = vmatpush1.bf16.msra.mxu0 0
      %2876 = vmatprep.subr.bf16.mxu0 0
      %2877 = vmatpush1.bf16.msra.mxu0 0
      %2878 = vmatprep.subr.bf16.mxu0 0
      %2879 = vmatpush1.bf16.msra.mxu0 0
      %2880 = vmatprep.subr.bf16.mxu0 0
      %2881 = vmatpush1.bf16.msra.mxu0 0
      %2882 = vmatprep.subr.bf16.mxu0 0
      %2883 = vmatpush1.bf16.msra.mxu0 0
      %2884 = vmatprep.mubr.bf16.mxu0 0
      %2885 = vmatmul.mubr.bf16.gmra.mrb[0].mxu0 %v2844
      %v2886 = vpop.f32.mrb[0].mxu0
      %v2887 = vadd.f32 0.0, %v2886
      %v2888 = vpop.f32.mrb[0].mxu0
      %v2889 = vpop.f32.mrb[0].mxu0
      %v2890 = vadd.f32 0.0, %v2889
      %v2891 = vpop.f32.mrb[0].mxu0
      %2892 = vmatprep.mubr.bf16.mxu0 0
      %2893 = vmatmul.mubr.bf16.gmra.mrb[0].mxu0 %v2847
      %v2894 = vpop.f32.mrb[0].mxu0
      %v2895 = vadd.f32 0.0, %v2894
      %v2896 = vpop.f32.mrb[0].mxu0
      %v2897 = vpop.f32.mrb[0].mxu0
      %v2898 = vpop.f32.mrb[0].mxu0
      %2899 = vdwg.mxu0
      %v2900 = vpack.c.bf16 %v2890, %v2887
      %v2901 = vpack.c.bf16 %v2895, %v2895
      %v2902 = vld [vmem:[%s883] sm:$0xf]
      %v2903 = vld [vmem:[%s883 + $0x4] sm:$0xf]
      %v2904 = vld [vmem:[%s883 + $0x8] sm:$0xf]
      %v2905 = vld [vmem:[%s883 + $0xc] sm:$0xf]
      %v2907 = vsel %vm1238, %v2900, 0
      %v2910 = vsel %vm1238, %v2901, 0
      %v2913 = vsel %vm1408, %v2902, 0
      %2915 = vmatprep.subr.bf16.mxu0 0
      %2916 = vmatpush1.bf16.msra.mxu0 %v2913
      %2917 = vmatprep.subr.bf16.mxu0 0
      %2918 = vmatpush1.bf16.msra.mxu0 0
      %2919 = vmatprep.subr.bf16.mxu0 0
      %2920 = vmatpush1.bf16.msra.mxu0 0
      %2921 = vmatprep.subr.bf16.mxu0 0
      %2922 = vmatpush1.bf16.msra.mxu0 0
      %2923 = vmatprep.subr.bf16.mxu0 0
      %2924 = vmatpush1.bf16.msra.mxu0 0
      %2925 = vmatprep.subr.bf16.mxu0 0
      %2926 = vmatpush1.bf16.msra.mxu0 0
      %2927 = vmatprep.subr.bf16.mxu0 0
      %2928 = vmatpush1.bf16.msra.mxu0 0
      %2929 = vmatprep.subr.bf16.mxu0 0
      %2930 = vmatpush1.bf16.msra.mxu0 0
      %2931 = vmatprep.subr.bf16.mxu0 0
      %2932 = vmatpush1.bf16.msra.mxu0 0
      %2933 = vmatprep.subr.bf16.mxu0 0
      %2934 = vmatpush1.bf16.msra.mxu0 0
      %2935 = vmatprep.subr.bf16.mxu0 0
      %2936 = vmatpush1.bf16.msra.mxu0 0
      %2937 = vmatprep.subr.bf16.mxu0 0
      %2938 = vmatpush1.bf16.msra.mxu0 0
      %2939 = vmatprep.subr.bf16.mxu0 0
      %2940 = vmatpush1.bf16.msra.mxu0 0
      %2941 = vmatprep.subr.bf16.mxu0 0
      %2942 = vmatpush1.bf16.msra.mxu0 0
      %2943 = vmatprep.subr.bf16.mxu0 0
      %2944 = vmatpush1.bf16.msra.mxu0 0
      %2945 = vmatprep.subr.bf16.mxu0 0
      %2946 = vmatpush1.bf16.msra.mxu0 0
      %2947 = vmatprep.mubr.bf16.mxu0 0
      %2948 = vmatmul.mubr.bf16.gmra.mrb[0].mxu0 %v2907
      %v2949 = vpop.f32.mrb[0].mxu0
      %v2950 = vadd.f32 0.0, %v2949
      %v2951 = vpop.f32.mrb[0].mxu0
      %v2952 = vpop.f32.mrb[0].mxu0
      %v2953 = vadd.f32 0.0, %v2952
      %v2954 = vpop.f32.mrb[0].mxu0
      %2955 = vmatprep.mubr.bf16.mxu0 0
      %2956 = vmatmul.mubr.bf16.gmra.mrb[0].mxu0 %v2910
      %v2957 = vpop.f32.mrb[0].mxu0
      %v2958 = vadd.f32 0.0, %v2957
      %v2959 = vpop.f32.mrb[0].mxu0
      %v2960 = vpop.f32.mrb[0].mxu0
      %v2961 = vpop.f32.mrb[0].mxu0
      %2962 = vdwg.mxu0
      %v2963 = vadd.f32 %v2456, %v2950
      %v2964 = vadd.f32 %v2457, %v2953
      %v2965 = vadd.f32 %v2458, %v2958
      %2968 = vrot.lane.b32.xlu0 %v2742, 120
      %v2969 = vpop.permute.xlu0 %2968
      %2970 = vrot.lane.b32.xlu0 %v2743, 120
      %v2971 = vpop.permute.xlu0 %2970
      %2974 = vrot.lane.b32.xlu0 %v2744, 120
      %v2975 = vpop.permute.xlu0 %2974
      %2976 = vrot.lane.b32.xlu0 %v2745, 120
      %v2977 = vpop.permute.xlu0 %2976
      %v2979 = vsel %vm1238, %v2969, 0
      %v2982 = vsel %vm1238, %v2971, 0
      %v2985 = vsel %vm1238, %v2975, 0
      %v2988 = vsel %vm1238, %v2977, 0
      %2990 = vmatprep.subr.bf16.mxu0 0
      %2991 = vmatpush1.bf16.xpose.msra.mxu0 %v2985
      %2992 = vmatprep.subr.bf16.mxu0 0
      %2993 = vmatpush1.bf16.xpose.msra.mxu0 %v2988
      %2994 = vmatprep.subr.bf16.mxu0 0
      %2995 = vmatpush1.bf16.xpose.msra.mxu0 0
      %2996 = vmatprep.subr.bf16.mxu0 0
      %2997 = vmatpush1.bf16.xpose.msra.mxu0 0
      %2998 = vmatprep.subr.bf16.mxu0 0
      %2999 = vmatpush1.bf16.xpose.msra.mxu0 0
      %3000 = vmatprep.subr.bf16.mxu0 0
      %3001 = vmatpush1.bf16.xpose.msra.mxu0 0
      %3002 = vmatprep.subr.bf16.mxu0 0
      %3003 = vmatpush1.bf16.xpose.msra.mxu0 0
      %3004 = vmatprep.subr.bf16.mxu0 0
      %3005 = vmatpush1.bf16.xpose.msra.mxu0 0
      %3006 = vmatprep.subr.bf16.mxu0 0
      %3007 = vmatpush1.bf16.xpose.msra.mxu0 0
      %3008 = vmatprep.subr.bf16.mxu0 0
      %3009 = vmatpush1.bf16.xpose.msra.mxu0 0
      %3010 = vmatprep.subr.bf16.mxu0 0
      %3011 = vmatpush1.bf16.xpose.msra.mxu0 0
      %3012 = vmatprep.subr.bf16.mxu0 0
      %3013 = vmatpush1.bf16.xpose.msra.mxu0 0
      %3014 = vmatprep.subr.bf16.mxu0 0
      %3015 = vmatpush1.bf16.xpose.msra.mxu0 0
      %3016 = vmatprep.subr.bf16.mxu0 0
      %3017 = vmatpush1.bf16.xpose.msra.mxu0 0
      %3018 = vmatprep.subr.bf16.mxu0 0
      %3019 = vmatpush1.bf16.xpose.msra.mxu0 0
      %3020 = vmatprep.subr.bf16.mxu0 0
      %3021 = vmatpush1.bf16.xpose.msra.mxu0 0
      %3022 = vmatprep.mubr.bf16.mxu0 0
      %3023 = vmatmul.mubr.bf16.gmra.mrb[0].mxu0 %v2979
      %v3024 = vpop.f32.mrb[0].mxu0
      %v3025 = vadd.f32 0.0, %v3024
      %v3026 = vpop.f32.mrb[0].mxu0
      %v3027 = vpop.f32.mrb[0].mxu0
      %v3028 = vadd.f32 0.0, %v3027
      %v3029 = vpop.f32.mrb[0].mxu0
      %3030 = vmatprep.mubr.bf16.mxu0 0
      %3031 = vmatmul.mubr.bf16.gmra.mrb[0].mxu0 %v2982
      %v3032 = vpop.f32.mrb[0].mxu0
      %v3033 = vadd.f32 0.0, %v3032
      %v3034 = vpop.f32.mrb[0].mxu0
      %v3035 = vpop.f32.mrb[0].mxu0
      %v3036 = vpop.f32.mrb[0].mxu0
      %3037 = vdwg.mxu0
      %v3038 = vsel %vm1299, %v3025, -inf
      %3039 = vmax.xlane.f32.xlu0 %v3038
      %v3040 = vpop.xlane.xlu0 %3039
      %v3041 = vsel %vm1299, %v3028, -inf
      %3042 = vmax.xlane.f32.xlu0 %v3041
      %v3043 = vpop.xlane.xlu0 %3042
      %v3044 = vsel %vm1306, %v3033, -inf
      %3045 = vmax.xlane.f32.xlu0 %v3044
      %v3046 = vpop.xlane.xlu0 %3045
      %v3047 = vsub.f32 %v3025, %v3040
      %v3048 = vsub.f32 %v3028, %v3043
      %v3049 = vsub.f32 %v3033, %v3046
      %v3050 = vmul.f32 %v3047, 1.442695
      %v3051 = vpow.pop %v3050
      %v3052 = vmul.f32 %v3048, 1.442695
      %v3053 = vpow.pop %v3052
      %v3054 = vmul.f32 %v3049, 1.442695
      %v3055 = vpow.pop %v3054
      %v3056 = vsel %vm1299, %v3051, 0.0
      %3057 = vadd.xlane.f32.xlu0 %v3056
      %v3058 = vpop.xlane.xlu0 %3057
      %v3059 = vsel %vm1299, %v3053, 0.0
      %3060 = vadd.xlane.f32.xlu0 %v3059
      %v3061 = vpop.xlane.xlu0 %3060
      %v3062 = vsel %vm1306, %v3055, 0.0
      %3063 = vadd.xlane.f32.xlu0 %v3062
      %v3064 = vpop.xlane.xlu0 %3063
      %v3065 = vrcp.pop %v3058
      %v3066 = vmul.f32 %v3051, %v3065
      %v3067 = vrcp.pop %v3061
      %v3068 = vmul.f32 %v3053, %v3067
      %v3069 = vrcp.pop %v3064
      %v3070 = vmul.f32 %v3055, %v3069
      %v3071 = vpack.c.bf16 %v3068, %v3066
      %v3072 = vpack.c.bf16 %v3070, %v3070
      %3075 = vrot.lane.b32.xlu0 %v2746, 120
      %v3076 = vpop.permute.xlu0 %3075
      %3077 = vrot.lane.b32.xlu0 %v2747, 120
      %v3078 = vpop.permute.xlu0 %3077
      %v3081 = vsel %vm1299, %v3071, 0
      %v3084 = vsel %vm1299, %v3072, 0
      %v3087 = vand.u32 %v3078, %v1344
      %3089 = vmatprep.subr.bf16.mxu0 0
      %3090 = vmatpush1.bf16.msra.mxu0 %v3076
      %3091 = vmatprep.subr.bf16.mxu0 0
      %3092 = vmatpush1.bf16.msra.mxu0 %v3087
      %3093 = vmatprep.subr.bf16.mxu0 0
      %3094 = vmatpush1.bf16.msra.mxu0 0
      %3095 = vmatprep.subr.bf16.mxu0 0
      %3096 = vmatpush1.bf16.msra.mxu0 0
      %3097 = vmatprep.subr.bf16.mxu0 0
      %3098 = vmatpush1.bf16.msra.mxu0 0
      %3099 = vmatprep.subr.bf16.mxu0 0
      %3100 = vmatpush1.bf16.msra.mxu0 0
      %3101 = vmatprep.subr.bf16.mxu0 0
      %3102 = vmatpush1.bf16.msra.mxu0 0
      %3103 = vmatprep.subr.bf16.mxu0 0
      %3104 = vmatpush1.bf16.msra.mxu0 0
      %3105 = vmatprep.subr.bf16.mxu0 0
      %3106 = vmatpush1.bf16.msra.mxu0 0
      %3107 = vmatprep.subr.bf16.mxu0 0
      %3108 = vmatpush1.bf16.msra.mxu0 0
      %3109 = vmatprep.subr.bf16.mxu0 0
      %3110 = vmatpush1.bf16.msra.mxu0 0
      %3111 = vmatprep.subr.bf16.mxu0 0
      %3112 = vmatpush1.bf16.msra.mxu0 0
      %3113 = vmatprep.subr.bf16.mxu0 0
      %3114 = vmatpush1.bf16.msra.mxu0 0
      %3115 = vmatprep.subr.bf16.mxu0 0
      %3116 = vmatpush1.bf16.msra.mxu0 0
      %3117 = vmatprep.subr.bf16.mxu0 0
      %3118 = vmatpush1.bf16.msra.mxu0 0
      %3119 = vmatprep.subr.bf16.mxu0 0
      %3120 = vmatpush1.bf16.msra.mxu0 0
      %3121 = vmatprep.mubr.bf16.mxu0 0
      %3122 = vmatmul.mubr.bf16.gmra.mrb[0].mxu0 %v3081
      %v3123 = vpop.f32.mrb[0].mxu0
      %v3124 = vadd.f32 0.0, %v3123
      %v3125 = vpop.f32.mrb[0].mxu0
      %v3126 = vpop.f32.mrb[0].mxu0
      %v3127 = vadd.f32 0.0, %v3126
      %v3128 = vpop.f32.mrb[0].mxu0
      %3129 = vmatprep.mubr.bf16.mxu0 0
      %3130 = vmatmul.mubr.bf16.gmra.mrb[0].mxu0 %v3084
      %v3131 = vpop.f32.mrb[0].mxu0
      %v3132 = vadd.f32 0.0, %v3131
      %v3133 = vpop.f32.mrb[0].mxu0
      %v3134 = vpop.f32.mrb[0].mxu0
      %v3135 = vpop.f32.mrb[0].mxu0
      %3136 = vdwg.mxu0
      %v3137 = vpack.c.bf16 %v3127, %v3124
      %v3138 = vpack.c.bf16 %v3132, %v3132
      %v3140 = vsel %vm1238, %v3137, 0
      %v3143 = vsel %vm1238, %v3138, 0
      %v3146 = vsel %vm1408, %v2903, 0
      %3148 = vmatprep.subr.bf16.mxu0 0
      %3149 = vmatpush1.bf16.msra.mxu0 %v3146
      %3150 = vmatprep.subr.bf16.mxu0 0
      %3151 = vmatpush1.bf16.msra.mxu0 0
      %3152 = vmatprep.subr.bf16.mxu0 0
      %3153 = vmatpush1.bf16.msra.mxu0 0
      %3154 = vmatprep.subr.bf16.mxu0 0
      %3155 = vmatpush1.bf16.msra.mxu0 0
      %3156 = vmatprep.subr.bf16.mxu0 0
      %3157 = vmatpush1.bf16.msra.mxu0 0
      %3158 = vmatprep.subr.bf16.mxu0 0
      %3159 = vmatpush1.bf16.msra.mxu0 0
      %3160 = vmatprep.subr.bf16.mxu0 0
      %3161 = vmatpush1.bf16.msra.mxu0 0
      %3162 = vmatprep.subr.bf16.mxu0 0
      %3163 = vmatpush1.bf16.msra.mxu0 0
      %3164 = vmatprep.subr.bf16.mxu0 0
      %3165 = vmatpush1.bf16.msra.mxu0 0
      %3166 = vmatprep.subr.bf16.mxu0 0
      %3167 = vmatpush1.bf16.msra.mxu0 0
      %3168 = vmatprep.subr.bf16.mxu0 0
      %3169 = vmatpush1.bf16.msra.mxu0 0
      %3170 = vmatprep.subr.bf16.mxu0 0
      %3171 = vmatpush1.bf16.msra.mxu0 0
      %3172 = vmatprep.subr.bf16.mxu0 0
      %3173 = vmatpush1.bf16.msra.mxu0 0
      %3174 = vmatprep.subr.bf16.mxu0 0
      %3175 = vmatpush1.bf16.msra.mxu0 0
      %3176 = vmatprep.subr.bf16.mxu0 0
      %3177 = vmatpush1.bf16.msra.mxu0 0
      %3178 = vmatprep.subr.bf16.mxu0 0
      %3179 = vmatpush1.bf16.msra.mxu0 0
      %3180 = vmatprep.mubr.bf16.mxu0 0
      %3181 = vmatmul.mubr.bf16.gmra.mrb[0].mxu0 %v3140
      %v3182 = vpop.f32.mrb[0].mxu0
      %v3183 = vadd.f32 0.0, %v3182
      %v3184 = vpop.f32.mrb[0].mxu0
      %v3185 = vpop.f32.mrb[0].mxu0
      %v3186 = vadd.f32 0.0, %v3185
      %v3187 = vpop.f32.mrb[0].mxu0
      %3188 = vmatprep.mubr.bf16.mxu0 0
      %3189 = vmatmul.mubr.bf16.gmra.mrb[0].mxu0 %v3143
      %v3190 = vpop.f32.mrb[0].mxu0
      %v3191 = vadd.f32 0.0, %v3190
      %v3192 = vpop.f32.mrb[0].mxu0
      %v3193 = vpop.f32.mrb[0].mxu0
      %v3194 = vpop.f32.mrb[0].mxu0
      %3195 = vdwg.mxu0
      %v3196 = vadd.f32 %v2963, %v3183
      %v3197 = vadd.f32 %v2964, %v3186
      %v3198 = vadd.f32 %v2965, %v3191
      %3199 = vrot.lane.b32.xlu0 %v2742, 112
      %v3200 = vpop.permute.xlu0 %3199
      %3201 = vrot.lane.b32.xlu0 %v2743, 112
      %v3202 = vpop.permute.xlu0 %3201
      %3203 = vrot.lane.b32.xlu0 %v2744, 112
      %v3204 = vpop.permute.xlu0 %3203
      %3205 = vrot.lane.b32.xlu0 %v2745, 112
      %v3206 = vpop.permute.xlu0 %3205
      %v3208 = vsel %vm1238, %v3200, 0
      %v3211 = vsel %vm1238, %v3202, 0
      %v3214 = vsel %vm1238, %v3204, 0
      %v3217 = vsel %vm1238, %v3206, 0
      %3219 = vmatprep.subr.bf16.mxu0 0
      %3220 = vmatpush1.bf16.xpose.msra.mxu0 %v3214
      %3221 = vmatprep.subr.bf16.mxu0 0
      %3222 = vmatpush1.bf16.xpose.msra.mxu0 %v3217
      %3223 = vmatprep.subr.bf16.mxu0 0
      %3224 = vmatpush1.bf16.xpose.msra.mxu0 0
      %3225 = vmatprep.subr.bf16.mxu0 0
      %3226 = vmatpush1.bf16.xpose.msra.mxu0 0
      %3227 = vmatprep.subr.bf16.mxu0 0
      %3228 = vmatpush1.bf16.xpose.msra.mxu0 0
      %3229 = vmatprep.subr.bf16.mxu0 0
      %3230 = vmatpush1.bf16.xpose.msra.mxu0 0
      %3231 = vmatprep.subr.bf16.mxu0 0
      %3232 = vmatpush1.bf16.xpose.msra.mxu0 0
      %3233 = vmatprep.subr.bf16.mxu0 0
      %3234 = vmatpush1.bf16.xpose.msra.mxu0 0
      %3235 = vmatprep.subr.bf16.mxu0 0
      %3236 = vmatpush1.bf16.xpose.msra.mxu0 0
      %3237 = vmatprep.subr.bf16.mxu0 0
      %3238 = vmatpush1.bf16.xpose.msra.mxu0 0
      %3239 = vmatprep.subr.bf16.mxu0 0
      %3240 = vmatpush1.bf16.xpose.msra.mxu0 0
      %3241 = vmatprep.subr.bf16.mxu0 0
      %3242 = vmatpush1.bf16.xpose.msra.mxu0 0
      %3243 = vmatprep.subr.bf16.mxu0 0
      %3244 = vmatpush1.bf16.xpose.msra.mxu0 0
      %3245 = vmatprep.subr.bf16.mxu0 0
      %3246 = vmatpush1.bf16.xpose.msra.mxu0 0
      %3247 = vmatprep.subr.bf16.mxu0 0
      %3248 = vmatpush1.bf16.xpose.msra.mxu0 0
      %3249 = vmatprep.subr.bf16.mxu0 0
      %3250 = vmatpush1.bf16.xpose.msra.mxu0 0
      %3251 = vmatprep.mubr.bf16.mxu0 0
      %3252 = vmatmul.mubr.bf16.gmra.mrb[0].mxu0 %v3208
      %v3253 = vpop.f32.mrb[0].mxu0
      %v3254 = vadd.f32 0.0, %v3253
      %v3255 = vpop.f32.mrb[0].mxu0
      %v3256 = vpop.f32.mrb[0].mxu0
      %v3257 = vadd.f32 0.0, %v3256
      %v3258 = vpop.f32.mrb[0].mxu0
      %3259 = vmatprep.mubr.bf16.mxu0 0
      %3260 = vmatmul.mubr.bf16.gmra.mrb[0].mxu0 %v3211
      %v3261 = vpop.f32.mrb[0].mxu0
      %v3262 = vadd.f32 0.0, %v3261
      %v3263 = vpop.f32.mrb[0].mxu0
      %v3264 = vpop.f32.mrb[0].mxu0
      %v3265 = vpop.f32.mrb[0].mxu0
      %3266 = vdwg.mxu0
      %v3267 = vsel %vm1299, %v3254, -inf
      %3268 = vmax.xlane.f32.xlu0 %v3267
      %v3269 = vpop.xlane.xlu0 %3268
      %v3270 = vsel %vm1299, %v3257, -inf
      %3271 = vmax.xlane.f32.xlu0 %v3270
      %v3272 = vpop.xlane.xlu0 %3271
      %v3273 = vsel %vm1306, %v3262, -inf
      %3274 = vmax.xlane.f32.xlu0 %v3273
      %v3275 = vpop.xlane.xlu0 %3274
      %v3276 = vsub.f32 %v3254, %v3269
      %v3277 = vsub.f32 %v3257, %v3272
      %v3278 = vsub.f32 %v3262, %v3275
      %v3279 = vmul.f32 %v3276, 1.442695
      %v3280 = vpow.pop %v3279
      %v3281 = vmul.f32 %v3277, 1.442695
      %v3282 = vpow.pop %v3281
      %v3283 = vmul.f32 %v3278, 1.442695
      %v3284 = vpow.pop %v3283
      %v3285 = vsel %vm1299, %v3280, 0.0
      %3286 = vadd.xlane.f32.xlu0 %v3285
      %v3287 = vpop.xlane.xlu0 %3286
      %v3288 = vsel %vm1299, %v3282, 0.0
      %3289 = vadd.xlane.f32.xlu0 %v3288
      %v3290 = vpop.xlane.xlu0 %3289
      %v3291 = vsel %vm1306, %v3284, 0.0
      %3292 = vadd.xlane.f32.xlu0 %v3291
      %v3293 = vpop.xlane.xlu0 %3292
      %v3294 = vrcp.pop %v3287
      %v3295 = vmul.f32 %v3280, %v3294
      %v3296 = vrcp.pop %v3290
      %v3297 = vmul.f32 %v3282, %v3296
      %v3298 = vrcp.pop %v3293
      %v3299 = vmul.f32 %v3284, %v3298
      %v3300 = vpack.c.bf16 %v3297, %v3295
      %v3301 = vpack.c.bf16 %v3299, %v3299
      %3302 = vrot.lane.b32.xlu0 %v2746, 112
      %v3303 = vpop.permute.xlu0 %3302
      %3304 = vrot.lane.b32.xlu0 %v2747, 112
      %v3305 = vpop.permute.xlu0 %3304
      %v3308 = vsel %vm1299, %v3300, 0
      %v3311 = vsel %vm1299, %v3301, 0
      %v3314 = vand.u32 %v3305, %v1344
      %3316 = vmatprep.subr.bf16.mxu0 0
      %3317 = vmatpush1.bf16.msra.mxu0 %v3303
      %3318 = vmatprep.subr.bf16.mxu0 0
      %3319 = vmatpush1.bf16.msra.mxu0 %v3314
      %3320 = vmatprep.subr.bf16.mxu0 0
      %3321 = vmatpush1.bf16.msra.mxu0 0
      %3322 = vmatprep.subr.bf16.mxu0 0
      %3323 = vmatpush1.bf16.msra.mxu0 0
      %3324 = vmatprep.subr.bf16.mxu0 0
      %3325 = vmatpush1.bf16.msra.mxu0 0
      %3326 = vmatprep.subr.bf16.mxu0 0
      %3327 = vmatpush1.bf16.msra.mxu0 0
      %3328 = vmatprep.subr.bf16.mxu0 0
      %3329 = vmatpush1.bf16.msra.mxu0 0
      %3330 = vmatprep.subr.bf16.mxu0 0
      %3331 = vmatpush1.bf16.msra.mxu0 0
      %3332 = vmatprep.subr.bf16.mxu0 0
      %3333 = vmatpush1.bf16.msra.mxu0 0
      %3334 = vmatprep.subr.bf16.mxu0 0
      %3335 = vmatpush1.bf16.msra.mxu0 0
      %3336 = vmatprep.subr.bf16.mxu0 0
      %3337 = vmatpush1.bf16.msra.mxu0 0
      %3338 = vmatprep.subr.bf16.mxu0 0
      %3339 = vmatpush1.bf16.msra.mxu0 0
      %3340 = vmatprep.subr.bf16.mxu0 0
      %3341 = vmatpush1.bf16.msra.mxu0 0
      %3342 = vmatprep.subr.bf16.mxu0 0
      %3343 = vmatpush1.bf16.msra.mxu0 0
      %3344 = vmatprep.subr.bf16.mxu0 0
      %3345 = vmatpush1.bf16.msra.mxu0 0
      %3346 = vmatprep.subr.bf16.mxu0 0
      %3347 = vmatpush1.bf16.msra.mxu0 0
      %3348 = vmatprep.mubr.bf16.mxu0 0
      %3349 = vmatmul.mubr.bf16.gmra.mrb[0].mxu0 %v3308
      %v3350 = vpop.f32.mrb[0].mxu0
      %v3351 = vadd.f32 0.0, %v3350
      %v3352 = vpop.f32.mrb[0].mxu0
      %v3353 = vpop.f32.mrb[0].mxu0
      %v3354 = vadd.f32 0.0, %v3353
      %v3355 = vpop.f32.mrb[0].mxu0
      %3356 = vmatprep.mubr.bf16.mxu0 0
      %3357 = vmatmul.mubr.bf16.gmra.mrb[0].mxu0 %v3311
      %v3358 = vpop.f32.mrb[0].mxu0
      %v3359 = vadd.f32 0.0, %v3358
      %v3360 = vpop.f32.mrb[0].mxu0
      %v3361 = vpop.f32.mrb[0].mxu0
      %v3362 = vpop.f32.mrb[0].mxu0
      %3363 = vdwg.mxu0
      %v3364 = vpack.c.bf16 %v3354, %v3351
      %v3365 = vpack.c.bf16 %v3359, %v3359
      %v3367 = vsel %vm1238, %v3364, 0
      %v3370 = vsel %vm1238, %v3365, 0
      %v3373 = vsel %vm1408, %v2904, 0
      %3375 = vmatprep.subr.bf16.mxu0 0
      %3376 = vmatpush1.bf16.msra.mxu0 %v3373
      %3377 = vmatprep.subr.bf16.mxu0 0
      %3378 = vmatpush1.bf16.msra.mxu0 0
      %3379 = vmatprep.subr.bf16.mxu0 0
      %3380 = vmatpush1.bf16.msra.mxu0 0
      %3381 = vmatprep.subr.bf16.mxu0 0
      %3382 = vmatpush1.bf16.msra.mxu0 0
      %3383 = vmatprep.subr.bf16.mxu0 0
      %3384 = vmatpush1.bf16.msra.mxu0 0
      %3385 = vmatprep.subr.bf16.mxu0 0
      %3386 = vmatpush1.bf16.msra.mxu0 0
      %3387 = vmatprep.subr.bf16.mxu0 0
      %3388 = vmatpush1.bf16.msra.mxu0 0
      %3389 = vmatprep.subr.bf16.mxu0 0
      %3390 = vmatpush1.bf16.msra.mxu0 0
      %3391 = vmatprep.subr.bf16.mxu0 0
      %3392 = vmatpush1.bf16.msra.mxu0 0
      %3393 = vmatprep.subr.bf16.mxu0 0
      %3394 = vmatpush1.bf16.msra.mxu0 0
      %3395 = vmatprep.subr.bf16.mxu0 0
      %3396 = vmatpush1.bf16.msra.mxu0 0
      %3397 = vmatprep.subr.bf16.mxu0 0
      %3398 = vmatpush1.bf16.msra.mxu0 0
      %3399 = vmatprep.subr.bf16.mxu0 0
      %3400 = vmatpush1.bf16.msra.mxu0 0
      %3401 = vmatprep.subr.bf16.mxu0 0
      %3402 = vmatpush1.bf16.msra.mxu0 0
      %3403 = vmatprep.subr.bf16.mxu0 0
      %3404 = vmatpush1.bf16.msra.mxu0 0
      %3405 = vmatprep.subr.bf16.mxu0 0
      %3406 = vmatpush1.bf16.msra.mxu0 0
      %3407 = vmatprep.mubr.bf16.mxu0 0
      %3408 = vmatmul.mubr.bf16.gmra.mrb[0].mxu0 %v3367
      %v3409 = vpop.f32.mrb[0].mxu0
      %v3410 = vadd.f32 0.0, %v3409
      %v3411 = vpop.f32.mrb[0].mxu0
      %v3412 = vpop.f32.mrb[0].mxu0
      %v3413 = vadd.f32 0.0, %v3412
      %v3414 = vpop.f32.mrb[0].mxu0
      %3415 = vmatprep.mubr.bf16.mxu0 0
      %3416 = vmatmul.mubr.bf16.gmra.mrb[0].mxu0 %v3370
      %v3417 = vpop.f32.mrb[0].mxu0
      %v3418 = vadd.f32 0.0, %v3417
      %v3419 = vpop.f32.mrb[0].mxu0
      %v3420 = vpop.f32.mrb[0].mxu0
      %v3421 = vpop.f32.mrb[0].mxu0
      %3422 = vdwg.mxu0
      %v3423 = vadd.f32 %v3196, %v3410
      %v3424 = vadd.f32 %v3197, %v3413
      %v3425 = vadd.f32 %v3198, %v3418
      %3426 = vrot.lane.b32.xlu0 %v2742, 104
      %v3427 = vpop.permute.xlu0 %3426
      %3428 = vrot.lane.b32.xlu0 %v2743, 104
      %v3429 = vpop.permute.xlu0 %3428
      %3430 = vrot.lane.b32.xlu0 %v2744, 104
      %v3431 = vpop.permute.xlu0 %3430
      %3432 = vrot.lane.b32.xlu0 %v2745, 104
      %v3433 = vpop.permute.xlu0 %3432
      %v3435 = vsel %vm1238, %v3427, 0
      %v3438 = vsel %vm1238, %v3429, 0
      %v3441 = vsel %vm1238, %v3431, 0
      %v3444 = vsel %vm1238, %v3433, 0
      %3446 = vmatprep.subr.bf16.mxu0 0
      %3447 = vmatpush1.bf16.xpose.msra.mxu0 %v3441
      %3448 = vmatprep.subr.bf16.mxu0 0
      %3449 = vmatpush1.bf16.xpose.msra.mxu0 %v3444
      %3450 = vmatprep.subr.bf16.mxu0 0
      %3451 = vmatpush1.bf16.xpose.msra.mxu0 0
      %3452 = vmatprep.subr.bf16.mxu0 0
      %3453 = vmatpush1.bf16.xpose.msra.mxu0 0
      %3454 = vmatprep.subr.bf16.mxu0 0
      %3455 = vmatpush1.bf16.xpose.msra.mxu0 0
      %3456 = vmatprep.subr.bf16.mxu0 0
      %3457 = vmatpush1.bf16.xpose.msra.mxu0 0
      %3458 = vmatprep.subr.bf16.mxu0 0
      %3459 = vmatpush1.bf16.xpose.msra.mxu0 0
      %3460 = vmatprep.subr.bf16.mxu0 0
      %3461 = vmatpush1.bf16.xpose.msra.mxu0 0
      %3462 = vmatprep.subr.bf16.mxu0 0
      %3463 = vmatpush1.bf16.xpose.msra.mxu0 0
      %3464 = vmatprep.subr.bf16.mxu0 0
      %3465 = vmatpush1.bf16.xpose.msra.mxu0 0
      %3466 = vmatprep.subr.bf16.mxu0 0
      %3467 = vmatpush1.bf16.xpose.msra.mxu0 0
      %3468 = vmatprep.subr.bf16.mxu0 0
      %3469 = vmatpush1.bf16.xpose.msra.mxu0 0
      %3470 = vmatprep.subr.bf16.mxu0 0
      %3471 = vmatpush1.bf16.xpose.msra.mxu0 0
      %3472 = vmatprep.subr.bf16.mxu0 0
      %3473 = vmatpush1.bf16.xpose.msra.mxu0 0
      %3474 = vmatprep.subr.bf16.mxu0 0
      %3475 = vmatpush1.bf16.xpose.msra.mxu0 0
      %3476 = vmatprep.subr.bf16.mxu0 0
      %3477 = vmatpush1.bf16.xpose.msra.mxu0 0
      %3478 = vmatprep.mubr.bf16.mxu0 0
      %3479 = vmatmul.mubr.bf16.gmra.mrb[0].mxu0 %v3435
      %v3480 = vpop.f32.mrb[0].mxu0
      %v3481 = vadd.f32 0.0, %v3480
      %v3482 = vpop.f32.mrb[0].mxu0
      %v3483 = vpop.f32.mrb[0].mxu0
      %v3484 = vadd.f32 0.0, %v3483
      %v3485 = vpop.f32.mrb[0].mxu0
      %3486 = vmatprep.mubr.bf16.mxu0 0
      %3487 = vmatmul.mubr.bf16.gmra.mrb[0].mxu0 %v3438
      %v3488 = vpop.f32.mrb[0].mxu0
      %v3489 = vadd.f32 0.0, %v3488
      %v3490 = vpop.f32.mrb[0].mxu0
      %v3491 = vpop.f32.mrb[0].mxu0
      %v3492 = vpop.f32.mrb[0].mxu0
      %3493 = vdwg.mxu0
      %v3494 = vsel %vm1299, %v3481, -inf
      %3495 = vmax.xlane.f32.xlu0 %v3494
      %v3496 = vpop.xlane.xlu0 %3495
      %v3497 = vsel %vm1299, %v3484, -inf
      %3498 = vmax.xlane.f32.xlu0 %v3497
      %v3499 = vpop.xlane.xlu0 %3498
      %v3500 = vsel %vm1306, %v3489, -inf
      %3501 = vmax.xlane.f32.xlu0 %v3500
      %v3502 = vpop.xlane.xlu0 %3501
      %v3503 = vsub.f32 %v3481, %v3496
      %v3504 = vsub.f32 %v3484, %v3499
      %v3505 = vsub.f32 %v3489, %v3502
      %v3506 = vmul.f32 %v3503, 1.442695
      %v3507 = vpow.pop %v3506
      %v3508 = vmul.f32 %v3504, 1.442695
      %v3509 = vpow.pop %v3508
      %v3510 = vmul.f32 %v3505, 1.442695
      %v3511 = vpow.pop %v3510
      %v3512 = vsel %vm1299, %v3507, 0.0
      %3513 = vadd.xlane.f32.xlu0 %v3512
      %v3514 = vpop.xlane.xlu0 %3513
      %v3515 = vsel %vm1299, %v3509, 0.0
      %3516 = vadd.xlane.f32.xlu0 %v3515
      %v3517 = vpop.xlane.xlu0 %3516
      %v3518 = vsel %vm1306, %v3511, 0.0
      %3519 = vadd.xlane.f32.xlu0 %v3518
      %v3520 = vpop.xlane.xlu0 %3519
      %v3521 = vrcp.pop %v3514
      %v3522 = vmul.f32 %v3507, %v3521
      %v3523 = vrcp.pop %v3517
      %v3524 = vmul.f32 %v3509, %v3523
      %v3525 = vrcp.pop %v3520
      %v3526 = vmul.f32 %v3511, %v3525
      %v3527 = vpack.c.bf16 %v3524, %v3522
      %v3528 = vpack.c.bf16 %v3526, %v3526
      %3529 = vrot.lane.b32.xlu0 %v2746, 104
      %v3530 = vpop.permute.xlu0 %3529
      %3531 = vrot.lane.b32.xlu0 %v2747, 104
      %v3532 = vpop.permute.xlu0 %3531
      %v3535 = vsel %vm1299, %v3527, 0
      %v3538 = vsel %vm1299, %v3528, 0
      %v3541 = vand.u32 %v3532, %v1344
      %3543 = vmatprep.subr.bf16.mxu0 0
      %3544 = vmatpush1.bf16.msra.mxu0 %v3530
      %3545 = vmatprep.subr.bf16.mxu0 0
      %3546 = vmatpush1.bf16.msra.mxu0 %v3541
      %3547 = vmatprep.subr.bf16.mxu0 0
      %3548 = vmatpush1.bf16.msra.mxu0 0
      %3549 = vmatprep.subr.bf16.mxu0 0
      %3550 = vmatpush1.bf16.msra.mxu0 0
      %3551 = vmatprep.subr.bf16.mxu0 0
      %3552 = vmatpush1.bf16.msra.mxu0 0
      %3553 = vmatprep.subr.bf16.mxu0 0
      %3554 = vmatpush1.bf16.msra.mxu0 0
      %3555 = vmatprep.subr.bf16.mxu0 0
      %3556 = vmatpush1.bf16.msra.mxu0 0
      %3557 = vmatprep.subr.bf16.mxu0 0
      %3558 = vmatpush1.bf16.msra.mxu0 0
      %3559 = vmatprep.subr.bf16.mxu0 0
      %3560 = vmatpush1.bf16.msra.mxu0 0
      %3561 = vmatprep.subr.bf16.mxu0 0
      %3562 = vmatpush1.bf16.msra.mxu0 0
      %3563 = vmatprep.subr.bf16.mxu0 0
      %3564 = vmatpush1.bf16.msra.mxu0 0
      %3565 = vmatprep.subr.bf16.mxu0 0
      %3566 = vmatpush1.bf16.msra.mxu0 0
      %3567 = vmatprep.subr.bf16.mxu0 0
      %3568 = vmatpush1.bf16.msra.mxu0 0
      %3569 = vmatprep.subr.bf16.mxu0 0
      %3570 = vmatpush1.bf16.msra.mxu0 0
      %3571 = vmatprep.subr.bf16.mxu0 0
      %3572 = vmatpush1.bf16.msra.mxu0 0
      %3573 = vmatprep.subr.bf16.mxu0 0
      %3574 = vmatpush1.bf16.msra.mxu0 0
      %3575 = vmatprep.mubr.bf16.mxu0 0
      %3576 = vmatmul.mubr.bf16.gmra.mrb[0].mxu0 %v3535
      %v3577 = vpop.f32.mrb[0].mxu0
      %v3578 = vadd.f32 0.0, %v3577
      %v3579 = vpop.f32.mrb[0].mxu0
      %v3580 = vpop.f32.mrb[0].mxu0
      %v3581 = vadd.f32 0.0, %v3580
      %v3582 = vpop.f32.mrb[0].mxu0
      %3583 = vmatprep.mubr.bf16.mxu0 0
      %3584 = vmatmul.mubr.bf16.gmra.mrb[0].mxu0 %v3538
      %v3585 = vpop.f32.mrb[0].mxu0
      %v3586 = vadd.f32 0.0, %v3585
      %v3587 = vpop.f32.mrb[0].mxu0
      %v3588 = vpop.f32.mrb[0].mxu0
      %v3589 = vpop.f32.mrb[0].mxu0
      %3590 = vdwg.mxu0
      %v3591 = vpack.c.bf16 %v3581, %v3578
      %v3592 = vpack.c.bf16 %v3586, %v3586
      %v3594 = vsel %vm1238, %v3591, 0
      %v3597 = vsel %vm1238, %v3592, 0
      %v3600 = vsel %vm1408, %v2905, 0
      %3602 = vmatprep.subr.bf16.mxu0 0
      %3603 = vmatpush1.bf16.msra.mxu0 %v3600
      %3604 = vmatprep.subr.bf16.mxu0 0
      %3605 = vmatpush1.bf16.msra.mxu0 0
      %3606 = vmatprep.subr.bf16.mxu0 0
      %3607 = vmatpush1.bf16.msra.mxu0 0
      %3608 = vmatprep.subr.bf16.mxu0 0
      %3609 = vmatpush1.bf16.msra.mxu0 0
      %3610 = vmatprep.subr.bf16.mxu0 0
      %3611 = vmatpush1.bf16.msra.mxu0 0
      %3612 = vmatprep.subr.bf16.mxu0 0
      %3613 = vmatpush1.bf16.msra.mxu0 0
      %3614 = vmatprep.subr.bf16.mxu0 0
      %3615 = vmatpush1.bf16.msra.mxu0 0
      %3616 = vmatprep.subr.bf16.mxu0 0
      %3617 = vmatpush1.bf16.msra.mxu0 0
      %3618 = vmatprep.subr.bf16.mxu0 0
      %3619 = vmatpush1.bf16.msra.mxu0 0
      %3620 = vmatprep.subr.bf16.mxu0 0
      %3621 = vmatpush1.bf16.msra.mxu0 0
      %3622 = vmatprep.subr.bf16.mxu0 0
      %3623 = vmatpush1.bf16.msra.mxu0 0
      %3624 = vmatprep.subr.bf16.mxu0 0
      %3625 = vmatpush1.bf16.msra.mxu0 0
      %3626 = vmatprep.subr.bf16.mxu0 0
      %3627 = vmatpush1.bf16.msra.mxu0 0
      %3628 = vmatprep.subr.bf16.mxu0 0
      %3629 = vmatpush1.bf16.msra.mxu0 0
      %3630 = vmatprep.subr.bf16.mxu0 0
      %3631 = vmatpush1.bf16.msra.mxu0 0
      %3632 = vmatprep.subr.bf16.mxu0 0
      %3633 = vmatpush1.bf16.msra.mxu0 0
      %3634 = vmatprep.mubr.bf16.mxu0 0
      %3635 = vmatmul.mubr.bf16.gmra.mrb[0].mxu0 %v3594
      %v3636 = vpop.f32.mrb[0].mxu0
      %v3637 = vadd.f32 0.0, %v3636
      %v3638 = vpop.f32.mrb[0].mxu0
      %v3639 = vpop.f32.mrb[0].mxu0
      %v3640 = vadd.f32 0.0, %v3639
      %v3641 = vpop.f32.mrb[0].mxu0
      %3642 = vmatprep.mubr.bf16.mxu0 0
      %3643 = vmatmul.mubr.bf16.gmra.mrb[0].mxu0 %v3597
      %v3644 = vpop.f32.mrb[0].mxu0
      %v3645 = vadd.f32 0.0, %v3644
      %v3646 = vpop.f32.mrb[0].mxu0
      %v3647 = vpop.f32.mrb[0].mxu0
      %v3648 = vpop.f32.mrb[0].mxu0
      %3649 = vdwg.mxu0
      %v3650 = vadd.f32 %v3423, %v3637
      %v3651 = vadd.f32 %v3424, %v3640
      %v3652 = vadd.f32 %v3425, %v3645
      %v3653 = vld [vmem:[%s886] sm:$0x1]
      %v3655 = vlaneseq
      %v3656 = vshrl.u32 %v3655, 7
      %v3657 = vsub.s32 0, %v3656
      %v3658 = vrot.slane %v3653, %v3657
      %v3660 = vadd.f32 %v3650, %v3658
      %v3661 = vadd.f32 %v3651, %v3658
      %v3662 = vadd.f32 %v3652, %v3658
      %v3663 = vld [vmem:[%s889] sm:$0x1]
      %v3664 = vld [vmem:[%s892] sm:$0x1]
      %v3665 = vsel %vm948, %v3660, 0.0
      %3666 = vadd.xlane.f32.xlu0 %v3665
      %v3667 = vpop.xlane.xlu0 %3666
      %v3668 = vsel %vm948, %v3661, 0.0
      %3669 = vadd.xlane.f32.xlu0 %v3668
      %v3670 = vpop.xlane.xlu0 %3669
      %v3671 = vsel %vm955, %v3662, 0.0
      %3672 = vadd.xlane.f32.xlu0 %v3671
      %v3673 = vpop.xlane.xlu0 %3672
      %v3674 = vmul.f32 %v3667, %v959
      %v3675 = vmul.f32 %v3670, %v959
      %v3676 = vmul.f32 %v3673, %v959
      %v3677 = vsub.f32 %v3660, %v3674
      %v3678 = vsub.f32 %v3661, %v3675
      %v3679 = vsub.f32 %v3662, %v3676
      %v3680 = vmul.f32 %v3677, %v3677
      %v3681 = vmul.f32 %v3678, %v3678
      %v3682 = vmul.f32 %v3679, %v3679
      %v3683 = vsel %vm948, %v3680, 0.0
      %3684 = vadd.xlane.f32.xlu0 %v3683
      %v3685 = vpop.xlane.xlu0 %3684
      %v3686 = vsel %vm948, %v3681, 0.0
      %3687 = vadd.xlane.f32.xlu0 %v3686
      %v3688 = vpop.xlane.xlu0 %3687
      %v3689 = vsel %vm955, %v3682, 0.0
      %3690 = vadd.xlane.f32.xlu0 %v3689
      %v3691 = vpop.xlane.xlu0 %3690
      %v3692 = vmul.f32 %v3685, %v959
      %v3693 = vmul.f32 %v3688, %v959
      %v3694 = vmul.f32 %v3691, %v959
      %v3695 = vadd.f32 %v3692, 1e-05
      %v3696 = vadd.f32 %v3693, 1e-05
      %v3697 = vadd.f32 %v3694, 1e-05
      %v3698 = vrsqrt.pop %v3695
      %v3699 = vrsqrt.pop %v3696
      %v3700 = vrsqrt.pop %v3697
      %v3701 = vmul.f32 %v3677, %v3698
      %v3702 = vmul.f32 %v3678, %v3699
      %v3703 = vmul.f32 %v3679, %v3700
      %v3705 = vlaneseq
      %v3706 = vshrl.u32 %v3705, 7
      %v3707 = vsub.s32 0, %v3706
      %v3708 = vrot.slane %v3663, %v3707
      %v3710 = vmul.f32 %v3701, %v3708
      %v3711 = vmul.f32 %v3702, %v3708
      %v3712 = vmul.f32 %v3703, %v3708
      %v3714 = vlaneseq
      %v3715 = vshrl.u32 %v3714, 7
      %v3716 = vsub.s32 0, %v3715
      %v3717 = vrot.slane %v3664, %v3716
      %v3719 = vadd.f32 %v3710, %v3717
      %v3720 = vadd.f32 %v3711, %v3717
      %v3721 = vadd.f32 %v3712, %v3717
      %v3722 = vpack.c.bf16 %v3720, %v3719
      %v3723 = vpack.c.bf16 %v3721, %v3721
      %v3724 = vld [vmem:[%s897] sm:$0xf]
      %v3725 = vld [vmem:[%s897 + $0x4] sm:$0xf]
      %v3726 = vld [vmem:[%s897 + $0x8] sm:$0xf]
      %v3727 = vld [vmem:[%s897 + $0xc] sm:$0xf]
      %v3728 = vld [vmem:[%s900] sm:$0x1]
      %v3730 = vlaneseq
      %v3731 = vshrl.u32 %v3730, 7
      %v3732 = vsub.s32 0, %v3731
      %v3733 = vrot.slane %v3728, %v3732
      %v3739 = vunpack.c.l.b16 %v3724
      %v3740 = vunpack.c.l.b16 %v3725
      %v3741 = vunpack.c.l.b16 %v3726
      %v3742 = vunpack.c.l.b16 %v3727
      %v3743 = vpack.c.b16 %v3740, %v3739
      %v3744 = vpack.c.b16 %v3742, %v3741
      %v3748 = vsel %vm948, %v3722, 0
      %v3751 = vsel %vm948, %v3723, 0
      %3753 = vmatprep.subr.bf16.mxu0 0
      %3754 = vmatpush1.bf16.msra.mxu0 %v3743
      %3755 = vmatprep.subr.bf16.mxu0 0
      %3756 = vmatpush1.bf16.msra.mxu0 %v3744
      %3757 = vmatprep.subr.bf16.mxu0 0
      %3758 = vmatpush1.bf16.msra.mxu0 0
      %3759 = vmatprep.subr.bf16.mxu0 0
      %3760 = vmatpush1.bf16.msra.mxu0 0
      %3761 = vmatprep.subr.bf16.mxu0 0
      %3762 = vmatpush1.bf16.msra.mxu0 0
      %3763 = vmatprep.subr.bf16.mxu0 0
      %3764 = vmatpush1.bf16.msra.mxu0 0
      %3765 = vmatprep.subr.bf16.mxu0 0
      %3766 = vmatpush1.bf16.msra.mxu0 0
      %3767 = vmatprep.subr.bf16.mxu0 0
      %3768 = vmatpush1.bf16.msra.mxu0 0
      %3769 = vmatprep.subr.bf16.mxu0 0
      %3770 = vmatpush1.bf16.msra.mxu0 0
      %3771 = vmatprep.subr.bf16.mxu0 0
      %3772 = vmatpush1.bf16.msra.mxu0 0
      %3773 = vmatprep.subr.bf16.mxu0 0
      %3774 = vmatpush1.bf16.msra.mxu0 0
      %3775 = vmatprep.subr.bf16.mxu0 0
      %3776 = vmatpush1.bf16.msra.mxu0 0
      %3777 = vmatprep.subr.bf16.mxu0 0
      %3778 = vmatpush1.bf16.msra.mxu0 0
      %3779 = vmatprep.subr.bf16.mxu0 0
      %3780 = vmatpush1.bf16.msra.mxu0 0
      %3781 = vmatprep.subr.bf16.mxu0 0
      %3782 = vmatpush1.bf16.msra.mxu0 0
      %3783 = vmatprep.subr.bf16.mxu0 0
      %3784 = vmatpush1.bf16.msra.mxu0 0
      %3785 = vmatprep.mubr.bf16.mxu0 0
      %3786 = vmatmul.mubr.bf16.gmra.mrb[0].mxu0 %v3748
      %v3787 = vpop.f32.mrb[0].mxu0
      %v3788 = vadd.f32 %v3733, %v3787
      %v3789 = vpop.f32.mrb[0].mxu0
      %v3790 = vpop.f32.mrb[0].mxu0
      %v3791 = vadd.f32 %v3733, %v3790
      %v3792 = vpop.f32.mrb[0].mxu0
      %3793 = vmatprep.mubr.bf16.mxu0 0
      %3794 = vmatmul.mubr.bf16.gmra.mrb[0].mxu0 %v3751
      %v3795 = vpop.f32.mrb[0].mxu0
      %v3796 = vadd.f32 %v3733, %v3795
      %v3797 = vpop.f32.mrb[0].mxu0
      %v3798 = vpop.f32.mrb[0].mxu0
      %v3799 = vpop.f32.mrb[0].mxu0
      %3800 = vdwg.mxu0
      %v3801 = vmul.f32 %v3788, %v3788
      %v3802 = vmul.f32 %v3791, %v3791
      %v3803 = vmul.f32 %v3796, %v3796
      %v3804 = vmul.f32 %v3788, %v3801
      %v3805 = vmul.f32 %v3791, %v3802
      %v3806 = vmul.f32 %v3796, %v3803
      %v3807 = vmul.f32 %v3804, 0.044715
      %v3808 = vmul.f32 %v3805, 0.044715
      %v3809 = vmul.f32 %v3806, 0.044715
      %v3810 = vadd.f32 %v3788, %v3807
      %v3811 = vadd.f32 %v3791, %v3808
      %v3812 = vadd.f32 %v3796, %v3809
      %v3813 = vmul.f32 %v3810, 0.7978846
      %v3814 = vmul.f32 %v3811, 0.7978846
      %v3815 = vmul.f32 %v3812, 0.7978846
      %v3816 = vtanh.pop %v3813
      %v3817 = vtanh.pop %v3814
      %v3818 = vtanh.pop %v3815
      %v3819 = vadd.f32 %v3816, 1.0
      %v3820 = vadd.f32 %v3817, 1.0
      %v3821 = vadd.f32 %v3818, 1.0
      %v3822 = vmul.f32 %v3819, 0.5
      %v3823 = vmul.f32 %v3820, 0.5
      %v3824 = vmul.f32 %v3821, 0.5
      %v3825 = vmul.f32 %v3788, %v3822
      %v3826 = vmul.f32 %v3791, %v3823
      %v3827 = vmul.f32 %v3796, %v3824
      %v3828 = vpack.c.bf16 %v3826, %v3825
      %v3829 = vpack.c.bf16 %v3827, %v3827
      %v3830 = vld [vmem:[%s905] sm:$0xf]
      %v3831 = vld [vmem:[%s905 + $0x4] sm:$0xf]
      %v3832 = vld [vmem:[%s905 + $0x8] sm:$0xf]
      %v3833 = vld [vmem:[%s905 + $0xc] sm:$0xf]
      %v3834 = vld [vmem:[%s905 + $0x10] sm:$0xf]
      %v3835 = vld [vmem:[%s905 + $0x14] sm:$0xf]
      %v3836 = vld [vmem:[%s905 + $0x18] sm:$0xf]
      %v3837 = vld [vmem:[%s905 + $0x1c] sm:$0xf]
      %v3838 = vld [vmem:[%s905 + $0x20] sm:$0xf]
      %v3839 = vld [vmem:[%s905 + $0x24] sm:$0xf]
      %v3840 = vld [vmem:[%s905 + $0x28] sm:$0xf]
      %v3841 = vld [vmem:[%s905 + $0x2c] sm:$0xf]
      %v3842 = vld [vmem:[%s905 + $0x30] sm:$0xf]
      %v3843 = vld [vmem:[%s905 + $0x34] sm:$0xf]
      %v3844 = vld [vmem:[%s905 + $0x38] sm:$0xf]
      %v3845 = vld [vmem:[%s905 + $0x3c] sm:$0xf]
      %v3862 = vunpack.c.l.b16 %v3830
      %v3863 = vunpack.c.l.b16 %v3831
      %v3864 = vunpack.c.l.b16 %v3832
      %v3865 = vunpack.c.l.b16 %v3833
      %v3866 = vunpack.c.l.b16 %v3834
      %v3867 = vunpack.c.l.b16 %v3835
      %v3868 = vunpack.c.l.b16 %v3836
      %v3869 = vunpack.c.l.b16 %v3837
      %v3870 = vunpack.c.l.b16 %v3838
      %v3871 = vunpack.c.l.b16 %v3839
      %v3872 = vunpack.c.l.b16 %v3840
      %v3873 = vunpack.c.l.b16 %v3841
      %v3874 = vunpack.c.l.b16 %v3842
      %v3875 = vunpack.c.l.b16 %v3843
      %v3876 = vunpack.c.l.b16 %v3844
      %v3877 = vunpack.c.l.b16 %v3845
      %v3878 = vpack.c.b16 %v3863, %v3862
      %v3879 = vpack.c.b16 %v3865, %v3864
      %v3880 = vpack.c.b16 %v3867, %v3866
      %v3881 = vpack.c.b16 %v3869, %v3868
      %v3882 = vpack.c.b16 %v3871, %v3870
      %v3883 = vpack.c.b16 %v3873, %v3872
      %v3884 = vpack.c.b16 %v3875, %v3874
      %v3885 = vpack.c.b16 %v3877, %v3876
      %3894 = vmatprep.subr.bf16.mxu0 0
      %3895 = vmatpush1.bf16.msra.mxu0 %v3878
      %3896 = vmatprep.subr.bf16.mxu0 0
      %3897 = vmatpush1.bf16.msra.mxu0 %v3879
      %3898 = vmatprep.subr.bf16.mxu0 0
      %3899 = vmatpush1.bf16.msra.mxu0 %v3880
      %3900 = vmatprep.subr.bf16.mxu0 0
      %3901 = vmatpush1.bf16.msra.mxu0 %v3881
      %3902 = vmatprep.subr.bf16.mxu0 0
      %3903 = vmatpush1.bf16.msra.mxu0 %v3882
      %3904 = vmatprep.subr.bf16.mxu0 0
      %3905 = vmatpush1.bf16.msra.mxu0 %v3883
      %3906 = vmatprep.subr.bf16.mxu0 0
      %3907 = vmatpush1.bf16.msra.mxu0 %v3884
      %3908 = vmatprep.subr.bf16.mxu0 0
      %3909 = vmatpush1.bf16.msra.mxu0 %v3885
      %3910 = vmatprep.subr.bf16.mxu0 0
      %3911 = vmatpush1.bf16.msra.mxu0 0
      %3912 = vmatprep.subr.bf16.mxu0 0
      %3913 = vmatpush1.bf16.msra.mxu0 0
      %3914 = vmatprep.subr.bf16.mxu0 0
      %3915 = vmatpush1.bf16.msra.mxu0 0
      %3916 = vmatprep.subr.bf16.mxu0 0
      %3917 = vmatpush1.bf16.msra.mxu0 0
      %3918 = vmatprep.subr.bf16.mxu0 0
      %3919 = vmatpush1.bf16.msra.mxu0 0
      %3920 = vmatprep.subr.bf16.mxu0 0
      %3921 = vmatpush1.bf16.msra.mxu0 0
      %3922 = vmatprep.subr.bf16.mxu0 0
      %3923 = vmatpush1.bf16.msra.mxu0 0
      %3924 = vmatprep.subr.bf16.mxu0 0
      %3925 = vmatpush1.bf16.msra.mxu0 0
      %3926 = vmatprep.mubr.bf16.mxu0 0
      %3927 = vmatmul.mubr.bf16.gmra.mrb[0].mxu0 %v3828
      %v3928 = vpop.f32.mrb[0].mxu0
      %v3929 = vadd.f32 0.0, %v3928
      %v3930 = vpop.f32.mrb[0].mxu0
      %v3931 = vpop.f32.mrb[0].mxu0
      %v3932 = vadd.f32 0.0, %v3931
      %v3933 = vpop.f32.mrb[0].mxu0
      %3934 = vmatprep.mubr.bf16.mxu0 0
      %3935 = vmatmul.mubr.bf16.gmra.mrb[0].mxu0 %v3829
      %v3936 = vpop.f32.mrb[0].mxu0
      %v3937 = vadd.f32 0.0, %v3936
      %v3938 = vpop.f32.mrb[0].mxu0
      %v3939 = vpop.f32.mrb[0].mxu0
      %v3940 = vpop.f32.mrb[0].mxu0
      %3941 = vdwg.mxu0
      %v3942 = vadd.f32 %v3660, %v3929
      %v3943 = vadd.f32 %v3661, %v3932
      %v3944 = vadd.f32 %v3662, %v3937
      %v3945 = vld [vmem:[%s908] sm:$0x1]
      %v3947 = vlaneseq
      %v3948 = vshrl.u32 %v3947, 7
      %v3949 = vsub.s32 0, %v3948
      %v3950 = vrot.slane %v3945, %v3949
      %v3952 = vadd.f32 %v3942, %v3950
      %v3953 = vadd.f32 %v3943, %v3950
      %v3954 = vadd.f32 %v3944, %v3950
      %3955 = vst.msk [vmem:[%s2455] sm:$0xff] %vm948, %v3952
      %3956 = vst.msk [vmem:[%s2455 + $0x8] sm:$0xff] %vm948, %v3953
      %3957 = vst.msk [vmem:[%s2455 + $0x10] sm:$0x1] %vm955, %v3954
      %p3958 = scmp.eq.s32.totalorder %s33, 1
      // Predicated region
      $region113: #{_lambda_.5} parent=107 // pred_check
        %p3959 = pneg %p3958
      $region114: #{_lambda_.5} parent=107 // pred_check_branch
        %3961 = sbr.rel (%p3959) target = $region116
      $region115: #{_lambda_.5} parent=107 // pred_region
        %v3962 = vld [vmem:[#allocation2] sm:$0xff]
        %v3963 = vld [vmem:[#allocation2 + $0x8] sm:$0xff]
        %v3964 = vld [vmem:[#allocation2 + $0x10] sm:$0x1]
        %v3965 = vld [vmem:[%s18] sm:$0x1]
        %v3966 = vld [vmem:[%s19] sm:$0x1]
        %v3967 = vsel %vm948, %v3962, 0.0
        %3968 = vadd.xlane.f32.xlu0 %v3967
        %v3969 = vpop.xlane.xlu0 %3968
        %v3970 = vsel %vm948, %v3963, 0.0
        %3971 = vadd.xlane.f32.xlu0 %v3970
        %v3972 = vpop.xlane.xlu0 %3971
        %v3973 = vsel %vm955, %v3964, 0.0
        %3974 = vadd.xlane.f32.xlu0 %v3973
        %v3975 = vpop.xlane.xlu0 %3974
        %v3976 = vmul.f32 %v3969, %v959
        %v3977 = vmul.f32 %v3972, %v959
        %v3978 = vmul.f32 %v3975, %v959
        %v3979 = vsub.f32 %v3962, %v3976
        %v3980 = vsub.f32 %v3963, %v3977
        %v3981 = vsub.f32 %v3964, %v3978
        %v3982 = vmul.f32 %v3979, %v3979
        %v3983 = vmul.f32 %v3980, %v3980
        %v3984 = vmul.f32 %v3981, %v3981
        %v3985 = vsel %vm948, %v3982, 0.0
        %3986 = vadd.xlane.f32.xlu0 %v3985
        %v3987 = vpop.xlane.xlu0 %3986
        %v3988 = vsel %vm948, %v3983, 0.0
        %3989 = vadd.xlane.f32.xlu0 %v3988
        %v3990 = vpop.xlane.xlu0 %3989
        %v3991 = vsel %vm955, %v3984, 0.0
        %3992 = vadd.xlane.f32.xlu0 %v3991
        %v3993 = vpop.xlane.xlu0 %3992
        %v3994 = vmul.f32 %v3987, %v959
        %v3995 = vmul.f32 %v3990, %v959
        %v3996 = vmul.f32 %v3993, %v959
        %v3997 = vadd.f32 %v3994, 1e-05
        %v3998 = vadd.f32 %v3995, 1e-05
        %v3999 = vadd.f32 %v3996, 1e-05
        %v4000 = vrsqrt.pop %v3997
        %v4001 = vrsqrt.pop %v3998
        %v4002 = vrsqrt.pop %v3999
        %v4003 = vmul.f32 %v3979, %v4000
        %v4004 = vmul.f32 %v3980, %v4001
        %v4005 = vmul.f32 %v3981, %v4002
        %v4007 = vlaneseq
        %v4008 = vshrl.u32 %v4007, 7
        %v4009 = vsub.s32 0, %v4008
        %v4010 = vrot.slane %v3965, %v4009
        %v4012 = vmul.f32 %v4003, %v4010
        %v4013 = vmul.f32 %v4004, %v4010
        %v4014 = vmul.f32 %v4005, %v4010
        %v4016 = vlaneseq
        %v4017 = vshrl.u32 %v4016, 7
        %v4018 = vsub.s32 0, %v4017
        %v4019 = vrot.slane %v3966, %v4018
        %v4021 = vadd.f32 %v4012, %v4019
        %v4022 = vadd.f32 %v4013, %v4019
        %v4023 = vadd.f32 %v4014, %v4019
        %v4024 = vpack.c.bf16 %v4022, %v4021
        %v4025 = vpack.c.bf16 %v4023, %v4023
        %v4026 = vld [vmem:[%s20] sm:$0xf]
        %v4027 = vld [vmem:[%s20 + $0x4] sm:$0xf]
        %v4028 = vld [vmem:[%s20 + $0x8] sm:$0xf]
        %v4029 = vld [vmem:[%s20 + $0xc] sm:$0xf]
        %v4030 = vld [vmem:[%s21] sm:$0x1]
        %v4032 = vlaneseq
        %v4033 = vshrl.u32 %v4032, 7
        %v4034 = vsub.s32 0, %v4033
        %v4035 = vrot.slane %v4030, %v4034
        %v4041 = vunpack.c.l.b16 %v4026
        %v4042 = vunpack.c.l.b16 %v4027
        %v4043 = vunpack.c.l.b16 %v4028
        %v4044 = vunpack.c.l.b16 %v4029
        %v4045 = vpack.c.b16 %v4042, %v4041
        %v4046 = vpack.c.b16 %v4044, %v4043
        %v4050 = vsel %vm948, %v4024, 0
        %v4053 = vsel %vm948, %v4025, 0
        %4055 = vmatprep.subr.bf16.mxu0 0
        %4056 = vmatpush1.bf16.msra.mxu0 %v4045
        %4057 = vmatprep.subr.bf16.mxu0 0
        %4058 = vmatpush1.bf16.msra.mxu0 %v4046
        %4059 = vmatprep.subr.bf16.mxu0 0
        %4060 = vmatpush1.bf16.msra.mxu0 0
        %4061 = vmatprep.subr.bf16.mxu0 0
        %4062 = vmatpush1.bf16.msra.mxu0 0
        %4063 = vmatprep.subr.bf16.mxu0 0
        %4064 = vmatpush1.bf16.msra.mxu0 0
        %4065 = vmatprep.subr.bf16.mxu0 0
        %4066 = vmatpush1.bf16.msra.mxu0 0
        %4067 = vmatprep.subr.bf16.mxu0 0
        %4068 = vmatpush1.bf16.msra.mxu0 0
        %4069 = vmatprep.subr.bf16.mxu0 0
        %4070 = vmatpush1.bf16.msra.mxu0 0
        %4071 = vmatprep.subr.bf16.mxu0 0
        %4072 = vmatpush1.bf16.msra.mxu0 0
        %4073 = vmatprep.subr.bf16.mxu0 0
        %4074 = vmatpush1.bf16.msra.mxu0 0
        %4075 = vmatprep.subr.bf16.mxu0 0
        %4076 = vmatpush1.bf16.msra.mxu0 0
        %4077 = vmatprep.subr.bf16.mxu0 0
        %4078 = vmatpush1.bf16.msra.mxu0 0
        %4079 = vmatprep.subr.bf16.mxu0 0
        %4080 = vmatpush1.bf16.msra.mxu0 0
        %4081 = vmatprep.subr.bf16.mxu0 0
        %4082 = vmatpush1.bf16.msra.mxu0 0
        %4083 = vmatprep.subr.bf16.mxu0 0
        %4084 = vmatpush1.bf16.msra.mxu0 0
        %4085 = vmatprep.subr.bf16.mxu0 0
        %4086 = vmatpush1.bf16.msra.mxu0 0
        %4087 = vmatprep.mubr.bf16.mxu0 0
        %4088 = vmatmul.mubr.bf16.gmra.mrb[0].mxu0 %v4050
        %v4089 = vpop.f32.mrb[0].mxu0
        %v4090 = vadd.f32 %v4035, %v4089
        %v4091 = vpop.f32.mrb[0].mxu0
        %v4092 = vpop.f32.mrb[0].mxu0
        %v4093 = vadd.f32 %v4035, %v4092
        %v4094 = vpop.f32.mrb[0].mxu0
        %4095 = vmatprep.mubr.bf16.mxu0 0
        %4096 = vmatmul.mubr.bf16.gmra.mrb[0].mxu0 %v4053
        %v4097 = vpop.f32.mrb[0].mxu0
        %v4098 = vadd.f32 %v4035, %v4097
        %v4099 = vpop.f32.mrb[0].mxu0
        %v4100 = vpop.f32.mrb[0].mxu0
        %v4101 = vpop.f32.mrb[0].mxu0
        %4102 = vdwg.mxu0
        %vm4103 = vcmask 130048
        %4104 = vst.msk [vmem:[%s22] sm:$0xff] %vm4103, %v4090
        %4105 = vst.msk [vmem:[%s22 + $0x8] sm:$0xff] %vm4103, %v4093
        %vm4106 = vcmask 122880
        %4107 = vst.msk [vmem:[%s22 + $0x10] sm:$0x1] %vm4106, %v4098
        %v4108 = vld [vmem:[%s2455] sm:$0xff]
        %v4109 = vld [vmem:[%s2455 + $0x8] sm:$0xff]
        %v4110 = vld [vmem:[%s2455 + $0x10] sm:$0x1]
        %v4111 = vld [vmem:[%s18] sm:$0x1]
        %v4112 = vld [vmem:[%s19] sm:$0x1]
        %v4113 = vsel %vm948, %v4108, 0.0
        %4114 = vadd.xlane.f32.xlu0 %v4113
        %v4115 = vpop.xlane.xlu0 %4114
        %v4116 = vsel %vm948, %v4109, 0.0
        %4117 = vadd.xlane.f32.xlu0 %v4116
        %v4118 = vpop.xlane.xlu0 %4117
        %v4119 = vsel %vm955, %v4110, 0.0
        %4120 = vadd.xlane.f32.xlu0 %v4119
        %v4121 = vpop.xlane.xlu0 %4120
        %v4122 = vmul.f32 %v4115, %v959
        %v4123 = vmul.f32 %v4118, %v959
        %v4124 = vmul.f32 %v4121, %v959
        %v4125 = vsub.f32 %v4108, %v4122
        %v4126 = vsub.f32 %v4109, %v4123
        %v4127 = vsub.f32 %v4110, %v4124
        %v4128 = vmul.f32 %v4125, %v4125
        %v4129 = vmul.f32 %v4126, %v4126
        %v4130 = vmul.f32 %v4127, %v4127
        %v4131 = vsel %vm948, %v4128, 0.0
        %4132 = vadd.xlane.f32.xlu0 %v4131
        %v4133 = vpop.xlane.xlu0 %4132
        %v4134 = vsel %vm948, %v4129, 0.0
        %4135 = vadd.xlane.f32.xlu0 %v4134
        %v4136 = vpop.xlane.xlu0 %4135
        %v4137 = vsel %vm955, %v4130, 0.0
        %4138 = vadd.xlane.f32.xlu0 %v4137
        %v4139 = vpop.xlane.xlu0 %4138
        %v4140 = vmul.f32 %v4133, %v959
        %v4141 = vmul.f32 %v4136, %v959
        %v4142 = vmul.f32 %v4139, %v959
        %v4143 = vadd.f32 %v4140, 1e-05
        %v4144 = vadd.f32 %v4141, 1e-05
        %v4145 = vadd.f32 %v4142, 1e-05
        %v4146 = vrsqrt.pop %v4143
        %v4147 = vrsqrt.pop %v4144
        %v4148 = vrsqrt.pop %v4145
        %v4149 = vmul.f32 %v4125, %v4146
        %v4150 = vmul.f32 %v4126, %v4147
        %v4151 = vmul.f32 %v4127, %v4148
        %v4153 = vlaneseq
        %v4154 = vshrl.u32 %v4153, 7
        %v4155 = vsub.s32 0, %v4154
        %v4156 = vrot.slane %v4111, %v4155
        %v4158 = vmul.f32 %v4149, %v4156
        %v4159 = vmul.f32 %v4150, %v4156
        %v4160 = vmul.f32 %v4151, %v4156
        %v4162 = vlaneseq
        %v4163 = vshrl.u32 %v4162, 7
        %v4164 = vsub.s32 0, %v4163
        %v4165 = vrot.slane %v4112, %v4164
        %v4167 = vadd.f32 %v4158, %v4165
        %v4168 = vadd.f32 %v4159, %v4165
        %v4169 = vadd.f32 %v4160, %v4165
        %v4170 = vpack.c.bf16 %v4168, %v4167
        %v4171 = vpack.c.bf16 %v4169, %v4169
        %v4172 = vld [vmem:[%s20] sm:$0xf]
        %v4173 = vld [vmem:[%s20 + $0x4] sm:$0xf]
        %v4174 = vld [vmem:[%s20 + $0x8] sm:$0xf]
        %v4175 = vld [vmem:[%s20 + $0xc] sm:$0xf]
        %v4176 = vld [vmem:[%s21] sm:$0x1]
        %v4178 = vlaneseq
        %v4179 = vshrl.u32 %v4178, 7
        %v4180 = vsub.s32 0, %v4179
        %v4181 = vrot.slane %v4176, %v4180
        %v4187 = vunpack.c.l.b16 %v4172
        %v4188 = vunpack.c.l.b16 %v4173
        %v4189 = vunpack.c.l.b16 %v4174
        %v4190 = vunpack.c.l.b16 %v4175
        %v4191 = vpack.c.b16 %v4188, %v4187
        %v4192 = vpack.c.b16 %v4190, %v4189
        %v4196 = vsel %vm948, %v4170, 0
        %v4199 = vsel %vm948, %v4171, 0
        %4201 = vmatprep.subr.bf16.mxu0 0
        %4202 = vmatpush1.bf16.msra.mxu0 %v4191
        %4203 = vmatprep.subr.bf16.mxu0 0
        %4204 = vmatpush1.bf16.msra.mxu0 %v4192
        %4205 = vmatprep.subr.bf16.mxu0 0
        %4206 = vmatpush1.bf16.msra.mxu0 0
        %4207 = vmatprep.subr.bf16.mxu0 0
        %4208 = vmatpush1.bf16.msra.mxu0 0
        %4209 = vmatprep.subr.bf16.mxu0 0
        %4210 = vmatpush1.bf16.msra.mxu0 0
        %4211 = vmatprep.subr.bf16.mxu0 0
        %4212 = vmatpush1.bf16.msra.mxu0 0
        %4213 = vmatprep.subr.bf16.mxu0 0
        %4214 = vmatpush1.bf16.msra.mxu0 0
        %4215 = vmatprep.subr.bf16.mxu0 0
        %4216 = vmatpush1.bf16.msra.mxu0 0
        %4217 = vmatprep.subr.bf16.mxu0 0
        %4218 = vmatpush1.bf16.msra.mxu0 0
        %4219 = vmatprep.subr.bf16.mxu0 0
        %4220 = vmatpush1.bf16.msra.mxu0 0
        %4221 = vmatprep.subr.bf16.mxu0 0
        %4222 = vmatpush1.bf16.msra.mxu0 0
        %4223 = vmatprep.subr.bf16.mxu0 0
        %4224 = vmatpush1.bf16.msra.mxu0 0
        %4225 = vmatprep.subr.bf16.mxu0 0
        %4226 = vmatpush1.bf16.msra.mxu0 0
        %4227 = vmatprep.subr.bf16.mxu0 0
        %4228 = vmatpush1.bf16.msra.mxu0 0
        %4229 = vmatprep.subr.bf16.mxu0 0
        %4230 = vmatpush1.bf16.msra.mxu0 0
        %4231 = vmatprep.subr.bf16.mxu0 0
        %4232 = vmatpush1.bf16.msra.mxu0 0
        %4233 = vmatprep.mubr.bf16.mxu0 0
        %4234 = vmatmul.mubr.bf16.gmra.mrb[0].mxu0 %v4196
        %v4235 = vpop.f32.mrb[0].mxu0
        %v4236 = vadd.f32 %v4181, %v4235
        %v4237 = vpop.f32.mrb[0].mxu0
        %v4238 = vpop.f32.mrb[0].mxu0
        %v4239 = vadd.f32 %v4181, %v4238
        %v4240 = vpop.f32.mrb[0].mxu0
        %4241 = vmatprep.mubr.bf16.mxu0 0
        %4242 = vmatmul.mubr.bf16.gmra.mrb[0].mxu0 %v4199
        %v4243 = vpop.f32.mrb[0].mxu0
        %v4244 = vadd.f32 %v4181, %v4243
        %v4245 = vpop.f32.mrb[0].mxu0
        %v4246 = vpop.f32.mrb[0].mxu0
        %v4247 = vpop.f32.mrb[0].mxu0
        %4248 = vdwg.mxu0
        %s4249 = scalar_lea.vmem %s22, 24
        %4250 = vst.msk [vmem:[%s4249] sm:$0xff] %vm4103, %v4236
        %4251 = vst.msk [vmem:[%s4249 + $0x8] sm:$0xff] %vm4103, %v4239
        %4252 = vst.msk [vmem:[%s4249 + $0x10] sm:$0x1] %vm4106, %v4244
      $region116: #{_lambda_.5} parent=107 // pred_fallthru
        _
      // Predicated region
      $region117: #{_lambda_.5} parent=107 // pred_check
        %p4253 = pneg %p588
      $region118: #{_lambda_.5} parent=107 // pred_check_branch
        %4255 = sbr.rel (%p4253) target = $region120
      $region119: #{_lambda_.5} parent=107 // pred_region
        _
      $region120: #{_lambda_.5} parent=107 // pred_fallthru
        _
      // Predicated region
      $region121: #{_lambda_.5} parent=107 // pred_check
        %p4256 = pneg %p588
      $region122: #{_lambda_.5} parent=107 // pred_check_branch
        %4258 = sbr.rel (%p4256) target = $region124
      $region123: #{_lambda_.5} parent=107 // pred_region
        _
      $region124: #{_lambda_.5} parent=107 // pred_fallthru
        _
    $region108: #{_lambda_.5} parent=5 // pred_fallthru
      _
    %p4259 = scmp.le.s32.totalorder 2, %s28
    // Predicated region
    $region125: #{_lambda_.5} parent=5 // pred_check
      %p4260 = pneg %p4259
    $region126: #{_lambda_.5} parent=5 // pred_check_branch
      %4262 = sbr.rel (%p4260) target = $region128
    $region127: #{_lambda_.5} parent=5 // pred_region
      %s4263 = ssub.s32 %s28, 2
    $region128: #{_lambda_.5} parent=5 // pred_fallthru
      _
  $region6: #{_lambda_.5} parent=0 // loop_footer
    %s32 = sadd.s32 1, %s28
  $region7: #{_lambda_.5} parent=0 // loop_footer_branch
    %27 = sbr.rel target = $region3
  $region8: #{_lambda_.5} parent=0 // loop_exit
    _

</llo_original>
